<compile_context>
chip_gen: v5e
topology: v5e:2x2
jax: 0.10.0
libtpu: 0.0.40
codegen_flags: <defaults>
</compile_context>

<pallas_src>
import math
from functools import partial

import jax
import jax.numpy as jnp
from jax.experimental import pallas as pl
from jax.experimental.pallas import tpu as pltpu

NEG_INF = -1e30          # additive mask value (finite, avoids -inf NaN edge cases)
LN_EPS = 1e-5
VMEM_LIMIT = 32 * 1024 * 1024


def _row_tile(M, cap=512):
    """Largest sublane-aligned divisor of M that still yields >=2 grid steps (v7x megacore).

    Falls back to the full M (single step) when M is too small / has no aligned divisor.
    """
    limit = min(cap, M // 2)
    best = 0
    t = 8
    while t <= limit:
        if M % t == 0:
            best = t
        t += 8
    return best if best else M


# ----------------------------- in-kernel helpers (trace-time) -----------------------------

def _ln(x, g, b):
    """LayerNorm over the last dim. x: (M, E) f32; g/b: (1, E) f32."""
    mu = jnp.mean(x, axis=-1, keepdims=True)
    xc = x - mu
    var = jnp.mean(xc * xc, axis=-1, keepdims=True)
    return xc * jax.lax.rsqrt(var + LN_EPS) * g + b


def _mha_proj(q, k, v, bias, wo_ref, nhead, scale):
    """Multi-head attention + output projection, entirely in registers/VMEM.

    q: (Lq, E) f32, k/v: (Lk, E) f32 (projection biases already added),
    bias: (Lq, Lk) f32 additive bias or None, wo_ref: (E, E) bf16 ref.
    Heads are a static Python loop; the head-concat + out_proj is folded into per-head
    (Lq,dk)@(dk,E) accumulations so no lane concatenation is required.
    Returns (Lq, E) f32 == concat_h(softmax(q_h k_h^T * scale + bias) v_h) @ Wo.
    """
    E = q.shape[-1]
    dk = E // nhead
    qb = q.astype(jnp.bfloat16)
    kb = k.astype(jnp.bfloat16)
    vb = v.astype(jnp.bfloat16)
    acc = None
    for h in range(nhead):
        sl = slice(h * dk, (h + 1) * dk)
        # q_h @ k_h^T via dot_general contracting the last dims (MXU "nt" matmul).
        s = jax.lax.dot_general(qb[:, sl], kb[:, sl], (((1,), (1,)), ((), ())),
                                preferred_element_type=jnp.float32) * scale
        if bias is not None:
            s = s + bias
        s = s - jnp.max(s, axis=-1, keepdims=True)
        p = jnp.exp(s)
        p = p * pl.reciprocal(jnp.sum(p, axis=-1, keepdims=True), approx=True)
        o_h = jnp.dot(p.astype(jnp.bfloat16), vb[:, sl], preferred_element_type=jnp.float32)
        term = jnp.dot(o_h.astype(jnp.bfloat16), wo_ref[sl, :],
                       preferred_element_type=jnp.float32)
        acc = term if acc is None else acc + term
    return acc


# ----------------------------- Pallas kernels -----------------------------

def _encoder_layer_kernel(*refs, nhead, scale, has_bias, final_ln):
    """One full TransformerEncoderLayer (post-norm) for one batch element, in one kernel."""
    it = iter(refs)
    x_ref = next(it)
    bias_ref = next(it) if has_bias else None
    wqkv = next(it); bqkv = next(it)
    wo = next(it); bo = next(it)
    g1 = next(it); be1 = next(it)
    w1 = next(it); bf1 = next(it)
    w2 = next(it); bf2 = next(it)
    g2 = next(it); be2 = next(it)
    if final_ln:
        gf = next(it); bfn = next(it)
    o_ref = next(it)

    x = x_ref[0]                                    # (L, E) bf16
    E = x.shape[-1]

    # --- self-attention block: LN(x + out_proj(MHA(x,x,x))) ---
    qkv = jnp.dot(x, wqkv[...], preferred_element_type=jnp.float32) + bqkv[...]
    bias = bias_ref[0] if has_bias else None
    attn = _mha_proj(qkv[:, :E], qkv[:, E:2 * E], qkv[:, 2 * E:], bias, wo, nhead, scale)
    y = attn + bo[...] + x.astype(jnp.float32)
    y = _ln(y, g1[...], be1[...])

    # --- FFN block: LN(y + linear2(relu(linear1(y)))) ---
    h = jnp.maximum(jnp.dot(y.astype(jnp.bfloat16), w1[...],
                            preferred_element_type=jnp.float32) + bf1[...], 0.0)
    z = jnp.dot(h.astype(jnp.bfloat16), w2[...],
                preferred_element_type=jnp.float32) + bf2[...] + y
    z = _ln(z, g2[...], be2[...])

    if final_ln:                                    # fused TransformerEncoder final norm
        z = _ln(z, gf[...], bfn[...])
    o_ref[0] = z.astype(o_ref.dtype)


def _decoder_layer_kernel(*refs, nhead, scale, has_self_bias, has_cross_bias):
    """One full TransformerDecoderLayer (post-norm) for one batch element, in one kernel."""
    it = iter(refs)
    x_ref = next(it)
    mem_ref = next(it)
    sbias_ref = next(it) if has_self_bias else None
    cbias_ref = next(it) if has_cross_bias else None
    wqkv = next(it); bqkv = next(it)
    wo1 = next(it); bo1 = next(it)
    g1 = next(it); be1 = next(it)
    wq = next(it); bq = next(it)
    wkv = next(it); bkv = next(it)
    wo2 = next(it); bo2 = next(it)
    g2 = next(it); be2 = next(it)
    w1 = next(it); bf1 = next(it)
    w2 = next(it); bf2 = next(it)
    g3 = next(it); be3 = next(it)
    o_ref = next(it)

    x = x_ref[0]                                    # (T, E) bf16
    mem = mem_ref[0]                                # (S, E) bf16
    E = x.shape[-1]

    # --- masked self-attention block ---
    qkv = jnp.dot(x, wqkv[...], preferred_element_type=jnp.float32) + bqkv[...]
    sb = sbias_ref[0] if has_self_bias else None
    attn = _mha_proj(qkv[:, :E], qkv[:, E:2 * E], qkv[:, 2 * E:], sb, wo1, nhead, scale)
    y = attn + bo1[...] + x.astype(jnp.float32)
    y = _ln(y, g1[...], be1[...])

    # --- cross-attention block (queries from tgt stream, keys/values from memory) ---
    q = jnp.dot(y.astype(jnp.bfloat16), wq[...], preferred_element_type=jnp.float32) + bq[...]
    kv = jnp.dot(mem, wkv[...], preferred_element_type=jnp.float32) + bkv[...]
    cb = cbias_ref[0] if has_cross_bias else None
    attn2 = _mha_proj(q, kv[:, :E], kv[:, E:], cb, wo2, nhead, scale)
    y2 = attn2 + bo2[...] + y
    y2 = _ln(y2, g2[...], be2[...])

    # --- FFN block ---
    h = jnp.maximum(jnp.dot(y2.astype(jnp.bfloat16), w1[...],
                            preferred_element_type=jnp.float32) + bf1[...], 0.0)
    z = jnp.dot(h.astype(jnp.bfloat16), w2[...],
                preferred_element_type=jnp.float32) + bf2[...] + y2
    z = _ln(z, g3[...], be3[...])
    o_ref[0] = z.astype(o_ref.dtype)


def _generator_kernel(x_ref, g_ref, b_ref, w_ref, bias_ref, o_ref):
    """Fused decoder-final-LayerNorm + generator linear: o = LN(x) @ W + b."""
    x = _ln(x_ref[...].astype(jnp.float32), g_ref[...], b_ref[...])
    o_ref[...] = jnp.dot(x.astype(jnp.bfloat16), w_ref[...],
                         preferred_element_type=jnp.float32) + bias_ref[...]


# ----------------------------- kernel wrappers -----------------------------

def encoder_layer(x, bias, p, nhead, final_norm=None):
    B, L, E = x.shape
    scale = 1.0 / math.sqrt(E // nhead)
    args = [x]
    specs = [pl.BlockSpec((1, L, E), lambda b: (b, 0, 0))]
    if bias is not None:
        args.append(bias)
        specs.append(pl.BlockSpec((1, L, L), lambda b: (b, 0, 0)))
    for name in ("wqkv", "bqkv", "wo", "bo", "ln1_g", "ln1_b",
                 "w1", "b1", "w2", "b2", "ln2_g", "ln2_b"):
        a = p[name]
        args.append(a)
        specs.append(pl.BlockSpec(a.shape, lambda b: (0, 0)))
    if final_norm is not None:
        for a in (final_norm["g"], final_norm["b"]):
            args.append(a)
            specs.append(pl.BlockSpec(a.shape, lambda b: (0, 0)))
    kern = partial(_encoder_layer_kernel, nhead=nhead, scale=scale,
                   has_bias=bias is not None, final_ln=final_norm is not None)
    return pl.pallas_call(
        kern,
        out_shape=jax.ShapeDtypeStruct((B, L, E), jnp.bfloat16),
        grid=(B,),
        in_specs=specs,
        out_specs=pl.BlockSpec((1, L, E), lambda b: (b, 0, 0)),
        compiler_params=pltpu.CompilerParams(dimension_semantics=("parallel",),
                                             vmem_limit_bytes=VMEM_LIMIT),
    )(*args)


def decoder_layer(x, mem, self_bias, cross_bias, p, nhead):
    B, T, E = x.shape
    S = mem.shape[1]
    scale = 1.0 / math.sqrt(E // nhead)
    args = [x, mem]
    specs = [pl.BlockSpec((1, T, E), lambda b: (b, 0, 0)),
             pl.BlockSpec((1, S, E), lambda b: (b, 0, 0))]
    if self_bias is not None:
        args.append(self_bias)
        specs.append(pl.BlockSpec((1, T, T), lambda b: (b, 0, 0)))
    if cross_bias is not None:
        args.append(cross_bias)
        specs.append(pl.BlockSpec((1, T, S), lambda b: (b, 0, 0)))
    for name in ("wqkv", "bqkv", "wo1", "bo1", "ln1_g", "ln1_b",
                 "wq", "bq", "wkv", "bkv", "wo2", "bo2", "ln2_g", "ln2_b",
                 "w1", "b1", "w2", "b2", "ln3_g", "ln3_b"):
        a = p[name]
        args.append(a)
        specs.append(pl.BlockSpec(a.shape, lambda b: (0, 0)))
    kern = partial(_decoder_layer_kernel, nhead=nhead, scale=scale,
                   has_self_bias=self_bias is not None,
                   has_cross_bias=cross_bias is not None)
    return pl.pallas_call(
        kern,
        out_shape=jax.ShapeDtypeStruct((B, T, E), jnp.bfloat16),
        grid=(B,),
        in_specs=specs,
        out_specs=pl.BlockSpec((1, T, E), lambda b: (b, 0, 0)),
        compiler_params=pltpu.CompilerParams(dimension_semantics=("parallel",),
                                             vmem_limit_bytes=VMEM_LIMIT),
    )(*args)


def generator(x, ln_g, ln_b, w, bias):
    """o = LN(x) @ W + b with row tiling and (128-multiple) N tiling. x:(M,E) bf16, w:(E,Vp)."""
    M, E = x.shape
    Vp = w.shape[1]
    tm = _row_tile(M)
    if Vp <= 2048:
        tn = Vp
    elif Vp % 2048 == 0:
        tn = 2048
    elif Vp % 1024 == 0:
        tn = 1024
    else:
        tn = Vp   # TODO(synk): general cdiv + masked-tail N tiler for odd paddings
    return pl.pallas_call(
        _generator_kernel,
        out_shape=jax.ShapeDtypeStruct((M, Vp), jnp.float32),
        grid=(M // tm, Vp // tn),
        in_specs=[
            pl.BlockSpec((tm, E), lambda i, j: (i, 0)),
            pl.BlockSpec((1, E), lambda i, j: (0, 0)),
            pl.BlockSpec((1, E), lambda i, j: (0, 0)),
            pl.BlockSpec((E, tn), lambda i, j: (0, j)),
            pl.BlockSpec((1, tn), lambda i, j: (0, j)),
        ],
        out_specs=pl.BlockSpec((tm, tn), lambda i, j: (i, j)),
        compiler_params=pltpu.CompilerParams(
            dimension_semantics=("parallel", "parallel"),
            vmem_limit_bytes=VMEM_LIMIT),
    )(x, ln_g, ln_b, w, bias)


# ----------------------------- model glue (plain JAX, tiny) -----------------------------

def make_attn_bias(attn_mask, key_padding_mask, B, Lq, Lk):
    """Per-batch additive attention bias (B, Lq, Lk), or None when no mask is given."""
    if attn_mask is None and key_padding_mask is None:
        return None
    bias = jnp.zeros((B, Lq, Lk), jnp.float32)
    if attn_mask is not None:
        bias = bias + attn_mask[None, :, :].astype(jnp.float32)
    if key_padding_mask is not None:
        kp = jnp.where(key_padding_mask, NEG_INF, 0.0).astype(jnp.float32)
        bias = bias + kp[:, None, :]
    return bias


def sinusoidal_pe(maxlen, d_model):
    pos = jnp.arange(maxlen, dtype=jnp.float32)[:, None]
    den = jnp.exp(-jnp.arange(0, d_model, 2, dtype=jnp.float32) * math.log(10000.0) / d_model)
    pe = jnp.zeros((maxlen, d_model), jnp.float32)
    pe = pe.at[:, 0::2].set(jnp.sin(pos * den))
    pe = pe.at[:, 1::2].set(jnp.cos(pos * den))
    return pe                                       # (maxlen, d_model)


def seq2seq_forward(params, src, tgt, src_mask, tgt_mask,
                    src_padding_mask, tgt_padding_mask, memory_key_padding_mask, cfg):
    E, nhead = cfg["d_model"], cfg["nhead"]
    S, B = src.shape
    T = tgt.shape[0]
    emb_scale = math.sqrt(E)

    # Batch-first (B, L, E) bf16 activations: in-kernel head handling stays contiguous;
    # only the final logits are transposed back to PyTorch's seq-first (T, B, V) layout.
    src_x = (jnp.take(params["src_emb"], src.T, axis=0) * emb_scale
             + params["src_pe"][:S][None]).astype(jnp.bfloat16)
    tgt_x = (jnp.take(params["tgt_emb"], tgt.T, axis=0) * emb_scale
             + params["tgt_pe"][:T][None]).astype(jnp.bfloat16)

    enc_bias = make_attn_bias(src_mask, src_padding_mask, B, S, S)
    dec_self_bias = make_attn_bias(tgt_mask, tgt_padding_mask, B, T, T)
    dec_cross_bias = make_attn_bias(None, memory_key_padding_mask, B, T, S)

    mem = src_x
    n_enc = len(params["encoder_layers"])
    for li, p in enumerate(params["encoder_layers"]):
        fn = params["enc_norm"] if li == n_enc - 1 else None   # encoder final LN fused here
        mem = encoder_layer(mem, enc_bias, p, nhead, final_norm=fn)

    out = tgt_x
    for p in params["decoder_layers"]:
        out = decoder_layer(out, mem, dec_self_bias, dec_cross_bias, p, nhead)

    V = cfg["tgt_vocab_size"]
    logits = generator(out.reshape(B * T, E), params["dec_norm"]["g"], params["dec_norm"]["b"],
                       params["generator_w"], params["generator_b"])
    return logits[:, :V].reshape(B, T, V).transpose(1, 0, 2)   # (T, B, V)


# ----------------------------- deterministic parameter init -----------------------------

def init_params(key, cfg):
    """Weights created directly in kernel layout: (K, N) bf16 (= PyTorch weight.T), biases /
    LN params as (1, N) f32 — no per-forward transpose/cast glue."""
    E, F = cfg["d_model"], cfg["dim_feedforward"]
    sv, tv = cfg["src_vocab_size"], cfg["tgt_vocab_size"]
    vp = ((tv + 127) // 128) * 128                 # generator N padded to a 128 multiple
    keys = iter(jax.random.split(key, 256))

    def w(k_dim, n_dim, scale=0.02):
        return (scale * jax.random.normal(next(keys), (k_dim, n_dim))).astype(jnp.bfloat16)

    def b(n):
        return (0.02 * jax.random.normal(next(keys), (1, n))).astype(jnp.float32)

    def ln():
        return jnp.ones((1, E), jnp.float32), jnp.zeros((1, E), jnp.float32)

    def enc_layer():
        g1, be1 = ln(); g2, be2 = ln()
        return {"wqkv": w(E, 3 * E), "bqkv": b(3 * E),
                "wo": w(E, E), "bo": b(E),
                "ln1_g": g1, "ln1_b": be1,
                "w1": w(E, F), "b1": b(F),
                "w2": w(F, E), "b2": b(E),
                "ln2_g": g2, "ln2_b": be2}

    def dec_layer():
        g1, be1 = ln(); g2, be2 = ln(); g3, be3 = ln()
        return {"wqkv": w(E, 3 * E), "bqkv": b(3 * E),
                "wo1": w(E, E), "bo1": b(E),
                "ln1_g": g1, "ln1_b": be1,
                "wq": w(E, E), "bq": b(E),
                "wkv": w(E, 2 * E), "bkv": b(2 * E),
                "wo2": w(E, E), "bo2": b(E),
                "ln2_g": g2, "ln2_b": be2,
                "w1": w(E, F), "b1": b(F),
                "w2": w(F, E), "b2": b(E),
                "ln3_g": g3, "ln3_b": be3}

    gw = 0.02 * jax.random.normal(next(keys), (E, tv))
    gb = 0.02 * jax.random.normal(next(keys), (1, tv))
    eg, eb = ln()
    dg, db = ln()
    return {
        "src_emb": jax.random.normal(next(keys), (sv, E), jnp.float32),
        "tgt_emb": jax.random.normal(next(keys), (tv, E), jnp.float32),
        # maxlen == vocab_size, matching PositionalEncoding(d_model, dropout, vocab_size)
        "src_pe": sinusoidal_pe(sv, E),
        "tgt_pe": sinusoidal_pe(tv, E),
        "encoder_layers": [enc_layer() for _ in range(cfg["num_encoder_layers"])],
        "decoder_layers": [dec_layer() for _ in range(cfg["num_decoder_layers"])],
        "enc_norm": {"g": eg, "b": eb},
        "dec_norm": {"g": dg, "b": db},
        "generator_w": jnp.pad(gw, ((0, 0), (0, vp - tv))).astype(jnp.bfloat16),
        "generator_b": jnp.pad(gb, ((0, 0), (0, vp - tv))).astype(jnp.float32),
    }


# ----------------------------- main -----------------------------

if __name__ == "__main__":
    cfg = dict(num_encoder_layers=2, num_decoder_layers=2, d_model=32, nhead=4,
               src_vocab_size=50, tgt_vocab_size=60, dim_feedforward=64, dropout=0.1)

    key = jax.random.PRNGKey(0)
    pkey, skey, tkey = jax.random.split(key, 3)
    params = init_params(pkey, cfg)

    S, T, B = 8, 8, 2
    assert S <= cfg["src_vocab_size"] and T <= cfg["tgt_vocab_size"]   # PE table length guard
    src = jax.random.randint(skey, (S, B), 0, cfg["src_vocab_size"], dtype=jnp.int32)
    tgt = jax.random.randint(tkey, (T, B), 0, cfg["tgt_vocab_size"], dtype=jnp.int32)

    src_mask = jnp.zeros((S, S), jnp.float32)
    tgt_mask = jnp.where(jnp.triu(jnp.ones((T, T), dtype=jnp.bool_), k=1), NEG_INF, 0.0)
    src_padding_mask = jnp.zeros((B, S), dtype=jnp.bool_)
    tgt_padding_mask = jnp.zeros((B, T), dtype=jnp.bool_)
    memory_key_padding_mask = src_padding_mask

    fwd = jax.jit(partial(seq2seq_forward, cfg=cfg))
    out = fwd(params, src, tgt, src_mask, tgt_mask,
              src_padding_mask, tgt_padding_mask, memory_key_padding_mask)
    out = jax.block_until_ready(out)

    assert out.shape == (T, B, cfg["tgt_vocab_size"]), out.shape
    assert bool(jnp.all(jnp.isfinite(out)))
    print("KERNEL_OK")
</pallas_src>

<mosaic_0001>
module attributes {stable_mosaic.version = 11 : i64} {
  func.func @_decoder_layer_kernel(%arg0: i32, %arg1: memref<1x8x32xbf16, #tpu.memory_space<vmem>>, %arg2: memref<1x8x32xbf16, #tpu.memory_space<vmem>>, %arg3: memref<1x8x8xf32, #tpu.memory_space<vmem>>, %arg4: memref<1x8x8xf32, #tpu.memory_space<vmem>>, %arg5: memref<32x96xbf16, #tpu.memory_space<vmem>>, %arg6: memref<1x96xf32, #tpu.memory_space<vmem>>, %arg7: memref<32x32xbf16, #tpu.memory_space<vmem>>, %arg8: memref<1x32xf32, #tpu.memory_space<vmem>>, %arg9: memref<1x32xf32, #tpu.memory_space<vmem>>, %arg10: memref<1x32xf32, #tpu.memory_space<vmem>>, %arg11: memref<32x32xbf16, #tpu.memory_space<vmem>>, %arg12: memref<1x32xf32, #tpu.memory_space<vmem>>, %arg13: memref<32x64xbf16, #tpu.memory_space<vmem>>, %arg14: memref<1x64xf32, #tpu.memory_space<vmem>>, %arg15: memref<32x32xbf16, #tpu.memory_space<vmem>>, %arg16: memref<1x32xf32, #tpu.memory_space<vmem>>, %arg17: memref<1x32xf32, #tpu.memory_space<vmem>>, %arg18: memref<1x32xf32, #tpu.memory_space<vmem>>, %arg19: memref<32x64xbf16, #tpu.memory_space<vmem>>, %arg20: memref<1x64xf32, #tpu.memory_space<vmem>>, %arg21: memref<64x32xbf16, #tpu.memory_space<vmem>>, %arg22: memref<1x32xf32, #tpu.memory_space<vmem>>, %arg23: memref<1x32xf32, #tpu.memory_space<vmem>>, %arg24: memref<1x32xf32, #tpu.memory_space<vmem>>, %arg25: memref<1x8x32xbf16, #tpu.memory_space<vmem>>) attributes {dimension_semantics = [#tpu.dimension_semantics<parallel>], iteration_bounds = array<i64: 2>, scalar_prefetch = 0 : i64, scratch_operands = 0 : i64, tpu.core_type = #tpu.core_type<tc>, window_params = [{transform_indices = @transform_0, window_bounds = array<i64: 1, 8, 32>}, {transform_indices = @transform_1, window_bounds = array<i64: 1, 8, 32>}, {transform_indices = @transform_2, window_bounds = array<i64: 1, 8, 8>}, {transform_indices = @transform_3, window_bounds = array<i64: 1, 8, 8>}, {pipeline_mode = #tpu.pipeline_mode<synchronous>, transform_indices = @transform_4, window_bounds = array<i64: 32, 96>}, {pipeline_mode = #tpu.pipeline_mode<synchronous>, transform_indices = @transform_5, window_bounds = array<i64: 1, 96>}, {pipeline_mode = #tpu.pipeline_mode<synchronous>, transform_indices = @transform_6, window_bounds = array<i64: 32, 32>}, {pipeline_mode = #tpu.pipeline_mode<synchronous>, transform_indices = @transform_7, window_bounds = array<i64: 1, 32>}, {pipeline_mode = #tpu.pipeline_mode<synchronous>, transform_indices = @transform_8, window_bounds = array<i64: 1, 32>}, {pipeline_mode = #tpu.pipeline_mode<synchronous>, transform_indices = @transform_9, window_bounds = array<i64: 1, 32>}, {pipeline_mode = #tpu.pipeline_mode<synchronous>, transform_indices = @transform_10, window_bounds = array<i64: 32, 32>}, {pipeline_mode = #tpu.pipeline_mode<synchronous>, transform_indices = @transform_11, window_bounds = array<i64: 1, 32>}, {pipeline_mode = #tpu.pipeline_mode<synchronous>, transform_indices = @transform_12, window_bounds = array<i64: 32, 64>}, {pipeline_mode = #tpu.pipeline_mode<synchronous>, transform_indices = @transform_13, window_bounds = array<i64: 1, 64>}, {pipeline_mode = #tpu.pipeline_mode<synchronous>, transform_indices = @transform_14, window_bounds = array<i64: 32, 32>}, {pipeline_mode = #tpu.pipeline_mode<synchronous>, transform_indices = @transform_15, window_bounds = array<i64: 1, 32>}, {pipeline_mode = #tpu.pipeline_mode<synchronous>, transform_indices = @transform_16, window_bounds = array<i64: 1, 32>}, {pipeline_mode = #tpu.pipeline_mode<synchronous>, transform_indices = @transform_17, window_bounds = array<i64: 1, 32>}, {pipeline_mode = #tpu.pipeline_mode<synchronous>, transform_indices = @transform_18, window_bounds = array<i64: 32, 64>}, {pipeline_mode = #tpu.pipeline_mode<synchronous>, transform_indices = @transform_19, window_bounds = array<i64: 1, 64>}, {pipeline_mode = #tpu.pipeline_mode<synchronous>, transform_indices = @transform_20, window_bounds = array<i64: 64, 32>}, {pipeline_mode = #tpu.pipeline_mode<synchronous>, transform_indices = @transform_21, window_bounds = array<i64: 1, 32>}, {pipeline_mode = #tpu.pipeline_mode<synchronous>, transform_indices = @transform_22, window_bounds = array<i64: 1, 32>}, {pipeline_mode = #tpu.pipeline_mode<synchronous>, transform_indices = @transform_23, window_bounds = array<i64: 1, 32>}, {transform_indices = @transform_24, window_bounds = array<i64: 1, 8, 32>}]} {
    %c0 = arith.constant 0 : index
    %c0_0 = arith.constant 0 : index
    %c0_1 = arith.constant 0 : index
    %0 = vector.load %arg1[%c0, %c0_0, %c0_1] : memref<1x8x32xbf16, #tpu.memory_space<vmem>>, vector<1x8x32xbf16>
    %1 = vector.shape_cast %0 : vector<1x8x32xbf16> to vector<8x32xbf16>
    %c0_2 = arith.constant 0 : index
    %c0_3 = arith.constant 0 : index
    %c0_4 = arith.constant 0 : index
    %2 = vector.load %arg2[%c0_2, %c0_3, %c0_4] : memref<1x8x32xbf16, #tpu.memory_space<vmem>>, vector<1x8x32xbf16>
    %3 = vector.shape_cast %2 : vector<1x8x32xbf16> to vector<8x32xbf16>
    %c0_5 = arith.constant 0 : index
    %c0_6 = arith.constant 0 : index
    %4 = vector.load %arg5[%c0_5, %c0_6] : memref<32x96xbf16, #tpu.memory_space<vmem>>, vector<32x96xbf16>
    %cst = arith.constant dense<0.000000e+00> : vector<8x96xf32>
    %5 = tpu.matmul %1, %4, %cst {dimension_numbers = #tpu.dot_dimension_numbers<[1], [0], [0], [1], [0, 0, 1, 1], [], []>} : vector<8x32xbf16>, vector<32x96xbf16>, vector<8x96xf32> -> vector<8x96xf32>
    %c0_7 = arith.constant 0 : index
    %c0_8 = arith.constant 0 : index
    %6 = vector.load %arg6[%c0_7, %c0_8] : memref<1x96xf32, #tpu.memory_space<vmem>>, vector<1x96xf32>
    %7 = vector.broadcast %6 : vector<1x96xf32> to vector<8x96xf32>
    %8 = arith.addf %5, %7 : vector<8x96xf32>
    %c0_9 = arith.constant 0 : index
    %c0_10 = arith.constant 0 : index
    %c0_11 = arith.constant 0 : index
    %9 = vector.load %arg3[%c0_9, %c0_10, %c0_11] : memref<1x8x8xf32, #tpu.memory_space<vmem>>, vector<1x8x8xf32>
    %10 = vector.shape_cast %9 : vector<1x8x8xf32> to vector<8x8xf32>
    %11 = vector.extract_strided_slice %8 {offsets = [0, 0], sizes = [8, 32], strides = [1, 1]} : vector<8x96xf32> to vector<8x32xf32>
    %12 = vector.extract_strided_slice %8 {offsets = [0, 32], sizes = [8, 32], strides = [1, 1]} : vector<8x96xf32> to vector<8x32xf32>
    %13 = vector.extract_strided_slice %8 {offsets = [0, 64], sizes = [8, 32], strides = [1, 1]} : vector<8x96xf32> to vector<8x32xf32>
    %14 = arith.truncf %11 : vector<8x32xf32> to vector<8x32xbf16>
    %15 = arith.truncf %12 : vector<8x32xf32> to vector<8x32xbf16>
    %16 = arith.truncf %13 : vector<8x32xf32> to vector<8x32xbf16>
    %17 = vector.extract_strided_slice %14 {offsets = [0, 0], sizes = [8, 8], strides = [1, 1]} : vector<8x32xbf16> to vector<8x8xbf16>
    %18 = vector.extract_strided_slice %15 {offsets = [0, 0], sizes = [8, 8], strides = [1, 1]} : vector<8x32xbf16> to vector<8x8xbf16>
    %cst_12 = arith.constant dense<0.000000e+00> : vector<8x8xf32>
    %19 = tpu.matmul %17, %18, %cst_12 {dimension_numbers = #tpu.dot_dimension_numbers<[1], [1], [0], [0], [0, 0, 1, 0], [], []>} : vector<8x8xbf16>, vector<8x8xbf16>, vector<8x8xf32> -> vector<8x8xf32>
    %cst_13 = arith.constant 0.353553385 : f32
    %20 = vector.broadcast %cst_13 : f32 to vector<8x8xf32>
    %21 = arith.mulf %19, %20 : vector<8x8xf32>
    %22 = arith.addf %21, %10 : vector<8x8xf32>
    %cst_14 = arith.constant dense<0xFF800000> : vector<8xf32>
    %23 = vector.multi_reduction <maximumf>, %22, %cst_14 [1] : vector<8x8xf32> to vector<8xf32>
    %24 = vector.shape_cast %23 : vector<8xf32> to vector<8x1xf32>
    %25 = vector.broadcast %24 : vector<8x1xf32> to vector<8x8xf32>
    %26 = arith.subf %22, %25 : vector<8x8xf32>
    %27 = math.exp %26 : vector<8x8xf32>
    %cst_15 = arith.constant dense<0.000000e+00> : vector<8xf32>
    %28 = vector.multi_reduction <add>, %27, %cst_15 [1] : vector<8x8xf32> to vector<8xf32>
    %29 = vector.shape_cast %28 : vector<8xf32> to vector<8x1xf32>
    %30 = tpu.reciprocal %29 {approx = true} : vector<8x1xf32> -> vector<8x1xf32>
    %31 = vector.broadcast %30 : vector<8x1xf32> to vector<8x8xf32>
    %32 = arith.mulf %27, %31 : vector<8x8xf32>
    %33 = arith.truncf %32 : vector<8x8xf32> to vector<8x8xbf16>
    %34 = vector.extract_strided_slice %16 {offsets = [0, 0], sizes = [8, 8], strides = [1, 1]} : vector<8x32xbf16> to vector<8x8xbf16>
    %cst_16 = arith.constant dense<0.000000e+00> : vector<8x8xf32>
    %35 = tpu.matmul %33, %34, %cst_16 {dimension_numbers = #tpu.dot_dimension_numbers<[1], [0], [0], [1], [0, 0, 1, 1], [], []>} : vector<8x8xbf16>, vector<8x8xbf16>, vector<8x8xf32> -> vector<8x8xf32>
    %36 = arith.truncf %35 : vector<8x8xf32> to vector<8x8xbf16>
    %c0_17 = arith.constant 0 : index
    %c0_18 = arith.constant 0 : index
    %37 = vector.load %arg7[%c0_17, %c0_18] : memref<32x32xbf16, #tpu.memory_space<vmem>>, vector<8x32xbf16>
    %cst_19 = arith.constant dense<0.000000e+00> : vector<8x32xf32>
    %38 = tpu.matmul %36, %37, %cst_19 {dimension_numbers = #tpu.dot_dimension_numbers<[1], [0], [0], [1], [0, 0, 1, 1], [], []>} : vector<8x8xbf16>, vector<8x32xbf16>, vector<8x32xf32> -> vector<8x32xf32>
    %39 = vector.extract_strided_slice %14 {offsets = [0, 8], sizes = [8, 8], strides = [1, 1]} : vector<8x32xbf16> to vector<8x8xbf16>
    %40 = vector.extract_strided_slice %15 {offsets = [0, 8], sizes = [8, 8], strides = [1, 1]} : vector<8x32xbf16> to vector<8x8xbf16>
    %cst_20 = arith.constant dense<0.000000e+00> : vector<8x8xf32>
    %41 = tpu.matmul %39, %40, %cst_20 {dimension_numbers = #tpu.dot_dimension_numbers<[1], [1], [0], [0], [0, 0, 1, 0], [], []>} : vector<8x8xbf16>, vector<8x8xbf16>, vector<8x8xf32> -> vector<8x8xf32>
    %cst_21 = arith.constant 0.353553385 : f32
    %42 = vector.broadcast %cst_21 : f32 to vector<8x8xf32>
    %43 = arith.mulf %41, %42 : vector<8x8xf32>
    %44 = arith.addf %43, %10 : vector<8x8xf32>
    %cst_22 = arith.constant dense<0xFF800000> : vector<8xf32>
    %45 = vector.multi_reduction <maximumf>, %44, %cst_22 [1] : vector<8x8xf32> to vector<8xf32>
    %46 = vector.shape_cast %45 : vector<8xf32> to vector<8x1xf32>
    %47 = vector.broadcast %46 : vector<8x1xf32> to vector<8x8xf32>
    %48 = arith.subf %44, %47 : vector<8x8xf32>
    %49 = math.exp %48 : vector<8x8xf32>
    %cst_23 = arith.constant dense<0.000000e+00> : vector<8xf32>
    %50 = vector.multi_reduction <add>, %49, %cst_23 [1] : vector<8x8xf32> to vector<8xf32>
    %51 = vector.shape_cast %50 : vector<8xf32> to vector<8x1xf32>
    %52 = tpu.reciprocal %51 {approx = true} : vector<8x1xf32> -> vector<8x1xf32>
    %53 = vector.broadcast %52 : vector<8x1xf32> to vector<8x8xf32>
    %54 = arith.mulf %49, %53 : vector<8x8xf32>
    %55 = arith.truncf %54 : vector<8x8xf32> to vector<8x8xbf16>
    %56 = vector.extract_strided_slice %16 {offsets = [0, 8], sizes = [8, 8], strides = [1, 1]} : vector<8x32xbf16> to vector<8x8xbf16>
    %cst_24 = arith.constant dense<0.000000e+00> : vector<8x8xf32>
    %57 = tpu.matmul %55, %56, %cst_24 {dimension_numbers = #tpu.dot_dimension_numbers<[1], [0], [0], [1], [0, 0, 1, 1], [], []>} : vector<8x8xbf16>, vector<8x8xbf16>, vector<8x8xf32> -> vector<8x8xf32>
    %58 = arith.truncf %57 : vector<8x8xf32> to vector<8x8xbf16>
    %c8 = arith.constant 8 : index
    %c0_25 = arith.constant 0 : index
    %59 = vector.load %arg7[%c8, %c0_25] : memref<32x32xbf16, #tpu.memory_space<vmem>>, vector<8x32xbf16>
    %cst_26 = arith.constant dense<0.000000e+00> : vector<8x32xf32>
    %60 = tpu.matmul %58, %59, %cst_26 {dimension_numbers = #tpu.dot_dimension_numbers<[1], [0], [0], [1], [0, 0, 1, 1], [], []>} : vector<8x8xbf16>, vector<8x32xbf16>, vector<8x32xf32> -> vector<8x32xf32>
    %61 = arith.addf %38, %60 : vector<8x32xf32>
    %62 = vector.extract_strided_slice %14 {offsets = [0, 16], sizes = [8, 8], strides = [1, 1]} : vector<8x32xbf16> to vector<8x8xbf16>
    %63 = vector.extract_strided_slice %15 {offsets = [0, 16], sizes = [8, 8], strides = [1, 1]} : vector<8x32xbf16> to vector<8x8xbf16>
    %cst_27 = arith.constant dense<0.000000e+00> : vector<8x8xf32>
    %64 = tpu.matmul %62, %63, %cst_27 {dimension_numbers = #tpu.dot_dimension_numbers<[1], [1], [0], [0], [0, 0, 1, 0], [], []>} : vector<8x8xbf16>, vector<8x8xbf16>, vector<8x8xf32> -> vector<8x8xf32>
    %cst_28 = arith.constant 0.353553385 : f32
    %65 = vector.broadcast %cst_28 : f32 to vector<8x8xf32>
    %66 = arith.mulf %64, %65 : vector<8x8xf32>
    %67 = arith.addf %66, %10 : vector<8x8xf32>
    %cst_29 = arith.constant dense<0xFF800000> : vector<8xf32>
    %68 = vector.multi_reduction <maximumf>, %67, %cst_29 [1] : vector<8x8xf32> to vector<8xf32>
    %69 = vector.shape_cast %68 : vector<8xf32> to vector<8x1xf32>
    %70 = vector.broadcast %69 : vector<8x1xf32> to vector<8x8xf32>
    %71 = arith.subf %67, %70 : vector<8x8xf32>
    %72 = math.exp %71 : vector<8x8xf32>
    %cst_30 = arith.constant dense<0.000000e+00> : vector<8xf32>
    %73 = vector.multi_reduction <add>, %72, %cst_30 [1] : vector<8x8xf32> to vector<8xf32>
    %74 = vector.shape_cast %73 : vector<8xf32> to vector<8x1xf32>
    %75 = tpu.reciprocal %74 {approx = true} : vector<8x1xf32> -> vector<8x1xf32>
    %76 = vector.broadcast %75 : vector<8x1xf32> to vector<8x8xf32>
    %77 = arith.mulf %72, %76 : vector<8x8xf32>
    %78 = arith.truncf %77 : vector<8x8xf32> to vector<8x8xbf16>
    %79 = vector.extract_strided_slice %16 {offsets = [0, 16], sizes = [8, 8], strides = [1, 1]} : vector<8x32xbf16> to vector<8x8xbf16>
    %cst_31 = arith.constant dense<0.000000e+00> : vector<8x8xf32>
    %80 = tpu.matmul %78, %79, %cst_31 {dimension_numbers = #tpu.dot_dimension_numbers<[1], [0], [0], [1], [0, 0, 1, 1], [], []>} : vector<8x8xbf16>, vector<8x8xbf16>, vector<8x8xf32> -> vector<8x8xf32>
    %81 = arith.truncf %80 : vector<8x8xf32> to vector<8x8xbf16>
    %c16 = arith.constant 16 : index
    %c0_32 = arith.constant 0 : index
    %82 = vector.load %arg7[%c16, %c0_32] : memref<32x32xbf16, #tpu.memory_space<vmem>>, vector<8x32xbf16>
    %cst_33 = arith.constant dense<0.000000e+00> : vector<8x32xf32>
    %83 = tpu.matmul %81, %82, %cst_33 {dimension_numbers = #tpu.dot_dimension_numbers<[1], [0], [0], [1], [0, 0, 1, 1], [], []>} : vector<8x8xbf16>, vector<8x32xbf16>, vector<8x32xf32> -> vector<8x32xf32>
    %84 = arith.addf %61, %83 : vector<8x32xf32>
    %85 = vector.extract_strided_slice %14 {offsets = [0, 24], sizes = [8, 8], strides = [1, 1]} : vector<8x32xbf16> to vector<8x8xbf16>
    %86 = vector.extract_strided_slice %15 {offsets = [0, 24], sizes = [8, 8], strides = [1, 1]} : vector<8x32xbf16> to vector<8x8xbf16>
    %cst_34 = arith.constant dense<0.000000e+00> : vector<8x8xf32>
    %87 = tpu.matmul %85, %86, %cst_34 {dimension_numbers = #tpu.dot_dimension_numbers<[1], [1], [0], [0], [0, 0, 1, 0], [], []>} : vector<8x8xbf16>, vector<8x8xbf16>, vector<8x8xf32> -> vector<8x8xf32>
    %cst_35 = arith.constant 0.353553385 : f32
    %88 = vector.broadcast %cst_35 : f32 to vector<8x8xf32>
    %89 = arith.mulf %87, %88 : vector<8x8xf32>
    %90 = arith.addf %89, %10 : vector<8x8xf32>
    %cst_36 = arith.constant dense<0xFF800000> : vector<8xf32>
    %91 = vector.multi_reduction <maximumf>, %90, %cst_36 [1] : vector<8x8xf32> to vector<8xf32>
    %92 = vector.shape_cast %91 : vector<8xf32> to vector<8x1xf32>
    %93 = vector.broadcast %92 : vector<8x1xf32> to vector<8x8xf32>
    %94 = arith.subf %90, %93 : vector<8x8xf32>
    %95 = math.exp %94 : vector<8x8xf32>
    %cst_37 = arith.constant dense<0.000000e+00> : vector<8xf32>
    %96 = vector.multi_reduction <add>, %95, %cst_37 [1] : vector<8x8xf32> to vector<8xf32>
    %97 = vector.shape_cast %96 : vector<8xf32> to vector<8x1xf32>
    %98 = tpu.reciprocal %97 {approx = true} : vector<8x1xf32> -> vector<8x1xf32>
    %99 = vector.broadcast %98 : vector<8x1xf32> to vector<8x8xf32>
    %100 = arith.mulf %95, %99 : vector<8x8xf32>
    %101 = arith.truncf %100 : vector<8x8xf32> to vector<8x8xbf16>
    %102 = vector.extract_strided_slice %16 {offsets = [0, 24], sizes = [8, 8], strides = [1, 1]} : vector<8x32xbf16> to vector<8x8xbf16>
    %cst_38 = arith.constant dense<0.000000e+00> : vector<8x8xf32>
    %103 = tpu.matmul %101, %102, %cst_38 {dimension_numbers = #tpu.dot_dimension_numbers<[1], [0], [0], [1], [0, 0, 1, 1], [], []>} : vector<8x8xbf16>, vector<8x8xbf16>, vector<8x8xf32> -> vector<8x8xf32>
    %104 = arith.truncf %103 : vector<8x8xf32> to vector<8x8xbf16>
    %c24 = arith.constant 24 : index
    %c0_39 = arith.constant 0 : index
    %105 = vector.load %arg7[%c24, %c0_39] : memref<32x32xbf16, #tpu.memory_space<vmem>>, vector<8x32xbf16>
    %cst_40 = arith.constant dense<0.000000e+00> : vector<8x32xf32>
    %106 = tpu.matmul %104, %105, %cst_40 {dimension_numbers = #tpu.dot_dimension_numbers<[1], [0], [0], [1], [0, 0, 1, 1], [], []>} : vector<8x8xbf16>, vector<8x32xbf16>, vector<8x32xf32> -> vector<8x32xf32>
    %107 = arith.addf %84, %106 : vector<8x32xf32>
    %c0_41 = arith.constant 0 : index
    %c0_42 = arith.constant 0 : index
    %108 = vector.load %arg8[%c0_41, %c0_42] : memref<1x32xf32, #tpu.memory_space<vmem>>, vector<1x32xf32>
    %109 = vector.broadcast %108 : vector<1x32xf32> to vector<8x32xf32>
    %110 = arith.addf %107, %109 : vector<8x32xf32>
    %111 = arith.extf %1 : vector<8x32xbf16> to vector<8x32xf32>
    %112 = arith.addf %110, %111 : vector<8x32xf32>
    %c0_43 = arith.constant 0 : index
    %c0_44 = arith.constant 0 : index
    %113 = vector.load %arg9[%c0_43, %c0_44] : memref<1x32xf32, #tpu.memory_space<vmem>>, vector<1x32xf32>
    %c0_45 = arith.constant 0 : index
    %c0_46 = arith.constant 0 : index
    %114 = vector.load %arg10[%c0_45, %c0_46] : memref<1x32xf32, #tpu.memory_space<vmem>>, vector<1x32xf32>
    %cst_47 = arith.constant dense<0.000000e+00> : vector<8xf32>
    %115 = vector.multi_reduction <add>, %112, %cst_47 [1] : vector<8x32xf32> to vector<8xf32>
    %116 = vector.shape_cast %115 : vector<8xf32> to vector<8x1xf32>
    %cst_48 = arith.constant 3.200000e+01 : f32
    %117 = vector.broadcast %cst_48 : f32 to vector<8x1xf32>
    %118 = arith.divf %116, %117 : vector<8x1xf32>
    %119 = vector.broadcast %118 : vector<8x1xf32> to vector<8x32xf32>
    %120 = arith.subf %112, %119 : vector<8x32xf32>
    %121 = arith.mulf %120, %120 : vector<8x32xf32>
    %cst_49 = arith.constant dense<0.000000e+00> : vector<8xf32>
    %122 = vector.multi_reduction <add>, %121, %cst_49 [1] : vector<8x32xf32> to vector<8xf32>
    %123 = vector.shape_cast %122 : vector<8xf32> to vector<8x1xf32>
    %cst_50 = arith.constant 3.200000e+01 : f32
    %124 = vector.broadcast %cst_50 : f32 to vector<8x1xf32>
    %125 = arith.divf %123, %124 : vector<8x1xf32>
    %cst_51 = arith.constant 9.99999974E-6 : f32
    %126 = vector.broadcast %cst_51 : f32 to vector<8x1xf32>
    %127 = arith.addf %125, %126 : vector<8x1xf32>
    %128 = math.rsqrt %127 : vector<8x1xf32>
    %129 = vector.broadcast %128 : vector<8x1xf32> to vector<8x32xf32>
    %130 = arith.mulf %120, %129 : vector<8x32xf32>
    %131 = vector.broadcast %113 : vector<1x32xf32> to vector<8x32xf32>
    %132 = arith.mulf %130, %131 : vector<8x32xf32>
    %133 = vector.broadcast %114 : vector<1x32xf32> to vector<8x32xf32>
    %134 = arith.addf %132, %133 : vector<8x32xf32>
    %135 = arith.truncf %134 : vector<8x32xf32> to vector<8x32xbf16>
    %c0_52 = arith.constant 0 : index
    %c0_53 = arith.constant 0 : index
    %136 = vector.load %arg11[%c0_52, %c0_53] : memref<32x32xbf16, #tpu.memory_space<vmem>>, vector<32x32xbf16>
    %cst_54 = arith.constant dense<0.000000e+00> : vector<8x32xf32>
    %137 = tpu.matmul %135, %136, %cst_54 {dimension_numbers = #tpu.dot_dimension_numbers<[1], [0], [0], [1], [0, 0, 1, 1], [], []>} : vector<8x32xbf16>, vector<32x32xbf16>, vector<8x32xf32> -> vector<8x32xf32>
    %c0_55 = arith.constant 0 : index
    %c0_56 = arith.constant 0 : index
    %138 = vector.load %arg12[%c0_55, %c0_56] : memref<1x32xf32, #tpu.memory_space<vmem>>, vector<1x32xf32>
    %139 = vector.broadcast %138 : vector<1x32xf32> to vector<8x32xf32>
    %140 = arith.addf %137, %139 : vector<8x32xf32>
    %c0_57 = arith.constant 0 : index
    %c0_58 = arith.constant 0 : index
    %141 = vector.load %arg13[%c0_57, %c0_58] : memref<32x64xbf16, #tpu.memory_space<vmem>>, vector<32x64xbf16>
    %cst_59 = arith.constant dense<0.000000e+00> : vector<8x64xf32>
    %142 = tpu.matmul %3, %141, %cst_59 {dimension_numbers = #tpu.dot_dimension_numbers<[1], [0], [0], [1], [0, 0, 1, 1], [], []>} : vector<8x32xbf16>, vector<32x64xbf16>, vector<8x64xf32> -> vector<8x64xf32>
    %c0_60 = arith.constant 0 : index
    %c0_61 = arith.constant 0 : index
    %143 = vector.load %arg14[%c0_60, %c0_61] : memref<1x64xf32, #tpu.memory_space<vmem>>, vector<1x64xf32>
    %144 = vector.broadcast %143 : vector<1x64xf32> to vector<8x64xf32>
    %145 = arith.addf %142, %144 : vector<8x64xf32>
    %c0_62 = arith.constant 0 : index
    %c0_63 = arith.constant 0 : index
    %c0_64 = arith.constant 0 : index
    %146 = vector.load %arg4[%c0_62, %c0_63, %c0_64] : memref<1x8x8xf32, #tpu.memory_space<vmem>>, vector<1x8x8xf32>
    %147 = vector.shape_cast %146 : vector<1x8x8xf32> to vector<8x8xf32>
    %148 = vector.extract_strided_slice %145 {offsets = [0, 0], sizes = [8, 32], strides = [1, 1]} : vector<8x64xf32> to vector<8x32xf32>
    %149 = vector.extract_strided_slice %145 {offsets = [0, 32], sizes = [8, 32], strides = [1, 1]} : vector<8x64xf32> to vector<8x32xf32>
    %150 = arith.truncf %140 : vector<8x32xf32> to vector<8x32xbf16>
    %151 = arith.truncf %148 : vector<8x32xf32> to vector<8x32xbf16>
    %152 = arith.truncf %149 : vector<8x32xf32> to vector<8x32xbf16>
    %153 = vector.extract_strided_slice %150 {offsets = [0, 0], sizes = [8, 8], strides = [1, 1]} : vector<8x32xbf16> to vector<8x8xbf16>
    %154 = vector.extract_strided_slice %151 {offsets = [0, 0], sizes = [8, 8], strides = [1, 1]} : vector<8x32xbf16> to vector<8x8xbf16>
    %cst_65 = arith.constant dense<0.000000e+00> : vector<8x8xf32>
    %155 = tpu.matmul %153, %154, %cst_65 {dimension_numbers = #tpu.dot_dimension_numbers<[1], [1], [0], [0], [0, 0, 1, 0], [], []>} : vector<8x8xbf16>, vector<8x8xbf16>, vector<8x8xf32> -> vector<8x8xf32>
    %cst_66 = arith.constant 0.353553385 : f32
    %156 = vector.broadcast %cst_66 : f32 to vector<8x8xf32>
    %157 = arith.mulf %155, %156 : vector<8x8xf32>
    %158 = arith.addf %157, %147 : vector<8x8xf32>
    %cst_67 = arith.constant dense<0xFF800000> : vector<8xf32>
    %159 = vector.multi_reduction <maximumf>, %158, %cst_67 [1] : vector<8x8xf32> to vector<8xf32>
    %160 = vector.shape_cast %159 : vector<8xf32> to vector<8x1xf32>
    %161 = vector.broadcast %160 : vector<8x1xf32> to vector<8x8xf32>
    %162 = arith.subf %158, %161 : vector<8x8xf32>
    %163 = math.exp %162 : vector<8x8xf32>
    %cst_68 = arith.constant dense<0.000000e+00> : vector<8xf32>
    %164 = vector.multi_reduction <add>, %163, %cst_68 [1] : vector<8x8xf32> to vector<8xf32>
    %165 = vector.shape_cast %164 : vector<8xf32> to vector<8x1xf32>
    %166 = tpu.reciprocal %165 {approx = true} : vector<8x1xf32> -> vector<8x1xf32>
    %167 = vector.broadcast %166 : vector<8x1xf32> to vector<8x8xf32>
    %168 = arith.mulf %163, %167 : vector<8x8xf32>
    %169 = arith.truncf %168 : vector<8x8xf32> to vector<8x8xbf16>
    %170 = vector.extract_strided_slice %152 {offsets = [0, 0], sizes = [8, 8], strides = [1, 1]} : vector<8x32xbf16> to vector<8x8xbf16>
    %cst_69 = arith.constant dense<0.000000e+00> : vector<8x8xf32>
    %171 = tpu.matmul %169, %170, %cst_69 {dimension_numbers = #tpu.dot_dimension_numbers<[1], [0], [0], [1], [0, 0, 1, 1], [], []>} : vector<8x8xbf16>, vector<8x8xbf16>, vector<8x8xf32> -> vector<8x8xf32>
    %172 = arith.truncf %171 : vector<8x8xf32> to vector<8x8xbf16>
    %c0_70 = arith.constant 0 : index
    %c0_71 = arith.constant 0 : index
    %173 = vector.load %arg15[%c0_70, %c0_71] : memref<32x32xbf16, #tpu.memory_space<vmem>>, vector<8x32xbf16>
    %cst_72 = arith.constant dense<0.000000e+00> : vector<8x32xf32>
    %174 = tpu.matmul %172, %173, %cst_72 {dimension_numbers = #tpu.dot_dimension_numbers<[1], [0], [0], [1], [0, 0, 1, 1], [], []>} : vector<8x8xbf16>, vector<8x32xbf16>, vector<8x32xf32> -> vector<8x32xf32>
    %175 = vector.extract_strided_slice %150 {offsets = [0, 8], sizes = [8, 8], strides = [1, 1]} : vector<8x32xbf16> to vector<8x8xbf16>
    %176 = vector.extract_strided_slice %151 {offsets = [0, 8], sizes = [8, 8], strides = [1, 1]} : vector<8x32xbf16> to vector<8x8xbf16>
    %cst_73 = arith.constant dense<0.000000e+00> : vector<8x8xf32>
    %177 = tpu.matmul %175, %176, %cst_73 {dimension_numbers = #tpu.dot_dimension_numbers<[1], [1], [0], [0], [0, 0, 1, 0], [], []>} : vector<8x8xbf16>, vector<8x8xbf16>, vector<8x8xf32> -> vector<8x8xf32>
    %cst_74 = arith.constant 0.353553385 : f32
    %178 = vector.broadcast %cst_74 : f32 to vector<8x8xf32>
    %179 = arith.mulf %177, %178 : vector<8x8xf32>
    %180 = arith.addf %179, %147 : vector<8x8xf32>
    %cst_75 = arith.constant dense<0xFF800000> : vector<8xf32>
    %181 = vector.multi_reduction <maximumf>, %180, %cst_75 [1] : vector<8x8xf32> to vector<8xf32>
    %182 = vector.shape_cast %181 : vector<8xf32> to vector<8x1xf32>
    %183 = vector.broadcast %182 : vector<8x1xf32> to vector<8x8xf32>
    %184 = arith.subf %180, %183 : vector<8x8xf32>
    %185 = math.exp %184 : vector<8x8xf32>
    %cst_76 = arith.constant dense<0.000000e+00> : vector<8xf32>
    %186 = vector.multi_reduction <add>, %185, %cst_76 [1] : vector<8x8xf32> to vector<8xf32>
    %187 = vector.shape_cast %186 : vector<8xf32> to vector<8x1xf32>
    %188 = tpu.reciprocal %187 {approx = true} : vector<8x1xf32> -> vector<8x1xf32>
    %189 = vector.broadcast %188 : vector<8x1xf32> to vector<8x8xf32>
    %190 = arith.mulf %185, %189 : vector<8x8xf32>
    %191 = arith.truncf %190 : vector<8x8xf32> to vector<8x8xbf16>
    %192 = vector.extract_strided_slice %152 {offsets = [0, 8], sizes = [8, 8], strides = [1, 1]} : vector<8x32xbf16> to vector<8x8xbf16>
    %cst_77 = arith.constant dense<0.000000e+00> : vector<8x8xf32>
    %193 = tpu.matmul %191, %192, %cst_77 {dimension_numbers = #tpu.dot_dimension_numbers<[1], [0], [0], [1], [0, 0, 1, 1], [], []>} : vector<8x8xbf16>, vector<8x8xbf16>, vector<8x8xf32> -> vector<8x8xf32>
    %194 = arith.truncf %193 : vector<8x8xf32> to vector<8x8xbf16>
    %c8_78 = arith.constant 8 : index
    %c0_79 = arith.constant 0 : index
    %195 = vector.load %arg15[%c8_78, %c0_79] : memref<32x32xbf16, #tpu.memory_space<vmem>>, vector<8x32xbf16>
    %cst_80 = arith.constant dense<0.000000e+00> : vector<8x32xf32>
    %196 = tpu.matmul %194, %195, %cst_80 {dimension_numbers = #tpu.dot_dimension_numbers<[1], [0], [0], [1], [0, 0, 1, 1], [], []>} : vector<8x8xbf16>, vector<8x32xbf16>, vector<8x32xf32> -> vector<8x32xf32>
    %197 = arith.addf %174, %196 : vector<8x32xf32>
    %198 = vector.extract_strided_slice %150 {offsets = [0, 16], sizes = [8, 8], strides = [1, 1]} : vector<8x32xbf16> to vector<8x8xbf16>
    %199 = vector.extract_strided_slice %151 {offsets = [0, 16], sizes = [8, 8], strides = [1, 1]} : vector<8x32xbf16> to vector<8x8xbf16>
    %cst_81 = arith.constant dense<0.000000e+00> : vector<8x8xf32>
    %200 = tpu.matmul %198, %199, %cst_81 {dimension_numbers = #tpu.dot_dimension_numbers<[1], [1], [0], [0], [0, 0, 1, 0], [], []>} : vector<8x8xbf16>, vector<8x8xbf16>, vector<8x8xf32> -> vector<8x8xf32>
    %cst_82 = arith.constant 0.353553385 : f32
    %201 = vector.broadcast %cst_82 : f32 to vector<8x8xf32>
    %202 = arith.mulf %200, %201 : vector<8x8xf32>
    %203 = arith.addf %202, %147 : vector<8x8xf32>
    %cst_83 = arith.constant dense<0xFF800000> : vector<8xf32>
    %204 = vector.multi_reduction <maximumf>, %203, %cst_83 [1] : vector<8x8xf32> to vector<8xf32>
    %205 = vector.shape_cast %204 : vector<8xf32> to vector<8x1xf32>
    %206 = vector.broadcast %205 : vector<8x1xf32> to vector<8x8xf32>
    %207 = arith.subf %203, %206 : vector<8x8xf32>
    %208 = math.exp %207 : vector<8x8xf32>
    %cst_84 = arith.constant dense<0.000000e+00> : vector<8xf32>
    %209 = vector.multi_reduction <add>, %208, %cst_84 [1] : vector<8x8xf32> to vector<8xf32>
    %210 = vector.shape_cast %209 : vector<8xf32> to vector<8x1xf32>
    %211 = tpu.reciprocal %210 {approx = true} : vector<8x1xf32> -> vector<8x1xf32>
    %212 = vector.broadcast %211 : vector<8x1xf32> to vector<8x8xf32>
    %213 = arith.mulf %208, %212 : vector<8x8xf32>
    %214 = arith.truncf %213 : vector<8x8xf32> to vector<8x8xbf16>
    %215 = vector.extract_strided_slice %152 {offsets = [0, 16], sizes = [8, 8], strides = [1, 1]} : vector<8x32xbf16> to vector<8x8xbf16>
    %cst_85 = arith.constant dense<0.000000e+00> : vector<8x8xf32>
    %216 = tpu.matmul %214, %215, %cst_85 {dimension_numbers = #tpu.dot_dimension_numbers<[1], [0], [0], [1], [0, 0, 1, 1], [], []>} : vector<8x8xbf16>, vector<8x8xbf16>, vector<8x8xf32> -> vector<8x8xf32>
    %217 = arith.truncf %216 : vector<8x8xf32> to vector<8x8xbf16>
    %c16_86 = arith.constant 16 : index
    %c0_87 = arith.constant 0 : index
    %218 = vector.load %arg15[%c16_86, %c0_87] : memref<32x32xbf16, #tpu.memory_space<vmem>>, vector<8x32xbf16>
    %cst_88 = arith.constant dense<0.000000e+00> : vector<8x32xf32>
    %219 = tpu.matmul %217, %218, %cst_88 {dimension_numbers = #tpu.dot_dimension_numbers<[1], [0], [0], [1], [0, 0, 1, 1], [], []>} : vector<8x8xbf16>, vector<8x32xbf16>, vector<8x32xf32> -> vector<8x32xf32>
    %220 = arith.addf %197, %219 : vector<8x32xf32>
    %221 = vector.extract_strided_slice %150 {offsets = [0, 24], sizes = [8, 8], strides = [1, 1]} : vector<8x32xbf16> to vector<8x8xbf16>
    %222 = vector.extract_strided_slice %151 {offsets = [0, 24], sizes = [8, 8], strides = [1, 1]} : vector<8x32xbf16> to vector<8x8xbf16>
    %cst_89 = arith.constant dense<0.000000e+00> : vector<8x8xf32>
    %223 = tpu.matmul %221, %222, %cst_89 {dimension_numbers = #tpu.dot_dimension_numbers<[1], [1], [0], [0], [0, 0, 1, 0], [], []>} : vector<8x8xbf16>, vector<8x8xbf16>, vector<8x8xf32> -> vector<8x8xf32>
    %cst_90 = arith.constant 0.353553385 : f32
    %224 = vector.broadcast %cst_90 : f32 to vector<8x8xf32>
    %225 = arith.mulf %223, %224 : vector<8x8xf32>
    %226 = arith.addf %225, %147 : vector<8x8xf32>
    %cst_91 = arith.constant dense<0xFF800000> : vector<8xf32>
    %227 = vector.multi_reduction <maximumf>, %226, %cst_91 [1] : vector<8x8xf32> to vector<8xf32>
    %228 = vector.shape_cast %227 : vector<8xf32> to vector<8x1xf32>
    %229 = vector.broadcast %228 : vector<8x1xf32> to vector<8x8xf32>
    %230 = arith.subf %226, %229 : vector<8x8xf32>
    %231 = math.exp %230 : vector<8x8xf32>
    %cst_92 = arith.constant dense<0.000000e+00> : vector<8xf32>
    %232 = vector.multi_reduction <add>, %231, %cst_92 [1] : vector<8x8xf32> to vector<8xf32>
    %233 = vector.shape_cast %232 : vector<8xf32> to vector<8x1xf32>
    %234 = tpu.reciprocal %233 {approx = true} : vector<8x1xf32> -> vector<8x1xf32>
    %235 = vector.broadcast %234 : vector<8x1xf32> to vector<8x8xf32>
    %236 = arith.mulf %231, %235 : vector<8x8xf32>
    %237 = arith.truncf %236 : vector<8x8xf32> to vector<8x8xbf16>
    %238 = vector.extract_strided_slice %152 {offsets = [0, 24], sizes = [8, 8], strides = [1, 1]} : vector<8x32xbf16> to vector<8x8xbf16>
    %cst_93 = arith.constant dense<0.000000e+00> : vector<8x8xf32>
    %239 = tpu.matmul %237, %238, %cst_93 {dimension_numbers = #tpu.dot_dimension_numbers<[1], [0], [0], [1], [0, 0, 1, 1], [], []>} : vector<8x8xbf16>, vector<8x8xbf16>, vector<8x8xf32> -> vector<8x8xf32>
    %240 = arith.truncf %239 : vector<8x8xf32> to vector<8x8xbf16>
    %c24_94 = arith.constant 24 : index
    %c0_95 = arith.constant 0 : index
    %241 = vector.load %arg15[%c24_94, %c0_95] : memref<32x32xbf16, #tpu.memory_space<vmem>>, vector<8x32xbf16>
    %cst_96 = arith.constant dense<0.000000e+00> : vector<8x32xf32>
    %242 = tpu.matmul %240, %241, %cst_96 {dimension_numbers = #tpu.dot_dimension_numbers<[1], [0], [0], [1], [0, 0, 1, 1], [], []>} : vector<8x8xbf16>, vector<8x32xbf16>, vector<8x32xf32> -> vector<8x32xf32>
    %243 = arith.addf %220, %242 : vector<8x32xf32>
    %c0_97 = arith.constant 0 : index
    %c0_98 = arith.constant 0 : index
    %244 = vector.load %arg16[%c0_97, %c0_98] : memref<1x32xf32, #tpu.memory_space<vmem>>, vector<1x32xf32>
    %245 = vector.broadcast %244 : vector<1x32xf32> to vector<8x32xf32>
    %246 = arith.addf %243, %245 : vector<8x32xf32>
    %247 = arith.addf %246, %134 : vector<8x32xf32>
    %c0_99 = arith.constant 0 : index
    %c0_100 = arith.constant 0 : index
    %248 = vector.load %arg17[%c0_99, %c0_100] : memref<1x32xf32, #tpu.memory_space<vmem>>, vector<1x32xf32>
    %c0_101 = arith.constant 0 : index
    %c0_102 = arith.constant 0 : index
    %249 = vector.load %arg18[%c0_101, %c0_102] : memref<1x32xf32, #tpu.memory_space<vmem>>, vector<1x32xf32>
    %cst_103 = arith.constant dense<0.000000e+00> : vector<8xf32>
    %250 = vector.multi_reduction <add>, %247, %cst_103 [1] : vector<8x32xf32> to vector<8xf32>
    %251 = vector.shape_cast %250 : vector<8xf32> to vector<8x1xf32>
    %cst_104 = arith.constant 3.200000e+01 : f32
    %252 = vector.broadcast %cst_104 : f32 to vector<8x1xf32>
    %253 = arith.divf %251, %252 : vector<8x1xf32>
    %254 = vector.broadcast %253 : vector<8x1xf32> to vector<8x32xf32>
    %255 = arith.subf %247, %254 : vector<8x32xf32>
    %256 = arith.mulf %255, %255 : vector<8x32xf32>
    %cst_105 = arith.constant dense<0.000000e+00> : vector<8xf32>
    %257 = vector.multi_reduction <add>, %256, %cst_105 [1] : vector<8x32xf32> to vector<8xf32>
    %258 = vector.shape_cast %257 : vector<8xf32> to vector<8x1xf32>
    %cst_106 = arith.constant 3.200000e+01 : f32
    %259 = vector.broadcast %cst_106 : f32 to vector<8x1xf32>
    %260 = arith.divf %258, %259 : vector<8x1xf32>
    %cst_107 = arith.constant 9.99999974E-6 : f32
    %261 = vector.broadcast %cst_107 : f32 to vector<8x1xf32>
    %262 = arith.addf %260, %261 : vector<8x1xf32>
    %263 = math.rsqrt %262 : vector<8x1xf32>
    %264 = vector.broadcast %263 : vector<8x1xf32> to vector<8x32xf32>
    %265 = arith.mulf %255, %264 : vector<8x32xf32>
    %266 = vector.broadcast %248 : vector<1x32xf32> to vector<8x32xf32>
    %267 = arith.mulf %265, %266 : vector<8x32xf32>
    %268 = vector.broadcast %249 : vector<1x32xf32> to vector<8x32xf32>
    %269 = arith.addf %267, %268 : vector<8x32xf32>
    %270 = arith.truncf %269 : vector<8x32xf32> to vector<8x32xbf16>
    %c0_108 = arith.constant 0 : index
    %c0_109 = arith.constant 0 : index
    %271 = vector.load %arg19[%c0_108, %c0_109] : memref<32x64xbf16, #tpu.memory_space<vmem>>, vector<32x64xbf16>
    %cst_110 = arith.constant dense<0.000000e+00> : vector<8x64xf32>
    %272 = tpu.matmul %270, %271, %cst_110 {dimension_numbers = #tpu.dot_dimension_numbers<[1], [0], [0], [1], [0, 0, 1, 1], [], []>} : vector<8x32xbf16>, vector<32x64xbf16>, vector<8x64xf32> -> vector<8x64xf32>
    %c0_111 = arith.constant 0 : index
    %c0_112 = arith.constant 0 : index
    %273 = vector.load %arg20[%c0_111, %c0_112] : memref<1x64xf32, #tpu.memory_space<vmem>>, vector<1x64xf32>
    %274 = vector.broadcast %273 : vector<1x64xf32> to vector<8x64xf32>
    %275 = arith.addf %272, %274 : vector<8x64xf32>
    %cst_113 = arith.constant 0.000000e+00 : f32
    %276 = vector.broadcast %cst_113 : f32 to vector<8x64xf32>
    %277 = arith.maximumf %275, %276 : vector<8x64xf32>
    %278 = arith.truncf %277 : vector<8x64xf32> to vector<8x64xbf16>
    %c0_114 = arith.constant 0 : index
    %c0_115 = arith.constant 0 : index
    %279 = vector.load %arg21[%c0_114, %c0_115] : memref<64x32xbf16, #tpu.memory_space<vmem>>, vector<64x32xbf16>
    %cst_116 = arith.constant dense<0.000000e+00> : vector<8x32xf32>
    %280 = tpu.matmul %278, %279, %cst_116 {dimension_numbers = #tpu.dot_dimension_numbers<[1], [0], [0], [1], [0, 0, 1, 1], [], []>} : vector<8x64xbf16>, vector<64x32xbf16>, vector<8x32xf32> -> vector<8x32xf32>
    %c0_117 = arith.constant 0 : index
    %c0_118 = arith.constant 0 : index
    %281 = vector.load %arg22[%c0_117, %c0_118] : memref<1x32xf32, #tpu.memory_space<vmem>>, vector<1x32xf32>
    %282 = vector.broadcast %281 : vector<1x32xf32> to vector<8x32xf32>
    %283 = arith.addf %280, %282 : vector<8x32xf32>
    %284 = arith.addf %283, %269 : vector<8x32xf32>
    %c0_119 = arith.constant 0 : index
    %c0_120 = arith.constant 0 : index
    %285 = vector.load %arg23[%c0_119, %c0_120] : memref<1x32xf32, #tpu.memory_space<vmem>>, vector<1x32xf32>
    %c0_121 = arith.constant 0 : index
    %c0_122 = arith.constant 0 : index
    %286 = vector.load %arg24[%c0_121, %c0_122] : memref<1x32xf32, #tpu.memory_space<vmem>>, vector<1x32xf32>
    %cst_123 = arith.constant dense<0.000000e+00> : vector<8xf32>
    %287 = vector.multi_reduction <add>, %284, %cst_123 [1] : vector<8x32xf32> to vector<8xf32>
    %288 = vector.shape_cast %287 : vector<8xf32> to vector<8x1xf32>
    %cst_124 = arith.constant 3.200000e+01 : f32
    %289 = vector.broadcast %cst_124 : f32 to vector<8x1xf32>
    %290 = arith.divf %288, %289 : vector<8x1xf32>
    %291 = vector.broadcast %290 : vector<8x1xf32> to vector<8x32xf32>
    %292 = arith.subf %284, %291 : vector<8x32xf32>
    %293 = arith.mulf %292, %292 : vector<8x32xf32>
    %cst_125 = arith.constant dense<0.000000e+00> : vector<8xf32>
    %294 = vector.multi_reduction <add>, %293, %cst_125 [1] : vector<8x32xf32> to vector<8xf32>
    %295 = vector.shape_cast %294 : vector<8xf32> to vector<8x1xf32>
    %cst_126 = arith.constant 3.200000e+01 : f32
    %296 = vector.broadcast %cst_126 : f32 to vector<8x1xf32>
    %297 = arith.divf %295, %296 : vector<8x1xf32>
    %cst_127 = arith.constant 9.99999974E-6 : f32
    %298 = vector.broadcast %cst_127 : f32 to vector<8x1xf32>
    %299 = arith.addf %297, %298 : vector<8x1xf32>
    %300 = math.rsqrt %299 : vector<8x1xf32>
    %301 = vector.broadcast %300 : vector<8x1xf32> to vector<8x32xf32>
    %302 = arith.mulf %292, %301 : vector<8x32xf32>
    %303 = vector.broadcast %285 : vector<1x32xf32> to vector<8x32xf32>
    %304 = arith.mulf %302, %303 : vector<8x32xf32>
    %305 = vector.broadcast %286 : vector<1x32xf32> to vector<8x32xf32>
    %306 = arith.addf %304, %305 : vector<8x32xf32>
    %307 = arith.truncf %306 : vector<8x32xf32> to vector<8x32xbf16>
    %c0_128 = arith.constant 0 : index
    %c0_129 = arith.constant 0 : index
    %c0_130 = arith.constant 0 : index
    %308 = vector.load %arg25[%c0_128, %c0_129, %c0_130] : memref<1x8x32xbf16, #tpu.memory_space<vmem>>, vector<1x8x32xbf16>
    %309 = vector.shape_cast %308 : vector<1x8x32xbf16> to vector<8x32xbf16>
    %310 = vector.shape_cast %307 : vector<8x32xbf16> to vector<1x8x32xbf16>
    tpu.vector_store %arg25[%c0_128, %c0_129, %c0_130], %310 {strides = array<i32>} : memref<1x8x32xbf16, #tpu.memory_space<vmem>>, vector<1x8x32xbf16>,
    return
  }
  func.func @transform_0(%arg0: i32) -> (i32, i32, i32) {
    %c0_i32 = arith.constant 0 : i32
    %c0_i32_0 = arith.constant 0 : i32
    %c0_i32_1 = arith.constant 0 : i32
    return %arg0, %c0_i32, %c0_i32_0 : i32, i32, i32
  }
  func.func @transform_1(%arg0: i32) -> (i32, i32, i32) {
    %c0_i32 = arith.constant 0 : i32
    %c0_i32_0 = arith.constant 0 : i32
    %c0_i32_1 = arith.constant 0 : i32
    return %arg0, %c0_i32, %c0_i32_0 : i32, i32, i32
  }
  func.func @transform_2(%arg0: i32) -> (i32, i32, i32) {
    %c0_i32 = arith.constant 0 : i32
    %c0_i32_0 = arith.constant 0 : i32
    %c0_i32_1 = arith.constant 0 : i32
    return %arg0, %c0_i32, %c0_i32_0 : i32, i32, i32
  }
  func.func @transform_3(%arg0: i32) -> (i32, i32, i32) {
    %c0_i32 = arith.constant 0 : i32
    %c0_i32_0 = arith.constant 0 : i32
    %c0_i32_1 = arith.constant 0 : i32
    return %arg0, %c0_i32, %c0_i32_0 : i32, i32, i32
  }
  func.func @transform_4(%arg0: i32) -> (i32, i32) {
    %c0_i32 = arith.constant 0 : i32
    %c0_i32_0 = arith.constant 0 : i32
    %c0_i32_1 = arith.constant 0 : i32
    return %c0_i32, %c0_i32_0 : i32, i32
  }
  func.func @transform_5(%arg0: i32) -> (i32, i32) {
    %c0_i32 = arith.constant 0 : i32
    %c0_i32_0 = arith.constant 0 : i32
    %c0_i32_1 = arith.constant 0 : i32
    return %c0_i32, %c0_i32_0 : i32, i32
  }
  func.func @transform_6(%arg0: i32) -> (i32, i32) {
    %c0_i32 = arith.constant 0 : i32
    %c0_i32_0 = arith.constant 0 : i32
    %c0_i32_1 = arith.constant 0 : i32
    return %c0_i32, %c0_i32_0 : i32, i32
  }
  func.func @transform_7(%arg0: i32) -> (i32, i32) {
    %c0_i32 = arith.constant 0 : i32
    %c0_i32_0 = arith.constant 0 : i32
    %c0_i32_1 = arith.constant 0 : i32
    return %c0_i32, %c0_i32_0 : i32, i32
  }
  func.func @transform_8(%arg0: i32) -> (i32, i32) {
    %c0_i32 = arith.constant 0 : i32
    %c0_i32_0 = arith.constant 0 : i32
    %c0_i32_1 = arith.constant 0 : i32
    return %c0_i32, %c0_i32_0 : i32, i32
  }
  func.func @transform_9(%arg0: i32) -> (i32, i32) {
    %c0_i32 = arith.constant 0 : i32
    %c0_i32_0 = arith.constant 0 : i32
    %c0_i32_1 = arith.constant 0 : i32
    return %c0_i32, %c0_i32_0 : i32, i32
  }
  func.func @transform_10(%arg0: i32) -> (i32, i32) {
    %c0_i32 = arith.constant 0 : i32
    %c0_i32_0 = arith.constant 0 : i32
    %c0_i32_1 = arith.constant 0 : i32
    return %c0_i32, %c0_i32_0 : i32, i32
  }
  func.func @transform_11(%arg0: i32) -> (i32, i32) {
    %c0_i32 = arith.constant 0 : i32
    %c0_i32_0 = arith.constant 0 : i32
    %c0_i32_1 = arith.constant 0 : i32
    return %c0_i32, %c0_i32_0 : i32, i32
  }
  func.func @transform_12(%arg0: i32) -> (i32, i32) {
    %c0_i32 = arith.constant 0 : i32
    %c0_i32_0 = arith.constant 0 : i32
    %c0_i32_1 = arith.constant 0 : i32
    return %c0_i32, %c0_i32_0 : i32, i32
  }
  func.func @transform_13(%arg0: i32) -> (i32, i32) {
    %c0_i32 = arith.constant 0 : i32
    %c0_i32_0 = arith.constant 0 : i32
    %c0_i32_1 = arith.constant 0 : i32
    return %c0_i32, %c0_i32_0 : i32, i32
  }
  func.func @transform_14(%arg0: i32) -> (i32, i32) {
    %c0_i32 = arith.constant 0 : i32
    %c0_i32_0 = arith.constant 0 : i32
    %c0_i32_1 = arith.constant 0 : i32
    return %c0_i32, %c0_i32_0 : i32, i32
  }
  func.func @transform_15(%arg0: i32) -> (i32, i32) {
    %c0_i32 = arith.constant 0 : i32
    %c0_i32_0 = arith.constant 0 : i32
    %c0_i32_1 = arith.constant 0 : i32
    return %c0_i32, %c0_i32_0 : i32, i32
  }
  func.func @transform_16(%arg0: i32) -> (i32, i32) {
    %c0_i32 = arith.constant 0 : i32
    %c0_i32_0 = arith.constant 0 : i32
    %c0_i32_1 = arith.constant 0 : i32
    return %c0_i32, %c0_i32_0 : i32, i32
  }
  func.func @transform_17(%arg0: i32) -> (i32, i32) {
    %c0_i32 = arith.constant 0 : i32
    %c0_i32_0 = arith.constant 0 : i32
    %c0_i32_1 = arith.constant 0 : i32
    return %c0_i32, %c0_i32_0 : i32, i32
  }
  func.func @transform_18(%arg0: i32) -> (i32, i32) {
    %c0_i32 = arith.constant 0 : i32
    %c0_i32_0 = arith.constant 0 : i32
    %c0_i32_1 = arith.constant 0 : i32
    return %c0_i32, %c0_i32_0 : i32, i32
  }
  func.func @transform_19(%arg0: i32) -> (i32, i32) {
    %c0_i32 = arith.constant 0 : i32
    %c0_i32_0 = arith.constant 0 : i32
    %c0_i32_1 = arith.constant 0 : i32
    return %c0_i32, %c0_i32_0 : i32, i32
  }
  func.func @transform_20(%arg0: i32) -> (i32, i32) {
    %c0_i32 = arith.constant 0 : i32
    %c0_i32_0 = arith.constant 0 : i32
    %c0_i32_1 = arith.constant 0 : i32
    return %c0_i32, %c0_i32_0 : i32, i32
  }
  func.func @transform_21(%arg0: i32) -> (i32, i32) {
    %c0_i32 = arith.constant 0 : i32
    %c0_i32_0 = arith.constant 0 : i32
    %c0_i32_1 = arith.constant 0 : i32
    return %c0_i32, %c0_i32_0 : i32, i32
  }
  func.func @transform_22(%arg0: i32) -> (i32, i32) {
    %c0_i32 = arith.constant 0 : i32
    %c0_i32_0 = arith.constant 0 : i32
    %c0_i32_1 = arith.constant 0 : i32
    return %c0_i32, %c0_i32_0 : i32, i32
  }
  func.func @transform_23(%arg0: i32) -> (i32, i32) {
    %c0_i32 = arith.constant 0 : i32
    %c0_i32_0 = arith.constant 0 : i32
    %c0_i32_1 = arith.constant 0 : i32
    return %c0_i32, %c0_i32_0 : i32, i32
  }
  func.func @transform_24(%arg0: i32) -> (i32, i32, i32) {
    %c0_i32 = arith.constant 0 : i32
    %c0_i32_0 = arith.constant 0 : i32
    %c0_i32_1 = arith.constant 0 : i32
    return %arg0, %c0_i32, %c0_i32_0 : i32, i32, i32
  }
}

module attributes {stable_mosaic.version = 11 : i64} {
  func.func @_encoder_layer_kernel(%arg0: i32, %arg1: memref<1x8x32xbf16, #tpu.memory_space<vmem>>, %arg2: memref<1x8x8xf32, #tpu.memory_space<vmem>>, %arg3: memref<32x96xbf16, #tpu.memory_space<vmem>>, %arg4: memref<1x96xf32, #tpu.memory_space<vmem>>, %arg5: memref<32x32xbf16, #tpu.memory_space<vmem>>, %arg6: memref<1x32xf32, #tpu.memory_space<vmem>>, %arg7: memref<1x32xf32, #tpu.memory_space<vmem>>, %arg8: memref<1x32xf32, #tpu.memory_space<vmem>>, %arg9: memref<32x64xbf16, #tpu.memory_space<vmem>>, %arg10: memref<1x64xf32, #tpu.memory_space<vmem>>, %arg11: memref<64x32xbf16, #tpu.memory_space<vmem>>, %arg12: memref<1x32xf32, #tpu.memory_space<vmem>>, %arg13: memref<1x32xf32, #tpu.memory_space<vmem>>, %arg14: memref<1x32xf32, #tpu.memory_space<vmem>>, %arg15: memref<1x32xf32, #tpu.memory_space<vmem>>, %arg16: memref<1x32xf32, #tpu.memory_space<vmem>>, %arg17: memref<1x8x32xbf16, #tpu.memory_space<vmem>>) attributes {dimension_semantics = [#tpu.dimension_semantics<parallel>], iteration_bounds = array<i64: 2>, scalar_prefetch = 0 : i64, scratch_operands = 0 : i64, tpu.core_type = #tpu.core_type<tc>, window_params = [{transform_indices = @transform_0, window_bounds = array<i64: 1, 8, 32>}, {transform_indices = @transform_1, window_bounds = array<i64: 1, 8, 8>}, {pipeline_mode = #tpu.pipeline_mode<synchronous>, transform_indices = @transform_2, window_bounds = array<i64: 32, 96>}, {pipeline_mode = #tpu.pipeline_mode<synchronous>, transform_indices = @transform_3, window_bounds = array<i64: 1, 96>}, {pipeline_mode = #tpu.pipeline_mode<synchronous>, transform_indices = @transform_4, window_bounds = array<i64: 32, 32>}, {pipeline_mode = #tpu.pipeline_mode<synchronous>, transform_indices = @transform_5, window_bounds = array<i64: 1, 32>}, {pipeline_mode = #tpu.pipeline_mode<synchronous>, transform_indices = @transform_6, window_bounds = array<i64: 1, 32>}, {pipeline_mode = #tpu.pipeline_mode<synchronous>, transform_indices = @transform_7, window_bounds = array<i64: 1, 32>}, {pipeline_mode = #tpu.pipeline_mode<synchronous>, transform_indices = @transform_8, window_bounds = array<i64: 32, 64>}, {pipeline_mode = #tpu.pipeline_mode<synchronous>, transform_indices = @transform_9, window_bounds = array<i64: 1, 64>}, {pipeline_mode = #tpu.pipeline_mode<synchronous>, transform_indices = @transform_10, window_bounds = array<i64: 64, 32>}, {pipeline_mode = #tpu.pipeline_mode<synchronous>, transform_indices = @transform_11, window_bounds = array<i64: 1, 32>}, {pipeline_mode = #tpu.pipeline_mode<synchronous>, transform_indices = @transform_12, window_bounds = array<i64: 1, 32>}, {pipeline_mode = #tpu.pipeline_mode<synchronous>, transform_indices = @transform_13, window_bounds = array<i64: 1, 32>}, {pipeline_mode = #tpu.pipeline_mode<synchronous>, transform_indices = @transform_14, window_bounds = array<i64: 1, 32>}, {pipeline_mode = #tpu.pipeline_mode<synchronous>, transform_indices = @transform_15, window_bounds = array<i64: 1, 32>}, {transform_indices = @transform_16, window_bounds = array<i64: 1, 8, 32>}]} {
    %c0 = arith.constant 0 : index
    %c0_0 = arith.constant 0 : index
    %c0_1 = arith.constant 0 : index
    %0 = vector.load %arg1[%c0, %c0_0, %c0_1] : memref<1x8x32xbf16, #tpu.memory_space<vmem>>, vector<1x8x32xbf16>
    %1 = vector.shape_cast %0 : vector<1x8x32xbf16> to vector<8x32xbf16>
    %c0_2 = arith.constant 0 : index
    %c0_3 = arith.constant 0 : index
    %2 = vector.load %arg3[%c0_2, %c0_3] : memref<32x96xbf16, #tpu.memory_space<vmem>>, vector<32x96xbf16>
    %cst = arith.constant dense<0.000000e+00> : vector<8x96xf32>
    %3 = tpu.matmul %1, %2, %cst {dimension_numbers = #tpu.dot_dimension_numbers<[1], [0], [0], [1], [0, 0, 1, 1], [], []>} : vector<8x32xbf16>, vector<32x96xbf16>, vector<8x96xf32> -> vector<8x96xf32>
    %c0_4 = arith.constant 0 : index
    %c0_5 = arith.constant 0 : index
    %4 = vector.load %arg4[%c0_4, %c0_5] : memref<1x96xf32, #tpu.memory_space<vmem>>, vector<1x96xf32>
    %5 = vector.broadcast %4 : vector<1x96xf32> to vector<8x96xf32>
    %6 = arith.addf %3, %5 : vector<8x96xf32>
    %c0_6 = arith.constant 0 : index
    %c0_7 = arith.constant 0 : index
    %c0_8 = arith.constant 0 : index
    %7 = vector.load %arg2[%c0_6, %c0_7, %c0_8] : memref<1x8x8xf32, #tpu.memory_space<vmem>>, vector<1x8x8xf32>
    %8 = vector.shape_cast %7 : vector<1x8x8xf32> to vector<8x8xf32>
    %9 = vector.extract_strided_slice %6 {offsets = [0, 0], sizes = [8, 32], strides = [1, 1]} : vector<8x96xf32> to vector<8x32xf32>
    %10 = vector.extract_strided_slice %6 {offsets = [0, 32], sizes = [8, 32], strides = [1, 1]} : vector<8x96xf32> to vector<8x32xf32>
    %11 = vector.extract_strided_slice %6 {offsets = [0, 64], sizes = [8, 32], strides = [1, 1]} : vector<8x96xf32> to vector<8x32xf32>
    %12 = arith.truncf %9 : vector<8x32xf32> to vector<8x32xbf16>
    %13 = arith.truncf %10 : vector<8x32xf32> to vector<8x32xbf16>
    %14 = arith.truncf %11 : vector<8x32xf32> to vector<8x32xbf16>
    %15 = vector.extract_strided_slice %12 {offsets = [0, 0], sizes = [8, 8], strides = [1, 1]} : vector<8x32xbf16> to vector<8x8xbf16>
    %16 = vector.extract_strided_slice %13 {offsets = [0, 0], sizes = [8, 8], strides = [1, 1]} : vector<8x32xbf16> to vector<8x8xbf16>
    %cst_9 = arith.constant dense<0.000000e+00> : vector<8x8xf32>
    %17 = tpu.matmul %15, %16, %cst_9 {dimension_numbers = #tpu.dot_dimension_numbers<[1], [1], [0], [0], [0, 0, 1, 0], [], []>} : vector<8x8xbf16>, vector<8x8xbf16>, vector<8x8xf32> -> vector<8x8xf32>
    %cst_10 = arith.constant 0.353553385 : f32
    %18 = vector.broadcast %cst_10 : f32 to vector<8x8xf32>
    %19 = arith.mulf %17, %18 : vector<8x8xf32>
    %20 = arith.addf %19, %8 : vector<8x8xf32>
    %cst_11 = arith.constant dense<0xFF800000> : vector<8xf32>
    %21 = vector.multi_reduction <maximumf>, %20, %cst_11 [1] : vector<8x8xf32> to vector<8xf32>
    %22 = vector.shape_cast %21 : vector<8xf32> to vector<8x1xf32>
    %23 = vector.broadcast %22 : vector<8x1xf32> to vector<8x8xf32>
    %24 = arith.subf %20, %23 : vector<8x8xf32>
    %25 = math.exp %24 : vector<8x8xf32>
    %cst_12 = arith.constant dense<0.000000e+00> : vector<8xf32>
    %26 = vector.multi_reduction <add>, %25, %cst_12 [1] : vector<8x8xf32> to vector<8xf32>
    %27 = vector.shape_cast %26 : vector<8xf32> to vector<8x1xf32>
    %28 = tpu.reciprocal %27 {approx = true} : vector<8x1xf32> -> vector<8x1xf32>
    %29 = vector.broadcast %28 : vector<8x1xf32> to vector<8x8xf32>
    %30 = arith.mulf %25, %29 : vector<8x8xf32>
    %31 = arith.truncf %30 : vector<8x8xf32> to vector<8x8xbf16>
    %32 = vector.extract_strided_slice %14 {offsets = [0, 0], sizes = [8, 8], strides = [1, 1]} : vector<8x32xbf16> to vector<8x8xbf16>
    %cst_13 = arith.constant dense<0.000000e+00> : vector<8x8xf32>
    %33 = tpu.matmul %31, %32, %cst_13 {dimension_numbers = #tpu.dot_dimension_numbers<[1], [0], [0], [1], [0, 0, 1, 1], [], []>} : vector<8x8xbf16>, vector<8x8xbf16>, vector<8x8xf32> -> vector<8x8xf32>
    %34 = arith.truncf %33 : vector<8x8xf32> to vector<8x8xbf16>
    %c0_14 = arith.constant 0 : index
    %c0_15 = arith.constant 0 : index
    %35 = vector.load %arg5[%c0_14, %c0_15] : memref<32x32xbf16, #tpu.memory_space<vmem>>, vector<8x32xbf16>
    %cst_16 = arith.constant dense<0.000000e+00> : vector<8x32xf32>
    %36 = tpu.matmul %34, %35, %cst_16 {dimension_numbers = #tpu.dot_dimension_numbers<[1], [0], [0], [1], [0, 0, 1, 1], [], []>} : vector<8x8xbf16>, vector<8x32xbf16>, vector<8x32xf32> -> vector<8x32xf32>
    %37 = vector.extract_strided_slice %12 {offsets = [0, 8], sizes = [8, 8], strides = [1, 1]} : vector<8x32xbf16> to vector<8x8xbf16>
    %38 = vector.extract_strided_slice %13 {offsets = [0, 8], sizes = [8, 8], strides = [1, 1]} : vector<8x32xbf16> to vector<8x8xbf16>
    %cst_17 = arith.constant dense<0.000000e+00> : vector<8x8xf32>
    %39 = tpu.matmul %37, %38, %cst_17 {dimension_numbers = #tpu.dot_dimension_numbers<[1], [1], [0], [0], [0, 0, 1, 0], [], []>} : vector<8x8xbf16>, vector<8x8xbf16>, vector<8x8xf32> -> vector<8x8xf32>
    %cst_18 = arith.constant 0.353553385 : f32
    %40 = vector.broadcast %cst_18 : f32 to vector<8x8xf32>
    %41 = arith.mulf %39, %40 : vector<8x8xf32>
    %42 = arith.addf %41, %8 : vector<8x8xf32>
    %cst_19 = arith.constant dense<0xFF800000> : vector<8xf32>
    %43 = vector.multi_reduction <maximumf>, %42, %cst_19 [1] : vector<8x8xf32> to vector<8xf32>
    %44 = vector.shape_cast %43 : vector<8xf32> to vector<8x1xf32>
    %45 = vector.broadcast %44 : vector<8x1xf32> to vector<8x8xf32>
    %46 = arith.subf %42, %45 : vector<8x8xf32>
    %47 = math.exp %46 : vector<8x8xf32>
    %cst_20 = arith.constant dense<0.000000e+00> : vector<8xf32>
    %48 = vector.multi_reduction <add>, %47, %cst_20 [1] : vector<8x8xf32> to vector<8xf32>
    %49 = vector.shape_cast %48 : vector<8xf32> to vector<8x1xf32>
    %50 = tpu.reciprocal %49 {approx = true} : vector<8x1xf32> -> vector<8x1xf32>
    %51 = vector.broadcast %50 : vector<8x1xf32> to vector<8x8xf32>
    %52 = arith.mulf %47, %51 : vector<8x8xf32>
    %53 = arith.truncf %52 : vector<8x8xf32> to vector<8x8xbf16>
    %54 = vector.extract_strided_slice %14 {offsets = [0, 8], sizes = [8, 8], strides = [1, 1]} : vector<8x32xbf16> to vector<8x8xbf16>
    %cst_21 = arith.constant dense<0.000000e+00> : vector<8x8xf32>
    %55 = tpu.matmul %53, %54, %cst_21 {dimension_numbers = #tpu.dot_dimension_numbers<[1], [0], [0], [1], [0, 0, 1, 1], [], []>} : vector<8x8xbf16>, vector<8x8xbf16>, vector<8x8xf32> -> vector<8x8xf32>
    %56 = arith.truncf %55 : vector<8x8xf32> to vector<8x8xbf16>
    %c8 = arith.constant 8 : index
    %c0_22 = arith.constant 0 : index
    %57 = vector.load %arg5[%c8, %c0_22] : memref<32x32xbf16, #tpu.memory_space<vmem>>, vector<8x32xbf16>
    %cst_23 = arith.constant dense<0.000000e+00> : vector<8x32xf32>
    %58 = tpu.matmul %56, %57, %cst_23 {dimension_numbers = #tpu.dot_dimension_numbers<[1], [0], [0], [1], [0, 0, 1, 1], [], []>} : vector<8x8xbf16>, vector<8x32xbf16>, vector<8x32xf32> -> vector<8x32xf32>
    %59 = arith.addf %36, %58 : vector<8x32xf32>
    %60 = vector.extract_strided_slice %12 {offsets = [0, 16], sizes = [8, 8], strides = [1, 1]} : vector<8x32xbf16> to vector<8x8xbf16>
    %61 = vector.extract_strided_slice %13 {offsets = [0, 16], sizes = [8, 8], strides = [1, 1]} : vector<8x32xbf16> to vector<8x8xbf16>
    %cst_24 = arith.constant dense<0.000000e+00> : vector<8x8xf32>
    %62 = tpu.matmul %60, %61, %cst_24 {dimension_numbers = #tpu.dot_dimension_numbers<[1], [1], [0], [0], [0, 0, 1, 0], [], []>} : vector<8x8xbf16>, vector<8x8xbf16>, vector<8x8xf32> -> vector<8x8xf32>
    %cst_25 = arith.constant 0.353553385 : f32
    %63 = vector.broadcast %cst_25 : f32 to vector<8x8xf32>
    %64 = arith.mulf %62, %63 : vector<8x8xf32>
    %65 = arith.addf %64, %8 : vector<8x8xf32>
    %cst_26 = arith.constant dense<0xFF800000> : vector<8xf32>
    %66 = vector.multi_reduction <maximumf>, %65, %cst_26 [1] : vector<8x8xf32> to vector<8xf32>
    %67 = vector.shape_cast %66 : vector<8xf32> to vector<8x1xf32>
    %68 = vector.broadcast %67 : vector<8x1xf32> to vector<8x8xf32>
    %69 = arith.subf %65, %68 : vector<8x8xf32>
    %70 = math.exp %69 : vector<8x8xf32>
    %cst_27 = arith.constant dense<0.000000e+00> : vector<8xf32>
    %71 = vector.multi_reduction <add>, %70, %cst_27 [1] : vector<8x8xf32> to vector<8xf32>
    %72 = vector.shape_cast %71 : vector<8xf32> to vector<8x1xf32>
    %73 = tpu.reciprocal %72 {approx = true} : vector<8x1xf32> -> vector<8x1xf32>
    %74 = vector.broadcast %73 : vector<8x1xf32> to vector<8x8xf32>
    %75 = arith.mulf %70, %74 : vector<8x8xf32>
    %76 = arith.truncf %75 : vector<8x8xf32> to vector<8x8xbf16>
    %77 = vector.extract_strided_slice %14 {offsets = [0, 16], sizes = [8, 8], strides = [1, 1]} : vector<8x32xbf16> to vector<8x8xbf16>
    %cst_28 = arith.constant dense<0.000000e+00> : vector<8x8xf32>
    %78 = tpu.matmul %76, %77, %cst_28 {dimension_numbers = #tpu.dot_dimension_numbers<[1], [0], [0], [1], [0, 0, 1, 1], [], []>} : vector<8x8xbf16>, vector<8x8xbf16>, vector<8x8xf32> -> vector<8x8xf32>
    %79 = arith.truncf %78 : vector<8x8xf32> to vector<8x8xbf16>
    %c16 = arith.constant 16 : index
    %c0_29 = arith.constant 0 : index
    %80 = vector.load %arg5[%c16, %c0_29] : memref<32x32xbf16, #tpu.memory_space<vmem>>, vector<8x32xbf16>
    %cst_30 = arith.constant dense<0.000000e+00> : vector<8x32xf32>
    %81 = tpu.matmul %79, %80, %cst_30 {dimension_numbers = #tpu.dot_dimension_numbers<[1], [0], [0], [1], [0, 0, 1, 1], [], []>} : vector<8x8xbf16>, vector<8x32xbf16>, vector<8x32xf32> -> vector<8x32xf32>
    %82 = arith.addf %59, %81 : vector<8x32xf32>
    %83 = vector.extract_strided_slice %12 {offsets = [0, 24], sizes = [8, 8], strides = [1, 1]} : vector<8x32xbf16> to vector<8x8xbf16>
    %84 = vector.extract_strided_slice %13 {offsets = [0, 24], sizes = [8, 8], strides = [1, 1]} : vector<8x32xbf16> to vector<8x8xbf16>
    %cst_31 = arith.constant dense<0.000000e+00> : vector<8x8xf32>
    %85 = tpu.matmul %83, %84, %cst_31 {dimension_numbers = #tpu.dot_dimension_numbers<[1], [1], [0], [0], [0, 0, 1, 0], [], []>} : vector<8x8xbf16>, vector<8x8xbf16>, vector<8x8xf32> -> vector<8x8xf32>
    %cst_32 = arith.constant 0.353553385 : f32
    %86 = vector.broadcast %cst_32 : f32 to vector<8x8xf32>
    %87 = arith.mulf %85, %86 : vector<8x8xf32>
    %88 = arith.addf %87, %8 : vector<8x8xf32>
    %cst_33 = arith.constant dense<0xFF800000> : vector<8xf32>
    %89 = vector.multi_reduction <maximumf>, %88, %cst_33 [1] : vector<8x8xf32> to vector<8xf32>
    %90 = vector.shape_cast %89 : vector<8xf32> to vector<8x1xf32>
    %91 = vector.broadcast %90 : vector<8x1xf32> to vector<8x8xf32>
    %92 = arith.subf %88, %91 : vector<8x8xf32>
    %93 = math.exp %92 : vector<8x8xf32>
    %cst_34 = arith.constant dense<0.000000e+00> : vector<8xf32>
    %94 = vector.multi_reduction <add>, %93, %cst_34 [1] : vector<8x8xf32> to vector<8xf32>
    %95 = vector.shape_cast %94 : vector<8xf32> to vector<8x1xf32>
    %96 = tpu.reciprocal %95 {approx = true} : vector<8x1xf32> -> vector<8x1xf32>
    %97 = vector.broadcast %96 : vector<8x1xf32> to vector<8x8xf32>
    %98 = arith.mulf %93, %97 : vector<8x8xf32>
    %99 = arith.truncf %98 : vector<8x8xf32> to vector<8x8xbf16>
    %100 = vector.extract_strided_slice %14 {offsets = [0, 24], sizes = [8, 8], strides = [1, 1]} : vector<8x32xbf16> to vector<8x8xbf16>
    %cst_35 = arith.constant dense<0.000000e+00> : vector<8x8xf32>
    %101 = tpu.matmul %99, %100, %cst_35 {dimension_numbers = #tpu.dot_dimension_numbers<[1], [0], [0], [1], [0, 0, 1, 1], [], []>} : vector<8x8xbf16>, vector<8x8xbf16>, vector<8x8xf32> -> vector<8x8xf32>
    %102 = arith.truncf %101 : vector<8x8xf32> to vector<8x8xbf16>
    %c24 = arith.constant 24 : index
    %c0_36 = arith.constant 0 : index
    %103 = vector.load %arg5[%c24, %c0_36] : memref<32x32xbf16, #tpu.memory_space<vmem>>, vector<8x32xbf16>
    %cst_37 = arith.constant dense<0.000000e+00> : vector<8x32xf32>
    %104 = tpu.matmul %102, %103, %cst_37 {dimension_numbers = #tpu.dot_dimension_numbers<[1], [0], [0], [1], [0, 0, 1, 1], [], []>} : vector<8x8xbf16>, vector<8x32xbf16>, vector<8x32xf32> -> vector<8x32xf32>
    %105 = arith.addf %82, %104 : vector<8x32xf32>
    %c0_38 = arith.constant 0 : index
    %c0_39 = arith.constant 0 : index
    %106 = vector.load %arg6[%c0_38, %c0_39] : memref<1x32xf32, #tpu.memory_space<vmem>>, vector<1x32xf32>
    %107 = vector.broadcast %106 : vector<1x32xf32> to vector<8x32xf32>
    %108 = arith.addf %105, %107 : vector<8x32xf32>
    %109 = arith.extf %1 : vector<8x32xbf16> to vector<8x32xf32>
    %110 = arith.addf %108, %109 : vector<8x32xf32>
    %c0_40 = arith.constant 0 : index
    %c0_41 = arith.constant 0 : index
    %111 = vector.load %arg7[%c0_40, %c0_41] : memref<1x32xf32, #tpu.memory_space<vmem>>, vector<1x32xf32>
    %c0_42 = arith.constant 0 : index
    %c0_43 = arith.constant 0 : index
    %112 = vector.load %arg8[%c0_42, %c0_43] : memref<1x32xf32, #tpu.memory_space<vmem>>, vector<1x32xf32>
    %cst_44 = arith.constant dense<0.000000e+00> : vector<8xf32>
    %113 = vector.multi_reduction <add>, %110, %cst_44 [1] : vector<8x32xf32> to vector<8xf32>
    %114 = vector.shape_cast %113 : vector<8xf32> to vector<8x1xf32>
    %cst_45 = arith.constant 3.200000e+01 : f32
    %115 = vector.broadcast %cst_45 : f32 to vector<8x1xf32>
    %116 = arith.divf %114, %115 : vector<8x1xf32>
    %117 = vector.broadcast %116 : vector<8x1xf32> to vector<8x32xf32>
    %118 = arith.subf %110, %117 : vector<8x32xf32>
    %119 = arith.mulf %118, %118 : vector<8x32xf32>
    %cst_46 = arith.constant dense<0.000000e+00> : vector<8xf32>
    %120 = vector.multi_reduction <add>, %119, %cst_46 [1] : vector<8x32xf32> to vector<8xf32>
    %121 = vector.shape_cast %120 : vector<8xf32> to vector<8x1xf32>
    %cst_47 = arith.constant 3.200000e+01 : f32
    %122 = vector.broadcast %cst_47 : f32 to vector<8x1xf32>
    %123 = arith.divf %121, %122 : vector<8x1xf32>
    %cst_48 = arith.constant 9.99999974E-6 : f32
    %124 = vector.broadcast %cst_48 : f32 to vector<8x1xf32>
    %125 = arith.addf %123, %124 : vector<8x1xf32>
    %126 = math.rsqrt %125 : vector<8x1xf32>
    %127 = vector.broadcast %126 : vector<8x1xf32> to vector<8x32xf32>
    %128 = arith.mulf %118, %127 : vector<8x32xf32>
    %129 = vector.broadcast %111 : vector<1x32xf32> to vector<8x32xf32>
    %130 = arith.mulf %128, %129 : vector<8x32xf32>
    %131 = vector.broadcast %112 : vector<1x32xf32> to vector<8x32xf32>
    %132 = arith.addf %130, %131 : vector<8x32xf32>
    %133 = arith.truncf %132 : vector<8x32xf32> to vector<8x32xbf16>
    %c0_49 = arith.constant 0 : index
    %c0_50 = arith.constant 0 : index
    %134 = vector.load %arg9[%c0_49, %c0_50] : memref<32x64xbf16, #tpu.memory_space<vmem>>, vector<32x64xbf16>
    %cst_51 = arith.constant dense<0.000000e+00> : vector<8x64xf32>
    %135 = tpu.matmul %133, %134, %cst_51 {dimension_numbers = #tpu.dot_dimension_numbers<[1], [0], [0], [1], [0, 0, 1, 1], [], []>} : vector<8x32xbf16>, vector<32x64xbf16>, vector<8x64xf32> -> vector<8x64xf32>
    %c0_52 = arith.constant 0 : index
    %c0_53 = arith.constant 0 : index
    %136 = vector.load %arg10[%c0_52, %c0_53] : memref<1x64xf32, #tpu.memory_space<vmem>>, vector<1x64xf32>
    %137 = vector.broadcast %136 : vector<1x64xf32> to vector<8x64xf32>
    %138 = arith.addf %135, %137 : vector<8x64xf32>
    %cst_54 = arith.constant 0.000000e+00 : f32
    %139 = vector.broadcast %cst_54 : f32 to vector<8x64xf32>
    %140 = arith.maximumf %138, %139 : vector<8x64xf32>
    %141 = arith.truncf %140 : vector<8x64xf32> to vector<8x64xbf16>
    %c0_55 = arith.constant 0 : index
    %c0_56 = arith.constant 0 : index
    %142 = vector.load %arg11[%c0_55, %c0_56] : memref<64x32xbf16, #tpu.memory_space<vmem>>, vector<64x32xbf16>
    %cst_57 = arith.constant dense<0.000000e+00> : vector<8x32xf32>
    %143 = tpu.matmul %141, %142, %cst_57 {dimension_numbers = #tpu.dot_dimension_numbers<[1], [0], [0], [1], [0, 0, 1, 1], [], []>} : vector<8x64xbf16>, vector<64x32xbf16>, vector<8x32xf32> -> vector<8x32xf32>
    %c0_58 = arith.constant 0 : index
    %c0_59 = arith.constant 0 : index
    %144 = vector.load %arg12[%c0_58, %c0_59] : memref<1x32xf32, #tpu.memory_space<vmem>>, vector<1x32xf32>
    %145 = vector.broadcast %144 : vector<1x32xf32> to vector<8x32xf32>
    %146 = arith.addf %143, %145 : vector<8x32xf32>
    %147 = arith.addf %146, %132 : vector<8x32xf32>
    %c0_60 = arith.constant 0 : index
    %c0_61 = arith.constant 0 : index
    %148 = vector.load %arg13[%c0_60, %c0_61] : memref<1x32xf32, #tpu.memory_space<vmem>>, vector<1x32xf32>
    %c0_62 = arith.constant 0 : index
    %c0_63 = arith.constant 0 : index
    %149 = vector.load %arg14[%c0_62, %c0_63] : memref<1x32xf32, #tpu.memory_space<vmem>>, vector<1x32xf32>
    %cst_64 = arith.constant dense<0.000000e+00> : vector<8xf32>
    %150 = vector.multi_reduction <add>, %147, %cst_64 [1] : vector<8x32xf32> to vector<8xf32>
    %151 = vector.shape_cast %150 : vector<8xf32> to vector<8x1xf32>
    %cst_65 = arith.constant 3.200000e+01 : f32
    %152 = vector.broadcast %cst_65 : f32 to vector<8x1xf32>
    %153 = arith.divf %151, %152 : vector<8x1xf32>
    %154 = vector.broadcast %153 : vector<8x1xf32> to vector<8x32xf32>
    %155 = arith.subf %147, %154 : vector<8x32xf32>
    %156 = arith.mulf %155, %155 : vector<8x32xf32>
    %cst_66 = arith.constant dense<0.000000e+00> : vector<8xf32>
    %157 = vector.multi_reduction <add>, %156, %cst_66 [1] : vector<8x32xf32> to vector<8xf32>
    %158 = vector.shape_cast %157 : vector<8xf32> to vector<8x1xf32>
    %cst_67 = arith.constant 3.200000e+01 : f32
    %159 = vector.broadcast %cst_67 : f32 to vector<8x1xf32>
    %160 = arith.divf %158, %159 : vector<8x1xf32>
    %cst_68 = arith.constant 9.99999974E-6 : f32
    %161 = vector.broadcast %cst_68 : f32 to vector<8x1xf32>
    %162 = arith.addf %160, %161 : vector<8x1xf32>
    %163 = math.rsqrt %162 : vector<8x1xf32>
    %164 = vector.broadcast %163 : vector<8x1xf32> to vector<8x32xf32>
    %165 = arith.mulf %155, %164 : vector<8x32xf32>
    %166 = vector.broadcast %148 : vector<1x32xf32> to vector<8x32xf32>
    %167 = arith.mulf %165, %166 : vector<8x32xf32>
    %168 = vector.broadcast %149 : vector<1x32xf32> to vector<8x32xf32>
    %169 = arith.addf %167, %168 : vector<8x32xf32>
    %c0_69 = arith.constant 0 : index
    %c0_70 = arith.constant 0 : index
    %170 = vector.load %arg15[%c0_69, %c0_70] : memref<1x32xf32, #tpu.memory_space<vmem>>, vector<1x32xf32>
    %c0_71 = arith.constant 0 : index
    %c0_72 = arith.constant 0 : index
    %171 = vector.load %arg16[%c0_71, %c0_72] : memref<1x32xf32, #tpu.memory_space<vmem>>, vector<1x32xf32>
    %cst_73 = arith.constant dense<0.000000e+00> : vector<8xf32>
    %172 = vector.multi_reduction <add>, %169, %cst_73 [1] : vector<8x32xf32> to vector<8xf32>
    %173 = vector.shape_cast %172 : vector<8xf32> to vector<8x1xf32>
    %cst_74 = arith.constant 3.200000e+01 : f32
    %174 = vector.broadcast %cst_74 : f32 to vector<8x1xf32>
    %175 = arith.divf %173, %174 : vector<8x1xf32>
    %176 = vector.broadcast %175 : vector<8x1xf32> to vector<8x32xf32>
    %177 = arith.subf %169, %176 : vector<8x32xf32>
    %178 = arith.mulf %177, %177 : vector<8x32xf32>
    %cst_75 = arith.constant dense<0.000000e+00> : vector<8xf32>
    %179 = vector.multi_reduction <add>, %178, %cst_75 [1] : vector<8x32xf32> to vector<8xf32>
    %180 = vector.shape_cast %179 : vector<8xf32> to vector<8x1xf32>
    %cst_76 = arith.constant 3.200000e+01 : f32
    %181 = vector.broadcast %cst_76 : f32 to vector<8x1xf32>
    %182 = arith.divf %180, %181 : vector<8x1xf32>
    %cst_77 = arith.constant 9.99999974E-6 : f32
    %183 = vector.broadcast %cst_77 : f32 to vector<8x1xf32>
    %184 = arith.addf %182, %183 : vector<8x1xf32>
    %185 = math.rsqrt %184 : vector<8x1xf32>
    %186 = vector.broadcast %185 : vector<8x1xf32> to vector<8x32xf32>
    %187 = arith.mulf %177, %186 : vector<8x32xf32>
    %188 = vector.broadcast %170 : vector<1x32xf32> to vector<8x32xf32>
    %189 = arith.mulf %187, %188 : vector<8x32xf32>
    %190 = vector.broadcast %171 : vector<1x32xf32> to vector<8x32xf32>
    %191 = arith.addf %189, %190 : vector<8x32xf32>
    %192 = arith.truncf %191 : vector<8x32xf32> to vector<8x32xbf16>
    %c0_78 = arith.constant 0 : index
    %c0_79 = arith.constant 0 : index
    %c0_80 = arith.constant 0 : index
    %193 = vector.load %arg17[%c0_78, %c0_79, %c0_80] : memref<1x8x32xbf16, #tpu.memory_space<vmem>>, vector<1x8x32xbf16>
    %194 = vector.shape_cast %193 : vector<1x8x32xbf16> to vector<8x32xbf16>
    %195 = vector.shape_cast %192 : vector<8x32xbf16> to vector<1x8x32xbf16>
    tpu.vector_store %arg17[%c0_78, %c0_79, %c0_80], %195 {strides = array<i32>} : memref<1x8x32xbf16, #tpu.memory_space<vmem>>, vector<1x8x32xbf16>,
    return
  }
  func.func @transform_0(%arg0: i32) -> (i32, i32, i32) {
    %c0_i32 = arith.constant 0 : i32
    %c0_i32_0 = arith.constant 0 : i32
    %c0_i32_1 = arith.constant 0 : i32
    return %arg0, %c0_i32, %c0_i32_0 : i32, i32, i32
  }
  func.func @transform_1(%arg0: i32) -> (i32, i32, i32) {
    %c0_i32 = arith.constant 0 : i32
    %c0_i32_0 = arith.constant 0 : i32
    %c0_i32_1 = arith.constant 0 : i32
    return %arg0, %c0_i32, %c0_i32_0 : i32, i32, i32
  }
  func.func @transform_2(%arg0: i32) -> (i32, i32) {
    %c0_i32 = arith.constant 0 : i32
    %c0_i32_0 = arith.constant 0 : i32
    %c0_i32_1 = arith.constant 0 : i32
    return %c0_i32, %c0_i32_0 : i32, i32
  }
  func.func @transform_3(%arg0: i32) -> (i32, i32) {
    %c0_i32 = arith.constant 0 : i32
    %c0_i32_0 = arith.constant 0 : i32
    %c0_i32_1 = arith.constant 0 : i32
    return %c0_i32, %c0_i32_0 : i32, i32
  }
  func.func @transform_4(%arg0: i32) -> (i32, i32) {
    %c0_i32 = arith.constant 0 : i32
    %c0_i32_0 = arith.constant 0 : i32
    %c0_i32_1 = arith.constant 0 : i32
    return %c0_i32, %c0_i32_0 : i32, i32
  }
  func.func @transform_5(%arg0: i32) -> (i32, i32) {
    %c0_i32 = arith.constant 0 : i32
    %c0_i32_0 = arith.constant 0 : i32
    %c0_i32_1 = arith.constant 0 : i32
    return %c0_i32, %c0_i32_0 : i32, i32
  }
  func.func @transform_6(%arg0: i32) -> (i32, i32) {
    %c0_i32 = arith.constant 0 : i32
    %c0_i32_0 = arith.constant 0 : i32
    %c0_i32_1 = arith.constant 0 : i32
    return %c0_i32, %c0_i32_0 : i32, i32
  }
  func.func @transform_7(%arg0: i32) -> (i32, i32) {
    %c0_i32 = arith.constant 0 : i32
    %c0_i32_0 = arith.constant 0 : i32
    %c0_i32_1 = arith.constant 0 : i32
    return %c0_i32, %c0_i32_0 : i32, i32
  }
  func.func @transform_8(%arg0: i32) -> (i32, i32) {
    %c0_i32 = arith.constant 0 : i32
    %c0_i32_0 = arith.constant 0 : i32
    %c0_i32_1 = arith.constant 0 : i32
    return %c0_i32, %c0_i32_0 : i32, i32
  }
  func.func @transform_9(%arg0: i32) -> (i32, i32) {
    %c0_i32 = arith.constant 0 : i32
    %c0_i32_0 = arith.constant 0 : i32
    %c0_i32_1 = arith.constant 0 : i32
    return %c0_i32, %c0_i32_0 : i32, i32
  }
  func.func @transform_10(%arg0: i32) -> (i32, i32) {
    %c0_i32 = arith.constant 0 : i32
    %c0_i32_0 = arith.constant 0 : i32
    %c0_i32_1 = arith.constant 0 : i32
    return %c0_i32, %c0_i32_0 : i32, i32
  }
  func.func @transform_11(%arg0: i32) -> (i32, i32) {
    %c0_i32 = arith.constant 0 : i32
    %c0_i32_0 = arith.constant 0 : i32
    %c0_i32_1 = arith.constant 0 : i32
    return %c0_i32, %c0_i32_0 : i32, i32
  }
  func.func @transform_12(%arg0: i32) -> (i32, i32) {
    %c0_i32 = arith.constant 0 : i32
    %c0_i32_0 = arith.constant 0 : i32
    %c0_i32_1 = arith.constant 0 : i32
    return %c0_i32, %c0_i32_0 : i32, i32
  }
  func.func @transform_13(%arg0: i32) -> (i32, i32) {
    %c0_i32 = arith.constant 0 : i32
    %c0_i32_0 = arith.constant 0 : i32
    %c0_i32_1 = arith.constant 0 : i32
    return %c0_i32, %c0_i32_0 : i32, i32
  }
  func.func @transform_14(%arg0: i32) -> (i32, i32) {
    %c0_i32 = arith.constant 0 : i32
    %c0_i32_0 = arith.constant 0 : i32
    %c0_i32_1 = arith.constant 0 : i32
    return %c0_i32, %c0_i32_0 : i32, i32
  }
  func.func @transform_15(%arg0: i32) -> (i32, i32) {
    %c0_i32 = arith.constant 0 : i32
    %c0_i32_0 = arith.constant 0 : i32
    %c0_i32_1 = arith.constant 0 : i32
    return %c0_i32, %c0_i32_0 : i32, i32
  }
  func.func @transform_16(%arg0: i32) -> (i32, i32, i32) {
    %c0_i32 = arith.constant 0 : i32
    %c0_i32_0 = arith.constant 0 : i32
    %c0_i32_1 = arith.constant 0 : i32
    return %arg0, %c0_i32, %c0_i32_0 : i32, i32, i32
  }
}

module attributes {stable_mosaic.version = 11 : i64} {
  func.func @_encoder_layer_kernel(%arg0: i32, %arg1: memref<1x8x32xbf16, #tpu.memory_space<vmem>>, %arg2: memref<1x8x8xf32, #tpu.memory_space<vmem>>, %arg3: memref<32x96xbf16, #tpu.memory_space<vmem>>, %arg4: memref<1x96xf32, #tpu.memory_space<vmem>>, %arg5: memref<32x32xbf16, #tpu.memory_space<vmem>>, %arg6: memref<1x32xf32, #tpu.memory_space<vmem>>, %arg7: memref<1x32xf32, #tpu.memory_space<vmem>>, %arg8: memref<1x32xf32, #tpu.memory_space<vmem>>, %arg9: memref<32x64xbf16, #tpu.memory_space<vmem>>, %arg10: memref<1x64xf32, #tpu.memory_space<vmem>>, %arg11: memref<64x32xbf16, #tpu.memory_space<vmem>>, %arg12: memref<1x32xf32, #tpu.memory_space<vmem>>, %arg13: memref<1x32xf32, #tpu.memory_space<vmem>>, %arg14: memref<1x32xf32, #tpu.memory_space<vmem>>, %arg15: memref<1x8x32xbf16, #tpu.memory_space<vmem>>) attributes {dimension_semantics = [#tpu.dimension_semantics<parallel>], iteration_bounds = array<i64: 2>, scalar_prefetch = 0 : i64, scratch_operands = 0 : i64, tpu.core_type = #tpu.core_type<tc>, window_params = [{transform_indices = @transform_0, window_bounds = array<i64: 1, 8, 32>}, {transform_indices = @transform_1, window_bounds = array<i64: 1, 8, 8>}, {pipeline_mode = #tpu.pipeline_mode<synchronous>, transform_indices = @transform_2, window_bounds = array<i64: 32, 96>}, {pipeline_mode = #tpu.pipeline_mode<synchronous>, transform_indices = @transform_3, window_bounds = array<i64: 1, 96>}, {pipeline_mode = #tpu.pipeline_mode<synchronous>, transform_indices = @transform_4, window_bounds = array<i64: 32, 32>}, {pipeline_mode = #tpu.pipeline_mode<synchronous>, transform_indices = @transform_5, window_bounds = array<i64: 1, 32>}, {pipeline_mode = #tpu.pipeline_mode<synchronous>, transform_indices = @transform_6, window_bounds = array<i64: 1, 32>}, {pipeline_mode = #tpu.pipeline_mode<synchronous>, transform_indices = @transform_7, window_bounds = array<i64: 1, 32>}, {pipeline_mode = #tpu.pipeline_mode<synchronous>, transform_indices = @transform_8, window_bounds = array<i64: 32, 64>}, {pipeline_mode = #tpu.pipeline_mode<synchronous>, transform_indices = @transform_9, window_bounds = array<i64: 1, 64>}, {pipeline_mode = #tpu.pipeline_mode<synchronous>, transform_indices = @transform_10, window_bounds = array<i64: 64, 32>}, {pipeline_mode = #tpu.pipeline_mode<synchronous>, transform_indices = @transform_11, window_bounds = array<i64: 1, 32>}, {pipeline_mode = #tpu.pipeline_mode<synchronous>, transform_indices = @transform_12, window_bounds = array<i64: 1, 32>}, {pipeline_mode = #tpu.pipeline_mode<synchronous>, transform_indices = @transform_13, window_bounds = array<i64: 1, 32>}, {transform_indices = @transform_14, window_bounds = array<i64: 1, 8, 32>}]} {
    %c0 = arith.constant 0 : index
    %c0_0 = arith.constant 0 : index
    %c0_1 = arith.constant 0 : index
    %0 = vector.load %arg1[%c0, %c0_0, %c0_1] : memref<1x8x32xbf16, #tpu.memory_space<vmem>>, vector<1x8x32xbf16>
    %1 = vector.shape_cast %0 : vector<1x8x32xbf16> to vector<8x32xbf16>
    %c0_2 = arith.constant 0 : index
    %c0_3 = arith.constant 0 : index
    %2 = vector.load %arg3[%c0_2, %c0_3] : memref<32x96xbf16, #tpu.memory_space<vmem>>, vector<32x96xbf16>
    %cst = arith.constant dense<0.000000e+00> : vector<8x96xf32>
    %3 = tpu.matmul %1, %2, %cst {dimension_numbers = #tpu.dot_dimension_numbers<[1], [0], [0], [1], [0, 0, 1, 1], [], []>} : vector<8x32xbf16>, vector<32x96xbf16>, vector<8x96xf32> -> vector<8x96xf32>
    %c0_4 = arith.constant 0 : index
    %c0_5 = arith.constant 0 : index
    %4 = vector.load %arg4[%c0_4, %c0_5] : memref<1x96xf32, #tpu.memory_space<vmem>>, vector<1x96xf32>
    %5 = vector.broadcast %4 : vector<1x96xf32> to vector<8x96xf32>
    %6 = arith.addf %3, %5 : vector<8x96xf32>
    %c0_6 = arith.constant 0 : index
    %c0_7 = arith.constant 0 : index
    %c0_8 = arith.constant 0 : index
    %7 = vector.load %arg2[%c0_6, %c0_7, %c0_8] : memref<1x8x8xf32, #tpu.memory_space<vmem>>, vector<1x8x8xf32>
    %8 = vector.shape_cast %7 : vector<1x8x8xf32> to vector<8x8xf32>
    %9 = vector.extract_strided_slice %6 {offsets = [0, 0], sizes = [8, 32], strides = [1, 1]} : vector<8x96xf32> to vector<8x32xf32>
    %10 = vector.extract_strided_slice %6 {offsets = [0, 32], sizes = [8, 32], strides = [1, 1]} : vector<8x96xf32> to vector<8x32xf32>
    %11 = vector.extract_strided_slice %6 {offsets = [0, 64], sizes = [8, 32], strides = [1, 1]} : vector<8x96xf32> to vector<8x32xf32>
    %12 = arith.truncf %9 : vector<8x32xf32> to vector<8x32xbf16>
    %13 = arith.truncf %10 : vector<8x32xf32> to vector<8x32xbf16>
    %14 = arith.truncf %11 : vector<8x32xf32> to vector<8x32xbf16>
    %15 = vector.extract_strided_slice %12 {offsets = [0, 0], sizes = [8, 8], strides = [1, 1]} : vector<8x32xbf16> to vector<8x8xbf16>
    %16 = vector.extract_strided_slice %13 {offsets = [0, 0], sizes = [8, 8], strides = [1, 1]} : vector<8x32xbf16> to vector<8x8xbf16>
    %cst_9 = arith.constant dense<0.000000e+00> : vector<8x8xf32>
    %17 = tpu.matmul %15, %16, %cst_9 {dimension_numbers = #tpu.dot_dimension_numbers<[1], [1], [0], [0], [0, 0, 1, 0], [], []>} : vector<8x8xbf16>, vector<8x8xbf16>, vector<8x8xf32> -> vector<8x8xf32>
    %cst_10 = arith.constant 0.353553385 : f32
    %18 = vector.broadcast %cst_10 : f32 to vector<8x8xf32>
    %19 = arith.mulf %17, %18 : vector<8x8xf32>
    %20 = arith.addf %19, %8 : vector<8x8xf32>
    %cst_11 = arith.constant dense<0xFF800000> : vector<8xf32>
    %21 = vector.multi_reduction <maximumf>, %20, %cst_11 [1] : vector<8x8xf32> to vector<8xf32>
    %22 = vector.shape_cast %21 : vector<8xf32> to vector<8x1xf32>
    %23 = vector.broadcast %22 : vector<8x1xf32> to vector<8x8xf32>
    %24 = arith.subf %20, %23 : vector<8x8xf32>
    %25 = math.exp %24 : vector<8x8xf32>
    %cst_12 = arith.constant dense<0.000000e+00> : vector<8xf32>
    %26 = vector.multi_reduction <add>, %25, %cst_12 [1] : vector<8x8xf32> to vector<8xf32>
    %27 = vector.shape_cast %26 : vector<8xf32> to vector<8x1xf32>
    %28 = tpu.reciprocal %27 {approx = true} : vector<8x1xf32> -> vector<8x1xf32>
    %29 = vector.broadcast %28 : vector<8x1xf32> to vector<8x8xf32>
    %30 = arith.mulf %25, %29 : vector<8x8xf32>
    %31 = arith.truncf %30 : vector<8x8xf32> to vector<8x8xbf16>
    %32 = vector.extract_strided_slice %14 {offsets = [0, 0], sizes = [8, 8], strides = [1, 1]} : vector<8x32xbf16> to vector<8x8xbf16>
    %cst_13 = arith.constant dense<0.000000e+00> : vector<8x8xf32>
    %33 = tpu.matmul %31, %32, %cst_13 {dimension_numbers = #tpu.dot_dimension_numbers<[1], [0], [0], [1], [0, 0, 1, 1], [], []>} : vector<8x8xbf16>, vector<8x8xbf16>, vector<8x8xf32> -> vector<8x8xf32>
    %34 = arith.truncf %33 : vector<8x8xf32> to vector<8x8xbf16>
    %c0_14 = arith.constant 0 : index
    %c0_15 = arith.constant 0 : index
    %35 = vector.load %arg5[%c0_14, %c0_15] : memref<32x32xbf16, #tpu.memory_space<vmem>>, vector<8x32xbf16>
    %cst_16 = arith.constant dense<0.000000e+00> : vector<8x32xf32>
    %36 = tpu.matmul %34, %35, %cst_16 {dimension_numbers = #tpu.dot_dimension_numbers<[1], [0], [0], [1], [0, 0, 1, 1], [], []>} : vector<8x8xbf16>, vector<8x32xbf16>, vector<8x32xf32> -> vector<8x32xf32>
    %37 = vector.extract_strided_slice %12 {offsets = [0, 8], sizes = [8, 8], strides = [1, 1]} : vector<8x32xbf16> to vector<8x8xbf16>
    %38 = vector.extract_strided_slice %13 {offsets = [0, 8], sizes = [8, 8], strides = [1, 1]} : vector<8x32xbf16> to vector<8x8xbf16>
    %cst_17 = arith.constant dense<0.000000e+00> : vector<8x8xf32>
    %39 = tpu.matmul %37, %38, %cst_17 {dimension_numbers = #tpu.dot_dimension_numbers<[1], [1], [0], [0], [0, 0, 1, 0], [], []>} : vector<8x8xbf16>, vector<8x8xbf16>, vector<8x8xf32> -> vector<8x8xf32>
    %cst_18 = arith.constant 0.353553385 : f32
    %40 = vector.broadcast %cst_18 : f32 to vector<8x8xf32>
    %41 = arith.mulf %39, %40 : vector<8x8xf32>
    %42 = arith.addf %41, %8 : vector<8x8xf32>
    %cst_19 = arith.constant dense<0xFF800000> : vector<8xf32>
    %43 = vector.multi_reduction <maximumf>, %42, %cst_19 [1] : vector<8x8xf32> to vector<8xf32>
    %44 = vector.shape_cast %43 : vector<8xf32> to vector<8x1xf32>
    %45 = vector.broadcast %44 : vector<8x1xf32> to vector<8x8xf32>
    %46 = arith.subf %42, %45 : vector<8x8xf32>
    %47 = math.exp %46 : vector<8x8xf32>
    %cst_20 = arith.constant dense<0.000000e+00> : vector<8xf32>
    %48 = vector.multi_reduction <add>, %47, %cst_20 [1] : vector<8x8xf32> to vector<8xf32>
    %49 = vector.shape_cast %48 : vector<8xf32> to vector<8x1xf32>
    %50 = tpu.reciprocal %49 {approx = true} : vector<8x1xf32> -> vector<8x1xf32>
    %51 = vector.broadcast %50 : vector<8x1xf32> to vector<8x8xf32>
    %52 = arith.mulf %47, %51 : vector<8x8xf32>
    %53 = arith.truncf %52 : vector<8x8xf32> to vector<8x8xbf16>
    %54 = vector.extract_strided_slice %14 {offsets = [0, 8], sizes = [8, 8], strides = [1, 1]} : vector<8x32xbf16> to vector<8x8xbf16>
    %cst_21 = arith.constant dense<0.000000e+00> : vector<8x8xf32>
    %55 = tpu.matmul %53, %54, %cst_21 {dimension_numbers = #tpu.dot_dimension_numbers<[1], [0], [0], [1], [0, 0, 1, 1], [], []>} : vector<8x8xbf16>, vector<8x8xbf16>, vector<8x8xf32> -> vector<8x8xf32>
    %56 = arith.truncf %55 : vector<8x8xf32> to vector<8x8xbf16>
    %c8 = arith.constant 8 : index
    %c0_22 = arith.constant 0 : index
    %57 = vector.load %arg5[%c8, %c0_22] : memref<32x32xbf16, #tpu.memory_space<vmem>>, vector<8x32xbf16>
    %cst_23 = arith.constant dense<0.000000e+00> : vector<8x32xf32>
    %58 = tpu.matmul %56, %57, %cst_23 {dimension_numbers = #tpu.dot_dimension_numbers<[1], [0], [0], [1], [0, 0, 1, 1], [], []>} : vector<8x8xbf16>, vector<8x32xbf16>, vector<8x32xf32> -> vector<8x32xf32>
    %59 = arith.addf %36, %58 : vector<8x32xf32>
    %60 = vector.extract_strided_slice %12 {offsets = [0, 16], sizes = [8, 8], strides = [1, 1]} : vector<8x32xbf16> to vector<8x8xbf16>
    %61 = vector.extract_strided_slice %13 {offsets = [0, 16], sizes = [8, 8], strides = [1, 1]} : vector<8x32xbf16> to vector<8x8xbf16>
    %cst_24 = arith.constant dense<0.000000e+00> : vector<8x8xf32>
    %62 = tpu.matmul %60, %61, %cst_24 {dimension_numbers = #tpu.dot_dimension_numbers<[1], [1], [0], [0], [0, 0, 1, 0], [], []>} : vector<8x8xbf16>, vector<8x8xbf16>, vector<8x8xf32> -> vector<8x8xf32>
    %cst_25 = arith.constant 0.353553385 : f32
    %63 = vector.broadcast %cst_25 : f32 to vector<8x8xf32>
    %64 = arith.mulf %62, %63 : vector<8x8xf32>
    %65 = arith.addf %64, %8 : vector<8x8xf32>
    %cst_26 = arith.constant dense<0xFF800000> : vector<8xf32>
    %66 = vector.multi_reduction <maximumf>, %65, %cst_26 [1] : vector<8x8xf32> to vector<8xf32>
    %67 = vector.shape_cast %66 : vector<8xf32> to vector<8x1xf32>
    %68 = vector.broadcast %67 : vector<8x1xf32> to vector<8x8xf32>
    %69 = arith.subf %65, %68 : vector<8x8xf32>
    %70 = math.exp %69 : vector<8x8xf32>
    %cst_27 = arith.constant dense<0.000000e+00> : vector<8xf32>
    %71 = vector.multi_reduction <add>, %70, %cst_27 [1] : vector<8x8xf32> to vector<8xf32>
    %72 = vector.shape_cast %71 : vector<8xf32> to vector<8x1xf32>
    %73 = tpu.reciprocal %72 {approx = true} : vector<8x1xf32> -> vector<8x1xf32>
    %74 = vector.broadcast %73 : vector<8x1xf32> to vector<8x8xf32>
    %75 = arith.mulf %70, %74 : vector<8x8xf32>
    %76 = arith.truncf %75 : vector<8x8xf32> to vector<8x8xbf16>
    %77 = vector.extract_strided_slice %14 {offsets = [0, 16], sizes = [8, 8], strides = [1, 1]} : vector<8x32xbf16> to vector<8x8xbf16>
    %cst_28 = arith.constant dense<0.000000e+00> : vector<8x8xf32>
    %78 = tpu.matmul %76, %77, %cst_28 {dimension_numbers = #tpu.dot_dimension_numbers<[1], [0], [0], [1], [0, 0, 1, 1], [], []>} : vector<8x8xbf16>, vector<8x8xbf16>, vector<8x8xf32> -> vector<8x8xf32>
    %79 = arith.truncf %78 : vector<8x8xf32> to vector<8x8xbf16>
    %c16 = arith.constant 16 : index
    %c0_29 = arith.constant 0 : index
    %80 = vector.load %arg5[%c16, %c0_29] : memref<32x32xbf16, #tpu.memory_space<vmem>>, vector<8x32xbf16>
    %cst_30 = arith.constant dense<0.000000e+00> : vector<8x32xf32>
    %81 = tpu.matmul %79, %80, %cst_30 {dimension_numbers = #tpu.dot_dimension_numbers<[1], [0], [0], [1], [0, 0, 1, 1], [], []>} : vector<8x8xbf16>, vector<8x32xbf16>, vector<8x32xf32> -> vector<8x32xf32>
    %82 = arith.addf %59, %81 : vector<8x32xf32>
    %83 = vector.extract_strided_slice %12 {offsets = [0, 24], sizes = [8, 8], strides = [1, 1]} : vector<8x32xbf16> to vector<8x8xbf16>
    %84 = vector.extract_strided_slice %13 {offsets = [0, 24], sizes = [8, 8], strides = [1, 1]} : vector<8x32xbf16> to vector<8x8xbf16>
    %cst_31 = arith.constant dense<0.000000e+00> : vector<8x8xf32>
    %85 = tpu.matmul %83, %84, %cst_31 {dimension_numbers = #tpu.dot_dimension_numbers<[1], [1], [0], [0], [0, 0, 1, 0], [], []>} : vector<8x8xbf16>, vector<8x8xbf16>, vector<8x8xf32> -> vector<8x8xf32>
    %cst_32 = arith.constant 0.353553385 : f32
    %86 = vector.broadcast %cst_32 : f32 to vector<8x8xf32>
    %87 = arith.mulf %85, %86 : vector<8x8xf32>
    %88 = arith.addf %87, %8 : vector<8x8xf32>
    %cst_33 = arith.constant dense<0xFF800000> : vector<8xf32>
    %89 = vector.multi_reduction <maximumf>, %88, %cst_33 [1] : vector<8x8xf32> to vector<8xf32>
    %90 = vector.shape_cast %89 : vector<8xf32> to vector<8x1xf32>
    %91 = vector.broadcast %90 : vector<8x1xf32> to vector<8x8xf32>
    %92 = arith.subf %88, %91 : vector<8x8xf32>
    %93 = math.exp %92 : vector<8x8xf32>
    %cst_34 = arith.constant dense<0.000000e+00> : vector<8xf32>
    %94 = vector.multi_reduction <add>, %93, %cst_34 [1] : vector<8x8xf32> to vector<8xf32>
    %95 = vector.shape_cast %94 : vector<8xf32> to vector<8x1xf32>
    %96 = tpu.reciprocal %95 {approx = true} : vector<8x1xf32> -> vector<8x1xf32>
    %97 = vector.broadcast %96 : vector<8x1xf32> to vector<8x8xf32>
    %98 = arith.mulf %93, %97 : vector<8x8xf32>
    %99 = arith.truncf %98 : vector<8x8xf32> to vector<8x8xbf16>
    %100 = vector.extract_strided_slice %14 {offsets = [0, 24], sizes = [8, 8], strides = [1, 1]} : vector<8x32xbf16> to vector<8x8xbf16>
    %cst_35 = arith.constant dense<0.000000e+00> : vector<8x8xf32>
    %101 = tpu.matmul %99, %100, %cst_35 {dimension_numbers = #tpu.dot_dimension_numbers<[1], [0], [0], [1], [0, 0, 1, 1], [], []>} : vector<8x8xbf16>, vector<8x8xbf16>, vector<8x8xf32> -> vector<8x8xf32>
    %102 = arith.truncf %101 : vector<8x8xf32> to vector<8x8xbf16>
    %c24 = arith.constant 24 : index
    %c0_36 = arith.constant 0 : index
    %103 = vector.load %arg5[%c24, %c0_36] : memref<32x32xbf16, #tpu.memory_space<vmem>>, vector<8x32xbf16>
    %cst_37 = arith.constant dense<0.000000e+00> : vector<8x32xf32>
    %104 = tpu.matmul %102, %103, %cst_37 {dimension_numbers = #tpu.dot_dimension_numbers<[1], [0], [0], [1], [0, 0, 1, 1], [], []>} : vector<8x8xbf16>, vector<8x32xbf16>, vector<8x32xf32> -> vector<8x32xf32>
    %105 = arith.addf %82, %104 : vector<8x32xf32>
    %c0_38 = arith.constant 0 : index
    %c0_39 = arith.constant 0 : index
    %106 = vector.load %arg6[%c0_38, %c0_39] : memref<1x32xf32, #tpu.memory_space<vmem>>, vector<1x32xf32>
    %107 = vector.broadcast %106 : vector<1x32xf32> to vector<8x32xf32>
    %108 = arith.addf %105, %107 : vector<8x32xf32>
    %109 = arith.extf %1 : vector<8x32xbf16> to vector<8x32xf32>
    %110 = arith.addf %108, %109 : vector<8x32xf32>
    %c0_40 = arith.constant 0 : index
    %c0_41 = arith.constant 0 : index
    %111 = vector.load %arg7[%c0_40, %c0_41] : memref<1x32xf32, #tpu.memory_space<vmem>>, vector<1x32xf32>
    %c0_42 = arith.constant 0 : index
    %c0_43 = arith.constant 0 : index
    %112 = vector.load %arg8[%c0_42, %c0_43] : memref<1x32xf32, #tpu.memory_space<vmem>>, vector<1x32xf32>
    %cst_44 = arith.constant dense<0.000000e+00> : vector<8xf32>
    %113 = vector.multi_reduction <add>, %110, %cst_44 [1] : vector<8x32xf32> to vector<8xf32>
    %114 = vector.shape_cast %113 : vector<8xf32> to vector<8x1xf32>
    %cst_45 = arith.constant 3.200000e+01 : f32
    %115 = vector.broadcast %cst_45 : f32 to vector<8x1xf32>
    %116 = arith.divf %114, %115 : vector<8x1xf32>
    %117 = vector.broadcast %116 : vector<8x1xf32> to vector<8x32xf32>
    %118 = arith.subf %110, %117 : vector<8x32xf32>
    %119 = arith.mulf %118, %118 : vector<8x32xf32>
    %cst_46 = arith.constant dense<0.000000e+00> : vector<8xf32>
    %120 = vector.multi_reduction <add>, %119, %cst_46 [1] : vector<8x32xf32> to vector<8xf32>
    %121 = vector.shape_cast %120 : vector<8xf32> to vector<8x1xf32>
    %cst_47 = arith.constant 3.200000e+01 : f32
    %122 = vector.broadcast %cst_47 : f32 to vector<8x1xf32>
    %123 = arith.divf %121, %122 : vector<8x1xf32>
    %cst_48 = arith.constant 9.99999974E-6 : f32
    %124 = vector.broadcast %cst_48 : f32 to vector<8x1xf32>
    %125 = arith.addf %123, %124 : vector<8x1xf32>
    %126 = math.rsqrt %125 : vector<8x1xf32>
    %127 = vector.broadcast %126 : vector<8x1xf32> to vector<8x32xf32>
    %128 = arith.mulf %118, %127 : vector<8x32xf32>
    %129 = vector.broadcast %111 : vector<1x32xf32> to vector<8x32xf32>
    %130 = arith.mulf %128, %129 : vector<8x32xf32>
    %131 = vector.broadcast %112 : vector<1x32xf32> to vector<8x32xf32>
    %132 = arith.addf %130, %131 : vector<8x32xf32>
    %133 = arith.truncf %132 : vector<8x32xf32> to vector<8x32xbf16>
    %c0_49 = arith.constant 0 : index
    %c0_50 = arith.constant 0 : index
    %134 = vector.load %arg9[%c0_49, %c0_50] : memref<32x64xbf16, #tpu.memory_space<vmem>>, vector<32x64xbf16>
    %cst_51 = arith.constant dense<0.000000e+00> : vector<8x64xf32>
    %135 = tpu.matmul %133, %134, %cst_51 {dimension_numbers = #tpu.dot_dimension_numbers<[1], [0], [0], [1], [0, 0, 1, 1], [], []>} : vector<8x32xbf16>, vector<32x64xbf16>, vector<8x64xf32> -> vector<8x64xf32>
    %c0_52 = arith.constant 0 : index
    %c0_53 = arith.constant 0 : index
    %136 = vector.load %arg10[%c0_52, %c0_53] : memref<1x64xf32, #tpu.memory_space<vmem>>, vector<1x64xf32>
    %137 = vector.broadcast %136 : vector<1x64xf32> to vector<8x64xf32>
    %138 = arith.addf %135, %137 : vector<8x64xf32>
    %cst_54 = arith.constant 0.000000e+00 : f32
    %139 = vector.broadcast %cst_54 : f32 to vector<8x64xf32>
    %140 = arith.maximumf %138, %139 : vector<8x64xf32>
    %141 = arith.truncf %140 : vector<8x64xf32> to vector<8x64xbf16>
    %c0_55 = arith.constant 0 : index
    %c0_56 = arith.constant 0 : index
    %142 = vector.load %arg11[%c0_55, %c0_56] : memref<64x32xbf16, #tpu.memory_space<vmem>>, vector<64x32xbf16>
    %cst_57 = arith.constant dense<0.000000e+00> : vector<8x32xf32>
    %143 = tpu.matmul %141, %142, %cst_57 {dimension_numbers = #tpu.dot_dimension_numbers<[1], [0], [0], [1], [0, 0, 1, 1], [], []>} : vector<8x64xbf16>, vector<64x32xbf16>, vector<8x32xf32> -> vector<8x32xf32>
    %c0_58 = arith.constant 0 : index
    %c0_59 = arith.constant 0 : index
    %144 = vector.load %arg12[%c0_58, %c0_59] : memref<1x32xf32, #tpu.memory_space<vmem>>, vector<1x32xf32>
    %145 = vector.broadcast %144 : vector<1x32xf32> to vector<8x32xf32>
    %146 = arith.addf %143, %145 : vector<8x32xf32>
    %147 = arith.addf %146, %132 : vector<8x32xf32>
    %c0_60 = arith.constant 0 : index
    %c0_61 = arith.constant 0 : index
    %148 = vector.load %arg13[%c0_60, %c0_61] : memref<1x32xf32, #tpu.memory_space<vmem>>, vector<1x32xf32>
    %c0_62 = arith.constant 0 : index
    %c0_63 = arith.constant 0 : index
    %149 = vector.load %arg14[%c0_62, %c0_63] : memref<1x32xf32, #tpu.memory_space<vmem>>, vector<1x32xf32>
    %cst_64 = arith.constant dense<0.000000e+00> : vector<8xf32>
    %150 = vector.multi_reduction <add>, %147, %cst_64 [1] : vector<8x32xf32> to vector<8xf32>
    %151 = vector.shape_cast %150 : vector<8xf32> to vector<8x1xf32>
    %cst_65 = arith.constant 3.200000e+01 : f32
    %152 = vector.broadcast %cst_65 : f32 to vector<8x1xf32>
    %153 = arith.divf %151, %152 : vector<8x1xf32>
    %154 = vector.broadcast %153 : vector<8x1xf32> to vector<8x32xf32>
    %155 = arith.subf %147, %154 : vector<8x32xf32>
    %156 = arith.mulf %155, %155 : vector<8x32xf32>
    %cst_66 = arith.constant dense<0.000000e+00> : vector<8xf32>
    %157 = vector.multi_reduction <add>, %156, %cst_66 [1] : vector<8x32xf32> to vector<8xf32>
    %158 = vector.shape_cast %157 : vector<8xf32> to vector<8x1xf32>
    %cst_67 = arith.constant 3.200000e+01 : f32
    %159 = vector.broadcast %cst_67 : f32 to vector<8x1xf32>
    %160 = arith.divf %158, %159 : vector<8x1xf32>
    %cst_68 = arith.constant 9.99999974E-6 : f32
    %161 = vector.broadcast %cst_68 : f32 to vector<8x1xf32>
    %162 = arith.addf %160, %161 : vector<8x1xf32>
    %163 = math.rsqrt %162 : vector<8x1xf32>
    %164 = vector.broadcast %163 : vector<8x1xf32> to vector<8x32xf32>
    %165 = arith.mulf %155, %164 : vector<8x32xf32>
    %166 = vector.broadcast %148 : vector<1x32xf32> to vector<8x32xf32>
    %167 = arith.mulf %165, %166 : vector<8x32xf32>
    %168 = vector.broadcast %149 : vector<1x32xf32> to vector<8x32xf32>
    %169 = arith.addf %167, %168 : vector<8x32xf32>
    %170 = arith.truncf %169 : vector<8x32xf32> to vector<8x32xbf16>
    %c0_69 = arith.constant 0 : index
    %c0_70 = arith.constant 0 : index
    %c0_71 = arith.constant 0 : index
    %171 = vector.load %arg15[%c0_69, %c0_70, %c0_71] : memref<1x8x32xbf16, #tpu.memory_space<vmem>>, vector<1x8x32xbf16>
    %172 = vector.shape_cast %171 : vector<1x8x32xbf16> to vector<8x32xbf16>
    %173 = vector.shape_cast %170 : vector<8x32xbf16> to vector<1x8x32xbf16>
    tpu.vector_store %arg15[%c0_69, %c0_70, %c0_71], %173 {strides = array<i32>} : memref<1x8x32xbf16, #tpu.memory_space<vmem>>, vector<1x8x32xbf16>,
    return
  }
  func.func @transform_0(%arg0: i32) -> (i32, i32, i32) {
    %c0_i32 = arith.constant 0 : i32
    %c0_i32_0 = arith.constant 0 : i32
    %c0_i32_1 = arith.constant 0 : i32
    return %arg0, %c0_i32, %c0_i32_0 : i32, i32, i32
  }
  func.func @transform_1(%arg0: i32) -> (i32, i32, i32) {
    %c0_i32 = arith.constant 0 : i32
    %c0_i32_0 = arith.constant 0 : i32
    %c0_i32_1 = arith.constant 0 : i32
    return %arg0, %c0_i32, %c0_i32_0 : i32, i32, i32
  }
  func.func @transform_2(%arg0: i32) -> (i32, i32) {
    %c0_i32 = arith.constant 0 : i32
    %c0_i32_0 = arith.constant 0 : i32
    %c0_i32_1 = arith.constant 0 : i32
    return %c0_i32, %c0_i32_0 : i32, i32
  }
  func.func @transform_3(%arg0: i32) -> (i32, i32) {
    %c0_i32 = arith.constant 0 : i32
    %c0_i32_0 = arith.constant 0 : i32
    %c0_i32_1 = arith.constant 0 : i32
    return %c0_i32, %c0_i32_0 : i32, i32
  }
  func.func @transform_4(%arg0: i32) -> (i32, i32) {
    %c0_i32 = arith.constant 0 : i32
    %c0_i32_0 = arith.constant 0 : i32
    %c0_i32_1 = arith.constant 0 : i32
    return %c0_i32, %c0_i32_0 : i32, i32
  }
  func.func @transform_5(%arg0: i32) -> (i32, i32) {
    %c0_i32 = arith.constant 0 : i32
    %c0_i32_0 = arith.constant 0 : i32
    %c0_i32_1 = arith.constant 0 : i32
    return %c0_i32, %c0_i32_0 : i32, i32
  }
  func.func @transform_6(%arg0: i32) -> (i32, i32) {
    %c0_i32 = arith.constant 0 : i32
    %c0_i32_0 = arith.constant 0 : i32
    %c0_i32_1 = arith.constant 0 : i32
    return %c0_i32, %c0_i32_0 : i32, i32
  }
  func.func @transform_7(%arg0: i32) -> (i32, i32) {
    %c0_i32 = arith.constant 0 : i32
    %c0_i32_0 = arith.constant 0 : i32
    %c0_i32_1 = arith.constant 0 : i32
    return %c0_i32, %c0_i32_0 : i32, i32
  }
  func.func @transform_8(%arg0: i32) -> (i32, i32) {
    %c0_i32 = arith.constant 0 : i32
    %c0_i32_0 = arith.constant 0 : i32
    %c0_i32_1 = arith.constant 0 : i32
    return %c0_i32, %c0_i32_0 : i32, i32
  }
  func.func @transform_9(%arg0: i32) -> (i32, i32) {
    %c0_i32 = arith.constant 0 : i32
    %c0_i32_0 = arith.constant 0 : i32
    %c0_i32_1 = arith.constant 0 : i32
    return %c0_i32, %c0_i32_0 : i32, i32
  }
  func.func @transform_10(%arg0: i32) -> (i32, i32) {
    %c0_i32 = arith.constant 0 : i32
    %c0_i32_0 = arith.constant 0 : i32
    %c0_i32_1 = arith.constant 0 : i32
    return %c0_i32, %c0_i32_0 : i32, i32
  }
  func.func @transform_11(%arg0: i32) -> (i32, i32) {
    %c0_i32 = arith.constant 0 : i32
    %c0_i32_0 = arith.constant 0 : i32
    %c0_i32_1 = arith.constant 0 : i32
    return %c0_i32, %c0_i32_0 : i32, i32
  }
  func.func @transform_12(%arg0: i32) -> (i32, i32) {
    %c0_i32 = arith.constant 0 : i32
    %c0_i32_0 = arith.constant 0 : i32
    %c0_i32_1 = arith.constant 0 : i32
    return %c0_i32, %c0_i32_0 : i32, i32
  }
  func.func @transform_13(%arg0: i32) -> (i32, i32) {
    %c0_i32 = arith.constant 0 : i32
    %c0_i32_0 = arith.constant 0 : i32
    %c0_i32_1 = arith.constant 0 : i32
    return %c0_i32, %c0_i32_0 : i32, i32
  }
  func.func @transform_14(%arg0: i32) -> (i32, i32, i32) {
    %c0_i32 = arith.constant 0 : i32
    %c0_i32_0 = arith.constant 0 : i32
    %c0_i32_1 = arith.constant 0 : i32
    return %arg0, %c0_i32, %c0_i32_0 : i32, i32, i32
  }
}

module attributes {stable_mosaic.version = 11 : i64} {
  func.func @_decoder_layer_kernel(%arg0: i32, %arg1: memref<1x8x32xbf16, #tpu.memory_space<vmem>>, %arg2: memref<1x8x32xbf16, #tpu.memory_space<vmem>>, %arg3: memref<1x8x8xf32, #tpu.memory_space<vmem>>, %arg4: memref<1x8x8xf32, #tpu.memory_space<vmem>>, %arg5: memref<32x96xbf16, #tpu.memory_space<vmem>>, %arg6: memref<1x96xf32, #tpu.memory_space<vmem>>, %arg7: memref<32x32xbf16, #tpu.memory_space<vmem>>, %arg8: memref<1x32xf32, #tpu.memory_space<vmem>>, %arg9: memref<1x32xf32, #tpu.memory_space<vmem>>, %arg10: memref<1x32xf32, #tpu.memory_space<vmem>>, %arg11: memref<32x32xbf16, #tpu.memory_space<vmem>>, %arg12: memref<1x32xf32, #tpu.memory_space<vmem>>, %arg13: memref<32x64xbf16, #tpu.memory_space<vmem>>, %arg14: memref<1x64xf32, #tpu.memory_space<vmem>>, %arg15: memref<32x32xbf16, #tpu.memory_space<vmem>>, %arg16: memref<1x32xf32, #tpu.memory_space<vmem>>, %arg17: memref<1x32xf32, #tpu.memory_space<vmem>>, %arg18: memref<1x32xf32, #tpu.memory_space<vmem>>, %arg19: memref<32x64xbf16, #tpu.memory_space<vmem>>, %arg20: memref<1x64xf32, #tpu.memory_space<vmem>>, %arg21: memref<64x32xbf16, #tpu.memory_space<vmem>>, %arg22: memref<1x32xf32, #tpu.memory_space<vmem>>, %arg23: memref<1x32xf32, #tpu.memory_space<vmem>>, %arg24: memref<1x32xf32, #tpu.memory_space<vmem>>, %arg25: memref<1x8x32xbf16, #tpu.memory_space<vmem>>) attributes {dimension_semantics = [#tpu.dimension_semantics<parallel>], iteration_bounds = array<i64: 2>, scalar_prefetch = 0 : i64, scratch_operands = 0 : i64, tpu.core_type = #tpu.core_type<tc>, window_params = [{transform_indices = @transform_0, window_bounds = array<i64: 1, 8, 32>}, {transform_indices = @transform_1, window_bounds = array<i64: 1, 8, 32>}, {transform_indices = @transform_2, window_bounds = array<i64: 1, 8, 8>}, {transform_indices = @transform_3, window_bounds = array<i64: 1, 8, 8>}, {pipeline_mode = #tpu.pipeline_mode<synchronous>, transform_indices = @transform_4, window_bounds = array<i64: 32, 96>}, {pipeline_mode = #tpu.pipeline_mode<synchronous>, transform_indices = @transform_5, window_bounds = array<i64: 1, 96>}, {pipeline_mode = #tpu.pipeline_mode<synchronous>, transform_indices = @transform_6, window_bounds = array<i64: 32, 32>}, {pipeline_mode = #tpu.pipeline_mode<synchronous>, transform_indices = @transform_7, window_bounds = array<i64: 1, 32>}, {pipeline_mode = #tpu.pipeline_mode<synchronous>, transform_indices = @transform_8, window_bounds = array<i64: 1, 32>}, {pipeline_mode = #tpu.pipeline_mode<synchronous>, transform_indices = @transform_9, window_bounds = array<i64: 1, 32>}, {pipeline_mode = #tpu.pipeline_mode<synchronous>, transform_indices = @transform_10, window_bounds = array<i64: 32, 32>}, {pipeline_mode = #tpu.pipeline_mode<synchronous>, transform_indices = @transform_11, window_bounds = array<i64: 1, 32>}, {pipeline_mode = #tpu.pipeline_mode<synchronous>, transform_indices = @transform_12, window_bounds = array<i64: 32, 64>}, {pipeline_mode = #tpu.pipeline_mode<synchronous>, transform_indices = @transform_13, window_bounds = array<i64: 1, 64>}, {pipeline_mode = #tpu.pipeline_mode<synchronous>, transform_indices = @transform_14, window_bounds = array<i64: 32, 32>}, {pipeline_mode = #tpu.pipeline_mode<synchronous>, transform_indices = @transform_15, window_bounds = array<i64: 1, 32>}, {pipeline_mode = #tpu.pipeline_mode<synchronous>, transform_indices = @transform_16, window_bounds = array<i64: 1, 32>}, {pipeline_mode = #tpu.pipeline_mode<synchronous>, transform_indices = @transform_17, window_bounds = array<i64: 1, 32>}, {pipeline_mode = #tpu.pipeline_mode<synchronous>, transform_indices = @transform_18, window_bounds = array<i64: 32, 64>}, {pipeline_mode = #tpu.pipeline_mode<synchronous>, transform_indices = @transform_19, window_bounds = array<i64: 1, 64>}, {pipeline_mode = #tpu.pipeline_mode<synchronous>, transform_indices = @transform_20, window_bounds = array<i64: 64, 32>}, {pipeline_mode = #tpu.pipeline_mode<synchronous>, transform_indices = @transform_21, window_bounds = array<i64: 1, 32>}, {pipeline_mode = #tpu.pipeline_mode<synchronous>, transform_indices = @transform_22, window_bounds = array<i64: 1, 32>}, {pipeline_mode = #tpu.pipeline_mode<synchronous>, transform_indices = @transform_23, window_bounds = array<i64: 1, 32>}, {transform_indices = @transform_24, window_bounds = array<i64: 1, 8, 32>}]} {
    %c0 = arith.constant 0 : index
    %c0_0 = arith.constant 0 : index
    %c0_1 = arith.constant 0 : index
    %0 = vector.load %arg1[%c0, %c0_0, %c0_1] : memref<1x8x32xbf16, #tpu.memory_space<vmem>>, vector<1x8x32xbf16>
    %1 = vector.shape_cast %0 : vector<1x8x32xbf16> to vector<8x32xbf16>
    %c0_2 = arith.constant 0 : index
    %c0_3 = arith.constant 0 : index
    %c0_4 = arith.constant 0 : index
    %2 = vector.load %arg2[%c0_2, %c0_3, %c0_4] : memref<1x8x32xbf16, #tpu.memory_space<vmem>>, vector<1x8x32xbf16>
    %3 = vector.shape_cast %2 : vector<1x8x32xbf16> to vector<8x32xbf16>
    %c0_5 = arith.constant 0 : index
    %c0_6 = arith.constant 0 : index
    %4 = vector.load %arg5[%c0_5, %c0_6] : memref<32x96xbf16, #tpu.memory_space<vmem>>, vector<32x96xbf16>
    %cst = arith.constant dense<0.000000e+00> : vector<8x96xf32>
    %5 = tpu.matmul %1, %4, %cst {dimension_numbers = #tpu.dot_dimension_numbers<[1], [0], [0], [1], [0, 0, 1, 1], [], []>} : vector<8x32xbf16>, vector<32x96xbf16>, vector<8x96xf32> -> vector<8x96xf32>
    %c0_7 = arith.constant 0 : index
    %c0_8 = arith.constant 0 : index
    %6 = vector.load %arg6[%c0_7, %c0_8] : memref<1x96xf32, #tpu.memory_space<vmem>>, vector<1x96xf32>
    %7 = vector.broadcast %6 : vector<1x96xf32> to vector<8x96xf32>
    %8 = arith.addf %5, %7 : vector<8x96xf32>
    %c0_9 = arith.constant 0 : index
    %c0_10 = arith.constant 0 : index
    %c0_11 = arith.constant 0 : index
    %9 = vector.load %arg3[%c0_9, %c0_10, %c0_11] : memref<1x8x8xf32, #tpu.memory_space<vmem>>, vector<1x8x8xf32>
    %10 = vector.shape_cast %9 : vector<1x8x8xf32> to vector<8x8xf32>
    %11 = vector.extract_strided_slice %8 {offsets = [0, 0], sizes = [8, 32], strides = [1, 1]} : vector<8x96xf32> to vector<8x32xf32>
    %12 = vector.extract_strided_slice %8 {offsets = [0, 32], sizes = [8, 32], strides = [1, 1]} : vector<8x96xf32> to vector<8x32xf32>
    %13 = vector.extract_strided_slice %8 {offsets = [0, 64], sizes = [8, 32], strides = [1, 1]} : vector<8x96xf32> to vector<8x32xf32>
    %14 = arith.truncf %11 : vector<8x32xf32> to vector<8x32xbf16>
    %15 = arith.truncf %12 : vector<8x32xf32> to vector<8x32xbf16>
    %16 = arith.truncf %13 : vector<8x32xf32> to vector<8x32xbf16>
    %17 = vector.extract_strided_slice %14 {offsets = [0, 0], sizes = [8, 8], strides = [1, 1]} : vector<8x32xbf16> to vector<8x8xbf16>
    %18 = vector.extract_strided_slice %15 {offsets = [0, 0], sizes = [8, 8], strides = [1, 1]} : vector<8x32xbf16> to vector<8x8xbf16>
    %cst_12 = arith.constant dense<0.000000e+00> : vector<8x8xf32>
    %19 = tpu.matmul %17, %18, %cst_12 {dimension_numbers = #tpu.dot_dimension_numbers<[1], [1], [0], [0], [0, 0, 1, 0], [], []>} : vector<8x8xbf16>, vector<8x8xbf16>, vector<8x8xf32> -> vector<8x8xf32>
    %cst_13 = arith.constant 0.353553385 : f32
    %20 = vector.broadcast %cst_13 : f32 to vector<8x8xf32>
    %21 = arith.mulf %19, %20 : vector<8x8xf32>
    %22 = arith.addf %21, %10 : vector<8x8xf32>
    %cst_14 = arith.constant dense<0xFF800000> : vector<8xf32>
    %23 = vector.multi_reduction <maximumf>, %22, %cst_14 [1] : vector<8x8xf32> to vector<8xf32>
    %24 = vector.shape_cast %23 : vector<8xf32> to vector<8x1xf32>
    %25 = vector.broadcast %24 : vector<8x1xf32> to vector<8x8xf32>
    %26 = arith.subf %22, %25 : vector<8x8xf32>
    %27 = math.exp %26 : vector<8x8xf32>
    %cst_15 = arith.constant dense<0.000000e+00> : vector<8xf32>
    %28 = vector.multi_reduction <add>, %27, %cst_15 [1] : vector<8x8xf32> to vector<8xf32>
    %29 = vector.shape_cast %28 : vector<8xf32> to vector<8x1xf32>
    %30 = tpu.reciprocal %29 {approx = true} : vector<8x1xf32> -> vector<8x1xf32>
    %31 = vector.broadcast %30 : vector<8x1xf32> to vector<8x8xf32>
    %32 = arith.mulf %27, %31 : vector<8x8xf32>
    %33 = arith.truncf %32 : vector<8x8xf32> to vector<8x8xbf16>
    %34 = vector.extract_strided_slice %16 {offsets = [0, 0], sizes = [8, 8], strides = [1, 1]} : vector<8x32xbf16> to vector<8x8xbf16>
    %cst_16 = arith.constant dense<0.000000e+00> : vector<8x8xf32>
    %35 = tpu.matmul %33, %34, %cst_16 {dimension_numbers = #tpu.dot_dimension_numbers<[1], [0], [0], [1], [0, 0, 1, 1], [], []>} : vector<8x8xbf16>, vector<8x8xbf16>, vector<8x8xf32> -> vector<8x8xf32>
    %36 = arith.truncf %35 : vector<8x8xf32> to vector<8x8xbf16>
    %c0_17 = arith.constant 0 : index
    %c0_18 = arith.constant 0 : index
    %37 = vector.load %arg7[%c0_17, %c0_18] : memref<32x32xbf16, #tpu.memory_space<vmem>>, vector<8x32xbf16>
    %cst_19 = arith.constant dense<0.000000e+00> : vector<8x32xf32>
    %38 = tpu.matmul %36, %37, %cst_19 {dimension_numbers = #tpu.dot_dimension_numbers<[1], [0], [0], [1], [0, 0, 1, 1], [], []>} : vector<8x8xbf16>, vector<8x32xbf16>, vector<8x32xf32> -> vector<8x32xf32>
    %39 = vector.extract_strided_slice %14 {offsets = [0, 8], sizes = [8, 8], strides = [1, 1]} : vector<8x32xbf16> to vector<8x8xbf16>
    %40 = vector.extract_strided_slice %15 {offsets = [0, 8], sizes = [8, 8], strides = [1, 1]} : vector<8x32xbf16> to vector<8x8xbf16>
    %cst_20 = arith.constant dense<0.000000e+00> : vector<8x8xf32>
    %41 = tpu.matmul %39, %40, %cst_20 {dimension_numbers = #tpu.dot_dimension_numbers<[1], [1], [0], [0], [0, 0, 1, 0], [], []>} : vector<8x8xbf16>, vector<8x8xbf16>, vector<8x8xf32> -> vector<8x8xf32>
    %cst_21 = arith.constant 0.353553385 : f32
    %42 = vector.broadcast %cst_21 : f32 to vector<8x8xf32>
    %43 = arith.mulf %41, %42 : vector<8x8xf32>
    %44 = arith.addf %43, %10 : vector<8x8xf32>
    %cst_22 = arith.constant dense<0xFF800000> : vector<8xf32>
    %45 = vector.multi_reduction <maximumf>, %44, %cst_22 [1] : vector<8x8xf32> to vector<8xf32>
    %46 = vector.shape_cast %45 : vector<8xf32> to vector<8x1xf32>
    %47 = vector.broadcast %46 : vector<8x1xf32> to vector<8x8xf32>
    %48 = arith.subf %44, %47 : vector<8x8xf32>
    %49 = math.exp %48 : vector<8x8xf32>
    %cst_23 = arith.constant dense<0.000000e+00> : vector<8xf32>
    %50 = vector.multi_reduction <add>, %49, %cst_23 [1] : vector<8x8xf32> to vector<8xf32>
    %51 = vector.shape_cast %50 : vector<8xf32> to vector<8x1xf32>
    %52 = tpu.reciprocal %51 {approx = true} : vector<8x1xf32> -> vector<8x1xf32>
    %53 = vector.broadcast %52 : vector<8x1xf32> to vector<8x8xf32>
    %54 = arith.mulf %49, %53 : vector<8x8xf32>
    %55 = arith.truncf %54 : vector<8x8xf32> to vector<8x8xbf16>
    %56 = vector.extract_strided_slice %16 {offsets = [0, 8], sizes = [8, 8], strides = [1, 1]} : vector<8x32xbf16> to vector<8x8xbf16>
    %cst_24 = arith.constant dense<0.000000e+00> : vector<8x8xf32>
    %57 = tpu.matmul %55, %56, %cst_24 {dimension_numbers = #tpu.dot_dimension_numbers<[1], [0], [0], [1], [0, 0, 1, 1], [], []>} : vector<8x8xbf16>, vector<8x8xbf16>, vector<8x8xf32> -> vector<8x8xf32>
    %58 = arith.truncf %57 : vector<8x8xf32> to vector<8x8xbf16>
    %c8 = arith.constant 8 : index
    %c0_25 = arith.constant 0 : index
    %59 = vector.load %arg7[%c8, %c0_25] : memref<32x32xbf16, #tpu.memory_space<vmem>>, vector<8x32xbf16>
    %cst_26 = arith.constant dense<0.000000e+00> : vector<8x32xf32>
    %60 = tpu.matmul %58, %59, %cst_26 {dimension_numbers = #tpu.dot_dimension_numbers<[1], [0], [0], [1], [0, 0, 1, 1], [], []>} : vector<8x8xbf16>, vector<8x32xbf16>, vector<8x32xf32> -> vector<8x32xf32>
    %61 = arith.addf %38, %60 : vector<8x32xf32>
    %62 = vector.extract_strided_slice %14 {offsets = [0, 16], sizes = [8, 8], strides = [1, 1]} : vector<8x32xbf16> to vector<8x8xbf16>
    %63 = vector.extract_strided_slice %15 {offsets = [0, 16], sizes = [8, 8], strides = [1, 1]} : vector<8x32xbf16> to vector<8x8xbf16>
    %cst_27 = arith.constant dense<0.000000e+00> : vector<8x8xf32>
    %64 = tpu.matmul %62, %63, %cst_27 {dimension_numbers = #tpu.dot_dimension_numbers<[1], [1], [0], [0], [0, 0, 1, 0], [], []>} : vector<8x8xbf16>, vector<8x8xbf16>, vector<8x8xf32> -> vector<8x8xf32>
    %cst_28 = arith.constant 0.353553385 : f32
    %65 = vector.broadcast %cst_28 : f32 to vector<8x8xf32>
    %66 = arith.mulf %64, %65 : vector<8x8xf32>
    %67 = arith.addf %66, %10 : vector<8x8xf32>
    %cst_29 = arith.constant dense<0xFF800000> : vector<8xf32>
    %68 = vector.multi_reduction <maximumf>, %67, %cst_29 [1] : vector<8x8xf32> to vector<8xf32>
    %69 = vector.shape_cast %68 : vector<8xf32> to vector<8x1xf32>
    %70 = vector.broadcast %69 : vector<8x1xf32> to vector<8x8xf32>
    %71 = arith.subf %67, %70 : vector<8x8xf32>
    %72 = math.exp %71 : vector<8x8xf32>
    %cst_30 = arith.constant dense<0.000000e+00> : vector<8xf32>
    %73 = vector.multi_reduction <add>, %72, %cst_30 [1] : vector<8x8xf32> to vector<8xf32>
    %74 = vector.shape_cast %73 : vector<8xf32> to vector<8x1xf32>
    %75 = tpu.reciprocal %74 {approx = true} : vector<8x1xf32> -> vector<8x1xf32>
    %76 = vector.broadcast %75 : vector<8x1xf32> to vector<8x8xf32>
    %77 = arith.mulf %72, %76 : vector<8x8xf32>
    %78 = arith.truncf %77 : vector<8x8xf32> to vector<8x8xbf16>
    %79 = vector.extract_strided_slice %16 {offsets = [0, 16], sizes = [8, 8], strides = [1, 1]} : vector<8x32xbf16> to vector<8x8xbf16>
    %cst_31 = arith.constant dense<0.000000e+00> : vector<8x8xf32>
    %80 = tpu.matmul %78, %79, %cst_31 {dimension_numbers = #tpu.dot_dimension_numbers<[1], [0], [0], [1], [0, 0, 1, 1], [], []>} : vector<8x8xbf16>, vector<8x8xbf16>, vector<8x8xf32> -> vector<8x8xf32>
    %81 = arith.truncf %80 : vector<8x8xf32> to vector<8x8xbf16>
    %c16 = arith.constant 16 : index
    %c0_32 = arith.constant 0 : index
    %82 = vector.load %arg7[%c16, %c0_32] : memref<32x32xbf16, #tpu.memory_space<vmem>>, vector<8x32xbf16>
    %cst_33 = arith.constant dense<0.000000e+00> : vector<8x32xf32>
    %83 = tpu.matmul %81, %82, %cst_33 {dimension_numbers = #tpu.dot_dimension_numbers<[1], [0], [0], [1], [0, 0, 1, 1], [], []>} : vector<8x8xbf16>, vector<8x32xbf16>, vector<8x32xf32> -> vector<8x32xf32>
    %84 = arith.addf %61, %83 : vector<8x32xf32>
    %85 = vector.extract_strided_slice %14 {offsets = [0, 24], sizes = [8, 8], strides = [1, 1]} : vector<8x32xbf16> to vector<8x8xbf16>
    %86 = vector.extract_strided_slice %15 {offsets = [0, 24], sizes = [8, 8], strides = [1, 1]} : vector<8x32xbf16> to vector<8x8xbf16>
    %cst_34 = arith.constant dense<0.000000e+00> : vector<8x8xf32>
    %87 = tpu.matmul %85, %86, %cst_34 {dimension_numbers = #tpu.dot_dimension_numbers<[1], [1], [0], [0], [0, 0, 1, 0], [], []>} : vector<8x8xbf16>, vector<8x8xbf16>, vector<8x8xf32> -> vector<8x8xf32>
    %cst_35 = arith.constant 0.353553385 : f32
    %88 = vector.broadcast %cst_35 : f32 to vector<8x8xf32>
    %89 = arith.mulf %87, %88 : vector<8x8xf32>
    %90 = arith.addf %89, %10 : vector<8x8xf32>
    %cst_36 = arith.constant dense<0xFF800000> : vector<8xf32>
    %91 = vector.multi_reduction <maximumf>, %90, %cst_36 [1] : vector<8x8xf32> to vector<8xf32>
    %92 = vector.shape_cast %91 : vector<8xf32> to vector<8x1xf32>
    %93 = vector.broadcast %92 : vector<8x1xf32> to vector<8x8xf32>
    %94 = arith.subf %90, %93 : vector<8x8xf32>
    %95 = math.exp %94 : vector<8x8xf32>
    %cst_37 = arith.constant dense<0.000000e+00> : vector<8xf32>
    %96 = vector.multi_reduction <add>, %95, %cst_37 [1] : vector<8x8xf32> to vector<8xf32>
    %97 = vector.shape_cast %96 : vector<8xf32> to vector<8x1xf32>
    %98 = tpu.reciprocal %97 {approx = true} : vector<8x1xf32> -> vector<8x1xf32>
    %99 = vector.broadcast %98 : vector<8x1xf32> to vector<8x8xf32>
    %100 = arith.mulf %95, %99 : vector<8x8xf32>
    %101 = arith.truncf %100 : vector<8x8xf32> to vector<8x8xbf16>
    %102 = vector.extract_strided_slice %16 {offsets = [0, 24], sizes = [8, 8], strides = [1, 1]} : vector<8x32xbf16> to vector<8x8xbf16>
    %cst_38 = arith.constant dense<0.000000e+00> : vector<8x8xf32>
    %103 = tpu.matmul %101, %102, %cst_38 {dimension_numbers = #tpu.dot_dimension_numbers<[1], [0], [0], [1], [0, 0, 1, 1], [], []>} : vector<8x8xbf16>, vector<8x8xbf16>, vector<8x8xf32> -> vector<8x8xf32>
    %104 = arith.truncf %103 : vector<8x8xf32> to vector<8x8xbf16>
    %c24 = arith.constant 24 : index
    %c0_39 = arith.constant 0 : index
    %105 = vector.load %arg7[%c24, %c0_39] : memref<32x32xbf16, #tpu.memory_space<vmem>>, vector<8x32xbf16>
    %cst_40 = arith.constant dense<0.000000e+00> : vector<8x32xf32>
    %106 = tpu.matmul %104, %105, %cst_40 {dimension_numbers = #tpu.dot_dimension_numbers<[1], [0], [0], [1], [0, 0, 1, 1], [], []>} : vector<8x8xbf16>, vector<8x32xbf16>, vector<8x32xf32> -> vector<8x32xf32>
    %107 = arith.addf %84, %106 : vector<8x32xf32>
    %c0_41 = arith.constant 0 : index
    %c0_42 = arith.constant 0 : index
    %108 = vector.load %arg8[%c0_41, %c0_42] : memref<1x32xf32, #tpu.memory_space<vmem>>, vector<1x32xf32>
    %109 = vector.broadcast %108 : vector<1x32xf32> to vector<8x32xf32>
    %110 = arith.addf %107, %109 : vector<8x32xf32>
    %111 = arith.extf %1 : vector<8x32xbf16> to vector<8x32xf32>
    %112 = arith.addf %110, %111 : vector<8x32xf32>
    %c0_43 = arith.constant 0 : index
    %c0_44 = arith.constant 0 : index
    %113 = vector.load %arg9[%c0_43, %c0_44] : memref<1x32xf32, #tpu.memory_space<vmem>>, vector<1x32xf32>
    %c0_45 = arith.constant 0 : index
    %c0_46 = arith.constant 0 : index
    %114 = vector.load %arg10[%c0_45, %c0_46] : memref<1x32xf32, #tpu.memory_space<vmem>>, vector<1x32xf32>
    %cst_47 = arith.constant dense<0.000000e+00> : vector<8xf32>
    %115 = vector.multi_reduction <add>, %112, %cst_47 [1] : vector<8x32xf32> to vector<8xf32>
    %116 = vector.shape_cast %115 : vector<8xf32> to vector<8x1xf32>
    %cst_48 = arith.constant 3.200000e+01 : f32
    %117 = vector.broadcast %cst_48 : f32 to vector<8x1xf32>
    %118 = arith.divf %116, %117 : vector<8x1xf32>
    %119 = vector.broadcast %118 : vector<8x1xf32> to vector<8x32xf32>
    %120 = arith.subf %112, %119 : vector<8x32xf32>
    %121 = arith.mulf %120, %120 : vector<8x32xf32>
    %cst_49 = arith.constant dense<0.000000e+00> : vector<8xf32>
    %122 = vector.multi_reduction <add>, %121, %cst_49 [1] : vector<8x32xf32> to vector<8xf32>
    %123 = vector.shape_cast %122 : vector<8xf32> to vector<8x1xf32>
    %cst_50 = arith.constant 3.200000e+01 : f32
    %124 = vector.broadcast %cst_50 : f32 to vector<8x1xf32>
    %125 = arith.divf %123, %124 : vector<8x1xf32>
    %cst_51 = arith.constant 9.99999974E-6 : f32
    %126 = vector.broadcast %cst_51 : f32 to vector<8x1xf32>
    %127 = arith.addf %125, %126 : vector<8x1xf32>
    %128 = math.rsqrt %127 : vector<8x1xf32>
    %129 = vector.broadcast %128 : vector<8x1xf32> to vector<8x32xf32>
    %130 = arith.mulf %120, %129 : vector<8x32xf32>
    %131 = vector.broadcast %113 : vector<1x32xf32> to vector<8x32xf32>
    %132 = arith.mulf %130, %131 : vector<8x32xf32>
    %133 = vector.broadcast %114 : vector<1x32xf32> to vector<8x32xf32>
    %134 = arith.addf %132, %133 : vector<8x32xf32>
    %135 = arith.truncf %134 : vector<8x32xf32> to vector<8x32xbf16>
    %c0_52 = arith.constant 0 : index
    %c0_53 = arith.constant 0 : index
    %136 = vector.load %arg11[%c0_52, %c0_53] : memref<32x32xbf16, #tpu.memory_space<vmem>>, vector<32x32xbf16>
    %cst_54 = arith.constant dense<0.000000e+00> : vector<8x32xf32>
    %137 = tpu.matmul %135, %136, %cst_54 {dimension_numbers = #tpu.dot_dimension_numbers<[1], [0], [0], [1], [0, 0, 1, 1], [], []>} : vector<8x32xbf16>, vector<32x32xbf16>, vector<8x32xf32> -> vector<8x32xf32>
    %c0_55 = arith.constant 0 : index
    %c0_56 = arith.constant 0 : index
    %138 = vector.load %arg12[%c0_55, %c0_56] : memref<1x32xf32, #tpu.memory_space<vmem>>, vector<1x32xf32>
    %139 = vector.broadcast %138 : vector<1x32xf32> to vector<8x32xf32>
    %140 = arith.addf %137, %139 : vector<8x32xf32>
    %c0_57 = arith.constant 0 : index
    %c0_58 = arith.constant 0 : index
    %141 = vector.load %arg13[%c0_57, %c0_58] : memref<32x64xbf16, #tpu.memory_space<vmem>>, vector<32x64xbf16>
    %cst_59 = arith.constant dense<0.000000e+00> : vector<8x64xf32>
    %142 = tpu.matmul %3, %141, %cst_59 {dimension_numbers = #tpu.dot_dimension_numbers<[1], [0], [0], [1], [0, 0, 1, 1], [], []>} : vector<8x32xbf16>, vector<32x64xbf16>, vector<8x64xf32> -> vector<8x64xf32>
    %c0_60 = arith.constant 0 : index
    %c0_61 = arith.constant 0 : index
    %143 = vector.load %arg14[%c0_60, %c0_61] : memref<1x64xf32, #tpu.memory_space<vmem>>, vector<1x64xf32>
    %144 = vector.broadcast %143 : vector<1x64xf32> to vector<8x64xf32>
    %145 = arith.addf %142, %144 : vector<8x64xf32>
    %c0_62 = arith.constant 0 : index
    %c0_63 = arith.constant 0 : index
    %c0_64 = arith.constant 0 : index
    %146 = vector.load %arg4[%c0_62, %c0_63, %c0_64] : memref<1x8x8xf32, #tpu.memory_space<vmem>>, vector<1x8x8xf32>
    %147 = vector.shape_cast %146 : vector<1x8x8xf32> to vector<8x8xf32>
    %148 = vector.extract_strided_slice %145 {offsets = [0, 0], sizes = [8, 32], strides = [1, 1]} : vector<8x64xf32> to vector<8x32xf32>
    %149 = vector.extract_strided_slice %145 {offsets = [0, 32], sizes = [8, 32], strides = [1, 1]} : vector<8x64xf32> to vector<8x32xf32>
    %150 = arith.truncf %140 : vector<8x32xf32> to vector<8x32xbf16>
    %151 = arith.truncf %148 : vector<8x32xf32> to vector<8x32xbf16>
    %152 = arith.truncf %149 : vector<8x32xf32> to vector<8x32xbf16>
    %153 = vector.extract_strided_slice %150 {offsets = [0, 0], sizes = [8, 8], strides = [1, 1]} : vector<8x32xbf16> to vector<8x8xbf16>
    %154 = vector.extract_strided_slice %151 {offsets = [0, 0], sizes = [8, 8], strides = [1, 1]} : vector<8x32xbf16> to vector<8x8xbf16>
    %cst_65 = arith.constant dense<0.000000e+00> : vector<8x8xf32>
    %155 = tpu.matmul %153, %154, %cst_65 {dimension_numbers = #tpu.dot_dimension_numbers<[1], [1], [0], [0], [0, 0, 1, 0], [], []>} : vector<8x8xbf16>, vector<8x8xbf16>, vector<8x8xf32> -> vector<8x8xf32>
    %cst_66 = arith.constant 0.353553385 : f32
    %156 = vector.broadcast %cst_66 : f32 to vector<8x8xf32>
    %157 = arith.mulf %155, %156 : vector<8x8xf32>
    %158 = arith.addf %157, %147 : vector<8x8xf32>
    %cst_67 = arith.constant dense<0xFF800000> : vector<8xf32>
    %159 = vector.multi_reduction <maximumf>, %158, %cst_67 [1] : vector<8x8xf32> to vector<8xf32>
    %160 = vector.shape_cast %159 : vector<8xf32> to vector<8x1xf32>
    %161 = vector.broadcast %160 : vector<8x1xf32> to vector<8x8xf32>
    %162 = arith.subf %158, %161 : vector<8x8xf32>
    %163 = math.exp %162 : vector<8x8xf32>
    %cst_68 = arith.constant dense<0.000000e+00> : vector<8xf32>
    %164 = vector.multi_reduction <add>, %163, %cst_68 [1] : vector<8x8xf32> to vector<8xf32>
    %165 = vector.shape_cast %164 : vector<8xf32> to vector<8x1xf32>
    %166 = tpu.reciprocal %165 {approx = true} : vector<8x1xf32> -> vector<8x1xf32>
    %167 = vector.broadcast %166 : vector<8x1xf32> to vector<8x8xf32>
    %168 = arith.mulf %163, %167 : vector<8x8xf32>
    %169 = arith.truncf %168 : vector<8x8xf32> to vector<8x8xbf16>
    %170 = vector.extract_strided_slice %152 {offsets = [0, 0], sizes = [8, 8], strides = [1, 1]} : vector<8x32xbf16> to vector<8x8xbf16>
    %cst_69 = arith.constant dense<0.000000e+00> : vector<8x8xf32>
    %171 = tpu.matmul %169, %170, %cst_69 {dimension_numbers = #tpu.dot_dimension_numbers<[1], [0], [0], [1], [0, 0, 1, 1], [], []>} : vector<8x8xbf16>, vector<8x8xbf16>, vector<8x8xf32> -> vector<8x8xf32>
    %172 = arith.truncf %171 : vector<8x8xf32> to vector<8x8xbf16>
    %c0_70 = arith.constant 0 : index
    %c0_71 = arith.constant 0 : index
    %173 = vector.load %arg15[%c0_70, %c0_71] : memref<32x32xbf16, #tpu.memory_space<vmem>>, vector<8x32xbf16>
    %cst_72 = arith.constant dense<0.000000e+00> : vector<8x32xf32>
    %174 = tpu.matmul %172, %173, %cst_72 {dimension_numbers = #tpu.dot_dimension_numbers<[1], [0], [0], [1], [0, 0, 1, 1], [], []>} : vector<8x8xbf16>, vector<8x32xbf16>, vector<8x32xf32> -> vector<8x32xf32>
    %175 = vector.extract_strided_slice %150 {offsets = [0, 8], sizes = [8, 8], strides = [1, 1]} : vector<8x32xbf16> to vector<8x8xbf16>
    %176 = vector.extract_strided_slice %151 {offsets = [0, 8], sizes = [8, 8], strides = [1, 1]} : vector<8x32xbf16> to vector<8x8xbf16>
    %cst_73 = arith.constant dense<0.000000e+00> : vector<8x8xf32>
    %177 = tpu.matmul %175, %176, %cst_73 {dimension_numbers = #tpu.dot_dimension_numbers<[1], [1], [0], [0], [0, 0, 1, 0], [], []>} : vector<8x8xbf16>, vector<8x8xbf16>, vector<8x8xf32> -> vector<8x8xf32>
    %cst_74 = arith.constant 0.353553385 : f32
    %178 = vector.broadcast %cst_74 : f32 to vector<8x8xf32>
    %179 = arith.mulf %177, %178 : vector<8x8xf32>
    %180 = arith.addf %179, %147 : vector<8x8xf32>
    %cst_75 = arith.constant dense<0xFF800000> : vector<8xf32>
    %181 = vector.multi_reduction <maximumf>, %180, %cst_75 [1] : vector<8x8xf32> to vector<8xf32>
    %182 = vector.shape_cast %181 : vector<8xf32> to vector<8x1xf32>
    %183 = vector.broadcast %182 : vector<8x1xf32> to vector<8x8xf32>
    %184 = arith.subf %180, %183 : vector<8x8xf32>
    %185 = math.exp %184 : vector<8x8xf32>
    %cst_76 = arith.constant dense<0.000000e+00> : vector<8xf32>
    %186 = vector.multi_reduction <add>, %185, %cst_76 [1] : vector<8x8xf32> to vector<8xf32>
    %187 = vector.shape_cast %186 : vector<8xf32> to vector<8x1xf32>
    %188 = tpu.reciprocal %187 {approx = true} : vector<8x1xf32> -> vector<8x1xf32>
    %189 = vector.broadcast %188 : vector<8x1xf32> to vector<8x8xf32>
    %190 = arith.mulf %185, %189 : vector<8x8xf32>
    %191 = arith.truncf %190 : vector<8x8xf32> to vector<8x8xbf16>
    %192 = vector.extract_strided_slice %152 {offsets = [0, 8], sizes = [8, 8], strides = [1, 1]} : vector<8x32xbf16> to vector<8x8xbf16>
    %cst_77 = arith.constant dense<0.000000e+00> : vector<8x8xf32>
    %193 = tpu.matmul %191, %192, %cst_77 {dimension_numbers = #tpu.dot_dimension_numbers<[1], [0], [0], [1], [0, 0, 1, 1], [], []>} : vector<8x8xbf16>, vector<8x8xbf16>, vector<8x8xf32> -> vector<8x8xf32>
    %194 = arith.truncf %193 : vector<8x8xf32> to vector<8x8xbf16>
    %c8_78 = arith.constant 8 : index
    %c0_79 = arith.constant 0 : index
    %195 = vector.load %arg15[%c8_78, %c0_79] : memref<32x32xbf16, #tpu.memory_space<vmem>>, vector<8x32xbf16>
    %cst_80 = arith.constant dense<0.000000e+00> : vector<8x32xf32>
    %196 = tpu.matmul %194, %195, %cst_80 {dimension_numbers = #tpu.dot_dimension_numbers<[1], [0], [0], [1], [0, 0, 1, 1], [], []>} : vector<8x8xbf16>, vector<8x32xbf16>, vector<8x32xf32> -> vector<8x32xf32>
    %197 = arith.addf %174, %196 : vector<8x32xf32>
    %198 = vector.extract_strided_slice %150 {offsets = [0, 16], sizes = [8, 8], strides = [1, 1]} : vector<8x32xbf16> to vector<8x8xbf16>
    %199 = vector.extract_strided_slice %151 {offsets = [0, 16], sizes = [8, 8], strides = [1, 1]} : vector<8x32xbf16> to vector<8x8xbf16>
    %cst_81 = arith.constant dense<0.000000e+00> : vector<8x8xf32>
    %200 = tpu.matmul %198, %199, %cst_81 {dimension_numbers = #tpu.dot_dimension_numbers<[1], [1], [0], [0], [0, 0, 1, 0], [], []>} : vector<8x8xbf16>, vector<8x8xbf16>, vector<8x8xf32> -> vector<8x8xf32>
    %cst_82 = arith.constant 0.353553385 : f32
    %201 = vector.broadcast %cst_82 : f32 to vector<8x8xf32>
    %202 = arith.mulf %200, %201 : vector<8x8xf32>
    %203 = arith.addf %202, %147 : vector<8x8xf32>
    %cst_83 = arith.constant dense<0xFF800000> : vector<8xf32>
    %204 = vector.multi_reduction <maximumf>, %203, %cst_83 [1] : vector<8x8xf32> to vector<8xf32>
    %205 = vector.shape_cast %204 : vector<8xf32> to vector<8x1xf32>
    %206 = vector.broadcast %205 : vector<8x1xf32> to vector<8x8xf32>
    %207 = arith.subf %203, %206 : vector<8x8xf32>
    %208 = math.exp %207 : vector<8x8xf32>
    %cst_84 = arith.constant dense<0.000000e+00> : vector<8xf32>
    %209 = vector.multi_reduction <add>, %208, %cst_84 [1] : vector<8x8xf32> to vector<8xf32>
    %210 = vector.shape_cast %209 : vector<8xf32> to vector<8x1xf32>
    %211 = tpu.reciprocal %210 {approx = true} : vector<8x1xf32> -> vector<8x1xf32>
    %212 = vector.broadcast %211 : vector<8x1xf32> to vector<8x8xf32>
    %213 = arith.mulf %208, %212 : vector<8x8xf32>
    %214 = arith.truncf %213 : vector<8x8xf32> to vector<8x8xbf16>
    %215 = vector.extract_strided_slice %152 {offsets = [0, 16], sizes = [8, 8], strides = [1, 1]} : vector<8x32xbf16> to vector<8x8xbf16>
    %cst_85 = arith.constant dense<0.000000e+00> : vector<8x8xf32>
    %216 = tpu.matmul %214, %215, %cst_85 {dimension_numbers = #tpu.dot_dimension_numbers<[1], [0], [0], [1], [0, 0, 1, 1], [], []>} : vector<8x8xbf16>, vector<8x8xbf16>, vector<8x8xf32> -> vector<8x8xf32>
    %217 = arith.truncf %216 : vector<8x8xf32> to vector<8x8xbf16>
    %c16_86 = arith.constant 16 : index
    %c0_87 = arith.constant 0 : index
    %218 = vector.load %arg15[%c16_86, %c0_87] : memref<32x32xbf16, #tpu.memory_space<vmem>>, vector<8x32xbf16>
    %cst_88 = arith.constant dense<0.000000e+00> : vector<8x32xf32>
    %219 = tpu.matmul %217, %218, %cst_88 {dimension_numbers = #tpu.dot_dimension_numbers<[1], [0], [0], [1], [0, 0, 1, 1], [], []>} : vector<8x8xbf16>, vector<8x32xbf16>, vector<8x32xf32> -> vector<8x32xf32>
    %220 = arith.addf %197, %219 : vector<8x32xf32>
    %221 = vector.extract_strided_slice %150 {offsets = [0, 24], sizes = [8, 8], strides = [1, 1]} : vector<8x32xbf16> to vector<8x8xbf16>
    %222 = vector.extract_strided_slice %151 {offsets = [0, 24], sizes = [8, 8], strides = [1, 1]} : vector<8x32xbf16> to vector<8x8xbf16>
    %cst_89 = arith.constant dense<0.000000e+00> : vector<8x8xf32>
    %223 = tpu.matmul %221, %222, %cst_89 {dimension_numbers = #tpu.dot_dimension_numbers<[1], [1], [0], [0], [0, 0, 1, 0], [], []>} : vector<8x8xbf16>, vector<8x8xbf16>, vector<8x8xf32> -> vector<8x8xf32>
    %cst_90 = arith.constant 0.353553385 : f32
    %224 = vector.broadcast %cst_90 : f32 to vector<8x8xf32>
    %225 = arith.mulf %223, %224 : vector<8x8xf32>
    %226 = arith.addf %225, %147 : vector<8x8xf32>
    %cst_91 = arith.constant dense<0xFF800000> : vector<8xf32>
    %227 = vector.multi_reduction <maximumf>, %226, %cst_91 [1] : vector<8x8xf32> to vector<8xf32>
    %228 = vector.shape_cast %227 : vector<8xf32> to vector<8x1xf32>
    %229 = vector.broadcast %228 : vector<8x1xf32> to vector<8x8xf32>
    %230 = arith.subf %226, %229 : vector<8x8xf32>
    %231 = math.exp %230 : vector<8x8xf32>
    %cst_92 = arith.constant dense<0.000000e+00> : vector<8xf32>
    %232 = vector.multi_reduction <add>, %231, %cst_92 [1] : vector<8x8xf32> to vector<8xf32>
    %233 = vector.shape_cast %232 : vector<8xf32> to vector<8x1xf32>
    %234 = tpu.reciprocal %233 {approx = true} : vector<8x1xf32> -> vector<8x1xf32>
    %235 = vector.broadcast %234 : vector<8x1xf32> to vector<8x8xf32>
    %236 = arith.mulf %231, %235 : vector<8x8xf32>
    %237 = arith.truncf %236 : vector<8x8xf32> to vector<8x8xbf16>
    %238 = vector.extract_strided_slice %152 {offsets = [0, 24], sizes = [8, 8], strides = [1, 1]} : vector<8x32xbf16> to vector<8x8xbf16>
    %cst_93 = arith.constant dense<0.000000e+00> : vector<8x8xf32>
    %239 = tpu.matmul %237, %238, %cst_93 {dimension_numbers = #tpu.dot_dimension_numbers<[1], [0], [0], [1], [0, 0, 1, 1], [], []>} : vector<8x8xbf16>, vector<8x8xbf16>, vector<8x8xf32> -> vector<8x8xf32>
    %240 = arith.truncf %239 : vector<8x8xf32> to vector<8x8xbf16>
    %c24_94 = arith.constant 24 : index
    %c0_95 = arith.constant 0 : index
    %241 = vector.load %arg15[%c24_94, %c0_95] : memref<32x32xbf16, #tpu.memory_space<vmem>>, vector<8x32xbf16>
    %cst_96 = arith.constant dense<0.000000e+00> : vector<8x32xf32>
    %242 = tpu.matmul %240, %241, %cst_96 {dimension_numbers = #tpu.dot_dimension_numbers<[1], [0], [0], [1], [0, 0, 1, 1], [], []>} : vector<8x8xbf16>, vector<8x32xbf16>, vector<8x32xf32> -> vector<8x32xf32>
    %243 = arith.addf %220, %242 : vector<8x32xf32>
    %c0_97 = arith.constant 0 : index
    %c0_98 = arith.constant 0 : index
    %244 = vector.load %arg16[%c0_97, %c0_98] : memref<1x32xf32, #tpu.memory_space<vmem>>, vector<1x32xf32>
    %245 = vector.broadcast %244 : vector<1x32xf32> to vector<8x32xf32>
    %246 = arith.addf %243, %245 : vector<8x32xf32>
    %247 = arith.addf %246, %134 : vector<8x32xf32>
    %c0_99 = arith.constant 0 : index
    %c0_100 = arith.constant 0 : index
    %248 = vector.load %arg17[%c0_99, %c0_100] : memref<1x32xf32, #tpu.memory_space<vmem>>, vector<1x32xf32>
    %c0_101 = arith.constant 0 : index
    %c0_102 = arith.constant 0 : index
    %249 = vector.load %arg18[%c0_101, %c0_102] : memref<1x32xf32, #tpu.memory_space<vmem>>, vector<1x32xf32>
    %cst_103 = arith.constant dense<0.000000e+00> : vector<8xf32>
    %250 = vector.multi_reduction <add>, %247, %cst_103 [1] : vector<8x32xf32> to vector<8xf32>
    %251 = vector.shape_cast %250 : vector<8xf32> to vector<8x1xf32>
    %cst_104 = arith.constant 3.200000e+01 : f32
    %252 = vector.broadcast %cst_104 : f32 to vector<8x1xf32>
    %253 = arith.divf %251, %252 : vector<8x1xf32>
    %254 = vector.broadcast %253 : vector<8x1xf32> to vector<8x32xf32>
    %255 = arith.subf %247, %254 : vector<8x32xf32>
    %256 = arith.mulf %255, %255 : vector<8x32xf32>
    %cst_105 = arith.constant dense<0.000000e+00> : vector<8xf32>
    %257 = vector.multi_reduction <add>, %256, %cst_105 [1] : vector<8x32xf32> to vector<8xf32>
    %258 = vector.shape_cast %257 : vector<8xf32> to vector<8x1xf32>
    %cst_106 = arith.constant 3.200000e+01 : f32
    %259 = vector.broadcast %cst_106 : f32 to vector<8x1xf32>
    %260 = arith.divf %258, %259 : vector<8x1xf32>
    %cst_107 = arith.constant 9.99999974E-6 : f32
    %261 = vector.broadcast %cst_107 : f32 to vector<8x1xf32>
    %262 = arith.addf %260, %261 : vector<8x1xf32>
    %263 = math.rsqrt %262 : vector<8x1xf32>
    %264 = vector.broadcast %263 : vector<8x1xf32> to vector<8x32xf32>
    %265 = arith.mulf %255, %264 : vector<8x32xf32>
    %266 = vector.broadcast %248 : vector<1x32xf32> to vector<8x32xf32>
    %267 = arith.mulf %265, %266 : vector<8x32xf32>
    %268 = vector.broadcast %249 : vector<1x32xf32> to vector<8x32xf32>
    %269 = arith.addf %267, %268 : vector<8x32xf32>
    %270 = arith.truncf %269 : vector<8x32xf32> to vector<8x32xbf16>
    %c0_108 = arith.constant 0 : index
    %c0_109 = arith.constant 0 : index
    %271 = vector.load %arg19[%c0_108, %c0_109] : memref<32x64xbf16, #tpu.memory_space<vmem>>, vector<32x64xbf16>
    %cst_110 = arith.constant dense<0.000000e+00> : vector<8x64xf32>
    %272 = tpu.matmul %270, %271, %cst_110 {dimension_numbers = #tpu.dot_dimension_numbers<[1], [0], [0], [1], [0, 0, 1, 1], [], []>} : vector<8x32xbf16>, vector<32x64xbf16>, vector<8x64xf32> -> vector<8x64xf32>
    %c0_111 = arith.constant 0 : index
    %c0_112 = arith.constant 0 : index
    %273 = vector.load %arg20[%c0_111, %c0_112] : memref<1x64xf32, #tpu.memory_space<vmem>>, vector<1x64xf32>
    %274 = vector.broadcast %273 : vector<1x64xf32> to vector<8x64xf32>
    %275 = arith.addf %272, %274 : vector<8x64xf32>
    %cst_113 = arith.constant 0.000000e+00 : f32
    %276 = vector.broadcast %cst_113 : f32 to vector<8x64xf32>
    %277 = arith.maximumf %275, %276 : vector<8x64xf32>
    %278 = arith.truncf %277 : vector<8x64xf32> to vector<8x64xbf16>
    %c0_114 = arith.constant 0 : index
    %c0_115 = arith.constant 0 : index
    %279 = vector.load %arg21[%c0_114, %c0_115] : memref<64x32xbf16, #tpu.memory_space<vmem>>, vector<64x32xbf16>
    %cst_116 = arith.constant dense<0.000000e+00> : vector<8x32xf32>
    %280 = tpu.matmul %278, %279, %cst_116 {dimension_numbers = #tpu.dot_dimension_numbers<[1], [0], [0], [1], [0, 0, 1, 1], [], []>} : vector<8x64xbf16>, vector<64x32xbf16>, vector<8x32xf32> -> vector<8x32xf32>
    %c0_117 = arith.constant 0 : index
    %c0_118 = arith.constant 0 : index
    %281 = vector.load %arg22[%c0_117, %c0_118] : memref<1x32xf32, #tpu.memory_space<vmem>>, vector<1x32xf32>
    %282 = vector.broadcast %281 : vector<1x32xf32> to vector<8x32xf32>
    %283 = arith.addf %280, %282 : vector<8x32xf32>
    %284 = arith.addf %283, %269 : vector<8x32xf32>
    %c0_119 = arith.constant 0 : index
    %c0_120 = arith.constant 0 : index
    %285 = vector.load %arg23[%c0_119, %c0_120] : memref<1x32xf32, #tpu.memory_space<vmem>>, vector<1x32xf32>
    %c0_121 = arith.constant 0 : index
    %c0_122 = arith.constant 0 : index
    %286 = vector.load %arg24[%c0_121, %c0_122] : memref<1x32xf32, #tpu.memory_space<vmem>>, vector<1x32xf32>
    %cst_123 = arith.constant dense<0.000000e+00> : vector<8xf32>
    %287 = vector.multi_reduction <add>, %284, %cst_123 [1] : vector<8x32xf32> to vector<8xf32>
    %288 = vector.shape_cast %287 : vector<8xf32> to vector<8x1xf32>
    %cst_124 = arith.constant 3.200000e+01 : f32
    %289 = vector.broadcast %cst_124 : f32 to vector<8x1xf32>
    %290 = arith.divf %288, %289 : vector<8x1xf32>
    %291 = vector.broadcast %290 : vector<8x1xf32> to vector<8x32xf32>
    %292 = arith.subf %284, %291 : vector<8x32xf32>
    %293 = arith.mulf %292, %292 : vector<8x32xf32>
    %cst_125 = arith.constant dense<0.000000e+00> : vector<8xf32>
    %294 = vector.multi_reduction <add>, %293, %cst_125 [1] : vector<8x32xf32> to vector<8xf32>
    %295 = vector.shape_cast %294 : vector<8xf32> to vector<8x1xf32>
    %cst_126 = arith.constant 3.200000e+01 : f32
    %296 = vector.broadcast %cst_126 : f32 to vector<8x1xf32>
    %297 = arith.divf %295, %296 : vector<8x1xf32>
    %cst_127 = arith.constant 9.99999974E-6 : f32
    %298 = vector.broadcast %cst_127 : f32 to vector<8x1xf32>
    %299 = arith.addf %297, %298 : vector<8x1xf32>
    %300 = math.rsqrt %299 : vector<8x1xf32>
    %301 = vector.broadcast %300 : vector<8x1xf32> to vector<8x32xf32>
    %302 = arith.mulf %292, %301 : vector<8x32xf32>
    %303 = vector.broadcast %285 : vector<1x32xf32> to vector<8x32xf32>
    %304 = arith.mulf %302, %303 : vector<8x32xf32>
    %305 = vector.broadcast %286 : vector<1x32xf32> to vector<8x32xf32>
    %306 = arith.addf %304, %305 : vector<8x32xf32>
    %307 = arith.truncf %306 : vector<8x32xf32> to vector<8x32xbf16>
    %c0_128 = arith.constant 0 : index
    %c0_129 = arith.constant 0 : index
    %c0_130 = arith.constant 0 : index
    %308 = vector.load %arg25[%c0_128, %c0_129, %c0_130] : memref<1x8x32xbf16, #tpu.memory_space<vmem>>, vector<1x8x32xbf16>
    %309 = vector.shape_cast %308 : vector<1x8x32xbf16> to vector<8x32xbf16>
    %310 = vector.shape_cast %307 : vector<8x32xbf16> to vector<1x8x32xbf16>
    tpu.vector_store %arg25[%c0_128, %c0_129, %c0_130], %310 {strides = array<i32>} : memref<1x8x32xbf16, #tpu.memory_space<vmem>>, vector<1x8x32xbf16>,
    return
  }
  func.func @transform_0(%arg0: i32) -> (i32, i32, i32) {
    %c0_i32 = arith.constant 0 : i32
    %c0_i32_0 = arith.constant 0 : i32
    %c0_i32_1 = arith.constant 0 : i32
    return %arg0, %c0_i32, %c0_i32_0 : i32, i32, i32
  }
  func.func @transform_1(%arg0: i32) -> (i32, i32, i32) {
    %c0_i32 = arith.constant 0 : i32
    %c0_i32_0 = arith.constant 0 : i32
    %c0_i32_1 = arith.constant 0 : i32
    return %arg0, %c0_i32, %c0_i32_0 : i32, i32, i32
  }
  func.func @transform_2(%arg0: i32) -> (i32, i32, i32) {
    %c0_i32 = arith.constant 0 : i32
    %c0_i32_0 = arith.constant 0 : i32
    %c0_i32_1 = arith.constant 0 : i32
    return %arg0, %c0_i32, %c0_i32_0 : i32, i32, i32
  }
  func.func @transform_3(%arg0: i32) -> (i32, i32, i32) {
    %c0_i32 = arith.constant 0 : i32
    %c0_i32_0 = arith.constant 0 : i32
    %c0_i32_1 = arith.constant 0 : i32
    return %arg0, %c0_i32, %c0_i32_0 : i32, i32, i32
  }
  func.func @transform_4(%arg0: i32) -> (i32, i32) {
    %c0_i32 = arith.constant 0 : i32
    %c0_i32_0 = arith.constant 0 : i32
    %c0_i32_1 = arith.constant 0 : i32
    return %c0_i32, %c0_i32_0 : i32, i32
  }
  func.func @transform_5(%arg0: i32) -> (i32, i32) {
    %c0_i32 = arith.constant 0 : i32
    %c0_i32_0 = arith.constant 0 : i32
    %c0_i32_1 = arith.constant 0 : i32
    return %c0_i32, %c0_i32_0 : i32, i32
  }
  func.func @transform_6(%arg0: i32) -> (i32, i32) {
    %c0_i32 = arith.constant 0 : i32
    %c0_i32_0 = arith.constant 0 : i32
    %c0_i32_1 = arith.constant 0 : i32
    return %c0_i32, %c0_i32_0 : i32, i32
  }
  func.func @transform_7(%arg0: i32) -> (i32, i32) {
    %c0_i32 = arith.constant 0 : i32
    %c0_i32_0 = arith.constant 0 : i32
    %c0_i32_1 = arith.constant 0 : i32
    return %c0_i32, %c0_i32_0 : i32, i32
  }
  func.func @transform_8(%arg0: i32) -> (i32, i32) {
    %c0_i32 = arith.constant 0 : i32
    %c0_i32_0 = arith.constant 0 : i32
    %c0_i32_1 = arith.constant 0 : i32
    return %c0_i32, %c0_i32_0 : i32, i32
  }
  func.func @transform_9(%arg0: i32) -> (i32, i32) {
    %c0_i32 = arith.constant 0 : i32
    %c0_i32_0 = arith.constant 0 : i32
    %c0_i32_1 = arith.constant 0 : i32
    return %c0_i32, %c0_i32_0 : i32, i32
  }
  func.func @transform_10(%arg0: i32) -> (i32, i32) {
    %c0_i32 = arith.constant 0 : i32
    %c0_i32_0 = arith.constant 0 : i32
    %c0_i32_1 = arith.constant 0 : i32
    return %c0_i32, %c0_i32_0 : i32, i32
  }
  func.func @transform_11(%arg0: i32) -> (i32, i32) {
    %c0_i32 = arith.constant 0 : i32
    %c0_i32_0 = arith.constant 0 : i32
    %c0_i32_1 = arith.constant 0 : i32
    return %c0_i32, %c0_i32_0 : i32, i32
  }
  func.func @transform_12(%arg0: i32) -> (i32, i32) {
    %c0_i32 = arith.constant 0 : i32
    %c0_i32_0 = arith.constant 0 : i32
    %c0_i32_1 = arith.constant 0 : i32
    return %c0_i32, %c0_i32_0 : i32, i32
  }
  func.func @transform_13(%arg0: i32) -> (i32, i32) {
    %c0_i32 = arith.constant 0 : i32
    %c0_i32_0 = arith.constant 0 : i32
    %c0_i32_1 = arith.constant 0 : i32
    return %c0_i32, %c0_i32_0 : i32, i32
  }
  func.func @transform_14(%arg0: i32) -> (i32, i32) {
    %c0_i32 = arith.constant 0 : i32
    %c0_i32_0 = arith.constant 0 : i32
    %c0_i32_1 = arith.constant 0 : i32
    return %c0_i32, %c0_i32_0 : i32, i32
  }
  func.func @transform_15(%arg0: i32) -> (i32, i32) {
    %c0_i32 = arith.constant 0 : i32
    %c0_i32_0 = arith.constant 0 : i32
    %c0_i32_1 = arith.constant 0 : i32
    return %c0_i32, %c0_i32_0 : i32, i32
  }
  func.func @transform_16(%arg0: i32) -> (i32, i32) {
    %c0_i32 = arith.constant 0 : i32
    %c0_i32_0 = arith.constant 0 : i32
    %c0_i32_1 = arith.constant 0 : i32
    return %c0_i32, %c0_i32_0 : i32, i32
  }
  func.func @transform_17(%arg0: i32) -> (i32, i32) {
    %c0_i32 = arith.constant 0 : i32
    %c0_i32_0 = arith.constant 0 : i32
    %c0_i32_1 = arith.constant 0 : i32
    return %c0_i32, %c0_i32_0 : i32, i32
  }
  func.func @transform_18(%arg0: i32) -> (i32, i32) {
    %c0_i32 = arith.constant 0 : i32
    %c0_i32_0 = arith.constant 0 : i32
    %c0_i32_1 = arith.constant 0 : i32
    return %c0_i32, %c0_i32_0 : i32, i32
  }
  func.func @transform_19(%arg0: i32) -> (i32, i32) {
    %c0_i32 = arith.constant 0 : i32
    %c0_i32_0 = arith.constant 0 : i32
    %c0_i32_1 = arith.constant 0 : i32
    return %c0_i32, %c0_i32_0 : i32, i32
  }
  func.func @transform_20(%arg0: i32) -> (i32, i32) {
    %c0_i32 = arith.constant 0 : i32
    %c0_i32_0 = arith.constant 0 : i32
    %c0_i32_1 = arith.constant 0 : i32
    return %c0_i32, %c0_i32_0 : i32, i32
  }
  func.func @transform_21(%arg0: i32) -> (i32, i32) {
    %c0_i32 = arith.constant 0 : i32
    %c0_i32_0 = arith.constant 0 : i32
    %c0_i32_1 = arith.constant 0 : i32
    return %c0_i32, %c0_i32_0 : i32, i32
  }
  func.func @transform_22(%arg0: i32) -> (i32, i32) {
    %c0_i32 = arith.constant 0 : i32
    %c0_i32_0 = arith.constant 0 : i32
    %c0_i32_1 = arith.constant 0 : i32
    return %c0_i32, %c0_i32_0 : i32, i32
  }
  func.func @transform_23(%arg0: i32) -> (i32, i32) {
    %c0_i32 = arith.constant 0 : i32
    %c0_i32_0 = arith.constant 0 : i32
    %c0_i32_1 = arith.constant 0 : i32
    return %c0_i32, %c0_i32_0 : i32, i32
  }
  func.func @transform_24(%arg0: i32) -> (i32, i32, i32) {
    %c0_i32 = arith.constant 0 : i32
    %c0_i32_0 = arith.constant 0 : i32
    %c0_i32_1 = arith.constant 0 : i32
    return %arg0, %c0_i32, %c0_i32_0 : i32, i32, i32
  }
}

module attributes {stable_mosaic.version = 11 : i64} {
  func.func @_generator_kernel(%arg0: i32, %arg1: i32, %arg2: memref<8x32xbf16, #tpu.memory_space<vmem>>, %arg3: memref<1x32xf32, #tpu.memory_space<vmem>>, %arg4: memref<1x32xf32, #tpu.memory_space<vmem>>, %arg5: memref<32x128xbf16, #tpu.memory_space<vmem>>, %arg6: memref<1x128xf32, #tpu.memory_space<vmem>>, %arg7: memref<8x128xf32, #tpu.memory_space<vmem>>) attributes {dimension_semantics = [#tpu.dimension_semantics<parallel>, #tpu.dimension_semantics<parallel>], iteration_bounds = array<i64: 2, 1>, scalar_prefetch = 0 : i64, scratch_operands = 0 : i64, tpu.core_type = #tpu.core_type<tc>, window_params = [{transform_indices = @transform_0, window_bounds = array<i64: 8, 32>}, {pipeline_mode = #tpu.pipeline_mode<synchronous>, transform_indices = @transform_1, window_bounds = array<i64: 1, 32>}, {pipeline_mode = #tpu.pipeline_mode<synchronous>, transform_indices = @transform_2, window_bounds = array<i64: 1, 32>}, {transform_indices = @transform_3, window_bounds = array<i64: 32, 128>}, {transform_indices = @transform_4, window_bounds = array<i64: 1, 128>}, {transform_indices = @transform_5, window_bounds = array<i64: 8, 128>}]} {
    %c0 = arith.constant 0 : index
    %c0_0 = arith.constant 0 : index
    %0 = vector.load %arg2[%c0, %c0_0] : memref<8x32xbf16, #tpu.memory_space<vmem>>, vector<8x32xbf16>
    %1 = arith.extf %0 : vector<8x32xbf16> to vector<8x32xf32>
    %c0_1 = arith.constant 0 : index
    %c0_2 = arith.constant 0 : index
    %2 = vector.load %arg3[%c0_1, %c0_2] : memref<1x32xf32, #tpu.memory_space<vmem>>, vector<1x32xf32>
    %c0_3 = arith.constant 0 : index
    %c0_4 = arith.constant 0 : index
    %3 = vector.load %arg4[%c0_3, %c0_4] : memref<1x32xf32, #tpu.memory_space<vmem>>, vector<1x32xf32>
    %cst = arith.constant dense<0.000000e+00> : vector<8xf32>
    %4 = vector.multi_reduction <add>, %1, %cst [1] : vector<8x32xf32> to vector<8xf32>
    %5 = vector.shape_cast %4 : vector<8xf32> to vector<8x1xf32>
    %cst_5 = arith.constant 3.200000e+01 : f32
    %6 = vector.broadcast %cst_5 : f32 to vector<8x1xf32>
    %7 = arith.divf %5, %6 : vector<8x1xf32>
    %8 = vector.broadcast %7 : vector<8x1xf32> to vector<8x32xf32>
    %9 = arith.subf %1, %8 : vector<8x32xf32>
    %10 = arith.mulf %9, %9 : vector<8x32xf32>
    %cst_6 = arith.constant dense<0.000000e+00> : vector<8xf32>
    %11 = vector.multi_reduction <add>, %10, %cst_6 [1] : vector<8x32xf32> to vector<8xf32>
    %12 = vector.shape_cast %11 : vector<8xf32> to vector<8x1xf32>
    %cst_7 = arith.constant 3.200000e+01 : f32
    %13 = vector.broadcast %cst_7 : f32 to vector<8x1xf32>
    %14 = arith.divf %12, %13 : vector<8x1xf32>
    %cst_8 = arith.constant 9.99999974E-6 : f32
    %15 = vector.broadcast %cst_8 : f32 to vector<8x1xf32>
    %16 = arith.addf %14, %15 : vector<8x1xf32>
    %17 = math.rsqrt %16 : vector<8x1xf32>
    %18 = vector.broadcast %17 : vector<8x1xf32> to vector<8x32xf32>
    %19 = arith.mulf %9, %18 : vector<8x32xf32>
    %20 = vector.broadcast %2 : vector<1x32xf32> to vector<8x32xf32>
    %21 = arith.mulf %19, %20 : vector<8x32xf32>
    %22 = vector.broadcast %3 : vector<1x32xf32> to vector<8x32xf32>
    %23 = arith.addf %21, %22 : vector<8x32xf32>
    %24 = arith.truncf %23 : vector<8x32xf32> to vector<8x32xbf16>
    %c0_9 = arith.constant 0 : index
    %c0_10 = arith.constant 0 : index
    %25 = vector.load %arg5[%c0_9, %c0_10] : memref<32x128xbf16, #tpu.memory_space<vmem>>, vector<32x128xbf16>
    %cst_11 = arith.constant dense<0.000000e+00> : vector<8x128xf32>
    %26 = tpu.matmul %24, %25, %cst_11 {dimension_numbers = #tpu.dot_dimension_numbers<[1], [0], [0], [1], [0, 0, 1, 1], [], []>} : vector<8x32xbf16>, vector<32x128xbf16>, vector<8x128xf32> -> vector<8x128xf32>
    %c0_12 = arith.constant 0 : index
    %c0_13 = arith.constant 0 : index
    %27 = vector.load %arg6[%c0_12, %c0_13] : memref<1x128xf32, #tpu.memory_space<vmem>>, vector<1x128xf32>
    %28 = vector.broadcast %27 : vector<1x128xf32> to vector<8x128xf32>
    %29 = arith.addf %26, %28 : vector<8x128xf32>
    %c0_14 = arith.constant 0 : index
    %c0_15 = arith.constant 0 : index
    %30 = vector.load %arg7[%c0_14, %c0_15] : memref<8x128xf32, #tpu.memory_space<vmem>>, vector<8x128xf32>
    tpu.vector_store %arg7[%c0_14, %c0_15], %29 {strides = array<i32>} : memref<8x128xf32, #tpu.memory_space<vmem>>, vector<8x128xf32>,
    return
  }
  func.func @transform_0(%arg0: i32, %arg1: i32) -> (i32, i32) {
    %c0_i32 = arith.constant 0 : i32
    %c0_i32_0 = arith.constant 0 : i32
    return %arg0, %c0_i32 : i32, i32
  }
  func.func @transform_1(%arg0: i32, %arg1: i32) -> (i32, i32) {
    %c0_i32 = arith.constant 0 : i32
    %c0_i32_0 = arith.constant 0 : i32
    %c0_i32_1 = arith.constant 0 : i32
    return %c0_i32, %c0_i32_0 : i32, i32
  }
  func.func @transform_2(%arg0: i32, %arg1: i32) -> (i32, i32) {
    %c0_i32 = arith.constant 0 : i32
    %c0_i32_0 = arith.constant 0 : i32
    %c0_i32_1 = arith.constant 0 : i32
    return %c0_i32, %c0_i32_0 : i32, i32
  }
  func.func @transform_3(%arg0: i32, %arg1: i32) -> (i32, i32) {
    %c0_i32 = arith.constant 0 : i32
    %c0_i32_0 = arith.constant 0 : i32
    return %c0_i32, %arg1 : i32, i32
  }
  func.func @transform_4(%arg0: i32, %arg1: i32) -> (i32, i32) {
    %c0_i32 = arith.constant 0 : i32
    %c0_i32_0 = arith.constant 0 : i32
    return %c0_i32, %arg1 : i32, i32
  }
  func.func @transform_5(%arg0: i32, %arg1: i32) -> (i32, i32) {
    %c0_i32 = arith.constant 0 : i32
    return %arg0, %arg1 : i32, i32
  }
}

</mosaic_0001>

<llo_original>
// kernel: seq2seq_forward.5
$region0: #{seq2seq_forward.5}
  #allocation0 [shape = 'u32[]', space=smem, size = 0x4, offset = 0x4, fixed_abs, tag = 'smem constant byte address 0x4 - core index']
  #allocation1 [shape = 'u32[72,128]{1,0:T(1,128)}', space=vmem, size = 0x9000, scoped, tag = 'internal scratch']
  %s0 = inlined_call_operand.vmem [shape: bf16[2,8,32], index: 0, kind: input, shape index: {}]
  %s1 = inlined_call_operand.vmem [shape: f32[2,8,8], index: 1, kind: input, shape index: {}]
  %s2 = inlined_call_operand.vmem [shape: bf16[32,96], index: 2, kind: input, shape index: {}]
  %s3 = inlined_call_operand.vmem [shape: f32[1,96], index: 3, kind: input, shape index: {}]
  %s4 = inlined_call_operand.vmem [shape: bf16[32,32], index: 4, kind: input, shape index: {}]
  %s5 = inlined_call_operand.vmem [shape: f32[1,32], index: 5, kind: input, shape index: {}]
  %s6 = inlined_call_operand.vmem [shape: f32[1,32], index: 6, kind: input, shape index: {}]
  %s7 = inlined_call_operand.vmem [shape: f32[1,32], index: 7, kind: input, shape index: {}]
  %s8 = inlined_call_operand.vmem [shape: bf16[32,64], index: 8, kind: input, shape index: {}]
  %s9 = inlined_call_operand.vmem [shape: f32[1,64], index: 9, kind: input, shape index: {}]
  %s10 = inlined_call_operand.vmem [shape: bf16[64,32], index: 10, kind: input, shape index: {}]
  %s11 = inlined_call_operand.vmem [shape: f32[1,32], index: 11, kind: input, shape index: {}]
  %s12 = inlined_call_operand.vmem [shape: f32[1,32], index: 12, kind: input, shape index: {}]
  %s13 = inlined_call_operand.vmem [shape: f32[1,32], index: 13, kind: input, shape index: {}]
  %s14 = inlined_call_operand.vmem [shape: bf16[2,8,32], index: 14, kind: output, shape index: {}]
  %s15 = sld [smem:[#allocation0]]
  $region89: #{seq2seq_forward.5} parent=0
    _
  %s17 = ssub.s32 1, %s15
  %s18 = scalar_select 0, %s17, %s15
  loop: start=0, step=1, limit=4
  $region2: #{seq2seq_forward.5} parent=0 // loop_pre_header
    _
  $region3: #{seq2seq_forward.5} parent=0 // loop_header
    %s20 = sphi 0, %s24
    %p21 = scmp.ge.s32.totalorder %s20, 4
    %s30 = sphi 0, %s32
    %s33 = sphi 0, %s30
    %s34 = sphi 0, %s33
    %s50 = sphi 0, %s34
    %s56 = sphi 0, %s58
    %s59 = sphi 0, %s56
    %s60 = sphi 0, %s59
    %s76 = sphi 0, %s60
    %s80 = sphi 0, %s80
    %s82 = sphi 0, %s80
    %s83 = sphi 0, %s82
    %s97 = sphi 0, %s83
    %s101 = sphi 0, %s101
    %s103 = sphi 0, %s101
    %s104 = sphi 0, %s103
    %s118 = sphi 0, %s104
    %s122 = sphi 0, %s122
    %s124 = sphi 0, %s122
    %s125 = sphi 0, %s124
    %s139 = sphi 0, %s125
    %s143 = sphi 0, %s143
    %s145 = sphi 0, %s143
    %s146 = sphi 0, %s145
    %s160 = sphi 0, %s146
    %s164 = sphi 0, %s164
    %s166 = sphi 0, %s164
    %s167 = sphi 0, %s166
    %s181 = sphi 0, %s167
    %s185 = sphi 0, %s185
    %s187 = sphi 0, %s185
    %s188 = sphi 0, %s187
    %s202 = sphi 0, %s188
    %s206 = sphi 0, %s206
    %s208 = sphi 0, %s206
    %s209 = sphi 0, %s208
    %s223 = sphi 0, %s209
    %s227 = sphi 0, %s227
    %s229 = sphi 0, %s227
    %s230 = sphi 0, %s229
    %s244 = sphi 0, %s230
    %s248 = sphi 0, %s248
    %s250 = sphi 0, %s248
    %s251 = sphi 0, %s250
    %s265 = sphi 0, %s251
    %s269 = sphi 0, %s269
    %s271 = sphi 0, %s269
    %s272 = sphi 0, %s271
    %s286 = sphi 0, %s272
    %s290 = sphi 0, %s290
    %s292 = sphi 0, %s290
    %s293 = sphi 0, %s292
    %s307 = sphi 0, %s293
    %s311 = sphi 0, %s311
    %s313 = sphi 0, %s311
    %s314 = sphi 0, %s313
    %s328 = sphi 0, %s314
    %s334 = sphi 0, %s336
    %s337 = sphi 0, %s334
    %s338 = sphi 0, %s337
    %s354 = sphi 0, %s338
  $region4: #{seq2seq_forward.5} parent=0 // loop_header_branch
    %23 = sbr.rel (%p21) target = $region8
  $region5: #{seq2seq_forward.5} parent=0 // loop_body
    %s25 = ssub.s32 %s20, 1
    %s26 = ssub.s32 %s20, 2
    %s27 = sadd.s32 %s20, 1
    %s28 = ssub.s32 %s20, %s27
    %p29 = scmp.eq.s32.totalorder %s28, 0
    %s31 = sadd.s32 %s30, 1
    %s32 = scalar_select %p29, %s30, %s31
    %p35 = pneg %p29
    %p36 = scmp.eq.s32.totalorder %s20, 1
    %p37 = por %p35, %p36
    %p38 = scmp.ne.s32.totalorder %s30, %s33
    %p39 = scmp.eq.s32.totalorder %s20, 0
    %p40 = por %p38, %p39
    %p41 = scmp.ne.s32.totalorder %s30, %s33
    %p42 = scmp.eq.s32.totalorder %s25, 1
    %p43 = por %p41, %p42
    %p44 = scmp.ne.s32.totalorder %s33, %s34
    %p45 = scmp.eq.s32.totalorder %s25, 0
    %p46 = por %p44, %p45
    %p47 = scmp.ne.s32.totalorder %s33, %s34
    %p48 = scmp.eq.s32.totalorder %s26, 1
    %p49 = por %p47, %p48
    %p51 = scmp.ne.s32.totalorder %s34, %s50
    %p52 = scmp.eq.s32.totalorder %s26, 0
    %p53 = por %p51, %p52
    %s54 = ssub.s32 %s20, %s27
    %p55 = scmp.eq.s32.totalorder %s54, 0
    %s57 = sadd.s32 %s56, 1
    %s58 = scalar_select %p55, %s56, %s57
    %p61 = pneg %p55
    %p62 = scmp.eq.s32.totalorder %s20, 1
    %p63 = por %p61, %p62
    %p64 = scmp.ne.s32.totalorder %s56, %s59
    %p65 = scmp.eq.s32.totalorder %s20, 0
    %p66 = por %p64, %p65
    %p67 = scmp.ne.s32.totalorder %s56, %s59
    %p68 = scmp.eq.s32.totalorder %s25, 1
    %p69 = por %p67, %p68
    %p70 = scmp.ne.s32.totalorder %s59, %s60
    %p71 = scmp.eq.s32.totalorder %s25, 0
    %p72 = por %p70, %p71
    %p73 = scmp.ne.s32.totalorder %s59, %s60
    %p74 = scmp.eq.s32.totalorder %s26, 1
    %p75 = por %p73, %p74
    %p77 = scmp.ne.s32.totalorder %s60, %s76
    %p78 = scmp.eq.s32.totalorder %s26, 0
    %p79 = por %p77, %p78
    %s81 = sadd.s32 %s80, 1
    %p84 = scmp.eq.s32.totalorder %s20, 1
    %p85 = scmp.ne.s32.totalorder %s80, %s82
    %p86 = scmp.eq.s32.totalorder %s20, 0
    %p87 = por %p85, %p86
    %p88 = scmp.ne.s32.totalorder %s80, %s82
    %p89 = scmp.eq.s32.totalorder %s25, 1
    %p90 = por %p88, %p89
    %p91 = scmp.ne.s32.totalorder %s82, %s83
    %p92 = scmp.eq.s32.totalorder %s25, 0
    %p93 = por %p91, %p92
    %p94 = scmp.ne.s32.totalorder %s82, %s83
    %p95 = scmp.eq.s32.totalorder %s26, 1
    %p96 = por %p94, %p95
    %p98 = scmp.ne.s32.totalorder %s83, %s97
    %p99 = scmp.eq.s32.totalorder %s26, 0
    %p100 = por %p98, %p99
    %s102 = sadd.s32 %s101, 1
    %p105 = scmp.eq.s32.totalorder %s20, 1
    %p106 = scmp.ne.s32.totalorder %s101, %s103
    %p107 = scmp.eq.s32.totalorder %s20, 0
    %p108 = por %p106, %p107
    %p109 = scmp.ne.s32.totalorder %s101, %s103
    %p110 = scmp.eq.s32.totalorder %s25, 1
    %p111 = por %p109, %p110
    %p112 = scmp.ne.s32.totalorder %s103, %s104
    %p113 = scmp.eq.s32.totalorder %s25, 0
    %p114 = por %p112, %p113
    %p115 = scmp.ne.s32.totalorder %s103, %s104
    %p116 = scmp.eq.s32.totalorder %s26, 1
    %p117 = por %p115, %p116
    %p119 = scmp.ne.s32.totalorder %s104, %s118
    %p120 = scmp.eq.s32.totalorder %s26, 0
    %p121 = por %p119, %p120
    %s123 = sadd.s32 %s122, 1
    %p126 = scmp.eq.s32.totalorder %s20, 1
    %p127 = scmp.ne.s32.totalorder %s122, %s124
    %p128 = scmp.eq.s32.totalorder %s20, 0
    %p129 = por %p127, %p128
    %p130 = scmp.ne.s32.totalorder %s122, %s124
    %p131 = scmp.eq.s32.totalorder %s25, 1
    %p132 = por %p130, %p131
    %p133 = scmp.ne.s32.totalorder %s124, %s125
    %p134 = scmp.eq.s32.totalorder %s25, 0
    %p135 = por %p133, %p134
    %p136 = scmp.ne.s32.totalorder %s124, %s125
    %p137 = scmp.eq.s32.totalorder %s26, 1
    %p138 = por %p136, %p137
    %p140 = scmp.ne.s32.totalorder %s125, %s139
    %p141 = scmp.eq.s32.totalorder %s26, 0
    %p142 = por %p140, %p141
    %s144 = sadd.s32 %s143, 1
    %p147 = scmp.eq.s32.totalorder %s20, 1
    %p148 = scmp.ne.s32.totalorder %s143, %s145
    %p149 = scmp.eq.s32.totalorder %s20, 0
    %p150 = por %p148, %p149
    %p151 = scmp.ne.s32.totalorder %s143, %s145
    %p152 = scmp.eq.s32.totalorder %s25, 1
    %p153 = por %p151, %p152
    %p154 = scmp.ne.s32.totalorder %s145, %s146
    %p155 = scmp.eq.s32.totalorder %s25, 0
    %p156 = por %p154, %p155
    %p157 = scmp.ne.s32.totalorder %s145, %s146
    %p158 = scmp.eq.s32.totalorder %s26, 1
    %p159 = por %p157, %p158
    %p161 = scmp.ne.s32.totalorder %s146, %s160
    %p162 = scmp.eq.s32.totalorder %s26, 0
    %p163 = por %p161, %p162
    %s165 = sadd.s32 %s164, 1
    %p168 = scmp.eq.s32.totalorder %s20, 1
    %p169 = scmp.ne.s32.totalorder %s164, %s166
    %p170 = scmp.eq.s32.totalorder %s20, 0
    %p171 = por %p169, %p170
    %p172 = scmp.ne.s32.totalorder %s164, %s166
    %p173 = scmp.eq.s32.totalorder %s25, 1
    %p174 = por %p172, %p173
    %p175 = scmp.ne.s32.totalorder %s166, %s167
    %p176 = scmp.eq.s32.totalorder %s25, 0
    %p177 = por %p175, %p176
    %p178 = scmp.ne.s32.totalorder %s166, %s167
    %p179 = scmp.eq.s32.totalorder %s26, 1
    %p180 = por %p178, %p179
    %p182 = scmp.ne.s32.totalorder %s167, %s181
    %p183 = scmp.eq.s32.totalorder %s26, 0
    %p184 = por %p182, %p183
    %s186 = sadd.s32 %s185, 1
    %p189 = scmp.eq.s32.totalorder %s20, 1
    %p190 = scmp.ne.s32.totalorder %s185, %s187
    %p191 = scmp.eq.s32.totalorder %s20, 0
    %p192 = por %p190, %p191
    %p193 = scmp.ne.s32.totalorder %s185, %s187
    %p194 = scmp.eq.s32.totalorder %s25, 1
    %p195 = por %p193, %p194
    %p196 = scmp.ne.s32.totalorder %s187, %s188
    %p197 = scmp.eq.s32.totalorder %s25, 0
    %p198 = por %p196, %p197
    %p199 = scmp.ne.s32.totalorder %s187, %s188
    %p200 = scmp.eq.s32.totalorder %s26, 1
    %p201 = por %p199, %p200
    %p203 = scmp.ne.s32.totalorder %s188, %s202
    %p204 = scmp.eq.s32.totalorder %s26, 0
    %p205 = por %p203, %p204
    %s207 = sadd.s32 %s206, 1
    %p210 = scmp.eq.s32.totalorder %s20, 1
    %p211 = scmp.ne.s32.totalorder %s206, %s208
    %p212 = scmp.eq.s32.totalorder %s20, 0
    %p213 = por %p211, %p212
    %p214 = scmp.ne.s32.totalorder %s206, %s208
    %p215 = scmp.eq.s32.totalorder %s25, 1
    %p216 = por %p214, %p215
    %p217 = scmp.ne.s32.totalorder %s208, %s209
    %p218 = scmp.eq.s32.totalorder %s25, 0
    %p219 = por %p217, %p218
    %p220 = scmp.ne.s32.totalorder %s208, %s209
    %p221 = scmp.eq.s32.totalorder %s26, 1
    %p222 = por %p220, %p221
    %p224 = scmp.ne.s32.totalorder %s209, %s223
    %p225 = scmp.eq.s32.totalorder %s26, 0
    %p226 = por %p224, %p225
    %s228 = sadd.s32 %s227, 1
    %p231 = scmp.eq.s32.totalorder %s20, 1
    %p232 = scmp.ne.s32.totalorder %s227, %s229
    %p233 = scmp.eq.s32.totalorder %s20, 0
    %p234 = por %p232, %p233
    %p235 = scmp.ne.s32.totalorder %s227, %s229
    %p236 = scmp.eq.s32.totalorder %s25, 1
    %p237 = por %p235, %p236
    %p238 = scmp.ne.s32.totalorder %s229, %s230
    %p239 = scmp.eq.s32.totalorder %s25, 0
    %p240 = por %p238, %p239
    %p241 = scmp.ne.s32.totalorder %s229, %s230
    %p242 = scmp.eq.s32.totalorder %s26, 1
    %p243 = por %p241, %p242
    %p245 = scmp.ne.s32.totalorder %s230, %s244
    %p246 = scmp.eq.s32.totalorder %s26, 0
    %p247 = por %p245, %p246
    %s249 = sadd.s32 %s248, 1
    %p252 = scmp.eq.s32.totalorder %s20, 1
    %p253 = scmp.ne.s32.totalorder %s248, %s250
    %p254 = scmp.eq.s32.totalorder %s20, 0
    %p255 = por %p253, %p254
    %p256 = scmp.ne.s32.totalorder %s248, %s250
    %p257 = scmp.eq.s32.totalorder %s25, 1
    %p258 = por %p256, %p257
    %p259 = scmp.ne.s32.totalorder %s250, %s251
    %p260 = scmp.eq.s32.totalorder %s25, 0
    %p261 = por %p259, %p260
    %p262 = scmp.ne.s32.totalorder %s250, %s251
    %p263 = scmp.eq.s32.totalorder %s26, 1
    %p264 = por %p262, %p263
    %p266 = scmp.ne.s32.totalorder %s251, %s265
    %p267 = scmp.eq.s32.totalorder %s26, 0
    %p268 = por %p266, %p267
    %s270 = sadd.s32 %s269, 1
    %p273 = scmp.eq.s32.totalorder %s20, 1
    %p274 = scmp.ne.s32.totalorder %s269, %s271
    %p275 = scmp.eq.s32.totalorder %s20, 0
    %p276 = por %p274, %p275
    %p277 = scmp.ne.s32.totalorder %s269, %s271
    %p278 = scmp.eq.s32.totalorder %s25, 1
    %p279 = por %p277, %p278
    %p280 = scmp.ne.s32.totalorder %s271, %s272
    %p281 = scmp.eq.s32.totalorder %s25, 0
    %p282 = por %p280, %p281
    %p283 = scmp.ne.s32.totalorder %s271, %s272
    %p284 = scmp.eq.s32.totalorder %s26, 1
    %p285 = por %p283, %p284
    %p287 = scmp.ne.s32.totalorder %s272, %s286
    %p288 = scmp.eq.s32.totalorder %s26, 0
    %p289 = por %p287, %p288
    %s291 = sadd.s32 %s290, 1
    %p294 = scmp.eq.s32.totalorder %s20, 1
    %p295 = scmp.ne.s32.totalorder %s290, %s292
    %p296 = scmp.eq.s32.totalorder %s20, 0
    %p297 = por %p295, %p296
    %p298 = scmp.ne.s32.totalorder %s290, %s292
    %p299 = scmp.eq.s32.totalorder %s25, 1
    %p300 = por %p298, %p299
    %p301 = scmp.ne.s32.totalorder %s292, %s293
    %p302 = scmp.eq.s32.totalorder %s25, 0
    %p303 = por %p301, %p302
    %p304 = scmp.ne.s32.totalorder %s292, %s293
    %p305 = scmp.eq.s32.totalorder %s26, 1
    %p306 = por %p304, %p305
    %p308 = scmp.ne.s32.totalorder %s293, %s307
    %p309 = scmp.eq.s32.totalorder %s26, 0
    %p310 = por %p308, %p309
    %s312 = sadd.s32 %s311, 1
    %p315 = scmp.eq.s32.totalorder %s20, 1
    %p316 = scmp.ne.s32.totalorder %s311, %s313
    %p317 = scmp.eq.s32.totalorder %s20, 0
    %p318 = por %p316, %p317
    %p319 = scmp.ne.s32.totalorder %s311, %s313
    %p320 = scmp.eq.s32.totalorder %s25, 1
    %p321 = por %p319, %p320
    %p322 = scmp.ne.s32.totalorder %s313, %s314
    %p323 = scmp.eq.s32.totalorder %s25, 0
    %p324 = por %p322, %p323
    %p325 = scmp.ne.s32.totalorder %s313, %s314
    %p326 = scmp.eq.s32.totalorder %s26, 1
    %p327 = por %p325, %p326
    %p329 = scmp.ne.s32.totalorder %s314, %s328
    %p330 = scmp.eq.s32.totalorder %s26, 0
    %p331 = por %p329, %p330
    %s332 = ssub.s32 %s20, %s27
    %p333 = scmp.eq.s32.totalorder %s332, 0
    %s335 = sadd.s32 %s334, 1
    %s336 = scalar_select %p333, %s334, %s335
    %p339 = pneg %p333
    %p340 = scmp.eq.s32.totalorder %s20, 1
    %p341 = por %p339, %p340
    %p342 = scmp.ne.s32.totalorder %s334, %s337
    %p343 = scmp.eq.s32.totalorder %s20, 0
    %p344 = por %p342, %p343
    %p345 = scmp.ne.s32.totalorder %s334, %s337
    %p346 = scmp.eq.s32.totalorder %s25, 1
    %p347 = por %p345, %p346
    %p348 = scmp.ne.s32.totalorder %s337, %s338
    %p349 = scmp.eq.s32.totalorder %s25, 0
    %p350 = por %p348, %p349
    %p351 = scmp.ne.s32.totalorder %s337, %s338
    %p352 = scmp.eq.s32.totalorder %s26, 1
    %p353 = por %p351, %p352
    %p355 = scmp.ne.s32.totalorder %s338, %s354
    %p356 = scmp.eq.s32.totalorder %s26, 0
    %p357 = por %p355, %p356
    %p358 = scmp.le.s32.totalorder 1, %s20
    %p359 = scmp.lt.s32.totalorder %s20, 3
    %p360 = pnand %p358, %p359
    %p361 = pneg %p360
    // Predicated region
    $region9: #{seq2seq_forward.5} parent=5 // pred_check
      _
    $region10: #{seq2seq_forward.5} parent=5 // pred_check_branch
      %363 = sbr.rel (%p360) target = $region12
    $region11: #{seq2seq_forward.5} parent=5 // pred_region
      %s364 = ssub.s32 %s20, 1
      // Predicated region
      $region13: #{seq2seq_forward.5} parent=11 // pred_check
        %p365 = pneg %p93
      $region14: #{seq2seq_forward.5} parent=11 // pred_check_branch
        %367 = sbr.rel (%p365) target = $region16
      $region15: #{seq2seq_forward.5} parent=11 // pred_region
        _
      $region16: #{seq2seq_forward.5} parent=11 // pred_fallthru
        _
      // Predicated region
      $region17: #{seq2seq_forward.5} parent=11 // pred_check
        %p368 = pneg %p114
      $region18: #{seq2seq_forward.5} parent=11 // pred_check_branch
        %370 = sbr.rel (%p368) target = $region20
      $region19: #{seq2seq_forward.5} parent=11 // pred_region
        _
      $region20: #{seq2seq_forward.5} parent=11 // pred_fallthru
        _
      // Predicated region
      $region21: #{seq2seq_forward.5} parent=11 // pred_check
        %p371 = pneg %p135
      $region22: #{seq2seq_forward.5} parent=11 // pred_check_branch
        %373 = sbr.rel (%p371) target = $region24
      $region23: #{seq2seq_forward.5} parent=11 // pred_region
        _
      $region24: #{seq2seq_forward.5} parent=11 // pred_fallthru
        _
      // Predicated region
      $region25: #{seq2seq_forward.5} parent=11 // pred_check
        %p374 = pneg %p156
      $region26: #{seq2seq_forward.5} parent=11 // pred_check_branch
        %376 = sbr.rel (%p374) target = $region28
      $region27: #{seq2seq_forward.5} parent=11 // pred_region
        _
      $region28: #{seq2seq_forward.5} parent=11 // pred_fallthru
        _
      // Predicated region
      $region29: #{seq2seq_forward.5} parent=11 // pred_check
        %p377 = pneg %p177
      $region30: #{seq2seq_forward.5} parent=11 // pred_check_branch
        %379 = sbr.rel (%p377) target = $region32
      $region31: #{seq2seq_forward.5} parent=11 // pred_region
        _
      $region32: #{seq2seq_forward.5} parent=11 // pred_fallthru
        _
      // Predicated region
      $region33: #{seq2seq_forward.5} parent=11 // pred_check
        %p380 = pneg %p198
      $region34: #{seq2seq_forward.5} parent=11 // pred_check_branch
        %382 = sbr.rel (%p380) target = $region36
      $region35: #{seq2seq_forward.5} parent=11 // pred_region
        _
      $region36: #{seq2seq_forward.5} parent=11 // pred_fallthru
        _
      // Predicated region
      $region37: #{seq2seq_forward.5} parent=11 // pred_check
        %p383 = pneg %p219
      $region38: #{seq2seq_forward.5} parent=11 // pred_check_branch
        %385 = sbr.rel (%p383) target = $region40
      $region39: #{seq2seq_forward.5} parent=11 // pred_region
        _
      $region40: #{seq2seq_forward.5} parent=11 // pred_fallthru
        _
      // Predicated region
      $region41: #{seq2seq_forward.5} parent=11 // pred_check
        %p386 = pneg %p240
      $region42: #{seq2seq_forward.5} parent=11 // pred_check_branch
        %388 = sbr.rel (%p386) target = $region44
      $region43: #{seq2seq_forward.5} parent=11 // pred_region
        _
      $region44: #{seq2seq_forward.5} parent=11 // pred_fallthru
        _
      // Predicated region
      $region45: #{seq2seq_forward.5} parent=11 // pred_check
        %p389 = pneg %p261
      $region46: #{seq2seq_forward.5} parent=11 // pred_check_branch
        %391 = sbr.rel (%p389) target = $region48
      $region47: #{seq2seq_forward.5} parent=11 // pred_region
        _
      $region48: #{seq2seq_forward.5} parent=11 // pred_fallthru
        _
      // Predicated region
      $region49: #{seq2seq_forward.5} parent=11 // pred_check
        %p392 = pneg %p282
      $region50: #{seq2seq_forward.5} parent=11 // pred_check_branch
        %394 = sbr.rel (%p392) target = $region52
      $region51: #{seq2seq_forward.5} parent=11 // pred_region
        _
      $region52: #{seq2seq_forward.5} parent=11 // pred_fallthru
        _
      // Predicated region
      $region53: #{seq2seq_forward.5} parent=11 // pred_check
        %p395 = pneg %p303
      $region54: #{seq2seq_forward.5} parent=11 // pred_check_branch
        %397 = sbr.rel (%p395) target = $region56
      $region55: #{seq2seq_forward.5} parent=11 // pred_region
        _
      $region56: #{seq2seq_forward.5} parent=11 // pred_fallthru
        _
      // Predicated region
      $region57: #{seq2seq_forward.5} parent=11 // pred_check
        %p398 = pneg %p324
      $region58: #{seq2seq_forward.5} parent=11 // pred_check_branch
        %400 = sbr.rel (%p398) target = $region60
      $region59: #{seq2seq_forward.5} parent=11 // pred_region
        _
      $region60: #{seq2seq_forward.5} parent=11 // pred_fallthru
        _
    $region12: #{seq2seq_forward.5} parent=5 // pred_fallthru
      _
    %p401 = scmp.lt.s32.totalorder %s20, 2
    // Predicated region
    $region61: #{seq2seq_forward.5} parent=5 // pred_check
      %p402 = pneg %p401
    $region62: #{seq2seq_forward.5} parent=5 // pred_check_branch
      %404 = sbr.rel (%p402) target = $region64
    $region63: #{seq2seq_forward.5} parent=5 // pred_region
      // Predicated region
      $region65: #{seq2seq_forward.5} parent=63 // pred_check
        %p405 = pneg %p40
      $region66: #{seq2seq_forward.5} parent=63 // pred_check_branch
        %407 = sbr.rel (%p405) target = $region68
      $region67: #{seq2seq_forward.5} parent=63 // pred_region
        %p408 = scmp.lt.s32.totalorder %s20, 1
        %s409 = scalar_select %p408, %s20, 1
        %s410 = smul.addr %s409, 4
        %s411 = scalar_lea.vmem %s0, %s410
      $region68: #{seq2seq_forward.5} parent=63 // pred_fallthru
        _
      // Predicated region
      $region69: #{seq2seq_forward.5} parent=63 // pred_check
        %p412 = pneg %p66
      $region70: #{seq2seq_forward.5} parent=63 // pred_check_branch
        %414 = sbr.rel (%p412) target = $region72
      $region71: #{seq2seq_forward.5} parent=63 // pred_region
        %p415 = scmp.lt.s32.totalorder %s20, 1
        %s416 = scalar_select %p415, %s20, 1
        %s417 = smul.addr %s416, 8
        %s418 = scalar_lea.vmem %s1, %s417
      $region72: #{seq2seq_forward.5} parent=63 // pred_fallthru
        _
    $region64: #{seq2seq_forward.5} parent=5 // pred_fallthru
      _
    %p419 = scmp.le.s32.totalorder 1, %s20
    %p420 = scmp.lt.s32.totalorder %s20, 3
    %p421 = pnand %p419, %p420
    %p422 = pneg %p421
    // Predicated region
    $region73: #{seq2seq_forward.5} parent=5 // pred_check
      _
    $region74: #{seq2seq_forward.5} parent=5 // pred_check_branch
      %424 = sbr.rel (%p421) target = $region76
    $region75: #{seq2seq_forward.5} parent=5 // pred_region
      %s425 = ssub.s32 %s20, 1
      %p426 = scmp.lt.s32.totalorder %s25, 1
      %s427 = scalar_select %p426, %s25, 1
      %s428 = smul.addr %s427, 4
      %s429 = scalar_lea.vmem %s0, %s428
      %p430 = pneg %p46
      %p431 = pneg %p43
      %p432 = scmp.lt.s32.totalorder %s25, 1
      %s433 = scalar_select %p432, %s25, 1
      %s434 = smul.addr %s433, 8
      %s435 = scalar_lea.vmem %s1, %s434
      %p436 = pneg %p72
      %p437 = pneg %p69
      %p438 = pneg %p93
      %p439 = pneg %p90
      %p440 = pneg %p114
      %p441 = pneg %p111
      %p442 = pneg %p135
      %p443 = pneg %p132
      %p444 = pneg %p156
      %p445 = pneg %p153
      %p446 = pneg %p177
      %p447 = pneg %p174
      %p448 = pneg %p198
      %p449 = pneg %p195
      %p450 = pneg %p219
      %p451 = pneg %p216
      %p452 = pneg %p240
      %p453 = pneg %p237
      %p454 = pneg %p261
      %p455 = pneg %p258
      %p456 = pneg %p282
      %p457 = pneg %p279
      %p458 = pneg %p303
      %p459 = pneg %p300
      %p460 = pneg %p324
      %p461 = pneg %p321
      %p462 = pneg %p350
      %p463 = pneg %p347
      %p464 = scmp.lt.s32.totalorder %s25, 1
      %s465 = scalar_select %p464, %s25, 1
      %s466 = smul.addr %s465, 4
      %s467 = scalar_lea.vmem %s14, %s466
      %p468 = scmp.lt.s32.totalorder %s25, 1
      %s469 = scalar_select %p468, %s25, 1
      %s470 = smul.addr %s469, 4
      %s471 = scalar_lea.vmem %s0, %s470
      %p472 = scmp.lt.s32.totalorder %s25, 1
      %s473 = scalar_select %p472, %s25, 1
      %s474 = smul.addr %s473, 8
      %s475 = scalar_lea.vmem %s1, %s474
      %p476 = scmp.lt.s32.totalorder %s25, 1
      %s477 = scalar_select %p476, %s25, 1
      %s478 = smul.addr %s477, 4
      %s479 = scalar_lea.vmem %s14, %s478
      %v481 = vld [vmem:[%s471] sm:$0xf]
      %v482 = vld [vmem:[%s2] sm:$0xf]
      %v483 = vld [vmem:[%s2 + $0x4] sm:$0xf]
      %v484 = vld [vmem:[%s2 + $0x8] sm:$0xf]
      %v485 = vld [vmem:[%s2 + $0xc] sm:$0xf]
      %v486 = vld [vmem:[%s3] sm:$0x1]
      %v488 = vperm.slane %v486, 0
      %v494 = vunpack.c.l.b16 %v482
      %v495 = vunpack.c.l.b16 %v483
      %v496 = vunpack.c.l.b16 %v484
      %v497 = vunpack.c.l.b16 %v485
      %v498 = vpack.c.b16 %v495, %v494
      %v499 = vpack.c.b16 %v497, %v496
      %vm502 = vcmask 261120
      %v504 = vsel %vm502, %v481, 0
      %506 = vmatpush.bf16.msra.mxu0 0
      %507 = vmatpush.bf16.msra.mxu0 0
      %508 = vmatpush.bf16.msra.mxu0 0
      %509 = vmatpush.bf16.msra.mxu0 0
      %510 = vmatpush.bf16.msra.mxu0 0
      %511 = vmatpush.bf16.msra.mxu0 0
      %512 = vmatpush.bf16.msra.mxu0 %v499
      %513 = vmatpush.bf16.msra.mxu0 %v498
      %514 = vmatmul.bf16.gmra.mxu0 %v504
      %v515 = vpop.f32.mrf.mxu0
      %v516 = vadd.f32 %v488, %v515
      %v517 = vpop.f32.mrf.mxu0
      %518 = vdwg.mxu0
      %v519 = vld [vmem:[%s475] sm:$0xff]
      %v520 = vpack.c.bf16 %v516, %v516
      %v522 = vunpack.c.l.b16 %v520
      %v523 = vpack.c.b16 %v522, %v522
      %524 = vrot.lane.b32.xlu0 %v523, 96
      %v525 = vpop.permute.xlu0 %524
      %vm526 = vcmask 64512
      %v528 = vsel %vm526, %v520, 0
      %v531 = vsel %vm526, %v525, 0
      %533 = vmatpush.bf16.xpose.msra.mxu0 0
      %534 = vmatpush.bf16.xpose.msra.mxu0 0
      %535 = vmatpush.bf16.xpose.msra.mxu0 0
      %536 = vmatpush.bf16.xpose.msra.mxu0 0
      %537 = vmatpush.bf16.xpose.msra.mxu0 0
      %538 = vmatpush.bf16.xpose.msra.mxu0 0
      %539 = vmatpush.bf16.xpose.msra.mxu0 0
      %540 = vmatpush.bf16.xpose.msra.mxu0 %v531
      %541 = vmatmul.bf16.gmra.mxu0 %v528
      %v542 = vpop.f32.mrf.mxu0
      %v543 = vadd.f32 0.0, %v542
      %v544 = vpop.f32.mrf.mxu0
      %545 = vdwg.mxu0
      %v546 = vmul.f32 %v543, 0.35355338
      %v547 = vadd.f32 %v546, %v519
      %v548 = vsel %vm526, %v547, -inf
      %549 = vmax.xlane.f32.xlu0 %v548
      %v550 = vpop.xlane.xlu0 %549
      %v551 = vsub.f32 %v547, %v550
      %v552 = vmul.f32 %v551, 1.442695
      %v553 = vpow.pop %v552
      %v554 = vsel %vm526, %v553, 0.0
      %555 = vadd.xlane.f32.xlu0 %v554
      %v556 = vpop.xlane.xlu0 %555
      %v557 = vrcp.pop %v556
      %v558 = vmul.f32 %v553, %v557
      %v559 = vpack.c.bf16 %v558, %v558
      %560 = vrot.lane.b32.xlu0 %v523, 64
      %v561 = vpop.permute.xlu0 %560
      %v563 = vsel %vm526, %v559, 0
      %vm565 = vcmask 1043456
      %v567 = vsel %vm565, %v561, 0
      %569 = vmatpush.bf16.msra.mxu0 0
      %570 = vmatpush.bf16.msra.mxu0 0
      %571 = vmatpush.bf16.msra.mxu0 0
      %572 = vmatpush.bf16.msra.mxu0 0
      %573 = vmatpush.bf16.msra.mxu0 0
      %574 = vmatpush.bf16.msra.mxu0 0
      %575 = vmatpush.bf16.msra.mxu0 0
      %576 = vmatpush.bf16.msra.mxu0 %v567
      %577 = vmatmul.bf16.gmra.mxu0 %v563
      %v578 = vpop.f32.mrf.mxu0
      %v579 = vadd.f32 0.0, %v578
      %v580 = vpop.f32.mrf.mxu0
      %581 = vdwg.mxu0
      %v582 = vpack.c.bf16 %v579, %v579
      %v583 = vld [vmem:[%s4] sm:$0xf]
      %584 = vrot.lane.b32.xlu0 %v523, 120
      %v585 = vpop.permute.xlu0 %584
      %586 = vrot.lane.b32.xlu0 %v523, 88
      %v587 = vpop.permute.xlu0 %586
      %v589 = vsel %vm526, %v585, 0
      %v592 = vsel %vm526, %v587, 0
      %594 = vmatpush.bf16.xpose.msra.mxu0 0
      %595 = vmatpush.bf16.xpose.msra.mxu0 0
      %596 = vmatpush.bf16.xpose.msra.mxu0 0
      %597 = vmatpush.bf16.xpose.msra.mxu0 0
      %598 = vmatpush.bf16.xpose.msra.mxu0 0
      %599 = vmatpush.bf16.xpose.msra.mxu0 0
      %600 = vmatpush.bf16.xpose.msra.mxu0 0
      %601 = vmatpush.bf16.xpose.msra.mxu0 %v592
      %602 = vmatmul.bf16.gmra.mxu0 %v589
      %v603 = vpop.f32.mrf.mxu0
      %v604 = vadd.f32 0.0, %v603
      %v605 = vpop.f32.mrf.mxu0
      %606 = vdwg.mxu0
      %v607 = vmul.f32 %v604, 0.35355338
      %v608 = vadd.f32 %v607, %v519
      %v609 = vsel %vm526, %v608, -inf
      %610 = vmax.xlane.f32.xlu0 %v609
      %v611 = vpop.xlane.xlu0 %610
      %v612 = vsub.f32 %v608, %v611
      %v613 = vmul.f32 %v612, 1.442695
      %v614 = vpow.pop %v613
      %v615 = vsel %vm526, %v614, 0.0
      %616 = vadd.xlane.f32.xlu0 %v615
      %v617 = vpop.xlane.xlu0 %616
      %v618 = vrcp.pop %v617
      %v619 = vmul.f32 %v614, %v618
      %v620 = vpack.c.bf16 %v619, %v619
      %621 = vrot.lane.b32.xlu0 %v523, 56
      %v622 = vpop.permute.xlu0 %621
      %v624 = vsel %vm526, %v620, 0
      %v627 = vsel %vm565, %v622, 0
      %629 = vmatpush.bf16.msra.mxu0 0
      %630 = vmatpush.bf16.msra.mxu0 0
      %631 = vmatpush.bf16.msra.mxu0 0
      %632 = vmatpush.bf16.msra.mxu0 0
      %633 = vmatpush.bf16.msra.mxu0 0
      %634 = vmatpush.bf16.msra.mxu0 0
      %635 = vmatpush.bf16.msra.mxu0 0
      %636 = vmatpush.bf16.msra.mxu0 %v627
      %637 = vmatmul.bf16.gmra.mxu0 %v624
      %v638 = vpop.f32.mrf.mxu0
      %v639 = vadd.f32 0.0, %v638
      %v640 = vpop.f32.mrf.mxu0
      %641 = vdwg.mxu0
      %v642 = vpack.c.bf16 %v639, %v639
      %v643 = vld [vmem:[%s4 + $0x4] sm:$0xf]
      %v645 = vsel %vm526, %v642, 0
      %v648 = vsel %vm565, %v643, 0
      %650 = vmatpush.bf16.msra.mxu0 0
      %651 = vmatpush.bf16.msra.mxu0 0
      %652 = vmatpush.bf16.msra.mxu0 0
      %653 = vmatpush.bf16.msra.mxu0 0
      %654 = vmatpush.bf16.msra.mxu0 0
      %655 = vmatpush.bf16.msra.mxu0 0
      %656 = vmatpush.bf16.msra.mxu0 0
      %657 = vmatpush.bf16.msra.mxu0 %v648
      %658 = vmatmul.bf16.gmra.mxu0 %v645
      %v659 = vpop.f32.mrf.mxu0
      %v660 = vadd.f32 0.0, %v659
      %v661 = vpop.f32.mrf.mxu0
      %662 = vdwg.mxu0
      %v664 = vsel %vm526, %v582, 0
      %v667 = vsel %vm565, %v583, 0
      %669 = vmatpush.bf16.msra.mxu0 0
      %670 = vmatpush.bf16.msra.mxu0 0
      %671 = vmatpush.bf16.msra.mxu0 0
      %672 = vmatpush.bf16.msra.mxu0 0
      %673 = vmatpush.bf16.msra.mxu0 0
      %674 = vmatpush.bf16.msra.mxu0 0
      %675 = vmatpush.bf16.msra.mxu0 0
      %676 = vmatpush.bf16.msra.mxu0 %v667
      %677 = vmatmul.bf16.gmra.mxu0 %v664
      %v678 = vpop.f32.mrf.mxu0
      %v679 = vadd.f32 %v660, %v678
      %v680 = vpop.f32.mrf.mxu0
      %681 = vdwg.mxu0
      %682 = vrot.lane.b32.xlu0 %v523, 112
      %v683 = vpop.permute.xlu0 %682
      %684 = vrot.lane.b32.xlu0 %v523, 80
      %v685 = vpop.permute.xlu0 %684
      %v687 = vsel %vm526, %v683, 0
      %v690 = vsel %vm526, %v685, 0
      %692 = vmatpush.bf16.xpose.msra.mxu0 0
      %693 = vmatpush.bf16.xpose.msra.mxu0 0
      %694 = vmatpush.bf16.xpose.msra.mxu0 0
      %695 = vmatpush.bf16.xpose.msra.mxu0 0
      %696 = vmatpush.bf16.xpose.msra.mxu0 0
      %697 = vmatpush.bf16.xpose.msra.mxu0 0
      %698 = vmatpush.bf16.xpose.msra.mxu0 0
      %699 = vmatpush.bf16.xpose.msra.mxu0 %v690
      %700 = vmatmul.bf16.gmra.mxu0 %v687
      %v701 = vpop.f32.mrf.mxu0
      %v702 = vadd.f32 0.0, %v701
      %v703 = vpop.f32.mrf.mxu0
      %704 = vdwg.mxu0
      %v705 = vmul.f32 %v702, 0.35355338
      %v706 = vadd.f32 %v705, %v519
      %v707 = vsel %vm526, %v706, -inf
      %708 = vmax.xlane.f32.xlu0 %v707
      %v709 = vpop.xlane.xlu0 %708
      %v710 = vsub.f32 %v706, %v709
      %v711 = vmul.f32 %v710, 1.442695
      %v712 = vpow.pop %v711
      %v713 = vsel %vm526, %v712, 0.0
      %714 = vadd.xlane.f32.xlu0 %v713
      %v715 = vpop.xlane.xlu0 %714
      %v716 = vrcp.pop %v715
      %v717 = vmul.f32 %v712, %v716
      %v718 = vpack.c.bf16 %v717, %v717
      %719 = vrot.lane.b32.xlu0 %v523, 48
      %v720 = vpop.permute.xlu0 %719
      %v722 = vsel %vm526, %v718, 0
      %v725 = vsel %vm565, %v720, 0
      %727 = vmatpush.bf16.msra.mxu0 0
      %728 = vmatpush.bf16.msra.mxu0 0
      %729 = vmatpush.bf16.msra.mxu0 0
      %730 = vmatpush.bf16.msra.mxu0 0
      %731 = vmatpush.bf16.msra.mxu0 0
      %732 = vmatpush.bf16.msra.mxu0 0
      %733 = vmatpush.bf16.msra.mxu0 0
      %734 = vmatpush.bf16.msra.mxu0 %v725
      %735 = vmatmul.bf16.gmra.mxu0 %v722
      %v736 = vpop.f32.mrf.mxu0
      %v737 = vadd.f32 0.0, %v736
      %v738 = vpop.f32.mrf.mxu0
      %739 = vdwg.mxu0
      %v740 = vpack.c.bf16 %v737, %v737
      %v741 = vld [vmem:[%s4 + $0x8] sm:$0xf]
      %v743 = vsel %vm526, %v740, 0
      %v746 = vsel %vm565, %v741, 0
      %748 = vmatpush.bf16.msra.mxu0 0
      %749 = vmatpush.bf16.msra.mxu0 0
      %750 = vmatpush.bf16.msra.mxu0 0
      %751 = vmatpush.bf16.msra.mxu0 0
      %752 = vmatpush.bf16.msra.mxu0 0
      %753 = vmatpush.bf16.msra.mxu0 0
      %754 = vmatpush.bf16.msra.mxu0 0
      %755 = vmatpush.bf16.msra.mxu0 %v746
      %756 = vmatmul.bf16.gmra.mxu0 %v743
      %v757 = vpop.f32.mrf.mxu0
      %v758 = vadd.f32 0.0, %v757
      %v759 = vpop.f32.mrf.mxu0
      %760 = vdwg.mxu0
      %v761 = vadd.f32 %v679, %v758
      %762 = vrot.lane.b32.xlu0 %v523, 104
      %v763 = vpop.permute.xlu0 %762
      %764 = vrot.lane.b32.xlu0 %v523, 72
      %v765 = vpop.permute.xlu0 %764
      %v767 = vsel %vm526, %v763, 0
      %v770 = vsel %vm526, %v765, 0
      %772 = vmatpush.bf16.xpose.msra.mxu0 0
      %773 = vmatpush.bf16.xpose.msra.mxu0 0
      %774 = vmatpush.bf16.xpose.msra.mxu0 0
      %775 = vmatpush.bf16.xpose.msra.mxu0 0
      %776 = vmatpush.bf16.xpose.msra.mxu0 0
      %777 = vmatpush.bf16.xpose.msra.mxu0 0
      %778 = vmatpush.bf16.xpose.msra.mxu0 0
      %779 = vmatpush.bf16.xpose.msra.mxu0 %v770
      %780 = vmatmul.bf16.gmra.mxu0 %v767
      %v781 = vpop.f32.mrf.mxu0
      %v782 = vadd.f32 0.0, %v781
      %v783 = vpop.f32.mrf.mxu0
      %784 = vdwg.mxu0
      %v785 = vmul.f32 %v782, 0.35355338
      %v786 = vadd.f32 %v785, %v519
      %v787 = vsel %vm526, %v786, -inf
      %788 = vmax.xlane.f32.xlu0 %v787
      %v789 = vpop.xlane.xlu0 %788
      %v790 = vsub.f32 %v786, %v789
      %v791 = vmul.f32 %v790, 1.442695
      %v792 = vpow.pop %v791
      %v793 = vsel %vm526, %v792, 0.0
      %794 = vadd.xlane.f32.xlu0 %v793
      %v795 = vpop.xlane.xlu0 %794
      %v796 = vrcp.pop %v795
      %v797 = vmul.f32 %v792, %v796
      %v798 = vpack.c.bf16 %v797, %v797
      %799 = vrot.lane.b32.xlu0 %v523, 40
      %v800 = vpop.permute.xlu0 %799
      %v802 = vsel %vm526, %v798, 0
      %v805 = vsel %vm565, %v800, 0
      %807 = vmatpush.bf16.msra.mxu0 0
      %808 = vmatpush.bf16.msra.mxu0 0
      %809 = vmatpush.bf16.msra.mxu0 0
      %810 = vmatpush.bf16.msra.mxu0 0
      %811 = vmatpush.bf16.msra.mxu0 0
      %812 = vmatpush.bf16.msra.mxu0 0
      %813 = vmatpush.bf16.msra.mxu0 0
      %814 = vmatpush.bf16.msra.mxu0 %v805
      %815 = vmatmul.bf16.gmra.mxu0 %v802
      %v816 = vpop.f32.mrf.mxu0
      %v817 = vadd.f32 0.0, %v816
      %v818 = vpop.f32.mrf.mxu0
      %819 = vdwg.mxu0
      %v820 = vpack.c.bf16 %v817, %v817
      %v821 = vld [vmem:[%s4 + $0xc] sm:$0xf]
      %v823 = vsel %vm526, %v820, 0
      %v826 = vsel %vm565, %v821, 0
      %828 = vmatpush.bf16.msra.mxu0 0
      %829 = vmatpush.bf16.msra.mxu0 0
      %830 = vmatpush.bf16.msra.mxu0 0
      %831 = vmatpush.bf16.msra.mxu0 0
      %832 = vmatpush.bf16.msra.mxu0 0
      %833 = vmatpush.bf16.msra.mxu0 0
      %834 = vmatpush.bf16.msra.mxu0 0
      %835 = vmatpush.bf16.msra.mxu0 %v826
      %836 = vmatmul.bf16.gmra.mxu0 %v823
      %v837 = vpop.f32.mrf.mxu0
      %v838 = vadd.f32 0.0, %v837
      %v839 = vpop.f32.mrf.mxu0
      %840 = vdwg.mxu0
      %v841 = vadd.f32 %v761, %v838
      %v842 = vld [vmem:[%s5] sm:$0x1]
      %v844 = vperm.slane %v842, 0
      %v846 = vadd.f32 %v841, %v844
      %v847 = vunpack.c.l.bf16 %v481
      %v848 = vadd.f32 %v846, %v847
      %v849 = vld [vmem:[%s6] sm:$0x1]
      %v850 = vld [vmem:[%s7] sm:$0x1]
      %v851 = vsel %vm502, %v848, 0.0
      %852 = vadd.xlane.f32.xlu0 %v851
      %v853 = vpop.xlane.xlu0 %852
      %v854 = vrcp.pop 32.0
      %v855 = vmul.f32 32.0, %v854
      %v856 = vsub.f32 1.0, %v855
      %v857 = vmul.f32 %v854, %v856
      %v858 = vadd.f32 %v854, %v857
      %vm859 = vweird.f32 %v854
      %v860 = vsel %vm859, %v854, %v858
      %v861 = vmul.f32 %v853, %v860
      %v862 = vsub.f32 %v848, %v861
      %v863 = vmul.f32 %v862, %v862
      %v864 = vsel %vm502, %v863, 0.0
      %865 = vadd.xlane.f32.xlu0 %v864
      %v866 = vpop.xlane.xlu0 %865
      %v867 = vmul.f32 %v866, %v860
      %v868 = vadd.f32 %v867, 1e-05
      %v869 = vrsqrt.pop %v868
      %v870 = vmul.f32 %v869, %v868
      %v871 = vmul.f32 %v870, %v869
      %v872 = vmul.f32 0.5, %v871
      %v873 = vsub.f32 1.5, %v872
      %v874 = vmul.f32 %v869, %v873
      %vm875 = vweird.f32 %v868
      %vm876 = vweird.f32 %v869
      %vm877 = vmor %vm875, %vm876
      %v878 = vsel %vm877, %v869, %v874
      %v879 = vmul.f32 %v862, %v878
      %v881 = vperm.slane %v849, 0
      %v883 = vmul.f32 %v879, %v881
      %v885 = vperm.slane %v850, 0
      %v887 = vadd.f32 %v883, %v885
      %v888 = vpack.c.bf16 %v887, %v887
      %v889 = vld [vmem:[%s8] sm:$0xf]
      %v890 = vld [vmem:[%s8 + $0x4] sm:$0xf]
      %v891 = vld [vmem:[%s8 + $0x8] sm:$0xf]
      %v892 = vld [vmem:[%s8 + $0xc] sm:$0xf]
      %v893 = vld [vmem:[%s9] sm:$0x1]
      %v895 = vperm.slane %v893, 0
      %v901 = vunpack.c.l.b16 %v889
      %v902 = vunpack.c.l.b16 %v890
      %v903 = vunpack.c.l.b16 %v891
      %v904 = vunpack.c.l.b16 %v892
      %v905 = vpack.c.b16 %v902, %v901
      %v906 = vpack.c.b16 %v904, %v903
      %v910 = vsel %vm502, %v888, 0
      %912 = vmatpush.bf16.msra.mxu0 0
      %913 = vmatpush.bf16.msra.mxu0 0
      %914 = vmatpush.bf16.msra.mxu0 0
      %915 = vmatpush.bf16.msra.mxu0 0
      %916 = vmatpush.bf16.msra.mxu0 0
      %917 = vmatpush.bf16.msra.mxu0 0
      %918 = vmatpush.bf16.msra.mxu0 %v906
      %919 = vmatpush.bf16.msra.mxu0 %v905
      %920 = vmatmul.bf16.gmra.mxu0 %v910
      %v921 = vpop.f32.mrf.mxu0
      %v922 = vadd.f32 %v895, %v921
      %v923 = vpop.f32.mrf.mxu0
      %924 = vdwg.mxu0
      %v925 = vmax.f32 %v922, 0.0
      %v926 = vpack.c.bf16 %v925, %v925
      %v927 = vld [vmem:[%s10] sm:$0xf]
      %v928 = vld [vmem:[%s10 + $0x4] sm:$0xf]
      %v929 = vld [vmem:[%s10 + $0x8] sm:$0xf]
      %v930 = vld [vmem:[%s10 + $0xc] sm:$0xf]
      %v931 = vld [vmem:[%s10 + $0x10] sm:$0xf]
      %v932 = vld [vmem:[%s10 + $0x14] sm:$0xf]
      %v933 = vld [vmem:[%s10 + $0x18] sm:$0xf]
      %v934 = vld [vmem:[%s10 + $0x1c] sm:$0xf]
      %v935 = vld [vmem:[%s11] sm:$0x1]
      %v937 = vperm.slane %v935, 0
      %v947 = vunpack.c.l.b16 %v927
      %v948 = vunpack.c.l.b16 %v928
      %v949 = vunpack.c.l.b16 %v929
      %v950 = vunpack.c.l.b16 %v930
      %v951 = vunpack.c.l.b16 %v931
      %v952 = vunpack.c.l.b16 %v932
      %v953 = vunpack.c.l.b16 %v933
      %v954 = vunpack.c.l.b16 %v934
      %v955 = vpack.c.b16 %v948, %v947
      %v956 = vpack.c.b16 %v950, %v949
      %v957 = vpack.c.b16 %v952, %v951
      %v958 = vpack.c.b16 %v954, %v953
      %vm963 = vcmask 523264
      %v965 = vsel %vm963, %v926, 0
      %967 = vmatpush.bf16.msra.mxu0 0
      %968 = vmatpush.bf16.msra.mxu0 0
      %969 = vmatpush.bf16.msra.mxu0 0
      %970 = vmatpush.bf16.msra.mxu0 0
      %971 = vmatpush.bf16.msra.mxu0 %v958
      %972 = vmatpush.bf16.msra.mxu0 %v957
      %973 = vmatpush.bf16.msra.mxu0 %v956
      %974 = vmatpush.bf16.msra.mxu0 %v955
      %975 = vmatmul.bf16.gmra.mxu0 %v965
      %v976 = vpop.f32.mrf.mxu0
      %v977 = vadd.f32 %v937, %v976
      %v978 = vpop.f32.mrf.mxu0
      %979 = vdwg.mxu0
      %v980 = vadd.f32 %v977, %v887
      %v981 = vld [vmem:[%s12] sm:$0x1]
      %v982 = vld [vmem:[%s13] sm:$0x1]
      %v983 = vsel %vm502, %v980, 0.0
      %984 = vadd.xlane.f32.xlu0 %v983
      %v985 = vpop.xlane.xlu0 %984
      %v986 = vmul.f32 %v985, %v860
      %v987 = vsub.f32 %v980, %v986
      %v988 = vmul.f32 %v987, %v987
      %v989 = vsel %vm502, %v988, 0.0
      %990 = vadd.xlane.f32.xlu0 %v989
      %v991 = vpop.xlane.xlu0 %990
      %v992 = vmul.f32 %v991, %v860
      %v993 = vadd.f32 %v992, 1e-05
      %v994 = vrsqrt.pop %v993
      %v995 = vmul.f32 %v994, %v993
      %v996 = vmul.f32 %v995, %v994
      %v997 = vmul.f32 0.5, %v996
      %v998 = vsub.f32 1.5, %v997
      %v999 = vmul.f32 %v994, %v998
      %vm1000 = vweird.f32 %v993
      %vm1001 = vweird.f32 %v994
      %vm1002 = vmor %vm1000, %vm1001
      %v1003 = vsel %vm1002, %v994, %v999
      %v1004 = vmul.f32 %v987, %v1003
      %v1006 = vperm.slane %v981, 0
      %v1008 = vmul.f32 %v1004, %v1006
      %v1010 = vperm.slane %v982, 0
      %v1012 = vadd.f32 %v1008, %v1010
      %v1013 = vpack.c.bf16 %v1012, %v1012
      %vm1014 = vcmask 257024
      %1015 = vst.msk [vmem:[%s479] sm:$0xf] %vm1014, %v1013
      %p1016 = scmp.lt.s32.totalorder %s25, 1
      %s1017 = scalar_select %p1016, %s25, 1
      %s1018 = smul.addr %s1017, 4
      %s1019 = scalar_lea.vmem %s14, %s1018
      // Predicated region
      $region77: #{seq2seq_forward.5} parent=75 // pred_check
        %p1020 = pneg %p347
      $region78: #{seq2seq_forward.5} parent=75 // pred_check_branch
        %1022 = sbr.rel (%p1020) target = $region80
      $region79: #{seq2seq_forward.5} parent=75 // pred_region
        _
      $region80: #{seq2seq_forward.5} parent=75 // pred_fallthru
        _
    $region76: #{seq2seq_forward.5} parent=5 // pred_fallthru
      _
    %p1023 = scmp.le.s32.totalorder 2, %s20
    // Predicated region
    $region81: #{seq2seq_forward.5} parent=5 // pred_check
      %p1024 = pneg %p1023
    $region82: #{seq2seq_forward.5} parent=5 // pred_check_branch
      %1026 = sbr.rel (%p1024) target = $region84
    $region83: #{seq2seq_forward.5} parent=5 // pred_region
      %s1027 = ssub.s32 %s20, 2
      // Predicated region
      $region85: #{seq2seq_forward.5} parent=83 // pred_check
        %p1028 = pneg %p353
      $region86: #{seq2seq_forward.5} parent=83 // pred_check_branch
        %1030 = sbr.rel (%p1028) target = $region88
      $region87: #{seq2seq_forward.5} parent=83 // pred_region
        %p1031 = scmp.lt.s32.totalorder %s26, 1
        %s1032 = scalar_select %p1031, %s26, 1
        %s1033 = smul.addr %s1032, 4
        %s1034 = scalar_lea.vmem %s14, %s1033
      $region88: #{seq2seq_forward.5} parent=83 // pred_fallthru
        _
    $region84: #{seq2seq_forward.5} parent=5 // pred_fallthru
      _
  $region6: #{seq2seq_forward.5} parent=0 // loop_footer
    %s24 = sadd.s32 1, %s20
  $region7: #{seq2seq_forward.5} parent=0 // loop_footer_branch
    %19 = sbr.rel target = $region3
  $region8: #{seq2seq_forward.5} parent=0 // loop_exit
    _

// kernel: seq2seq_forward.6
$region0: #{seq2seq_forward.6}
  #allocation0 [shape = 'u32[]', space=smem, size = 0x4, offset = 0x4, fixed_abs, tag = 'smem constant byte address 0x4 - core index']
  #allocation1 [shape = 'u32[72,128]{1,0:T(1,128)}', space=vmem, size = 0x9000, scoped, tag = 'internal scratch']
  %s0 = inlined_call_operand.vmem [shape: bf16[2,8,32], index: 0, kind: input, shape index: {}]
  %s1 = inlined_call_operand.vmem [shape: f32[2,8,8], index: 1, kind: input, shape index: {}]
  %s2 = inlined_call_operand.vmem [shape: bf16[32,96], index: 2, kind: input, shape index: {}]
  %s3 = inlined_call_operand.vmem [shape: f32[1,96], index: 3, kind: input, shape index: {}]
  %s4 = inlined_call_operand.vmem [shape: bf16[32,32], index: 4, kind: input, shape index: {}]
  %s5 = inlined_call_operand.vmem [shape: f32[1,32], index: 5, kind: input, shape index: {}]
  %s6 = inlined_call_operand.vmem [shape: f32[1,32], index: 6, kind: input, shape index: {}]
  %s7 = inlined_call_operand.vmem [shape: f32[1,32], index: 7, kind: input, shape index: {}]
  %s8 = inlined_call_operand.vmem [shape: bf16[32,64], index: 8, kind: input, shape index: {}]
  %s9 = inlined_call_operand.vmem [shape: f32[1,64], index: 9, kind: input, shape index: {}]
  %s10 = inlined_call_operand.vmem [shape: bf16[64,32], index: 10, kind: input, shape index: {}]
  %s11 = inlined_call_operand.vmem [shape: f32[1,32], index: 11, kind: input, shape index: {}]
  %s12 = inlined_call_operand.vmem [shape: f32[1,32], index: 12, kind: input, shape index: {}]
  %s13 = inlined_call_operand.vmem [shape: f32[1,32], index: 13, kind: input, shape index: {}]
  %s14 = inlined_call_operand.vmem [shape: f32[1,32], index: 14, kind: input, shape index: {}]
  %s15 = inlined_call_operand.vmem [shape: f32[1,32], index: 15, kind: input, shape index: {}]
  %s16 = inlined_call_operand.vmem [shape: bf16[2,8,32], index: 16, kind: output, shape index: {}]
  %s17 = sld [smem:[#allocation0]]
  $region97: #{seq2seq_forward.6} parent=0
    _
  %s19 = ssub.s32 1, %s17
  %s20 = scalar_select 0, %s19, %s17
  loop: start=0, step=1, limit=4
  $region2: #{seq2seq_forward.6} parent=0 // loop_pre_header
    _
  $region3: #{seq2seq_forward.6} parent=0 // loop_header
    %s22 = sphi 0, %s26
    %p23 = scmp.ge.s32.totalorder %s22, 4
    %s32 = sphi 0, %s34
    %s35 = sphi 0, %s32
    %s36 = sphi 0, %s35
    %s52 = sphi 0, %s36
    %s58 = sphi 0, %s60
    %s61 = sphi 0, %s58
    %s62 = sphi 0, %s61
    %s78 = sphi 0, %s62
    %s82 = sphi 0, %s82
    %s84 = sphi 0, %s82
    %s85 = sphi 0, %s84
    %s99 = sphi 0, %s85
    %s103 = sphi 0, %s103
    %s105 = sphi 0, %s103
    %s106 = sphi 0, %s105
    %s120 = sphi 0, %s106
    %s124 = sphi 0, %s124
    %s126 = sphi 0, %s124
    %s127 = sphi 0, %s126
    %s141 = sphi 0, %s127
    %s145 = sphi 0, %s145
    %s147 = sphi 0, %s145
    %s148 = sphi 0, %s147
    %s162 = sphi 0, %s148
    %s166 = sphi 0, %s166
    %s168 = sphi 0, %s166
    %s169 = sphi 0, %s168
    %s183 = sphi 0, %s169
    %s187 = sphi 0, %s187
    %s189 = sphi 0, %s187
    %s190 = sphi 0, %s189
    %s204 = sphi 0, %s190
    %s208 = sphi 0, %s208
    %s210 = sphi 0, %s208
    %s211 = sphi 0, %s210
    %s225 = sphi 0, %s211
    %s229 = sphi 0, %s229
    %s231 = sphi 0, %s229
    %s232 = sphi 0, %s231
    %s246 = sphi 0, %s232
    %s250 = sphi 0, %s250
    %s252 = sphi 0, %s250
    %s253 = sphi 0, %s252
    %s267 = sphi 0, %s253
    %s271 = sphi 0, %s271
    %s273 = sphi 0, %s271
    %s274 = sphi 0, %s273
    %s288 = sphi 0, %s274
    %s292 = sphi 0, %s292
    %s294 = sphi 0, %s292
    %s295 = sphi 0, %s294
    %s309 = sphi 0, %s295
    %s313 = sphi 0, %s313
    %s315 = sphi 0, %s313
    %s316 = sphi 0, %s315
    %s330 = sphi 0, %s316
    %s334 = sphi 0, %s334
    %s336 = sphi 0, %s334
    %s337 = sphi 0, %s336
    %s351 = sphi 0, %s337
    %s355 = sphi 0, %s355
    %s357 = sphi 0, %s355
    %s358 = sphi 0, %s357
    %s372 = sphi 0, %s358
    %s378 = sphi 0, %s380
    %s381 = sphi 0, %s378
    %s382 = sphi 0, %s381
    %s398 = sphi 0, %s382
  $region4: #{seq2seq_forward.6} parent=0 // loop_header_branch
    %25 = sbr.rel (%p23) target = $region8
  $region5: #{seq2seq_forward.6} parent=0 // loop_body
    %s27 = ssub.s32 %s22, 1
    %s28 = ssub.s32 %s22, 2
    %s29 = sadd.s32 %s22, 1
    %s30 = ssub.s32 %s22, %s29
    %p31 = scmp.eq.s32.totalorder %s30, 0
    %s33 = sadd.s32 %s32, 1
    %s34 = scalar_select %p31, %s32, %s33
    %p37 = pneg %p31
    %p38 = scmp.eq.s32.totalorder %s22, 1
    %p39 = por %p37, %p38
    %p40 = scmp.ne.s32.totalorder %s32, %s35
    %p41 = scmp.eq.s32.totalorder %s22, 0
    %p42 = por %p40, %p41
    %p43 = scmp.ne.s32.totalorder %s32, %s35
    %p44 = scmp.eq.s32.totalorder %s27, 1
    %p45 = por %p43, %p44
    %p46 = scmp.ne.s32.totalorder %s35, %s36
    %p47 = scmp.eq.s32.totalorder %s27, 0
    %p48 = por %p46, %p47
    %p49 = scmp.ne.s32.totalorder %s35, %s36
    %p50 = scmp.eq.s32.totalorder %s28, 1
    %p51 = por %p49, %p50
    %p53 = scmp.ne.s32.totalorder %s36, %s52
    %p54 = scmp.eq.s32.totalorder %s28, 0
    %p55 = por %p53, %p54
    %s56 = ssub.s32 %s22, %s29
    %p57 = scmp.eq.s32.totalorder %s56, 0
    %s59 = sadd.s32 %s58, 1
    %s60 = scalar_select %p57, %s58, %s59
    %p63 = pneg %p57
    %p64 = scmp.eq.s32.totalorder %s22, 1
    %p65 = por %p63, %p64
    %p66 = scmp.ne.s32.totalorder %s58, %s61
    %p67 = scmp.eq.s32.totalorder %s22, 0
    %p68 = por %p66, %p67
    %p69 = scmp.ne.s32.totalorder %s58, %s61
    %p70 = scmp.eq.s32.totalorder %s27, 1
    %p71 = por %p69, %p70
    %p72 = scmp.ne.s32.totalorder %s61, %s62
    %p73 = scmp.eq.s32.totalorder %s27, 0
    %p74 = por %p72, %p73
    %p75 = scmp.ne.s32.totalorder %s61, %s62
    %p76 = scmp.eq.s32.totalorder %s28, 1
    %p77 = por %p75, %p76
    %p79 = scmp.ne.s32.totalorder %s62, %s78
    %p80 = scmp.eq.s32.totalorder %s28, 0
    %p81 = por %p79, %p80
    %s83 = sadd.s32 %s82, 1
    %p86 = scmp.eq.s32.totalorder %s22, 1
    %p87 = scmp.ne.s32.totalorder %s82, %s84
    %p88 = scmp.eq.s32.totalorder %s22, 0
    %p89 = por %p87, %p88
    %p90 = scmp.ne.s32.totalorder %s82, %s84
    %p91 = scmp.eq.s32.totalorder %s27, 1
    %p92 = por %p90, %p91
    %p93 = scmp.ne.s32.totalorder %s84, %s85
    %p94 = scmp.eq.s32.totalorder %s27, 0
    %p95 = por %p93, %p94
    %p96 = scmp.ne.s32.totalorder %s84, %s85
    %p97 = scmp.eq.s32.totalorder %s28, 1
    %p98 = por %p96, %p97
    %p100 = scmp.ne.s32.totalorder %s85, %s99
    %p101 = scmp.eq.s32.totalorder %s28, 0
    %p102 = por %p100, %p101
    %s104 = sadd.s32 %s103, 1
    %p107 = scmp.eq.s32.totalorder %s22, 1
    %p108 = scmp.ne.s32.totalorder %s103, %s105
    %p109 = scmp.eq.s32.totalorder %s22, 0
    %p110 = por %p108, %p109
    %p111 = scmp.ne.s32.totalorder %s103, %s105
    %p112 = scmp.eq.s32.totalorder %s27, 1
    %p113 = por %p111, %p112
    %p114 = scmp.ne.s32.totalorder %s105, %s106
    %p115 = scmp.eq.s32.totalorder %s27, 0
    %p116 = por %p114, %p115
    %p117 = scmp.ne.s32.totalorder %s105, %s106
    %p118 = scmp.eq.s32.totalorder %s28, 1
    %p119 = por %p117, %p118
    %p121 = scmp.ne.s32.totalorder %s106, %s120
    %p122 = scmp.eq.s32.totalorder %s28, 0
    %p123 = por %p121, %p122
    %s125 = sadd.s32 %s124, 1
    %p128 = scmp.eq.s32.totalorder %s22, 1
    %p129 = scmp.ne.s32.totalorder %s124, %s126
    %p130 = scmp.eq.s32.totalorder %s22, 0
    %p131 = por %p129, %p130
    %p132 = scmp.ne.s32.totalorder %s124, %s126
    %p133 = scmp.eq.s32.totalorder %s27, 1
    %p134 = por %p132, %p133
    %p135 = scmp.ne.s32.totalorder %s126, %s127
    %p136 = scmp.eq.s32.totalorder %s27, 0
    %p137 = por %p135, %p136
    %p138 = scmp.ne.s32.totalorder %s126, %s127
    %p139 = scmp.eq.s32.totalorder %s28, 1
    %p140 = por %p138, %p139
    %p142 = scmp.ne.s32.totalorder %s127, %s141
    %p143 = scmp.eq.s32.totalorder %s28, 0
    %p144 = por %p142, %p143
    %s146 = sadd.s32 %s145, 1
    %p149 = scmp.eq.s32.totalorder %s22, 1
    %p150 = scmp.ne.s32.totalorder %s145, %s147
    %p151 = scmp.eq.s32.totalorder %s22, 0
    %p152 = por %p150, %p151
    %p153 = scmp.ne.s32.totalorder %s145, %s147
    %p154 = scmp.eq.s32.totalorder %s27, 1
    %p155 = por %p153, %p154
    %p156 = scmp.ne.s32.totalorder %s147, %s148
    %p157 = scmp.eq.s32.totalorder %s27, 0
    %p158 = por %p156, %p157
    %p159 = scmp.ne.s32.totalorder %s147, %s148
    %p160 = scmp.eq.s32.totalorder %s28, 1
    %p161 = por %p159, %p160
    %p163 = scmp.ne.s32.totalorder %s148, %s162
    %p164 = scmp.eq.s32.totalorder %s28, 0
    %p165 = por %p163, %p164
    %s167 = sadd.s32 %s166, 1
    %p170 = scmp.eq.s32.totalorder %s22, 1
    %p171 = scmp.ne.s32.totalorder %s166, %s168
    %p172 = scmp.eq.s32.totalorder %s22, 0
    %p173 = por %p171, %p172
    %p174 = scmp.ne.s32.totalorder %s166, %s168
    %p175 = scmp.eq.s32.totalorder %s27, 1
    %p176 = por %p174, %p175
    %p177 = scmp.ne.s32.totalorder %s168, %s169
    %p178 = scmp.eq.s32.totalorder %s27, 0
    %p179 = por %p177, %p178
    %p180 = scmp.ne.s32.totalorder %s168, %s169
    %p181 = scmp.eq.s32.totalorder %s28, 1
    %p182 = por %p180, %p181
    %p184 = scmp.ne.s32.totalorder %s169, %s183
    %p185 = scmp.eq.s32.totalorder %s28, 0
    %p186 = por %p184, %p185
    %s188 = sadd.s32 %s187, 1
    %p191 = scmp.eq.s32.totalorder %s22, 1
    %p192 = scmp.ne.s32.totalorder %s187, %s189
    %p193 = scmp.eq.s32.totalorder %s22, 0
    %p194 = por %p192, %p193
    %p195 = scmp.ne.s32.totalorder %s187, %s189
    %p196 = scmp.eq.s32.totalorder %s27, 1
    %p197 = por %p195, %p196
    %p198 = scmp.ne.s32.totalorder %s189, %s190
    %p199 = scmp.eq.s32.totalorder %s27, 0
    %p200 = por %p198, %p199
    %p201 = scmp.ne.s32.totalorder %s189, %s190
    %p202 = scmp.eq.s32.totalorder %s28, 1
    %p203 = por %p201, %p202
    %p205 = scmp.ne.s32.totalorder %s190, %s204
    %p206 = scmp.eq.s32.totalorder %s28, 0
    %p207 = por %p205, %p206
    %s209 = sadd.s32 %s208, 1
    %p212 = scmp.eq.s32.totalorder %s22, 1
    %p213 = scmp.ne.s32.totalorder %s208, %s210
    %p214 = scmp.eq.s32.totalorder %s22, 0
    %p215 = por %p213, %p214
    %p216 = scmp.ne.s32.totalorder %s208, %s210
    %p217 = scmp.eq.s32.totalorder %s27, 1
    %p218 = por %p216, %p217
    %p219 = scmp.ne.s32.totalorder %s210, %s211
    %p220 = scmp.eq.s32.totalorder %s27, 0
    %p221 = por %p219, %p220
    %p222 = scmp.ne.s32.totalorder %s210, %s211
    %p223 = scmp.eq.s32.totalorder %s28, 1
    %p224 = por %p222, %p223
    %p226 = scmp.ne.s32.totalorder %s211, %s225
    %p227 = scmp.eq.s32.totalorder %s28, 0
    %p228 = por %p226, %p227
    %s230 = sadd.s32 %s229, 1
    %p233 = scmp.eq.s32.totalorder %s22, 1
    %p234 = scmp.ne.s32.totalorder %s229, %s231
    %p235 = scmp.eq.s32.totalorder %s22, 0
    %p236 = por %p234, %p235
    %p237 = scmp.ne.s32.totalorder %s229, %s231
    %p238 = scmp.eq.s32.totalorder %s27, 1
    %p239 = por %p237, %p238
    %p240 = scmp.ne.s32.totalorder %s231, %s232
    %p241 = scmp.eq.s32.totalorder %s27, 0
    %p242 = por %p240, %p241
    %p243 = scmp.ne.s32.totalorder %s231, %s232
    %p244 = scmp.eq.s32.totalorder %s28, 1
    %p245 = por %p243, %p244
    %p247 = scmp.ne.s32.totalorder %s232, %s246
    %p248 = scmp.eq.s32.totalorder %s28, 0
    %p249 = por %p247, %p248
    %s251 = sadd.s32 %s250, 1
    %p254 = scmp.eq.s32.totalorder %s22, 1
    %p255 = scmp.ne.s32.totalorder %s250, %s252
    %p256 = scmp.eq.s32.totalorder %s22, 0
    %p257 = por %p255, %p256
    %p258 = scmp.ne.s32.totalorder %s250, %s252
    %p259 = scmp.eq.s32.totalorder %s27, 1
    %p260 = por %p258, %p259
    %p261 = scmp.ne.s32.totalorder %s252, %s253
    %p262 = scmp.eq.s32.totalorder %s27, 0
    %p263 = por %p261, %p262
    %p264 = scmp.ne.s32.totalorder %s252, %s253
    %p265 = scmp.eq.s32.totalorder %s28, 1
    %p266 = por %p264, %p265
    %p268 = scmp.ne.s32.totalorder %s253, %s267
    %p269 = scmp.eq.s32.totalorder %s28, 0
    %p270 = por %p268, %p269
    %s272 = sadd.s32 %s271, 1
    %p275 = scmp.eq.s32.totalorder %s22, 1
    %p276 = scmp.ne.s32.totalorder %s271, %s273
    %p277 = scmp.eq.s32.totalorder %s22, 0
    %p278 = por %p276, %p277
    %p279 = scmp.ne.s32.totalorder %s271, %s273
    %p280 = scmp.eq.s32.totalorder %s27, 1
    %p281 = por %p279, %p280
    %p282 = scmp.ne.s32.totalorder %s273, %s274
    %p283 = scmp.eq.s32.totalorder %s27, 0
    %p284 = por %p282, %p283
    %p285 = scmp.ne.s32.totalorder %s273, %s274
    %p286 = scmp.eq.s32.totalorder %s28, 1
    %p287 = por %p285, %p286
    %p289 = scmp.ne.s32.totalorder %s274, %s288
    %p290 = scmp.eq.s32.totalorder %s28, 0
    %p291 = por %p289, %p290
    %s293 = sadd.s32 %s292, 1
    %p296 = scmp.eq.s32.totalorder %s22, 1
    %p297 = scmp.ne.s32.totalorder %s292, %s294
    %p298 = scmp.eq.s32.totalorder %s22, 0
    %p299 = por %p297, %p298
    %p300 = scmp.ne.s32.totalorder %s292, %s294
    %p301 = scmp.eq.s32.totalorder %s27, 1
    %p302 = por %p300, %p301
    %p303 = scmp.ne.s32.totalorder %s294, %s295
    %p304 = scmp.eq.s32.totalorder %s27, 0
    %p305 = por %p303, %p304
    %p306 = scmp.ne.s32.totalorder %s294, %s295
    %p307 = scmp.eq.s32.totalorder %s28, 1
    %p308 = por %p306, %p307
    %p310 = scmp.ne.s32.totalorder %s295, %s309
    %p311 = scmp.eq.s32.totalorder %s28, 0
    %p312 = por %p310, %p311
    %s314 = sadd.s32 %s313, 1
    %p317 = scmp.eq.s32.totalorder %s22, 1
    %p318 = scmp.ne.s32.totalorder %s313, %s315
    %p319 = scmp.eq.s32.totalorder %s22, 0
    %p320 = por %p318, %p319
    %p321 = scmp.ne.s32.totalorder %s313, %s315
    %p322 = scmp.eq.s32.totalorder %s27, 1
    %p323 = por %p321, %p322
    %p324 = scmp.ne.s32.totalorder %s315, %s316
    %p325 = scmp.eq.s32.totalorder %s27, 0
    %p326 = por %p324, %p325
    %p327 = scmp.ne.s32.totalorder %s315, %s316
    %p328 = scmp.eq.s32.totalorder %s28, 1
    %p329 = por %p327, %p328
    %p331 = scmp.ne.s32.totalorder %s316, %s330
    %p332 = scmp.eq.s32.totalorder %s28, 0
    %p333 = por %p331, %p332
    %s335 = sadd.s32 %s334, 1
    %p338 = scmp.eq.s32.totalorder %s22, 1
    %p339 = scmp.ne.s32.totalorder %s334, %s336
    %p340 = scmp.eq.s32.totalorder %s22, 0
    %p341 = por %p339, %p340
    %p342 = scmp.ne.s32.totalorder %s334, %s336
    %p343 = scmp.eq.s32.totalorder %s27, 1
    %p344 = por %p342, %p343
    %p345 = scmp.ne.s32.totalorder %s336, %s337
    %p346 = scmp.eq.s32.totalorder %s27, 0
    %p347 = por %p345, %p346
    %p348 = scmp.ne.s32.totalorder %s336, %s337
    %p349 = scmp.eq.s32.totalorder %s28, 1
    %p350 = por %p348, %p349
    %p352 = scmp.ne.s32.totalorder %s337, %s351
    %p353 = scmp.eq.s32.totalorder %s28, 0
    %p354 = por %p352, %p353
    %s356 = sadd.s32 %s355, 1
    %p359 = scmp.eq.s32.totalorder %s22, 1
    %p360 = scmp.ne.s32.totalorder %s355, %s357
    %p361 = scmp.eq.s32.totalorder %s22, 0
    %p362 = por %p360, %p361
    %p363 = scmp.ne.s32.totalorder %s355, %s357
    %p364 = scmp.eq.s32.totalorder %s27, 1
    %p365 = por %p363, %p364
    %p366 = scmp.ne.s32.totalorder %s357, %s358
    %p367 = scmp.eq.s32.totalorder %s27, 0
    %p368 = por %p366, %p367
    %p369 = scmp.ne.s32.totalorder %s357, %s358
    %p370 = scmp.eq.s32.totalorder %s28, 1
    %p371 = por %p369, %p370
    %p373 = scmp.ne.s32.totalorder %s358, %s372
    %p374 = scmp.eq.s32.totalorder %s28, 0
    %p375 = por %p373, %p374
    %s376 = ssub.s32 %s22, %s29
    %p377 = scmp.eq.s32.totalorder %s376, 0
    %s379 = sadd.s32 %s378, 1
    %s380 = scalar_select %p377, %s378, %s379
    %p383 = pneg %p377
    %p384 = scmp.eq.s32.totalorder %s22, 1
    %p385 = por %p383, %p384
    %p386 = scmp.ne.s32.totalorder %s378, %s381
    %p387 = scmp.eq.s32.totalorder %s22, 0
    %p388 = por %p386, %p387
    %p389 = scmp.ne.s32.totalorder %s378, %s381
    %p390 = scmp.eq.s32.totalorder %s27, 1
    %p391 = por %p389, %p390
    %p392 = scmp.ne.s32.totalorder %s381, %s382
    %p393 = scmp.eq.s32.totalorder %s27, 0
    %p394 = por %p392, %p393
    %p395 = scmp.ne.s32.totalorder %s381, %s382
    %p396 = scmp.eq.s32.totalorder %s28, 1
    %p397 = por %p395, %p396
    %p399 = scmp.ne.s32.totalorder %s382, %s398
    %p400 = scmp.eq.s32.totalorder %s28, 0
    %p401 = por %p399, %p400
    %p402 = scmp.le.s32.totalorder 1, %s22
    %p403 = scmp.lt.s32.totalorder %s22, 3
    %p404 = pnand %p402, %p403
    %p405 = pneg %p404
    // Predicated region
    $region9: #{seq2seq_forward.6} parent=5 // pred_check
      _
    $region10: #{seq2seq_forward.6} parent=5 // pred_check_branch
      %407 = sbr.rel (%p404) target = $region12
    $region11: #{seq2seq_forward.6} parent=5 // pred_region
      %s408 = ssub.s32 %s22, 1
      // Predicated region
      $region13: #{seq2seq_forward.6} parent=11 // pred_check
        %p409 = pneg %p95
      $region14: #{seq2seq_forward.6} parent=11 // pred_check_branch
        %411 = sbr.rel (%p409) target = $region16
      $region15: #{seq2seq_forward.6} parent=11 // pred_region
        _
      $region16: #{seq2seq_forward.6} parent=11 // pred_fallthru
        _
      // Predicated region
      $region17: #{seq2seq_forward.6} parent=11 // pred_check
        %p412 = pneg %p116
      $region18: #{seq2seq_forward.6} parent=11 // pred_check_branch
        %414 = sbr.rel (%p412) target = $region20
      $region19: #{seq2seq_forward.6} parent=11 // pred_region
        _
      $region20: #{seq2seq_forward.6} parent=11 // pred_fallthru
        _
      // Predicated region
      $region21: #{seq2seq_forward.6} parent=11 // pred_check
        %p415 = pneg %p137
      $region22: #{seq2seq_forward.6} parent=11 // pred_check_branch
        %417 = sbr.rel (%p415) target = $region24
      $region23: #{seq2seq_forward.6} parent=11 // pred_region
        _
      $region24: #{seq2seq_forward.6} parent=11 // pred_fallthru
        _
      // Predicated region
      $region25: #{seq2seq_forward.6} parent=11 // pred_check
        %p418 = pneg %p158
      $region26: #{seq2seq_forward.6} parent=11 // pred_check_branch
        %420 = sbr.rel (%p418) target = $region28
      $region27: #{seq2seq_forward.6} parent=11 // pred_region
        _
      $region28: #{seq2seq_forward.6} parent=11 // pred_fallthru
        _
      // Predicated region
      $region29: #{seq2seq_forward.6} parent=11 // pred_check
        %p421 = pneg %p179
      $region30: #{seq2seq_forward.6} parent=11 // pred_check_branch
        %423 = sbr.rel (%p421) target = $region32
      $region31: #{seq2seq_forward.6} parent=11 // pred_region
        _
      $region32: #{seq2seq_forward.6} parent=11 // pred_fallthru
        _
      // Predicated region
      $region33: #{seq2seq_forward.6} parent=11 // pred_check
        %p424 = pneg %p200
      $region34: #{seq2seq_forward.6} parent=11 // pred_check_branch
        %426 = sbr.rel (%p424) target = $region36
      $region35: #{seq2seq_forward.6} parent=11 // pred_region
        _
      $region36: #{seq2seq_forward.6} parent=11 // pred_fallthru
        _
      // Predicated region
      $region37: #{seq2seq_forward.6} parent=11 // pred_check
        %p427 = pneg %p221
      $region38: #{seq2seq_forward.6} parent=11 // pred_check_branch
        %429 = sbr.rel (%p427) target = $region40
      $region39: #{seq2seq_forward.6} parent=11 // pred_region
        _
      $region40: #{seq2seq_forward.6} parent=11 // pred_fallthru
        _
      // Predicated region
      $region41: #{seq2seq_forward.6} parent=11 // pred_check
        %p430 = pneg %p242
      $region42: #{seq2seq_forward.6} parent=11 // pred_check_branch
        %432 = sbr.rel (%p430) target = $region44
      $region43: #{seq2seq_forward.6} parent=11 // pred_region
        _
      $region44: #{seq2seq_forward.6} parent=11 // pred_fallthru
        _
      // Predicated region
      $region45: #{seq2seq_forward.6} parent=11 // pred_check
        %p433 = pneg %p263
      $region46: #{seq2seq_forward.6} parent=11 // pred_check_branch
        %435 = sbr.rel (%p433) target = $region48
      $region47: #{seq2seq_forward.6} parent=11 // pred_region
        _
      $region48: #{seq2seq_forward.6} parent=11 // pred_fallthru
        _
      // Predicated region
      $region49: #{seq2seq_forward.6} parent=11 // pred_check
        %p436 = pneg %p284
      $region50: #{seq2seq_forward.6} parent=11 // pred_check_branch
        %438 = sbr.rel (%p436) target = $region52
      $region51: #{seq2seq_forward.6} parent=11 // pred_region
        _
      $region52: #{seq2seq_forward.6} parent=11 // pred_fallthru
        _
      // Predicated region
      $region53: #{seq2seq_forward.6} parent=11 // pred_check
        %p439 = pneg %p305
      $region54: #{seq2seq_forward.6} parent=11 // pred_check_branch
        %441 = sbr.rel (%p439) target = $region56
      $region55: #{seq2seq_forward.6} parent=11 // pred_region
        _
      $region56: #{seq2seq_forward.6} parent=11 // pred_fallthru
        _
      // Predicated region
      $region57: #{seq2seq_forward.6} parent=11 // pred_check
        %p442 = pneg %p326
      $region58: #{seq2seq_forward.6} parent=11 // pred_check_branch
        %444 = sbr.rel (%p442) target = $region60
      $region59: #{seq2seq_forward.6} parent=11 // pred_region
        _
      $region60: #{seq2seq_forward.6} parent=11 // pred_fallthru
        _
      // Predicated region
      $region61: #{seq2seq_forward.6} parent=11 // pred_check
        %p445 = pneg %p347
      $region62: #{seq2seq_forward.6} parent=11 // pred_check_branch
        %447 = sbr.rel (%p445) target = $region64
      $region63: #{seq2seq_forward.6} parent=11 // pred_region
        _
      $region64: #{seq2seq_forward.6} parent=11 // pred_fallthru
        _
      // Predicated region
      $region65: #{seq2seq_forward.6} parent=11 // pred_check
        %p448 = pneg %p368
      $region66: #{seq2seq_forward.6} parent=11 // pred_check_branch
        %450 = sbr.rel (%p448) target = $region68
      $region67: #{seq2seq_forward.6} parent=11 // pred_region
        _
      $region68: #{seq2seq_forward.6} parent=11 // pred_fallthru
        _
    $region12: #{seq2seq_forward.6} parent=5 // pred_fallthru
      _
    %p451 = scmp.lt.s32.totalorder %s22, 2
    // Predicated region
    $region69: #{seq2seq_forward.6} parent=5 // pred_check
      %p452 = pneg %p451
    $region70: #{seq2seq_forward.6} parent=5 // pred_check_branch
      %454 = sbr.rel (%p452) target = $region72
    $region71: #{seq2seq_forward.6} parent=5 // pred_region
      // Predicated region
      $region73: #{seq2seq_forward.6} parent=71 // pred_check
        %p455 = pneg %p42
      $region74: #{seq2seq_forward.6} parent=71 // pred_check_branch
        %457 = sbr.rel (%p455) target = $region76
      $region75: #{seq2seq_forward.6} parent=71 // pred_region
        %p458 = scmp.lt.s32.totalorder %s22, 1
        %s459 = scalar_select %p458, %s22, 1
        %s460 = smul.addr %s459, 4
        %s461 = scalar_lea.vmem %s0, %s460
      $region76: #{seq2seq_forward.6} parent=71 // pred_fallthru
        _
      // Predicated region
      $region77: #{seq2seq_forward.6} parent=71 // pred_check
        %p462 = pneg %p68
      $region78: #{seq2seq_forward.6} parent=71 // pred_check_branch
        %464 = sbr.rel (%p462) target = $region80
      $region79: #{seq2seq_forward.6} parent=71 // pred_region
        %p465 = scmp.lt.s32.totalorder %s22, 1
        %s466 = scalar_select %p465, %s22, 1
        %s467 = smul.addr %s466, 8
        %s468 = scalar_lea.vmem %s1, %s467
      $region80: #{seq2seq_forward.6} parent=71 // pred_fallthru
        _
    $region72: #{seq2seq_forward.6} parent=5 // pred_fallthru
      _
    %p469 = scmp.le.s32.totalorder 1, %s22
    %p470 = scmp.lt.s32.totalorder %s22, 3
    %p471 = pnand %p469, %p470
    %p472 = pneg %p471
    // Predicated region
    $region81: #{seq2seq_forward.6} parent=5 // pred_check
      _
    $region82: #{seq2seq_forward.6} parent=5 // pred_check_branch
      %474 = sbr.rel (%p471) target = $region84
    $region83: #{seq2seq_forward.6} parent=5 // pred_region
      %s475 = ssub.s32 %s22, 1
      %p476 = scmp.lt.s32.totalorder %s27, 1
      %s477 = scalar_select %p476, %s27, 1
      %s478 = smul.addr %s477, 4
      %s479 = scalar_lea.vmem %s0, %s478
      %p480 = pneg %p48
      %p481 = pneg %p45
      %p482 = scmp.lt.s32.totalorder %s27, 1
      %s483 = scalar_select %p482, %s27, 1
      %s484 = smul.addr %s483, 8
      %s485 = scalar_lea.vmem %s1, %s484
      %p486 = pneg %p74
      %p487 = pneg %p71
      %p488 = pneg %p95
      %p489 = pneg %p92
      %p490 = pneg %p116
      %p491 = pneg %p113
      %p492 = pneg %p137
      %p493 = pneg %p134
      %p494 = pneg %p158
      %p495 = pneg %p155
      %p496 = pneg %p179
      %p497 = pneg %p176
      %p498 = pneg %p200
      %p499 = pneg %p197
      %p500 = pneg %p221
      %p501 = pneg %p218
      %p502 = pneg %p242
      %p503 = pneg %p239
      %p504 = pneg %p263
      %p505 = pneg %p260
      %p506 = pneg %p284
      %p507 = pneg %p281
      %p508 = pneg %p305
      %p509 = pneg %p302
      %p510 = pneg %p326
      %p511 = pneg %p323
      %p512 = pneg %p347
      %p513 = pneg %p344
      %p514 = pneg %p368
      %p515 = pneg %p365
      %p516 = pneg %p394
      %p517 = pneg %p391
      %p518 = scmp.lt.s32.totalorder %s27, 1
      %s519 = scalar_select %p518, %s27, 1
      %s520 = smul.addr %s519, 4
      %s521 = scalar_lea.vmem %s16, %s520
      %p522 = scmp.lt.s32.totalorder %s27, 1
      %s523 = scalar_select %p522, %s27, 1
      %s524 = smul.addr %s523, 4
      %s525 = scalar_lea.vmem %s0, %s524
      %p526 = scmp.lt.s32.totalorder %s27, 1
      %s527 = scalar_select %p526, %s27, 1
      %s528 = smul.addr %s527, 8
      %s529 = scalar_lea.vmem %s1, %s528
      %p530 = scmp.lt.s32.totalorder %s27, 1
      %s531 = scalar_select %p530, %s27, 1
      %s532 = smul.addr %s531, 4
      %s533 = scalar_lea.vmem %s16, %s532
      %v535 = vld [vmem:[%s525] sm:$0xf]
      %v536 = vld [vmem:[%s2] sm:$0xf]
      %v537 = vld [vmem:[%s2 + $0x4] sm:$0xf]
      %v538 = vld [vmem:[%s2 + $0x8] sm:$0xf]
      %v539 = vld [vmem:[%s2 + $0xc] sm:$0xf]
      %v540 = vld [vmem:[%s3] sm:$0x1]
      %v542 = vperm.slane %v540, 0
      %v548 = vunpack.c.l.b16 %v536
      %v549 = vunpack.c.l.b16 %v537
      %v550 = vunpack.c.l.b16 %v538
      %v551 = vunpack.c.l.b16 %v539
      %v552 = vpack.c.b16 %v549, %v548
      %v553 = vpack.c.b16 %v551, %v550
      %vm556 = vcmask 261120
      %v558 = vsel %vm556, %v535, 0
      %560 = vmatpush.bf16.msra.mxu0 0
      %561 = vmatpush.bf16.msra.mxu0 0
      %562 = vmatpush.bf16.msra.mxu0 0
      %563 = vmatpush.bf16.msra.mxu0 0
      %564 = vmatpush.bf16.msra.mxu0 0
      %565 = vmatpush.bf16.msra.mxu0 0
      %566 = vmatpush.bf16.msra.mxu0 %v553
      %567 = vmatpush.bf16.msra.mxu0 %v552
      %568 = vmatmul.bf16.gmra.mxu0 %v558
      %v569 = vpop.f32.mrf.mxu0
      %v570 = vadd.f32 %v542, %v569
      %v571 = vpop.f32.mrf.mxu0
      %572 = vdwg.mxu0
      %v573 = vld [vmem:[%s529] sm:$0xff]
      %v574 = vpack.c.bf16 %v570, %v570
      %v576 = vunpack.c.l.b16 %v574
      %v577 = vpack.c.b16 %v576, %v576
      %578 = vrot.lane.b32.xlu0 %v577, 96
      %v579 = vpop.permute.xlu0 %578
      %vm580 = vcmask 64512
      %v582 = vsel %vm580, %v574, 0
      %v585 = vsel %vm580, %v579, 0
      %587 = vmatpush.bf16.xpose.msra.mxu0 0
      %588 = vmatpush.bf16.xpose.msra.mxu0 0
      %589 = vmatpush.bf16.xpose.msra.mxu0 0
      %590 = vmatpush.bf16.xpose.msra.mxu0 0
      %591 = vmatpush.bf16.xpose.msra.mxu0 0
      %592 = vmatpush.bf16.xpose.msra.mxu0 0
      %593 = vmatpush.bf16.xpose.msra.mxu0 0
      %594 = vmatpush.bf16.xpose.msra.mxu0 %v585
      %595 = vmatmul.bf16.gmra.mxu0 %v582
      %v596 = vpop.f32.mrf.mxu0
      %v597 = vadd.f32 0.0, %v596
      %v598 = vpop.f32.mrf.mxu0
      %599 = vdwg.mxu0
      %v600 = vmul.f32 %v597, 0.35355338
      %v601 = vadd.f32 %v600, %v573
      %v602 = vsel %vm580, %v601, -inf
      %603 = vmax.xlane.f32.xlu0 %v602
      %v604 = vpop.xlane.xlu0 %603
      %v605 = vsub.f32 %v601, %v604
      %v606 = vmul.f32 %v605, 1.442695
      %v607 = vpow.pop %v606
      %v608 = vsel %vm580, %v607, 0.0
      %609 = vadd.xlane.f32.xlu0 %v608
      %v610 = vpop.xlane.xlu0 %609
      %v611 = vrcp.pop %v610
      %v612 = vmul.f32 %v607, %v611
      %v613 = vpack.c.bf16 %v612, %v612
      %614 = vrot.lane.b32.xlu0 %v577, 64
      %v615 = vpop.permute.xlu0 %614
      %v617 = vsel %vm580, %v613, 0
      %vm619 = vcmask 1043456
      %v621 = vsel %vm619, %v615, 0
      %623 = vmatpush.bf16.msra.mxu0 0
      %624 = vmatpush.bf16.msra.mxu0 0
      %625 = vmatpush.bf16.msra.mxu0 0
      %626 = vmatpush.bf16.msra.mxu0 0
      %627 = vmatpush.bf16.msra.mxu0 0
      %628 = vmatpush.bf16.msra.mxu0 0
      %629 = vmatpush.bf16.msra.mxu0 0
      %630 = vmatpush.bf16.msra.mxu0 %v621
      %631 = vmatmul.bf16.gmra.mxu0 %v617
      %v632 = vpop.f32.mrf.mxu0
      %v633 = vadd.f32 0.0, %v632
      %v634 = vpop.f32.mrf.mxu0
      %635 = vdwg.mxu0
      %v636 = vpack.c.bf16 %v633, %v633
      %v637 = vld [vmem:[%s4] sm:$0xf]
      %638 = vrot.lane.b32.xlu0 %v577, 120
      %v639 = vpop.permute.xlu0 %638
      %640 = vrot.lane.b32.xlu0 %v577, 88
      %v641 = vpop.permute.xlu0 %640
      %v643 = vsel %vm580, %v639, 0
      %v646 = vsel %vm580, %v641, 0
      %648 = vmatpush.bf16.xpose.msra.mxu0 0
      %649 = vmatpush.bf16.xpose.msra.mxu0 0
      %650 = vmatpush.bf16.xpose.msra.mxu0 0
      %651 = vmatpush.bf16.xpose.msra.mxu0 0
      %652 = vmatpush.bf16.xpose.msra.mxu0 0
      %653 = vmatpush.bf16.xpose.msra.mxu0 0
      %654 = vmatpush.bf16.xpose.msra.mxu0 0
      %655 = vmatpush.bf16.xpose.msra.mxu0 %v646
      %656 = vmatmul.bf16.gmra.mxu0 %v643
      %v657 = vpop.f32.mrf.mxu0
      %v658 = vadd.f32 0.0, %v657
      %v659 = vpop.f32.mrf.mxu0
      %660 = vdwg.mxu0
      %v661 = vmul.f32 %v658, 0.35355338
      %v662 = vadd.f32 %v661, %v573
      %v663 = vsel %vm580, %v662, -inf
      %664 = vmax.xlane.f32.xlu0 %v663
      %v665 = vpop.xlane.xlu0 %664
      %v666 = vsub.f32 %v662, %v665
      %v667 = vmul.f32 %v666, 1.442695
      %v668 = vpow.pop %v667
      %v669 = vsel %vm580, %v668, 0.0
      %670 = vadd.xlane.f32.xlu0 %v669
      %v671 = vpop.xlane.xlu0 %670
      %v672 = vrcp.pop %v671
      %v673 = vmul.f32 %v668, %v672
      %v674 = vpack.c.bf16 %v673, %v673
      %675 = vrot.lane.b32.xlu0 %v577, 56
      %v676 = vpop.permute.xlu0 %675
      %v678 = vsel %vm580, %v674, 0
      %v681 = vsel %vm619, %v676, 0
      %683 = vmatpush.bf16.msra.mxu0 0
      %684 = vmatpush.bf16.msra.mxu0 0
      %685 = vmatpush.bf16.msra.mxu0 0
      %686 = vmatpush.bf16.msra.mxu0 0
      %687 = vmatpush.bf16.msra.mxu0 0
      %688 = vmatpush.bf16.msra.mxu0 0
      %689 = vmatpush.bf16.msra.mxu0 0
      %690 = vmatpush.bf16.msra.mxu0 %v681
      %691 = vmatmul.bf16.gmra.mxu0 %v678
      %v692 = vpop.f32.mrf.mxu0
      %v693 = vadd.f32 0.0, %v692
      %v694 = vpop.f32.mrf.mxu0
      %695 = vdwg.mxu0
      %v696 = vpack.c.bf16 %v693, %v693
      %v697 = vld [vmem:[%s4 + $0x4] sm:$0xf]
      %v699 = vsel %vm580, %v696, 0
      %v702 = vsel %vm619, %v697, 0
      %704 = vmatpush.bf16.msra.mxu0 0
      %705 = vmatpush.bf16.msra.mxu0 0
      %706 = vmatpush.bf16.msra.mxu0 0
      %707 = vmatpush.bf16.msra.mxu0 0
      %708 = vmatpush.bf16.msra.mxu0 0
      %709 = vmatpush.bf16.msra.mxu0 0
      %710 = vmatpush.bf16.msra.mxu0 0
      %711 = vmatpush.bf16.msra.mxu0 %v702
      %712 = vmatmul.bf16.gmra.mxu0 %v699
      %v713 = vpop.f32.mrf.mxu0
      %v714 = vadd.f32 0.0, %v713
      %v715 = vpop.f32.mrf.mxu0
      %716 = vdwg.mxu0
      %v718 = vsel %vm580, %v636, 0
      %v721 = vsel %vm619, %v637, 0
      %723 = vmatpush.bf16.msra.mxu0 0
      %724 = vmatpush.bf16.msra.mxu0 0
      %725 = vmatpush.bf16.msra.mxu0 0
      %726 = vmatpush.bf16.msra.mxu0 0
      %727 = vmatpush.bf16.msra.mxu0 0
      %728 = vmatpush.bf16.msra.mxu0 0
      %729 = vmatpush.bf16.msra.mxu0 0
      %730 = vmatpush.bf16.msra.mxu0 %v721
      %731 = vmatmul.bf16.gmra.mxu0 %v718
      %v732 = vpop.f32.mrf.mxu0
      %v733 = vadd.f32 %v714, %v732
      %v734 = vpop.f32.mrf.mxu0
      %735 = vdwg.mxu0
      %736 = vrot.lane.b32.xlu0 %v577, 112
      %v737 = vpop.permute.xlu0 %736
      %738 = vrot.lane.b32.xlu0 %v577, 80
      %v739 = vpop.permute.xlu0 %738
      %v741 = vsel %vm580, %v737, 0
      %v744 = vsel %vm580, %v739, 0
      %746 = vmatpush.bf16.xpose.msra.mxu0 0
      %747 = vmatpush.bf16.xpose.msra.mxu0 0
      %748 = vmatpush.bf16.xpose.msra.mxu0 0
      %749 = vmatpush.bf16.xpose.msra.mxu0 0
      %750 = vmatpush.bf16.xpose.msra.mxu0 0
      %751 = vmatpush.bf16.xpose.msra.mxu0 0
      %752 = vmatpush.bf16.xpose.msra.mxu0 0
      %753 = vmatpush.bf16.xpose.msra.mxu0 %v744
      %754 = vmatmul.bf16.gmra.mxu0 %v741
      %v755 = vpop.f32.mrf.mxu0
      %v756 = vadd.f32 0.0, %v755
      %v757 = vpop.f32.mrf.mxu0
      %758 = vdwg.mxu0
      %v759 = vmul.f32 %v756, 0.35355338
      %v760 = vadd.f32 %v759, %v573
      %v761 = vsel %vm580, %v760, -inf
      %762 = vmax.xlane.f32.xlu0 %v761
      %v763 = vpop.xlane.xlu0 %762
      %v764 = vsub.f32 %v760, %v763
      %v765 = vmul.f32 %v764, 1.442695
      %v766 = vpow.pop %v765
      %v767 = vsel %vm580, %v766, 0.0
      %768 = vadd.xlane.f32.xlu0 %v767
      %v769 = vpop.xlane.xlu0 %768
      %v770 = vrcp.pop %v769
      %v771 = vmul.f32 %v766, %v770
      %v772 = vpack.c.bf16 %v771, %v771
      %773 = vrot.lane.b32.xlu0 %v577, 48
      %v774 = vpop.permute.xlu0 %773
      %v776 = vsel %vm580, %v772, 0
      %v779 = vsel %vm619, %v774, 0
      %781 = vmatpush.bf16.msra.mxu0 0
      %782 = vmatpush.bf16.msra.mxu0 0
      %783 = vmatpush.bf16.msra.mxu0 0
      %784 = vmatpush.bf16.msra.mxu0 0
      %785 = vmatpush.bf16.msra.mxu0 0
      %786 = vmatpush.bf16.msra.mxu0 0
      %787 = vmatpush.bf16.msra.mxu0 0
      %788 = vmatpush.bf16.msra.mxu0 %v779
      %789 = vmatmul.bf16.gmra.mxu0 %v776
      %v790 = vpop.f32.mrf.mxu0
      %v791 = vadd.f32 0.0, %v790
      %v792 = vpop.f32.mrf.mxu0
      %793 = vdwg.mxu0
      %v794 = vpack.c.bf16 %v791, %v791
      %v795 = vld [vmem:[%s4 + $0x8] sm:$0xf]
      %v797 = vsel %vm580, %v794, 0
      %v800 = vsel %vm619, %v795, 0
      %802 = vmatpush.bf16.msra.mxu0 0
      %803 = vmatpush.bf16.msra.mxu0 0
      %804 = vmatpush.bf16.msra.mxu0 0
      %805 = vmatpush.bf16.msra.mxu0 0
      %806 = vmatpush.bf16.msra.mxu0 0
      %807 = vmatpush.bf16.msra.mxu0 0
      %808 = vmatpush.bf16.msra.mxu0 0
      %809 = vmatpush.bf16.msra.mxu0 %v800
      %810 = vmatmul.bf16.gmra.mxu0 %v797
      %v811 = vpop.f32.mrf.mxu0
      %v812 = vadd.f32 0.0, %v811
      %v813 = vpop.f32.mrf.mxu0
      %814 = vdwg.mxu0
      %v815 = vadd.f32 %v733, %v812
      %816 = vrot.lane.b32.xlu0 %v577, 104
      %v817 = vpop.permute.xlu0 %816
      %818 = vrot.lane.b32.xlu0 %v577, 72
      %v819 = vpop.permute.xlu0 %818
      %v821 = vsel %vm580, %v817, 0
      %v824 = vsel %vm580, %v819, 0
      %826 = vmatpush.bf16.xpose.msra.mxu0 0
      %827 = vmatpush.bf16.xpose.msra.mxu0 0
      %828 = vmatpush.bf16.xpose.msra.mxu0 0
      %829 = vmatpush.bf16.xpose.msra.mxu0 0
      %830 = vmatpush.bf16.xpose.msra.mxu0 0
      %831 = vmatpush.bf16.xpose.msra.mxu0 0
      %832 = vmatpush.bf16.xpose.msra.mxu0 0
      %833 = vmatpush.bf16.xpose.msra.mxu0 %v824
      %834 = vmatmul.bf16.gmra.mxu0 %v821
      %v835 = vpop.f32.mrf.mxu0
      %v836 = vadd.f32 0.0, %v835
      %v837 = vpop.f32.mrf.mxu0
      %838 = vdwg.mxu0
      %v839 = vmul.f32 %v836, 0.35355338
      %v840 = vadd.f32 %v839, %v573
      %v841 = vsel %vm580, %v840, -inf
      %842 = vmax.xlane.f32.xlu0 %v841
      %v843 = vpop.xlane.xlu0 %842
      %v844 = vsub.f32 %v840, %v843
      %v845 = vmul.f32 %v844, 1.442695
      %v846 = vpow.pop %v845
      %v847 = vsel %vm580, %v846, 0.0
      %848 = vadd.xlane.f32.xlu0 %v847
      %v849 = vpop.xlane.xlu0 %848
      %v850 = vrcp.pop %v849
      %v851 = vmul.f32 %v846, %v850
      %v852 = vpack.c.bf16 %v851, %v851
      %853 = vrot.lane.b32.xlu0 %v577, 40
      %v854 = vpop.permute.xlu0 %853
      %v856 = vsel %vm580, %v852, 0
      %v859 = vsel %vm619, %v854, 0
      %861 = vmatpush.bf16.msra.mxu0 0
      %862 = vmatpush.bf16.msra.mxu0 0
      %863 = vmatpush.bf16.msra.mxu0 0
      %864 = vmatpush.bf16.msra.mxu0 0
      %865 = vmatpush.bf16.msra.mxu0 0
      %866 = vmatpush.bf16.msra.mxu0 0
      %867 = vmatpush.bf16.msra.mxu0 0
      %868 = vmatpush.bf16.msra.mxu0 %v859
      %869 = vmatmul.bf16.gmra.mxu0 %v856
      %v870 = vpop.f32.mrf.mxu0
      %v871 = vadd.f32 0.0, %v870
      %v872 = vpop.f32.mrf.mxu0
      %873 = vdwg.mxu0
      %v874 = vpack.c.bf16 %v871, %v871
      %v875 = vld [vmem:[%s4 + $0xc] sm:$0xf]
      %v877 = vsel %vm580, %v874, 0
      %v880 = vsel %vm619, %v875, 0
      %882 = vmatpush.bf16.msra.mxu0 0
      %883 = vmatpush.bf16.msra.mxu0 0
      %884 = vmatpush.bf16.msra.mxu0 0
      %885 = vmatpush.bf16.msra.mxu0 0
      %886 = vmatpush.bf16.msra.mxu0 0
      %887 = vmatpush.bf16.msra.mxu0 0
      %888 = vmatpush.bf16.msra.mxu0 0
      %889 = vmatpush.bf16.msra.mxu0 %v880
      %890 = vmatmul.bf16.gmra.mxu0 %v877
      %v891 = vpop.f32.mrf.mxu0
      %v892 = vadd.f32 0.0, %v891
      %v893 = vpop.f32.mrf.mxu0
      %894 = vdwg.mxu0
      %v895 = vadd.f32 %v815, %v892
      %v896 = vld [vmem:[%s5] sm:$0x1]
      %v898 = vperm.slane %v896, 0
      %v900 = vadd.f32 %v895, %v898
      %v901 = vunpack.c.l.bf16 %v535
      %v902 = vadd.f32 %v900, %v901
      %v903 = vld [vmem:[%s6] sm:$0x1]
      %v904 = vld [vmem:[%s7] sm:$0x1]
      %v905 = vsel %vm556, %v902, 0.0
      %906 = vadd.xlane.f32.xlu0 %v905
      %v907 = vpop.xlane.xlu0 %906
      %v908 = vrcp.pop 32.0
      %v909 = vmul.f32 32.0, %v908
      %v910 = vsub.f32 1.0, %v909
      %v911 = vmul.f32 %v908, %v910
      %v912 = vadd.f32 %v908, %v911
      %vm913 = vweird.f32 %v908
      %v914 = vsel %vm913, %v908, %v912
      %v915 = vmul.f32 %v907, %v914
      %v916 = vsub.f32 %v902, %v915
      %v917 = vmul.f32 %v916, %v916
      %v918 = vsel %vm556, %v917, 0.0
      %919 = vadd.xlane.f32.xlu0 %v918
      %v920 = vpop.xlane.xlu0 %919
      %v921 = vmul.f32 %v920, %v914
      %v922 = vadd.f32 %v921, 1e-05
      %v923 = vrsqrt.pop %v922
      %v924 = vmul.f32 %v923, %v922
      %v925 = vmul.f32 %v924, %v923
      %v926 = vmul.f32 0.5, %v925
      %v927 = vsub.f32 1.5, %v926
      %v928 = vmul.f32 %v923, %v927
      %vm929 = vweird.f32 %v922
      %vm930 = vweird.f32 %v923
      %vm931 = vmor %vm929, %vm930
      %v932 = vsel %vm931, %v923, %v928
      %v933 = vmul.f32 %v916, %v932
      %v935 = vperm.slane %v903, 0
      %v937 = vmul.f32 %v933, %v935
      %v939 = vperm.slane %v904, 0
      %v941 = vadd.f32 %v937, %v939
      %v942 = vpack.c.bf16 %v941, %v941
      %v943 = vld [vmem:[%s8] sm:$0xf]
      %v944 = vld [vmem:[%s8 + $0x4] sm:$0xf]
      %v945 = vld [vmem:[%s8 + $0x8] sm:$0xf]
      %v946 = vld [vmem:[%s8 + $0xc] sm:$0xf]
      %v947 = vld [vmem:[%s9] sm:$0x1]
      %v949 = vperm.slane %v947, 0
      %v955 = vunpack.c.l.b16 %v943
      %v956 = vunpack.c.l.b16 %v944
      %v957 = vunpack.c.l.b16 %v945
      %v958 = vunpack.c.l.b16 %v946
      %v959 = vpack.c.b16 %v956, %v955
      %v960 = vpack.c.b16 %v958, %v957
      %v964 = vsel %vm556, %v942, 0
      %966 = vmatpush.bf16.msra.mxu0 0
      %967 = vmatpush.bf16.msra.mxu0 0
      %968 = vmatpush.bf16.msra.mxu0 0
      %969 = vmatpush.bf16.msra.mxu0 0
      %970 = vmatpush.bf16.msra.mxu0 0
      %971 = vmatpush.bf16.msra.mxu0 0
      %972 = vmatpush.bf16.msra.mxu0 %v960
      %973 = vmatpush.bf16.msra.mxu0 %v959
      %974 = vmatmul.bf16.gmra.mxu0 %v964
      %v975 = vpop.f32.mrf.mxu0
      %v976 = vadd.f32 %v949, %v975
      %v977 = vpop.f32.mrf.mxu0
      %978 = vdwg.mxu0
      %v979 = vmax.f32 %v976, 0.0
      %v980 = vpack.c.bf16 %v979, %v979
      %v981 = vld [vmem:[%s10] sm:$0xf]
      %v982 = vld [vmem:[%s10 + $0x4] sm:$0xf]
      %v983 = vld [vmem:[%s10 + $0x8] sm:$0xf]
      %v984 = vld [vmem:[%s10 + $0xc] sm:$0xf]
      %v985 = vld [vmem:[%s10 + $0x10] sm:$0xf]
      %v986 = vld [vmem:[%s10 + $0x14] sm:$0xf]
      %v987 = vld [vmem:[%s10 + $0x18] sm:$0xf]
      %v988 = vld [vmem:[%s10 + $0x1c] sm:$0xf]
      %v989 = vld [vmem:[%s11] sm:$0x1]
      %v991 = vperm.slane %v989, 0
      %v1001 = vunpack.c.l.b16 %v981
      %v1002 = vunpack.c.l.b16 %v982
      %v1003 = vunpack.c.l.b16 %v983
      %v1004 = vunpack.c.l.b16 %v984
      %v1005 = vunpack.c.l.b16 %v985
      %v1006 = vunpack.c.l.b16 %v986
      %v1007 = vunpack.c.l.b16 %v987
      %v1008 = vunpack.c.l.b16 %v988
      %v1009 = vpack.c.b16 %v1002, %v1001
      %v1010 = vpack.c.b16 %v1004, %v1003
      %v1011 = vpack.c.b16 %v1006, %v1005
      %v1012 = vpack.c.b16 %v1008, %v1007
      %vm1017 = vcmask 523264
      %v1019 = vsel %vm1017, %v980, 0
      %1021 = vmatpush.bf16.msra.mxu0 0
      %1022 = vmatpush.bf16.msra.mxu0 0
      %1023 = vmatpush.bf16.msra.mxu0 0
      %1024 = vmatpush.bf16.msra.mxu0 0
      %1025 = vmatpush.bf16.msra.mxu0 %v1012
      %1026 = vmatpush.bf16.msra.mxu0 %v1011
      %1027 = vmatpush.bf16.msra.mxu0 %v1010
      %1028 = vmatpush.bf16.msra.mxu0 %v1009
      %1029 = vmatmul.bf16.gmra.mxu0 %v1019
      %v1030 = vpop.f32.mrf.mxu0
      %v1031 = vadd.f32 %v991, %v1030
      %v1032 = vpop.f32.mrf.mxu0
      %1033 = vdwg.mxu0
      %v1034 = vadd.f32 %v1031, %v941
      %v1035 = vld [vmem:[%s12] sm:$0x1]
      %v1036 = vld [vmem:[%s13] sm:$0x1]
      %v1037 = vsel %vm556, %v1034, 0.0
      %1038 = vadd.xlane.f32.xlu0 %v1037
      %v1039 = vpop.xlane.xlu0 %1038
      %v1040 = vmul.f32 %v1039, %v914
      %v1041 = vsub.f32 %v1034, %v1040
      %v1042 = vmul.f32 %v1041, %v1041
      %v1043 = vsel %vm556, %v1042, 0.0
      %1044 = vadd.xlane.f32.xlu0 %v1043
      %v1045 = vpop.xlane.xlu0 %1044
      %v1046 = vmul.f32 %v1045, %v914
      %v1047 = vadd.f32 %v1046, 1e-05
      %v1048 = vrsqrt.pop %v1047
      %v1049 = vmul.f32 %v1048, %v1047
      %v1050 = vmul.f32 %v1049, %v1048
      %v1051 = vmul.f32 0.5, %v1050
      %v1052 = vsub.f32 1.5, %v1051
      %v1053 = vmul.f32 %v1048, %v1052
      %vm1054 = vweird.f32 %v1047
      %vm1055 = vweird.f32 %v1048
      %vm1056 = vmor %vm1054, %vm1055
      %v1057 = vsel %vm1056, %v1048, %v1053
      %v1058 = vmul.f32 %v1041, %v1057
      %v1060 = vperm.slane %v1035, 0
      %v1062 = vmul.f32 %v1058, %v1060
      %v1064 = vperm.slane %v1036, 0
      %v1066 = vadd.f32 %v1062, %v1064
      %v1067 = vld [vmem:[%s14] sm:$0x1]
      %v1068 = vld [vmem:[%s15] sm:$0x1]
      %v1069 = vsel %vm556, %v1066, 0.0
      %1070 = vadd.xlane.f32.xlu0 %v1069
      %v1071 = vpop.xlane.xlu0 %1070
      %v1072 = vmul.f32 %v1071, %v914
      %v1073 = vsub.f32 %v1066, %v1072
      %v1074 = vmul.f32 %v1073, %v1073
      %v1075 = vsel %vm556, %v1074, 0.0
      %1076 = vadd.xlane.f32.xlu0 %v1075
      %v1077 = vpop.xlane.xlu0 %1076
      %v1078 = vmul.f32 %v1077, %v914
      %v1079 = vadd.f32 %v1078, 1e-05
      %v1080 = vrsqrt.pop %v1079
      %v1081 = vmul.f32 %v1080, %v1079
      %v1082 = vmul.f32 %v1081, %v1080
      %v1083 = vmul.f32 0.5, %v1082
      %v1084 = vsub.f32 1.5, %v1083
      %v1085 = vmul.f32 %v1080, %v1084
      %vm1086 = vweird.f32 %v1079
      %vm1087 = vweird.f32 %v1080
      %vm1088 = vmor %vm1086, %vm1087
      %v1089 = vsel %vm1088, %v1080, %v1085
      %v1090 = vmul.f32 %v1073, %v1089
      %v1092 = vperm.slane %v1067, 0
      %v1094 = vmul.f32 %v1090, %v1092
      %v1096 = vperm.slane %v1068, 0
      %v1098 = vadd.f32 %v1094, %v1096
      %v1099 = vpack.c.bf16 %v1098, %v1098
      %vm1100 = vcmask 257024
      %1101 = vst.msk [vmem:[%s533] sm:$0xf] %vm1100, %v1099
      %p1102 = scmp.lt.s32.totalorder %s27, 1
      %s1103 = scalar_select %p1102, %s27, 1
      %s1104 = smul.addr %s1103, 4
      %s1105 = scalar_lea.vmem %s16, %s1104
      // Predicated region
      $region85: #{seq2seq_forward.6} parent=83 // pred_check
        %p1106 = pneg %p391
      $region86: #{seq2seq_forward.6} parent=83 // pred_check_branch
        %1108 = sbr.rel (%p1106) target = $region88
      $region87: #{seq2seq_forward.6} parent=83 // pred_region
        _
      $region88: #{seq2seq_forward.6} parent=83 // pred_fallthru
        _
    $region84: #{seq2seq_forward.6} parent=5 // pred_fallthru
      _
    %p1109 = scmp.le.s32.totalorder 2, %s22
    // Predicated region
    $region89: #{seq2seq_forward.6} parent=5 // pred_check
      %p1110 = pneg %p1109
    $region90: #{seq2seq_forward.6} parent=5 // pred_check_branch
      %1112 = sbr.rel (%p1110) target = $region92
    $region91: #{seq2seq_forward.6} parent=5 // pred_region
      %s1113 = ssub.s32 %s22, 2
      // Predicated region
      $region93: #{seq2seq_forward.6} parent=91 // pred_check
        %p1114 = pneg %p397
      $region94: #{seq2seq_forward.6} parent=91 // pred_check_branch
        %1116 = sbr.rel (%p1114) target = $region96
      $region95: #{seq2seq_forward.6} parent=91 // pred_region
        %p1117 = scmp.lt.s32.totalorder %s28, 1
        %s1118 = scalar_select %p1117, %s28, 1
        %s1119 = smul.addr %s1118, 4
        %s1120 = scalar_lea.vmem %s16, %s1119
      $region96: #{seq2seq_forward.6} parent=91 // pred_fallthru
        _
    $region92: #{seq2seq_forward.6} parent=5 // pred_fallthru
      _
  $region6: #{seq2seq_forward.6} parent=0 // loop_footer
    %s26 = sadd.s32 1, %s22
  $region7: #{seq2seq_forward.6} parent=0 // loop_footer_branch
    %21 = sbr.rel target = $region3
  $region8: #{seq2seq_forward.6} parent=0 // loop_exit
    _

// kernel: seq2seq_forward.8
$region0: #{seq2seq_forward.8}
  #allocation0 [shape = 'u32[]', space=smem, size = 0x4, offset = 0x4, fixed_abs, tag = 'smem constant byte address 0x4 - core index']
  #allocation1 [shape = 'u32[72,128]{1,0:T(1,128)}', space=vmem, size = 0x9000, scoped, tag = 'internal scratch']
  %s0 = inlined_call_operand.vmem [shape: bf16[2,8,32], index: 0, kind: input, shape index: {}]
  %s1 = inlined_call_operand.vmem [shape: bf16[2,8,32], index: 1, kind: input, shape index: {}]
  %s2 = inlined_call_operand.vmem [shape: f32[2,8,8], index: 2, kind: input, shape index: {}]
  %s3 = inlined_call_operand.vmem [shape: f32[2,8,8], index: 3, kind: input, shape index: {}]
  %s4 = inlined_call_operand.vmem [shape: bf16[32,96], index: 4, kind: input, shape index: {}]
  %s5 = inlined_call_operand.hbm [shape: f32[1,96], index: 5, kind: input, shape index: {}]
  %s6 = inlined_call_operand.vmem [shape: bf16[32,32], index: 6, kind: input, shape index: {}]
  %s7 = inlined_call_operand.hbm [shape: f32[1,32], index: 7, kind: input, shape index: {}]
  %s8 = inlined_call_operand.hbm [shape: f32[1,32], index: 8, kind: input, shape index: {}]
  %s9 = inlined_call_operand.hbm [shape: f32[1,32], index: 9, kind: input, shape index: {}]
  %s10 = inlined_call_operand.vmem [shape: bf16[32,32], index: 10, kind: input, shape index: {}]
  %s11 = inlined_call_operand.hbm [shape: f32[1,32], index: 11, kind: input, shape index: {}]
  %s12 = inlined_call_operand.vmem [shape: bf16[32,64], index: 12, kind: input, shape index: {}]
  %s13 = inlined_call_operand.hbm [shape: f32[1,64], index: 13, kind: input, shape index: {}]
  %s14 = inlined_call_operand.vmem [shape: bf16[32,32], index: 14, kind: input, shape index: {}]
  %s15 = inlined_call_operand.hbm [shape: f32[1,32], index: 15, kind: input, shape index: {}]
  %s16 = inlined_call_operand.hbm [shape: f32[1,32], index: 16, kind: input, shape index: {}]
  %s17 = inlined_call_operand.hbm [shape: f32[1,32], index: 17, kind: input, shape index: {}]
  %s18 = inlined_call_operand.vmem [shape: bf16[32,64], index: 18, kind: input, shape index: {}]
  %s19 = inlined_call_operand.hbm [shape: f32[1,64], index: 19, kind: input, shape index: {}]
  %s20 = inlined_call_operand.vmem [shape: bf16[64,32], index: 20, kind: input, shape index: {}]
  %s21 = inlined_call_operand.hbm [shape: f32[1,32], index: 21, kind: input, shape index: {}]
  %s22 = inlined_call_operand.hbm [shape: f32[1,32], index: 22, kind: input, shape index: {}]
  %s23 = inlined_call_operand.hbm [shape: f32[1,32], index: 23, kind: input, shape index: {}]
  %s24 = inlined_call_operand.vmem [shape: bf16[2,8,32], index: 24, kind: output, shape index: {}]
  %s25 = sld [smem:[#allocation0]]
  $region181: #{seq2seq_forward.8} parent=0
    _
  %s27 = ssub.s32 1, %s25
  %s28 = scalar_select 0, %s27, %s25
  $region1: #{seq2seq_forward.8} parent=0
    #allocation2 [shape = 'u8[512]{0}', space=vmem, size = 0x400, scoped, tag = 'input window, operand 5, single buffered']
    #allocation3 [shape = 's32[2]{0}', space=sflag, size = 0x8, scoped, tag = 'scoped memory for seq2seq_forward.8']
    #allocation4 [shape = 'u8[512]{0}', space=vmem, size = 0x400, scoped, tag = 'input window, operand 7, single buffered']
    #allocation5 [shape = 's32[1]{0}', space=sflag, size = 0x4, scoped, tag = 'scoped memory for seq2seq_forward.8']
    #allocation6 [shape = 'u8[512]{0}', space=vmem, size = 0x400, scoped, tag = 'input window, operand 8, single buffered']
    #allocation7 [shape = 'u8[512]{0}', space=vmem, size = 0x400, scoped, tag = 'input window, operand 9, single buffered']
    #allocation8 [shape = 's32[1]{0}', space=sflag, size = 0x4, scoped, tag = 'scoped memory for seq2seq_forward.8']
    #allocation9 [shape = 'u8[512]{0}', space=vmem, size = 0x400, scoped, tag = 'input window, operand 11, single buffered']
    #allocation10 [shape = 'u8[512]{0}', space=vmem, size = 0x400, scoped, tag = 'input window, operand 13, single buffered']
    #allocation11 [shape = 's32[1]{0}', space=sflag, size = 0x4, scoped, tag = 'scoped memory for seq2seq_forward.8']
    #allocation12 [shape = 'u8[512]{0}', space=vmem, size = 0x400, scoped, tag = 'input window, operand 15, single buffered']
    #allocation13 [shape = 'u8[512]{0}', space=vmem, size = 0x400, scoped, tag = 'input window, operand 16, single buffered']
    #allocation14 [shape = 's32[1]{0}', space=sflag, size = 0x4, scoped, tag = 'scoped memory for seq2seq_forward.8']
    #allocation15 [shape = 'u8[512]{0}', space=vmem, size = 0x400, scoped, tag = 'input window, operand 17, single buffered']
    #allocation16 [shape = 'u8[512]{0}', space=vmem, size = 0x400, scoped, tag = 'input window, operand 19, single buffered']
    #allocation17 [shape = 's32[1]{0}', space=sflag, size = 0x4, scoped, tag = 'scoped memory for seq2seq_forward.8']
    #allocation18 [shape = 'u8[512]{0}', space=vmem, size = 0x400, scoped, tag = 'input window, operand 21, single buffered']
    #allocation19 [shape = 'u8[512]{0}', space=vmem, size = 0x400, scoped, tag = 'input window, operand 22, single buffered']
    #allocation20 [shape = 's32[1]{0}', space=sflag, size = 0x4, scoped, tag = 'scoped memory for seq2seq_forward.8']
    #allocation21 [shape = 'u8[512]{0}', space=vmem, size = 0x400, scoped, tag = 'input window, operand 23, single buffered']
    %29 = vsyncpa [#allocation3], 0
    %30 = vsyncpa [#allocation5], 0
    %31 = vsyncpa [#allocation8], 0
    %32 = vsyncpa [#allocation11], 0
    %33 = vsyncpa [#allocation14], 0
    %34 = vsyncpa [#allocation17], 0
    %35 = vsyncpa [#allocation20], 0
    loop: start=0, step=1, limit=4
    $region2: #{seq2seq_forward.8} parent=1 // loop_pre_header
      _
    $region3: #{seq2seq_forward.8} parent=1 // loop_header
      %s37 = sphi 0, %s41
      %p38 = scmp.ge.s32.totalorder %s37, 4
      %s47 = sphi 0, %s49
      %s50 = sphi 0, %s47
      %s51 = sphi 0, %s50
      %s67 = sphi 0, %s51
      %s73 = sphi 0, %s75
      %s76 = sphi 0, %s73
      %s77 = sphi 0, %s76
      %s93 = sphi 0, %s77
      %s99 = sphi 0, %s101
      %s102 = sphi 0, %s99
      %s103 = sphi 0, %s102
      %s119 = sphi 0, %s103
      %s125 = sphi 0, %s127
      %s128 = sphi 0, %s125
      %s129 = sphi 0, %s128
      %s145 = sphi 0, %s129
      %s149 = sphi 0, %s149
      %s151 = sphi 0, %s149
      %s152 = sphi 0, %s151
      %s166 = sphi 0, %s152
      %s170 = sphi 0, %s170
      %s172 = sphi 0, %s170
      %s173 = sphi 0, %s172
      %s187 = sphi 0, %s173
      %s191 = sphi 0, %s191
      %s193 = sphi 0, %s191
      %s194 = sphi 0, %s193
      %s208 = sphi 0, %s194
      %s212 = sphi 0, %s212
      %s214 = sphi 0, %s212
      %s215 = sphi 0, %s214
      %s229 = sphi 0, %s215
      %s233 = sphi 0, %s233
      %s235 = sphi 0, %s233
      %s236 = sphi 0, %s235
      %s250 = sphi 0, %s236
      %s254 = sphi 0, %s254
      %s256 = sphi 0, %s254
      %s257 = sphi 0, %s256
      %s271 = sphi 0, %s257
      %s275 = sphi 0, %s275
      %s277 = sphi 0, %s275
      %s278 = sphi 0, %s277
      %s292 = sphi 0, %s278
      %s296 = sphi 0, %s296
      %s298 = sphi 0, %s296
      %s299 = sphi 0, %s298
      %s313 = sphi 0, %s299
      %s317 = sphi 0, %s317
      %s319 = sphi 0, %s317
      %s320 = sphi 0, %s319
      %s334 = sphi 0, %s320
      %s338 = sphi 0, %s338
      %s340 = sphi 0, %s338
      %s341 = sphi 0, %s340
      %s355 = sphi 0, %s341
      %s359 = sphi 0, %s359
      %s361 = sphi 0, %s359
      %s362 = sphi 0, %s361
      %s376 = sphi 0, %s362
      %s380 = sphi 0, %s380
      %s382 = sphi 0, %s380
      %s383 = sphi 0, %s382
      %s397 = sphi 0, %s383
      %s401 = sphi 0, %s401
      %s403 = sphi 0, %s401
      %s404 = sphi 0, %s403
      %s418 = sphi 0, %s404
      %s422 = sphi 0, %s422
      %s424 = sphi 0, %s422
      %s425 = sphi 0, %s424
      %s439 = sphi 0, %s425
      %s443 = sphi 0, %s443
      %s445 = sphi 0, %s443
      %s446 = sphi 0, %s445
      %s460 = sphi 0, %s446
      %s464 = sphi 0, %s464
      %s466 = sphi 0, %s464
      %s467 = sphi 0, %s466
      %s481 = sphi 0, %s467
      %s485 = sphi 0, %s485
      %s487 = sphi 0, %s485
      %s488 = sphi 0, %s487
      %s502 = sphi 0, %s488
      %s506 = sphi 0, %s506
      %s508 = sphi 0, %s506
      %s509 = sphi 0, %s508
      %s523 = sphi 0, %s509
      %s527 = sphi 0, %s527
      %s529 = sphi 0, %s527
      %s530 = sphi 0, %s529
      %s544 = sphi 0, %s530
      %s548 = sphi 0, %s548
      %s550 = sphi 0, %s548
      %s551 = sphi 0, %s550
      %s565 = sphi 0, %s551
      %s571 = sphi 0, %s573
      %s574 = sphi 0, %s571
      %s575 = sphi 0, %s574
      %s591 = sphi 0, %s575
    $region4: #{seq2seq_forward.8} parent=1 // loop_header_branch
      %40 = sbr.rel (%p38) target = $region8
    $region5: #{seq2seq_forward.8} parent=1 // loop_body
      %s42 = ssub.s32 %s37, 1
      %s43 = ssub.s32 %s37, 2
      %s44 = sadd.s32 %s37, 1
      %s45 = ssub.s32 %s37, %s44
      %p46 = scmp.eq.s32.totalorder %s45, 0
      %s48 = sadd.s32 %s47, 1
      %s49 = scalar_select %p46, %s47, %s48
      %p52 = pneg %p46
      %p53 = scmp.eq.s32.totalorder %s37, 1
      %p54 = por %p52, %p53
      %p55 = scmp.ne.s32.totalorder %s47, %s50
      %p56 = scmp.eq.s32.totalorder %s37, 0
      %p57 = por %p55, %p56
      %p58 = scmp.ne.s32.totalorder %s47, %s50
      %p59 = scmp.eq.s32.totalorder %s42, 1
      %p60 = por %p58, %p59
      %p61 = scmp.ne.s32.totalorder %s50, %s51
      %p62 = scmp.eq.s32.totalorder %s42, 0
      %p63 = por %p61, %p62
      %p64 = scmp.ne.s32.totalorder %s50, %s51
      %p65 = scmp.eq.s32.totalorder %s43, 1
      %p66 = por %p64, %p65
      %p68 = scmp.ne.s32.totalorder %s51, %s67
      %p69 = scmp.eq.s32.totalorder %s43, 0
      %p70 = por %p68, %p69
      %s71 = ssub.s32 %s37, %s44
      %p72 = scmp.eq.s32.totalorder %s71, 0
      %s74 = sadd.s32 %s73, 1
      %s75 = scalar_select %p72, %s73, %s74
      %p78 = pneg %p72
      %p79 = scmp.eq.s32.totalorder %s37, 1
      %p80 = por %p78, %p79
      %p81 = scmp.ne.s32.totalorder %s73, %s76
      %p82 = scmp.eq.s32.totalorder %s37, 0
      %p83 = por %p81, %p82
      %p84 = scmp.ne.s32.totalorder %s73, %s76
      %p85 = scmp.eq.s32.totalorder %s42, 1
      %p86 = por %p84, %p85
      %p87 = scmp.ne.s32.totalorder %s76, %s77
      %p88 = scmp.eq.s32.totalorder %s42, 0
      %p89 = por %p87, %p88
      %p90 = scmp.ne.s32.totalorder %s76, %s77
      %p91 = scmp.eq.s32.totalorder %s43, 1
      %p92 = por %p90, %p91
      %p94 = scmp.ne.s32.totalorder %s77, %s93
      %p95 = scmp.eq.s32.totalorder %s43, 0
      %p96 = por %p94, %p95
      %s97 = ssub.s32 %s37, %s44
      %p98 = scmp.eq.s32.totalorder %s97, 0
      %s100 = sadd.s32 %s99, 1
      %s101 = scalar_select %p98, %s99, %s100
      %p104 = pneg %p98
      %p105 = scmp.eq.s32.totalorder %s37, 1
      %p106 = por %p104, %p105
      %p107 = scmp.ne.s32.totalorder %s99, %s102
      %p108 = scmp.eq.s32.totalorder %s37, 0
      %p109 = por %p107, %p108
      %p110 = scmp.ne.s32.totalorder %s99, %s102
      %p111 = scmp.eq.s32.totalorder %s42, 1
      %p112 = por %p110, %p111
      %p113 = scmp.ne.s32.totalorder %s102, %s103
      %p114 = scmp.eq.s32.totalorder %s42, 0
      %p115 = por %p113, %p114
      %p116 = scmp.ne.s32.totalorder %s102, %s103
      %p117 = scmp.eq.s32.totalorder %s43, 1
      %p118 = por %p116, %p117
      %p120 = scmp.ne.s32.totalorder %s103, %s119
      %p121 = scmp.eq.s32.totalorder %s43, 0
      %p122 = por %p120, %p121
      %s123 = ssub.s32 %s37, %s44
      %p124 = scmp.eq.s32.totalorder %s123, 0
      %s126 = sadd.s32 %s125, 1
      %s127 = scalar_select %p124, %s125, %s126
      %p130 = pneg %p124
      %p131 = scmp.eq.s32.totalorder %s37, 1
      %p132 = por %p130, %p131
      %p133 = scmp.ne.s32.totalorder %s125, %s128
      %p134 = scmp.eq.s32.totalorder %s37, 0
      %p135 = por %p133, %p134
      %p136 = scmp.ne.s32.totalorder %s125, %s128
      %p137 = scmp.eq.s32.totalorder %s42, 1
      %p138 = por %p136, %p137
      %p139 = scmp.ne.s32.totalorder %s128, %s129
      %p140 = scmp.eq.s32.totalorder %s42, 0
      %p141 = por %p139, %p140
      %p142 = scmp.ne.s32.totalorder %s128, %s129
      %p143 = scmp.eq.s32.totalorder %s43, 1
      %p144 = por %p142, %p143
      %p146 = scmp.ne.s32.totalorder %s129, %s145
      %p147 = scmp.eq.s32.totalorder %s43, 0
      %p148 = por %p146, %p147
      %s150 = sadd.s32 %s149, 1
      %p153 = scmp.eq.s32.totalorder %s37, 1
      %p154 = scmp.ne.s32.totalorder %s149, %s151
      %p155 = scmp.eq.s32.totalorder %s37, 0
      %p156 = por %p154, %p155
      %p157 = scmp.ne.s32.totalorder %s149, %s151
      %p158 = scmp.eq.s32.totalorder %s42, 1
      %p159 = por %p157, %p158
      %p160 = scmp.ne.s32.totalorder %s151, %s152
      %p161 = scmp.eq.s32.totalorder %s42, 0
      %p162 = por %p160, %p161
      %p163 = scmp.ne.s32.totalorder %s151, %s152
      %p164 = scmp.eq.s32.totalorder %s43, 1
      %p165 = por %p163, %p164
      %p167 = scmp.ne.s32.totalorder %s152, %s166
      %p168 = scmp.eq.s32.totalorder %s43, 0
      %p169 = por %p167, %p168
      %s171 = sadd.s32 %s170, 1
      %p174 = scmp.eq.s32.totalorder %s37, 1
      %p175 = scmp.ne.s32.totalorder %s170, %s172
      %p176 = scmp.eq.s32.totalorder %s37, 0
      %p177 = por %p175, %p176
      %p178 = scmp.ne.s32.totalorder %s170, %s172
      %p179 = scmp.eq.s32.totalorder %s42, 1
      %p180 = por %p178, %p179
      %p181 = scmp.ne.s32.totalorder %s172, %s173
      %p182 = scmp.eq.s32.totalorder %s42, 0
      %p183 = por %p181, %p182
      %p184 = scmp.ne.s32.totalorder %s172, %s173
      %p185 = scmp.eq.s32.totalorder %s43, 1
      %p186 = por %p184, %p185
      %p188 = scmp.ne.s32.totalorder %s173, %s187
      %p189 = scmp.eq.s32.totalorder %s43, 0
      %p190 = por %p188, %p189
      %s192 = sadd.s32 %s191, 1
      %p195 = scmp.eq.s32.totalorder %s37, 1
      %p196 = scmp.ne.s32.totalorder %s191, %s193
      %p197 = scmp.eq.s32.totalorder %s37, 0
      %p198 = por %p196, %p197
      %p199 = scmp.ne.s32.totalorder %s191, %s193
      %p200 = scmp.eq.s32.totalorder %s42, 1
      %p201 = por %p199, %p200
      %p202 = scmp.ne.s32.totalorder %s193, %s194
      %p203 = scmp.eq.s32.totalorder %s42, 0
      %p204 = por %p202, %p203
      %p205 = scmp.ne.s32.totalorder %s193, %s194
      %p206 = scmp.eq.s32.totalorder %s43, 1
      %p207 = por %p205, %p206
      %p209 = scmp.ne.s32.totalorder %s194, %s208
      %p210 = scmp.eq.s32.totalorder %s43, 0
      %p211 = por %p209, %p210
      %s213 = sadd.s32 %s212, 1
      %p216 = scmp.eq.s32.totalorder %s37, 1
      %p217 = scmp.ne.s32.totalorder %s212, %s214
      %p218 = scmp.eq.s32.totalorder %s37, 0
      %p219 = por %p217, %p218
      %p220 = scmp.ne.s32.totalorder %s212, %s214
      %p221 = scmp.eq.s32.totalorder %s42, 1
      %p222 = por %p220, %p221
      %p223 = scmp.ne.s32.totalorder %s214, %s215
      %p224 = scmp.eq.s32.totalorder %s42, 0
      %p225 = por %p223, %p224
      %p226 = scmp.ne.s32.totalorder %s214, %s215
      %p227 = scmp.eq.s32.totalorder %s43, 1
      %p228 = por %p226, %p227
      %p230 = scmp.ne.s32.totalorder %s215, %s229
      %p231 = scmp.eq.s32.totalorder %s43, 0
      %p232 = por %p230, %p231
      %s234 = sadd.s32 %s233, 1
      %p237 = scmp.eq.s32.totalorder %s37, 1
      %p238 = scmp.ne.s32.totalorder %s233, %s235
      %p239 = scmp.eq.s32.totalorder %s37, 0
      %p240 = por %p238, %p239
      %p241 = scmp.ne.s32.totalorder %s233, %s235
      %p242 = scmp.eq.s32.totalorder %s42, 1
      %p243 = por %p241, %p242
      %p244 = scmp.ne.s32.totalorder %s235, %s236
      %p245 = scmp.eq.s32.totalorder %s42, 0
      %p246 = por %p244, %p245
      %p247 = scmp.ne.s32.totalorder %s235, %s236
      %p248 = scmp.eq.s32.totalorder %s43, 1
      %p249 = por %p247, %p248
      %p251 = scmp.ne.s32.totalorder %s236, %s250
      %p252 = scmp.eq.s32.totalorder %s43, 0
      %p253 = por %p251, %p252
      %s255 = sadd.s32 %s254, 1
      %p258 = scmp.eq.s32.totalorder %s37, 1
      %p259 = scmp.ne.s32.totalorder %s254, %s256
      %p260 = scmp.eq.s32.totalorder %s37, 0
      %p261 = por %p259, %p260
      %p262 = scmp.ne.s32.totalorder %s254, %s256
      %p263 = scmp.eq.s32.totalorder %s42, 1
      %p264 = por %p262, %p263
      %p265 = scmp.ne.s32.totalorder %s256, %s257
      %p266 = scmp.eq.s32.totalorder %s42, 0
      %p267 = por %p265, %p266
      %p268 = scmp.ne.s32.totalorder %s256, %s257
      %p269 = scmp.eq.s32.totalorder %s43, 1
      %p270 = por %p268, %p269
      %p272 = scmp.ne.s32.totalorder %s257, %s271
      %p273 = scmp.eq.s32.totalorder %s43, 0
      %p274 = por %p272, %p273
      %s276 = sadd.s32 %s275, 1
      %p279 = scmp.eq.s32.totalorder %s37, 1
      %p280 = scmp.ne.s32.totalorder %s275, %s277
      %p281 = scmp.eq.s32.totalorder %s37, 0
      %p282 = por %p280, %p281
      %p283 = scmp.ne.s32.totalorder %s275, %s277
      %p284 = scmp.eq.s32.totalorder %s42, 1
      %p285 = por %p283, %p284
      %p286 = scmp.ne.s32.totalorder %s277, %s278
      %p287 = scmp.eq.s32.totalorder %s42, 0
      %p288 = por %p286, %p287
      %p289 = scmp.ne.s32.totalorder %s277, %s278
      %p290 = scmp.eq.s32.totalorder %s43, 1
      %p291 = por %p289, %p290
      %p293 = scmp.ne.s32.totalorder %s278, %s292
      %p294 = scmp.eq.s32.totalorder %s43, 0
      %p295 = por %p293, %p294
      %s297 = sadd.s32 %s296, 1
      %p300 = scmp.eq.s32.totalorder %s37, 1
      %p301 = scmp.ne.s32.totalorder %s296, %s298
      %p302 = scmp.eq.s32.totalorder %s37, 0
      %p303 = por %p301, %p302
      %p304 = scmp.ne.s32.totalorder %s296, %s298
      %p305 = scmp.eq.s32.totalorder %s42, 1
      %p306 = por %p304, %p305
      %p307 = scmp.ne.s32.totalorder %s298, %s299
      %p308 = scmp.eq.s32.totalorder %s42, 0
      %p309 = por %p307, %p308
      %p310 = scmp.ne.s32.totalorder %s298, %s299
      %p311 = scmp.eq.s32.totalorder %s43, 1
      %p312 = por %p310, %p311
      %p314 = scmp.ne.s32.totalorder %s299, %s313
      %p315 = scmp.eq.s32.totalorder %s43, 0
      %p316 = por %p314, %p315
      %s318 = sadd.s32 %s317, 1
      %p321 = scmp.eq.s32.totalorder %s37, 1
      %p322 = scmp.ne.s32.totalorder %s317, %s319
      %p323 = scmp.eq.s32.totalorder %s37, 0
      %p324 = por %p322, %p323
      %p325 = scmp.ne.s32.totalorder %s317, %s319
      %p326 = scmp.eq.s32.totalorder %s42, 1
      %p327 = por %p325, %p326
      %p328 = scmp.ne.s32.totalorder %s319, %s320
      %p329 = scmp.eq.s32.totalorder %s42, 0
      %p330 = por %p328, %p329
      %p331 = scmp.ne.s32.totalorder %s319, %s320
      %p332 = scmp.eq.s32.totalorder %s43, 1
      %p333 = por %p331, %p332
      %p335 = scmp.ne.s32.totalorder %s320, %s334
      %p336 = scmp.eq.s32.totalorder %s43, 0
      %p337 = por %p335, %p336
      %s339 = sadd.s32 %s338, 1
      %p342 = scmp.eq.s32.totalorder %s37, 1
      %p343 = scmp.ne.s32.totalorder %s338, %s340
      %p344 = scmp.eq.s32.totalorder %s37, 0
      %p345 = por %p343, %p344
      %p346 = scmp.ne.s32.totalorder %s338, %s340
      %p347 = scmp.eq.s32.totalorder %s42, 1
      %p348 = por %p346, %p347
      %p349 = scmp.ne.s32.totalorder %s340, %s341
      %p350 = scmp.eq.s32.totalorder %s42, 0
      %p351 = por %p349, %p350
      %p352 = scmp.ne.s32.totalorder %s340, %s341
      %p353 = scmp.eq.s32.totalorder %s43, 1
      %p354 = por %p352, %p353
      %p356 = scmp.ne.s32.totalorder %s341, %s355
      %p357 = scmp.eq.s32.totalorder %s43, 0
      %p358 = por %p356, %p357
      %s360 = sadd.s32 %s359, 1
      %p363 = scmp.eq.s32.totalorder %s37, 1
      %p364 = scmp.ne.s32.totalorder %s359, %s361
      %p365 = scmp.eq.s32.totalorder %s37, 0
      %p366 = por %p364, %p365
      %p367 = scmp.ne.s32.totalorder %s359, %s361
      %p368 = scmp.eq.s32.totalorder %s42, 1
      %p369 = por %p367, %p368
      %p370 = scmp.ne.s32.totalorder %s361, %s362
      %p371 = scmp.eq.s32.totalorder %s42, 0
      %p372 = por %p370, %p371
      %p373 = scmp.ne.s32.totalorder %s361, %s362
      %p374 = scmp.eq.s32.totalorder %s43, 1
      %p375 = por %p373, %p374
      %p377 = scmp.ne.s32.totalorder %s362, %s376
      %p378 = scmp.eq.s32.totalorder %s43, 0
      %p379 = por %p377, %p378
      %s381 = sadd.s32 %s380, 1
      %p384 = scmp.eq.s32.totalorder %s37, 1
      %p385 = scmp.ne.s32.totalorder %s380, %s382
      %p386 = scmp.eq.s32.totalorder %s37, 0
      %p387 = por %p385, %p386
      %p388 = scmp.ne.s32.totalorder %s380, %s382
      %p389 = scmp.eq.s32.totalorder %s42, 1
      %p390 = por %p388, %p389
      %p391 = scmp.ne.s32.totalorder %s382, %s383
      %p392 = scmp.eq.s32.totalorder %s42, 0
      %p393 = por %p391, %p392
      %p394 = scmp.ne.s32.totalorder %s382, %s383
      %p395 = scmp.eq.s32.totalorder %s43, 1
      %p396 = por %p394, %p395
      %p398 = scmp.ne.s32.totalorder %s383, %s397
      %p399 = scmp.eq.s32.totalorder %s43, 0
      %p400 = por %p398, %p399
      %s402 = sadd.s32 %s401, 1
      %p405 = scmp.eq.s32.totalorder %s37, 1
      %p406 = scmp.ne.s32.totalorder %s401, %s403
      %p407 = scmp.eq.s32.totalorder %s37, 0
      %p408 = por %p406, %p407
      %p409 = scmp.ne.s32.totalorder %s401, %s403
      %p410 = scmp.eq.s32.totalorder %s42, 1
      %p411 = por %p409, %p410
      %p412 = scmp.ne.s32.totalorder %s403, %s404
      %p413 = scmp.eq.s32.totalorder %s42, 0
      %p414 = por %p412, %p413
      %p415 = scmp.ne.s32.totalorder %s403, %s404
      %p416 = scmp.eq.s32.totalorder %s43, 1
      %p417 = por %p415, %p416
      %p419 = scmp.ne.s32.totalorder %s404, %s418
      %p420 = scmp.eq.s32.totalorder %s43, 0
      %p421 = por %p419, %p420
      %s423 = sadd.s32 %s422, 1
      %p426 = scmp.eq.s32.totalorder %s37, 1
      %p427 = scmp.ne.s32.totalorder %s422, %s424
      %p428 = scmp.eq.s32.totalorder %s37, 0
      %p429 = por %p427, %p428
      %p430 = scmp.ne.s32.totalorder %s422, %s424
      %p431 = scmp.eq.s32.totalorder %s42, 1
      %p432 = por %p430, %p431
      %p433 = scmp.ne.s32.totalorder %s424, %s425
      %p434 = scmp.eq.s32.totalorder %s42, 0
      %p435 = por %p433, %p434
      %p436 = scmp.ne.s32.totalorder %s424, %s425
      %p437 = scmp.eq.s32.totalorder %s43, 1
      %p438 = por %p436, %p437
      %p440 = scmp.ne.s32.totalorder %s425, %s439
      %p441 = scmp.eq.s32.totalorder %s43, 0
      %p442 = por %p440, %p441
      %s444 = sadd.s32 %s443, 1
      %p447 = scmp.eq.s32.totalorder %s37, 1
      %p448 = scmp.ne.s32.totalorder %s443, %s445
      %p449 = scmp.eq.s32.totalorder %s37, 0
      %p450 = por %p448, %p449
      %p451 = scmp.ne.s32.totalorder %s443, %s445
      %p452 = scmp.eq.s32.totalorder %s42, 1
      %p453 = por %p451, %p452
      %p454 = scmp.ne.s32.totalorder %s445, %s446
      %p455 = scmp.eq.s32.totalorder %s42, 0
      %p456 = por %p454, %p455
      %p457 = scmp.ne.s32.totalorder %s445, %s446
      %p458 = scmp.eq.s32.totalorder %s43, 1
      %p459 = por %p457, %p458
      %p461 = scmp.ne.s32.totalorder %s446, %s460
      %p462 = scmp.eq.s32.totalorder %s43, 0
      %p463 = por %p461, %p462
      %s465 = sadd.s32 %s464, 1
      %p468 = scmp.eq.s32.totalorder %s37, 1
      %p469 = scmp.ne.s32.totalorder %s464, %s466
      %p470 = scmp.eq.s32.totalorder %s37, 0
      %p471 = por %p469, %p470
      %p472 = scmp.ne.s32.totalorder %s464, %s466
      %p473 = scmp.eq.s32.totalorder %s42, 1
      %p474 = por %p472, %p473
      %p475 = scmp.ne.s32.totalorder %s466, %s467
      %p476 = scmp.eq.s32.totalorder %s42, 0
      %p477 = por %p475, %p476
      %p478 = scmp.ne.s32.totalorder %s466, %s467
      %p479 = scmp.eq.s32.totalorder %s43, 1
      %p480 = por %p478, %p479
      %p482 = scmp.ne.s32.totalorder %s467, %s481
      %p483 = scmp.eq.s32.totalorder %s43, 0
      %p484 = por %p482, %p483
      %s486 = sadd.s32 %s485, 1
      %p489 = scmp.eq.s32.totalorder %s37, 1
      %p490 = scmp.ne.s32.totalorder %s485, %s487
      %p491 = scmp.eq.s32.totalorder %s37, 0
      %p492 = por %p490, %p491
      %p493 = scmp.ne.s32.totalorder %s485, %s487
      %p494 = scmp.eq.s32.totalorder %s42, 1
      %p495 = por %p493, %p494
      %p496 = scmp.ne.s32.totalorder %s487, %s488
      %p497 = scmp.eq.s32.totalorder %s42, 0
      %p498 = por %p496, %p497
      %p499 = scmp.ne.s32.totalorder %s487, %s488
      %p500 = scmp.eq.s32.totalorder %s43, 1
      %p501 = por %p499, %p500
      %p503 = scmp.ne.s32.totalorder %s488, %s502
      %p504 = scmp.eq.s32.totalorder %s43, 0
      %p505 = por %p503, %p504
      %s507 = sadd.s32 %s506, 1
      %p510 = scmp.eq.s32.totalorder %s37, 1
      %p511 = scmp.ne.s32.totalorder %s506, %s508
      %p512 = scmp.eq.s32.totalorder %s37, 0
      %p513 = por %p511, %p512
      %p514 = scmp.ne.s32.totalorder %s506, %s508
      %p515 = scmp.eq.s32.totalorder %s42, 1
      %p516 = por %p514, %p515
      %p517 = scmp.ne.s32.totalorder %s508, %s509
      %p518 = scmp.eq.s32.totalorder %s42, 0
      %p519 = por %p517, %p518
      %p520 = scmp.ne.s32.totalorder %s508, %s509
      %p521 = scmp.eq.s32.totalorder %s43, 1
      %p522 = por %p520, %p521
      %p524 = scmp.ne.s32.totalorder %s509, %s523
      %p525 = scmp.eq.s32.totalorder %s43, 0
      %p526 = por %p524, %p525
      %s528 = sadd.s32 %s527, 1
      %p531 = scmp.eq.s32.totalorder %s37, 1
      %p532 = scmp.ne.s32.totalorder %s527, %s529
      %p533 = scmp.eq.s32.totalorder %s37, 0
      %p534 = por %p532, %p533
      %p535 = scmp.ne.s32.totalorder %s527, %s529
      %p536 = scmp.eq.s32.totalorder %s42, 1
      %p537 = por %p535, %p536
      %p538 = scmp.ne.s32.totalorder %s529, %s530
      %p539 = scmp.eq.s32.totalorder %s42, 0
      %p540 = por %p538, %p539
      %p541 = scmp.ne.s32.totalorder %s529, %s530
      %p542 = scmp.eq.s32.totalorder %s43, 1
      %p543 = por %p541, %p542
      %p545 = scmp.ne.s32.totalorder %s530, %s544
      %p546 = scmp.eq.s32.totalorder %s43, 0
      %p547 = por %p545, %p546
      %s549 = sadd.s32 %s548, 1
      %p552 = scmp.eq.s32.totalorder %s37, 1
      %p553 = scmp.ne.s32.totalorder %s548, %s550
      %p554 = scmp.eq.s32.totalorder %s37, 0
      %p555 = por %p553, %p554
      %p556 = scmp.ne.s32.totalorder %s548, %s550
      %p557 = scmp.eq.s32.totalorder %s42, 1
      %p558 = por %p556, %p557
      %p559 = scmp.ne.s32.totalorder %s550, %s551
      %p560 = scmp.eq.s32.totalorder %s42, 0
      %p561 = por %p559, %p560
      %p562 = scmp.ne.s32.totalorder %s550, %s551
      %p563 = scmp.eq.s32.totalorder %s43, 1
      %p564 = por %p562, %p563
      %p566 = scmp.ne.s32.totalorder %s551, %s565
      %p567 = scmp.eq.s32.totalorder %s43, 0
      %p568 = por %p566, %p567
      %s569 = ssub.s32 %s37, %s44
      %p570 = scmp.eq.s32.totalorder %s569, 0
      %s572 = sadd.s32 %s571, 1
      %s573 = scalar_select %p570, %s571, %s572
      %p576 = pneg %p570
      %p577 = scmp.eq.s32.totalorder %s37, 1
      %p578 = por %p576, %p577
      %p579 = scmp.ne.s32.totalorder %s571, %s574
      %p580 = scmp.eq.s32.totalorder %s37, 0
      %p581 = por %p579, %p580
      %p582 = scmp.ne.s32.totalorder %s571, %s574
      %p583 = scmp.eq.s32.totalorder %s42, 1
      %p584 = por %p582, %p583
      %p585 = scmp.ne.s32.totalorder %s574, %s575
      %p586 = scmp.eq.s32.totalorder %s42, 0
      %p587 = por %p585, %p586
      %p588 = scmp.ne.s32.totalorder %s574, %s575
      %p589 = scmp.eq.s32.totalorder %s43, 1
      %p590 = por %p588, %p589
      %p592 = scmp.ne.s32.totalorder %s575, %s591
      %p593 = scmp.eq.s32.totalorder %s43, 0
      %p594 = por %p592, %p593
      %p595 = scmp.le.s32.totalorder 1, %s37
      %p596 = scmp.lt.s32.totalorder %s37, 3
      %p597 = pnand %p595, %p596
      %p598 = pneg %p597
      // Predicated region
      $region9: #{seq2seq_forward.8} parent=5 // pred_check
        _
      $region10: #{seq2seq_forward.8} parent=5 // pred_check_branch
        %600 = sbr.rel (%p597) target = $region12
      $region11: #{seq2seq_forward.8} parent=5 // pred_region
        %s601 = ssub.s32 %s37, 1
        // Predicated region
        $region13: #{seq2seq_forward.8} parent=11 // pred_check
          %p602 = pneg %p162
        $region14: #{seq2seq_forward.8} parent=11 // pred_check_branch
          %604 = sbr.rel (%p602) target = $region16
        $region15: #{seq2seq_forward.8} parent=11 // pred_region
          _
        $region16: #{seq2seq_forward.8} parent=11 // pred_fallthru
          _
        // Predicated region
        $region17: #{seq2seq_forward.8} parent=11 // pred_check
          %p605 = pneg %p183
        $region18: #{seq2seq_forward.8} parent=11 // pred_check_branch
          %607 = sbr.rel (%p605) target = $region20
        $region19: #{seq2seq_forward.8} parent=11 // pred_region
          %609 = vsyncadd [#allocation3], 0
          %s611 = sshll.u32 %s5, 4
          %s612 = int_to_ptr.hbm [resolvable:$true] %s611
          %s613 = sshll.u32 [#allocation2], 4
          %s614 = int_to_ptr.vmem [resolvable:$true] %s613
          %616 = dma.hbm_to_vmem [thread:$0]  %s612, 16, %s614, [#allocation3]
        $region20: #{seq2seq_forward.8} parent=11 // pred_fallthru
          _
        // Predicated region
        $region21: #{seq2seq_forward.8} parent=11 // pred_check
          %p617 = pneg %p204
        $region22: #{seq2seq_forward.8} parent=11 // pred_check_branch
          %619 = sbr.rel (%p617) target = $region24
        $region23: #{seq2seq_forward.8} parent=11 // pred_region
          _
        $region24: #{seq2seq_forward.8} parent=11 // pred_fallthru
          _
        // Predicated region
        $region25: #{seq2seq_forward.8} parent=11 // pred_check
          %p620 = pneg %p225
        $region26: #{seq2seq_forward.8} parent=11 // pred_check_branch
          %622 = sbr.rel (%p620) target = $region28
        $region27: #{seq2seq_forward.8} parent=11 // pred_region
          %624 = vsyncadd [#allocation5], 0
          %s626 = sshll.u32 %s7, 4
          %s627 = int_to_ptr.hbm [resolvable:$true] %s626
          %s628 = sshll.u32 [#allocation4], 4
          %s629 = int_to_ptr.vmem [resolvable:$true] %s628
          %631 = dma.hbm_to_vmem [thread:$0]  %s627, 16, %s629, [#allocation5]
        $region28: #{seq2seq_forward.8} parent=11 // pred_fallthru
          _
        // Predicated region
        $region29: #{seq2seq_forward.8} parent=11 // pred_check
          %p632 = pneg %p246
        $region30: #{seq2seq_forward.8} parent=11 // pred_check_branch
          %634 = sbr.rel (%p632) target = $region32
        $region31: #{seq2seq_forward.8} parent=11 // pred_region
          %636 = vsyncadd [#allocation5], 0
          %s638 = sshll.u32 %s8, 4
          %s639 = int_to_ptr.hbm [resolvable:$true] %s638
          %s640 = sshll.u32 [#allocation6], 4
          %s641 = int_to_ptr.vmem [resolvable:$true] %s640
          %643 = dma.hbm_to_vmem [thread:$0]  %s639, 16, %s641, [#allocation5]
        $region32: #{seq2seq_forward.8} parent=11 // pred_fallthru
          _
        // Predicated region
        $region33: #{seq2seq_forward.8} parent=11 // pred_check
          %p644 = pneg %p267
        $region34: #{seq2seq_forward.8} parent=11 // pred_check_branch
          %646 = sbr.rel (%p644) target = $region36
        $region35: #{seq2seq_forward.8} parent=11 // pred_region
          %648 = vsyncadd [#allocation8], 0
          %s650 = sshll.u32 %s9, 4
          %s651 = int_to_ptr.hbm [resolvable:$true] %s650
          %s652 = sshll.u32 [#allocation7], 4
          %s653 = int_to_ptr.vmem [resolvable:$true] %s652
          %655 = dma.hbm_to_vmem [thread:$0]  %s651, 16, %s653, [#allocation8]
        $region36: #{seq2seq_forward.8} parent=11 // pred_fallthru
          _
        // Predicated region
        $region37: #{seq2seq_forward.8} parent=11 // pred_check
          %p656 = pneg %p288
        $region38: #{seq2seq_forward.8} parent=11 // pred_check_branch
          %658 = sbr.rel (%p656) target = $region40
        $region39: #{seq2seq_forward.8} parent=11 // pred_region
          _
        $region40: #{seq2seq_forward.8} parent=11 // pred_fallthru
          _
        // Predicated region
        $region41: #{seq2seq_forward.8} parent=11 // pred_check
          %p659 = pneg %p309
        $region42: #{seq2seq_forward.8} parent=11 // pred_check_branch
          %661 = sbr.rel (%p659) target = $region44
        $region43: #{seq2seq_forward.8} parent=11 // pred_region
          %663 = vsyncadd [#allocation8], 0
          %s665 = sshll.u32 %s11, 4
          %s666 = int_to_ptr.hbm [resolvable:$true] %s665
          %s667 = sshll.u32 [#allocation9], 4
          %s668 = int_to_ptr.vmem [resolvable:$true] %s667
          %670 = dma.hbm_to_vmem [thread:$0]  %s666, 16, %s668, [#allocation8]
        $region44: #{seq2seq_forward.8} parent=11 // pred_fallthru
          _
        // Predicated region
        $region45: #{seq2seq_forward.8} parent=11 // pred_check
          %p671 = pneg %p330
        $region46: #{seq2seq_forward.8} parent=11 // pred_check_branch
          %673 = sbr.rel (%p671) target = $region48
        $region47: #{seq2seq_forward.8} parent=11 // pred_region
          _
        $region48: #{seq2seq_forward.8} parent=11 // pred_fallthru
          _
        // Predicated region
        $region49: #{seq2seq_forward.8} parent=11 // pred_check
          %p674 = pneg %p351
        $region50: #{seq2seq_forward.8} parent=11 // pred_check_branch
          %676 = sbr.rel (%p674) target = $region52
        $region51: #{seq2seq_forward.8} parent=11 // pred_region
          %678 = vsyncadd [#allocation11], 0
          %s680 = sshll.u32 %s13, 4
          %s681 = int_to_ptr.hbm [resolvable:$true] %s680
          %s682 = sshll.u32 [#allocation10], 4
          %s683 = int_to_ptr.vmem [resolvable:$true] %s682
          %685 = dma.hbm_to_vmem [thread:$0]  %s681, 16, %s683, [#allocation11]
        $region52: #{seq2seq_forward.8} parent=11 // pred_fallthru
          _
        // Predicated region
        $region53: #{seq2seq_forward.8} parent=11 // pred_check
          %p686 = pneg %p372
        $region54: #{seq2seq_forward.8} parent=11 // pred_check_branch
          %688 = sbr.rel (%p686) target = $region56
        $region55: #{seq2seq_forward.8} parent=11 // pred_region
          _
        $region56: #{seq2seq_forward.8} parent=11 // pred_fallthru
          _
        // Predicated region
        $region57: #{seq2seq_forward.8} parent=11 // pred_check
          %p689 = pneg %p393
        $region58: #{seq2seq_forward.8} parent=11 // pred_check_branch
          %691 = sbr.rel (%p689) target = $region60
        $region59: #{seq2seq_forward.8} parent=11 // pred_region
          %693 = vsyncadd [#allocation11], 0
          %s695 = sshll.u32 %s15, 4
          %s696 = int_to_ptr.hbm [resolvable:$true] %s695
          %s697 = sshll.u32 [#allocation12], 4
          %s698 = int_to_ptr.vmem [resolvable:$true] %s697
          %700 = dma.hbm_to_vmem [thread:$0]  %s696, 16, %s698, [#allocation11]
        $region60: #{seq2seq_forward.8} parent=11 // pred_fallthru
          _
        // Predicated region
        $region61: #{seq2seq_forward.8} parent=11 // pred_check
          %p701 = pneg %p414
        $region62: #{seq2seq_forward.8} parent=11 // pred_check_branch
          %703 = sbr.rel (%p701) target = $region64
        $region63: #{seq2seq_forward.8} parent=11 // pred_region
          %705 = vsyncadd [#allocation14], 0
          %s707 = sshll.u32 %s16, 4
          %s708 = int_to_ptr.hbm [resolvable:$true] %s707
          %s709 = sshll.u32 [#allocation13], 4
          %s710 = int_to_ptr.vmem [resolvable:$true] %s709
          %712 = dma.hbm_to_vmem [thread:$0]  %s708, 16, %s710, [#allocation14]
        $region64: #{seq2seq_forward.8} parent=11 // pred_fallthru
          _
        // Predicated region
        $region65: #{seq2seq_forward.8} parent=11 // pred_check
          %p713 = pneg %p435
        $region66: #{seq2seq_forward.8} parent=11 // pred_check_branch
          %715 = sbr.rel (%p713) target = $region68
        $region67: #{seq2seq_forward.8} parent=11 // pred_region
          %717 = vsyncadd [#allocation14], 0
          %s719 = sshll.u32 %s17, 4
          %s720 = int_to_ptr.hbm [resolvable:$true] %s719
          %s721 = sshll.u32 [#allocation15], 4
          %s722 = int_to_ptr.vmem [resolvable:$true] %s721
          %724 = dma.hbm_to_vmem [thread:$0]  %s720, 16, %s722, [#allocation14]
        $region68: #{seq2seq_forward.8} parent=11 // pred_fallthru
          _
        // Predicated region
        $region69: #{seq2seq_forward.8} parent=11 // pred_check
          %p725 = pneg %p456
        $region70: #{seq2seq_forward.8} parent=11 // pred_check_branch
          %727 = sbr.rel (%p725) target = $region72
        $region71: #{seq2seq_forward.8} parent=11 // pred_region
          _
        $region72: #{seq2seq_forward.8} parent=11 // pred_fallthru
          _
        // Predicated region
        $region73: #{seq2seq_forward.8} parent=11 // pred_check
          %p728 = pneg %p477
        $region74: #{seq2seq_forward.8} parent=11 // pred_check_branch
          %730 = sbr.rel (%p728) target = $region76
        $region75: #{seq2seq_forward.8} parent=11 // pred_region
          %732 = vsyncadd [#allocation17], 0
          %s734 = sshll.u32 %s19, 4
          %s735 = int_to_ptr.hbm [resolvable:$true] %s734
          %s736 = sshll.u32 [#allocation16], 4
          %s737 = int_to_ptr.vmem [resolvable:$true] %s736
          %739 = dma.hbm_to_vmem [thread:$0]  %s735, 16, %s737, [#allocation17]
        $region76: #{seq2seq_forward.8} parent=11 // pred_fallthru
          _
        // Predicated region
        $region77: #{seq2seq_forward.8} parent=11 // pred_check
          %p740 = pneg %p498
        $region78: #{seq2seq_forward.8} parent=11 // pred_check_branch
          %742 = sbr.rel (%p740) target = $region80
        $region79: #{seq2seq_forward.8} parent=11 // pred_region
          _
        $region80: #{seq2seq_forward.8} parent=11 // pred_fallthru
          _
        // Predicated region
        $region81: #{seq2seq_forward.8} parent=11 // pred_check
          %p743 = pneg %p519
        $region82: #{seq2seq_forward.8} parent=11 // pred_check_branch
          %745 = sbr.rel (%p743) target = $region84
        $region83: #{seq2seq_forward.8} parent=11 // pred_region
          %747 = vsyncadd [#allocation17], 0
          %s749 = sshll.u32 %s21, 4
          %s750 = int_to_ptr.hbm [resolvable:$true] %s749
          %s751 = sshll.u32 [#allocation18], 4
          %s752 = int_to_ptr.vmem [resolvable:$true] %s751
          %754 = dma.hbm_to_vmem [thread:$0]  %s750, 16, %s752, [#allocation17]
        $region84: #{seq2seq_forward.8} parent=11 // pred_fallthru
          _
        // Predicated region
        $region85: #{seq2seq_forward.8} parent=11 // pred_check
          %p755 = pneg %p540
        $region86: #{seq2seq_forward.8} parent=11 // pred_check_branch
          %757 = sbr.rel (%p755) target = $region88
        $region87: #{seq2seq_forward.8} parent=11 // pred_region
          %759 = vsyncadd [#allocation20], 0
          %s761 = sshll.u32 %s22, 4
          %s762 = int_to_ptr.hbm [resolvable:$true] %s761
          %s763 = sshll.u32 [#allocation19], 4
          %s764 = int_to_ptr.vmem [resolvable:$true] %s763
          %766 = dma.hbm_to_vmem [thread:$0]  %s762, 16, %s764, [#allocation20]
        $region88: #{seq2seq_forward.8} parent=11 // pred_fallthru
          _
        // Predicated region
        $region89: #{seq2seq_forward.8} parent=11 // pred_check
          %p767 = pneg %p561
        $region90: #{seq2seq_forward.8} parent=11 // pred_check_branch
          %769 = sbr.rel (%p767) target = $region92
        $region91: #{seq2seq_forward.8} parent=11 // pred_region
          %771 = vsyncadd [#allocation20], 0
          %s773 = sshll.u32 %s23, 4
          %s774 = int_to_ptr.hbm [resolvable:$true] %s773
          %s775 = sshll.u32 [#allocation21], 4
          %s776 = int_to_ptr.vmem [resolvable:$true] %s775
          %778 = dma.hbm_to_vmem [thread:$0]  %s774, 16, %s776, [#allocation20]
        $region92: #{seq2seq_forward.8} parent=11 // pred_fallthru
          _
      $region12: #{seq2seq_forward.8} parent=5 // pred_fallthru
        _
      %p779 = scmp.lt.s32.totalorder %s37, 2
      // Predicated region
      $region93: #{seq2seq_forward.8} parent=5 // pred_check
        %p780 = pneg %p779
      $region94: #{seq2seq_forward.8} parent=5 // pred_check_branch
        %782 = sbr.rel (%p780) target = $region96
      $region95: #{seq2seq_forward.8} parent=5 // pred_region
        // Predicated region
        $region97: #{seq2seq_forward.8} parent=95 // pred_check
          %p783 = pneg %p57
        $region98: #{seq2seq_forward.8} parent=95 // pred_check_branch
          %785 = sbr.rel (%p783) target = $region100
        $region99: #{seq2seq_forward.8} parent=95 // pred_region
          %p786 = scmp.lt.s32.totalorder %s37, 1
          %s787 = scalar_select %p786, %s37, 1
          %s788 = smul.addr %s787, 4
          %s789 = scalar_lea.vmem %s0, %s788
        $region100: #{seq2seq_forward.8} parent=95 // pred_fallthru
          _
        // Predicated region
        $region101: #{seq2seq_forward.8} parent=95 // pred_check
          %p790 = pneg %p83
        $region102: #{seq2seq_forward.8} parent=95 // pred_check_branch
          %792 = sbr.rel (%p790) target = $region104
        $region103: #{seq2seq_forward.8} parent=95 // pred_region
          %p793 = scmp.lt.s32.totalorder %s37, 1
          %s794 = scalar_select %p793, %s37, 1
          %s795 = smul.addr %s794, 4
          %s796 = scalar_lea.vmem %s1, %s795
        $region104: #{seq2seq_forward.8} parent=95 // pred_fallthru
          _
        // Predicated region
        $region105: #{seq2seq_forward.8} parent=95 // pred_check
          %p797 = pneg %p109
        $region106: #{seq2seq_forward.8} parent=95 // pred_check_branch
          %799 = sbr.rel (%p797) target = $region108
        $region107: #{seq2seq_forward.8} parent=95 // pred_region
          %p800 = scmp.lt.s32.totalorder %s37, 1
          %s801 = scalar_select %p800, %s37, 1
          %s802 = smul.addr %s801, 8
          %s803 = scalar_lea.vmem %s2, %s802
        $region108: #{seq2seq_forward.8} parent=95 // pred_fallthru
          _
        // Predicated region
        $region109: #{seq2seq_forward.8} parent=95 // pred_check
          %p804 = pneg %p135
        $region110: #{seq2seq_forward.8} parent=95 // pred_check_branch
          %806 = sbr.rel (%p804) target = $region112
        $region111: #{seq2seq_forward.8} parent=95 // pred_region
          %p807 = scmp.lt.s32.totalorder %s37, 1
          %s808 = scalar_select %p807, %s37, 1
          %s809 = smul.addr %s808, 8
          %s810 = scalar_lea.vmem %s3, %s809
        $region112: #{seq2seq_forward.8} parent=95 // pred_fallthru
          _
      $region96: #{seq2seq_forward.8} parent=5 // pred_fallthru
        _
      %p811 = scmp.le.s32.totalorder 1, %s37
      %p812 = scmp.lt.s32.totalorder %s37, 3
      %p813 = pnand %p811, %p812
      %p814 = pneg %p813
      // Predicated region
      $region113: #{seq2seq_forward.8} parent=5 // pred_check
        _
      $region114: #{seq2seq_forward.8} parent=5 // pred_check_branch
        %816 = sbr.rel (%p813) target = $region116
      $region115: #{seq2seq_forward.8} parent=5 // pred_region
        %s817 = ssub.s32 %s37, 1
        // Predicated region
        $region117: #{seq2seq_forward.8} parent=115 // pred_check
          %p818 = pneg %p183
        $region118: #{seq2seq_forward.8} parent=115 // pred_check_branch
          %820 = sbr.rel (%p818) target = $region120
        $region119: #{seq2seq_forward.8} parent=115 // pred_region
          %822 = dma.done [#allocation3], 16
        $region120: #{seq2seq_forward.8} parent=115 // pred_fallthru
          _
        // Predicated region
        $region121: #{seq2seq_forward.8} parent=115 // pred_check
          %p823 = pneg %p225
        $region122: #{seq2seq_forward.8} parent=115 // pred_check_branch
          %825 = sbr.rel (%p823) target = $region124
        $region123: #{seq2seq_forward.8} parent=115 // pred_region
          %827 = dma.done [#allocation5], 16
        $region124: #{seq2seq_forward.8} parent=115 // pred_fallthru
          _
        // Predicated region
        $region125: #{seq2seq_forward.8} parent=115 // pred_check
          %p828 = pneg %p246
        $region126: #{seq2seq_forward.8} parent=115 // pred_check_branch
          %830 = sbr.rel (%p828) target = $region128
        $region127: #{seq2seq_forward.8} parent=115 // pred_region
          %832 = dma.done [#allocation5], 16
        $region128: #{seq2seq_forward.8} parent=115 // pred_fallthru
          _
        // Predicated region
        $region129: #{seq2seq_forward.8} parent=115 // pred_check
          %p833 = pneg %p267
        $region130: #{seq2seq_forward.8} parent=115 // pred_check_branch
          %835 = sbr.rel (%p833) target = $region132
        $region131: #{seq2seq_forward.8} parent=115 // pred_region
          %837 = dma.done [#allocation8], 16
        $region132: #{seq2seq_forward.8} parent=115 // pred_fallthru
          _
        // Predicated region
        $region133: #{seq2seq_forward.8} parent=115 // pred_check
          %p838 = pneg %p309
        $region134: #{seq2seq_forward.8} parent=115 // pred_check_branch
          %840 = sbr.rel (%p838) target = $region136
        $region135: #{seq2seq_forward.8} parent=115 // pred_region
          %842 = dma.done [#allocation8], 16
        $region136: #{seq2seq_forward.8} parent=115 // pred_fallthru
          _
        // Predicated region
        $region137: #{seq2seq_forward.8} parent=115 // pred_check
          %p843 = pneg %p351
        $region138: #{seq2seq_forward.8} parent=115 // pred_check_branch
          %845 = sbr.rel (%p843) target = $region140
        $region139: #{seq2seq_forward.8} parent=115 // pred_region
          %847 = dma.done [#allocation11], 16
        $region140: #{seq2seq_forward.8} parent=115 // pred_fallthru
          _
        // Predicated region
        $region141: #{seq2seq_forward.8} parent=115 // pred_check
          %p848 = pneg %p393
        $region142: #{seq2seq_forward.8} parent=115 // pred_check_branch
          %850 = sbr.rel (%p848) target = $region144
        $region143: #{seq2seq_forward.8} parent=115 // pred_region
          %852 = dma.done [#allocation11], 16
        $region144: #{seq2seq_forward.8} parent=115 // pred_fallthru
          _
        // Predicated region
        $region145: #{seq2seq_forward.8} parent=115 // pred_check
          %p853 = pneg %p414
        $region146: #{seq2seq_forward.8} parent=115 // pred_check_branch
          %855 = sbr.rel (%p853) target = $region148
        $region147: #{seq2seq_forward.8} parent=115 // pred_region
          %857 = dma.done [#allocation14], 16
        $region148: #{seq2seq_forward.8} parent=115 // pred_fallthru
          _
        // Predicated region
        $region149: #{seq2seq_forward.8} parent=115 // pred_check
          %p858 = pneg %p435
        $region150: #{seq2seq_forward.8} parent=115 // pred_check_branch
          %860 = sbr.rel (%p858) target = $region152
        $region151: #{seq2seq_forward.8} parent=115 // pred_region
          %862 = dma.done [#allocation14], 16
        $region152: #{seq2seq_forward.8} parent=115 // pred_fallthru
          _
        // Predicated region
        $region153: #{seq2seq_forward.8} parent=115 // pred_check
          %p863 = pneg %p477
        $region154: #{seq2seq_forward.8} parent=115 // pred_check_branch
          %865 = sbr.rel (%p863) target = $region156
        $region155: #{seq2seq_forward.8} parent=115 // pred_region
          %867 = dma.done [#allocation17], 16
        $region156: #{seq2seq_forward.8} parent=115 // pred_fallthru
          _
        // Predicated region
        $region157: #{seq2seq_forward.8} parent=115 // pred_check
          %p868 = pneg %p519
        $region158: #{seq2seq_forward.8} parent=115 // pred_check_branch
          %870 = sbr.rel (%p868) target = $region160
        $region159: #{seq2seq_forward.8} parent=115 // pred_region
          %872 = dma.done [#allocation17], 16
        $region160: #{seq2seq_forward.8} parent=115 // pred_fallthru
          _
        // Predicated region
        $region161: #{seq2seq_forward.8} parent=115 // pred_check
          %p873 = pneg %p540
        $region162: #{seq2seq_forward.8} parent=115 // pred_check_branch
          %875 = sbr.rel (%p873) target = $region164
        $region163: #{seq2seq_forward.8} parent=115 // pred_region
          %877 = dma.done [#allocation20], 16
        $region164: #{seq2seq_forward.8} parent=115 // pred_fallthru
          _
        // Predicated region
        $region165: #{seq2seq_forward.8} parent=115 // pred_check
          %p878 = pneg %p561
        $region166: #{seq2seq_forward.8} parent=115 // pred_check_branch
          %880 = sbr.rel (%p878) target = $region168
        $region167: #{seq2seq_forward.8} parent=115 // pred_region
          %882 = dma.done [#allocation20], 16
        $region168: #{seq2seq_forward.8} parent=115 // pred_fallthru
          _
        %p883 = scmp.lt.s32.totalorder %s42, 1
        %s884 = scalar_select %p883, %s42, 1
        %s885 = smul.addr %s884, 4
        %s886 = scalar_lea.vmem %s0, %s885
        %p887 = pneg %p63
        %p888 = pneg %p60
        %p889 = scmp.lt.s32.totalorder %s42, 1
        %s890 = scalar_select %p889, %s42, 1
        %s891 = smul.addr %s890, 4
        %s892 = scalar_lea.vmem %s1, %s891
        %p893 = pneg %p89
        %p894 = pneg %p86
        %p895 = scmp.lt.s32.totalorder %s42, 1
        %s896 = scalar_select %p895, %s42, 1
        %s897 = smul.addr %s896, 8
        %s898 = scalar_lea.vmem %s2, %s897
        %p899 = pneg %p115
        %p900 = pneg %p112
        %p901 = scmp.lt.s32.totalorder %s42, 1
        %s902 = scalar_select %p901, %s42, 1
        %s903 = smul.addr %s902, 8
        %s904 = scalar_lea.vmem %s3, %s903
        %p905 = pneg %p141
        %p906 = pneg %p138
        %p907 = pneg %p162
        %p908 = pneg %p159
        %p909 = pneg %p183
        %p910 = pneg %p180
        %p911 = pneg %p204
        %p912 = pneg %p201
        %p913 = pneg %p225
        %p914 = pneg %p222
        %p915 = pneg %p246
        %p916 = pneg %p243
        %p917 = pneg %p267
        %p918 = pneg %p264
        %p919 = pneg %p288
        %p920 = pneg %p285
        %p921 = pneg %p309
        %p922 = pneg %p306
        %p923 = pneg %p330
        %p924 = pneg %p327
        %p925 = pneg %p351
        %p926 = pneg %p348
        %p927 = pneg %p372
        %p928 = pneg %p369
        %p929 = pneg %p393
        %p930 = pneg %p390
        %p931 = pneg %p414
        %p932 = pneg %p411
        %p933 = pneg %p435
        %p934 = pneg %p432
        %p935 = pneg %p456
        %p936 = pneg %p453
        %p937 = pneg %p477
        %p938 = pneg %p474
        %p939 = pneg %p498
        %p940 = pneg %p495
        %p941 = pneg %p519
        %p942 = pneg %p516
        %p943 = pneg %p540
        %p944 = pneg %p537
        %p945 = pneg %p561
        %p946 = pneg %p558
        %p947 = pneg %p587
        %p948 = pneg %p584
        %p949 = scmp.lt.s32.totalorder %s42, 1
        %s950 = scalar_select %p949, %s42, 1
        %s951 = smul.addr %s950, 4
        %s952 = scalar_lea.vmem %s24, %s951
        %p953 = scmp.lt.s32.totalorder %s42, 1
        %s954 = scalar_select %p953, %s42, 1
        %s955 = smul.addr %s954, 4
        %s956 = scalar_lea.vmem %s0, %s955
        %p957 = scmp.lt.s32.totalorder %s42, 1
        %s958 = scalar_select %p957, %s42, 1
        %s959 = smul.addr %s958, 4
        %s960 = scalar_lea.vmem %s1, %s959
        %p961 = scmp.lt.s32.totalorder %s42, 1
        %s962 = scalar_select %p961, %s42, 1
        %s963 = smul.addr %s962, 8
        %s964 = scalar_lea.vmem %s2, %s963
        %p965 = scmp.lt.s32.totalorder %s42, 1
        %s966 = scalar_select %p965, %s42, 1
        %s967 = smul.addr %s966, 8
        %s968 = scalar_lea.vmem %s3, %s967
        %p969 = scmp.lt.s32.totalorder %s42, 1
        %s970 = scalar_select %p969, %s42, 1
        %s971 = smul.addr %s970, 4
        %s972 = scalar_lea.vmem %s24, %s971
        %v974 = vld [vmem:[%s956] sm:$0xf]
        %v975 = vld [vmem:[%s960] sm:$0xf]
        %v976 = vld [vmem:[%s4] sm:$0xf]
        %v977 = vld [vmem:[%s4 + $0x4] sm:$0xf]
        %v978 = vld [vmem:[%s4 + $0x8] sm:$0xf]
        %v979 = vld [vmem:[%s4 + $0xc] sm:$0xf]
        %v980 = vld [vmem:[#allocation2] sm:$0x1]
        %v982 = vperm.slane %v980, 0
        %v988 = vunpack.c.l.b16 %v976
        %v989 = vunpack.c.l.b16 %v977
        %v990 = vunpack.c.l.b16 %v978
        %v991 = vunpack.c.l.b16 %v979
        %v992 = vpack.c.b16 %v989, %v988
        %v993 = vpack.c.b16 %v991, %v990
        %vm996 = vcmask 261120
        %v998 = vsel %vm996, %v974, 0
        %1000 = vmatpush.bf16.msra.mxu0 0
        %1001 = vmatpush.bf16.msra.mxu0 0
        %1002 = vmatpush.bf16.msra.mxu0 0
        %1003 = vmatpush.bf16.msra.mxu0 0
        %1004 = vmatpush.bf16.msra.mxu0 0
        %1005 = vmatpush.bf16.msra.mxu0 0
        %1006 = vmatpush.bf16.msra.mxu0 %v993
        %1007 = vmatpush.bf16.msra.mxu0 %v992
        %1008 = vmatmul.bf16.gmra.mxu0 %v998
        %v1009 = vpop.f32.mrf.mxu0
        %v1010 = vadd.f32 %v982, %v1009
        %v1011 = vpop.f32.mrf.mxu0
        %1012 = vdwg.mxu0
        %v1013 = vld [vmem:[%s964] sm:$0xff]
        %v1014 = vpack.c.bf16 %v1010, %v1010
        %v1016 = vunpack.c.l.b16 %v1014
        %v1017 = vpack.c.b16 %v1016, %v1016
        %1018 = vrot.lane.b32.xlu0 %v1017, 96
        %v1019 = vpop.permute.xlu0 %1018
        %vm1020 = vcmask 64512
        %v1022 = vsel %vm1020, %v1014, 0
        %v1025 = vsel %vm1020, %v1019, 0
        %1027 = vmatpush.bf16.xpose.msra.mxu0 0
        %1028 = vmatpush.bf16.xpose.msra.mxu0 0
        %1029 = vmatpush.bf16.xpose.msra.mxu0 0
        %1030 = vmatpush.bf16.xpose.msra.mxu0 0
        %1031 = vmatpush.bf16.xpose.msra.mxu0 0
        %1032 = vmatpush.bf16.xpose.msra.mxu0 0
        %1033 = vmatpush.bf16.xpose.msra.mxu0 0
        %1034 = vmatpush.bf16.xpose.msra.mxu0 %v1025
        %1035 = vmatmul.bf16.gmra.mxu0 %v1022
        %v1036 = vpop.f32.mrf.mxu0
        %v1037 = vadd.f32 0.0, %v1036
        %v1038 = vpop.f32.mrf.mxu0
        %1039 = vdwg.mxu0
        %v1040 = vmul.f32 %v1037, 0.35355338
        %v1041 = vadd.f32 %v1040, %v1013
        %v1042 = vsel %vm1020, %v1041, -inf
        %1043 = vmax.xlane.f32.xlu0 %v1042
        %v1044 = vpop.xlane.xlu0 %1043
        %v1045 = vsub.f32 %v1041, %v1044
        %v1046 = vmul.f32 %v1045, 1.442695
        %v1047 = vpow.pop %v1046
        %v1048 = vsel %vm1020, %v1047, 0.0
        %1049 = vadd.xlane.f32.xlu0 %v1048
        %v1050 = vpop.xlane.xlu0 %1049
        %v1051 = vrcp.pop %v1050
        %v1052 = vmul.f32 %v1047, %v1051
        %v1053 = vpack.c.bf16 %v1052, %v1052
        %1054 = vrot.lane.b32.xlu0 %v1017, 64
        %v1055 = vpop.permute.xlu0 %1054
        %v1057 = vsel %vm1020, %v1053, 0
        %vm1059 = vcmask 1043456
        %v1061 = vsel %vm1059, %v1055, 0
        %1063 = vmatpush.bf16.msra.mxu0 0
        %1064 = vmatpush.bf16.msra.mxu0 0
        %1065 = vmatpush.bf16.msra.mxu0 0
        %1066 = vmatpush.bf16.msra.mxu0 0
        %1067 = vmatpush.bf16.msra.mxu0 0
        %1068 = vmatpush.bf16.msra.mxu0 0
        %1069 = vmatpush.bf16.msra.mxu0 0
        %1070 = vmatpush.bf16.msra.mxu0 %v1061
        %1071 = vmatmul.bf16.gmra.mxu0 %v1057
        %v1072 = vpop.f32.mrf.mxu0
        %v1073 = vadd.f32 0.0, %v1072
        %v1074 = vpop.f32.mrf.mxu0
        %1075 = vdwg.mxu0
        %v1076 = vpack.c.bf16 %v1073, %v1073
        %v1077 = vld [vmem:[%s6] sm:$0xf]
        %1078 = vrot.lane.b32.xlu0 %v1017, 120
        %v1079 = vpop.permute.xlu0 %1078
        %1080 = vrot.lane.b32.xlu0 %v1017, 88
        %v1081 = vpop.permute.xlu0 %1080
        %v1083 = vsel %vm1020, %v1079, 0
        %v1086 = vsel %vm1020, %v1081, 0
        %1088 = vmatpush.bf16.xpose.msra.mxu0 0
        %1089 = vmatpush.bf16.xpose.msra.mxu0 0
        %1090 = vmatpush.bf16.xpose.msra.mxu0 0
        %1091 = vmatpush.bf16.xpose.msra.mxu0 0
        %1092 = vmatpush.bf16.xpose.msra.mxu0 0
        %1093 = vmatpush.bf16.xpose.msra.mxu0 0
        %1094 = vmatpush.bf16.xpose.msra.mxu0 0
        %1095 = vmatpush.bf16.xpose.msra.mxu0 %v1086
        %1096 = vmatmul.bf16.gmra.mxu0 %v1083
        %v1097 = vpop.f32.mrf.mxu0
        %v1098 = vadd.f32 0.0, %v1097
        %v1099 = vpop.f32.mrf.mxu0
        %1100 = vdwg.mxu0
        %v1101 = vmul.f32 %v1098, 0.35355338
        %v1102 = vadd.f32 %v1101, %v1013
        %v1103 = vsel %vm1020, %v1102, -inf
        %1104 = vmax.xlane.f32.xlu0 %v1103
        %v1105 = vpop.xlane.xlu0 %1104
        %v1106 = vsub.f32 %v1102, %v1105
        %v1107 = vmul.f32 %v1106, 1.442695
        %v1108 = vpow.pop %v1107
        %v1109 = vsel %vm1020, %v1108, 0.0
        %1110 = vadd.xlane.f32.xlu0 %v1109
        %v1111 = vpop.xlane.xlu0 %1110
        %v1112 = vrcp.pop %v1111
        %v1113 = vmul.f32 %v1108, %v1112
        %v1114 = vpack.c.bf16 %v1113, %v1113
        %1115 = vrot.lane.b32.xlu0 %v1017, 56
        %v1116 = vpop.permute.xlu0 %1115
        %v1118 = vsel %vm1020, %v1114, 0
        %v1121 = vsel %vm1059, %v1116, 0
        %1123 = vmatpush.bf16.msra.mxu0 0
        %1124 = vmatpush.bf16.msra.mxu0 0
        %1125 = vmatpush.bf16.msra.mxu0 0
        %1126 = vmatpush.bf16.msra.mxu0 0
        %1127 = vmatpush.bf16.msra.mxu0 0
        %1128 = vmatpush.bf16.msra.mxu0 0
        %1129 = vmatpush.bf16.msra.mxu0 0
        %1130 = vmatpush.bf16.msra.mxu0 %v1121
        %1131 = vmatmul.bf16.gmra.mxu0 %v1118
        %v1132 = vpop.f32.mrf.mxu0
        %v1133 = vadd.f32 0.0, %v1132
        %v1134 = vpop.f32.mrf.mxu0
        %1135 = vdwg.mxu0
        %v1136 = vpack.c.bf16 %v1133, %v1133
        %v1137 = vld [vmem:[%s6 + $0x4] sm:$0xf]
        %v1139 = vsel %vm1020, %v1136, 0
        %v1142 = vsel %vm1059, %v1137, 0
        %1144 = vmatpush.bf16.msra.mxu0 0
        %1145 = vmatpush.bf16.msra.mxu0 0
        %1146 = vmatpush.bf16.msra.mxu0 0
        %1147 = vmatpush.bf16.msra.mxu0 0
        %1148 = vmatpush.bf16.msra.mxu0 0
        %1149 = vmatpush.bf16.msra.mxu0 0
        %1150 = vmatpush.bf16.msra.mxu0 0
        %1151 = vmatpush.bf16.msra.mxu0 %v1142
        %1152 = vmatmul.bf16.gmra.mxu0 %v1139
        %v1153 = vpop.f32.mrf.mxu0
        %v1154 = vadd.f32 0.0, %v1153
        %v1155 = vpop.f32.mrf.mxu0
        %1156 = vdwg.mxu0
        %v1158 = vsel %vm1020, %v1076, 0
        %v1161 = vsel %vm1059, %v1077, 0
        %1163 = vmatpush.bf16.msra.mxu0 0
        %1164 = vmatpush.bf16.msra.mxu0 0
        %1165 = vmatpush.bf16.msra.mxu0 0
        %1166 = vmatpush.bf16.msra.mxu0 0
        %1167 = vmatpush.bf16.msra.mxu0 0
        %1168 = vmatpush.bf16.msra.mxu0 0
        %1169 = vmatpush.bf16.msra.mxu0 0
        %1170 = vmatpush.bf16.msra.mxu0 %v1161
        %1171 = vmatmul.bf16.gmra.mxu0 %v1158
        %v1172 = vpop.f32.mrf.mxu0
        %v1173 = vadd.f32 %v1154, %v1172
        %v1174 = vpop.f32.mrf.mxu0
        %1175 = vdwg.mxu0
        %1176 = vrot.lane.b32.xlu0 %v1017, 112
        %v1177 = vpop.permute.xlu0 %1176
        %1178 = vrot.lane.b32.xlu0 %v1017, 80
        %v1179 = vpop.permute.xlu0 %1178
        %v1181 = vsel %vm1020, %v1177, 0
        %v1184 = vsel %vm1020, %v1179, 0
        %1186 = vmatpush.bf16.xpose.msra.mxu0 0
        %1187 = vmatpush.bf16.xpose.msra.mxu0 0
        %1188 = vmatpush.bf16.xpose.msra.mxu0 0
        %1189 = vmatpush.bf16.xpose.msra.mxu0 0
        %1190 = vmatpush.bf16.xpose.msra.mxu0 0
        %1191 = vmatpush.bf16.xpose.msra.mxu0 0
        %1192 = vmatpush.bf16.xpose.msra.mxu0 0
        %1193 = vmatpush.bf16.xpose.msra.mxu0 %v1184
        %1194 = vmatmul.bf16.gmra.mxu0 %v1181
        %v1195 = vpop.f32.mrf.mxu0
        %v1196 = vadd.f32 0.0, %v1195
        %v1197 = vpop.f32.mrf.mxu0
        %1198 = vdwg.mxu0
        %v1199 = vmul.f32 %v1196, 0.35355338
        %v1200 = vadd.f32 %v1199, %v1013
        %v1201 = vsel %vm1020, %v1200, -inf
        %1202 = vmax.xlane.f32.xlu0 %v1201
        %v1203 = vpop.xlane.xlu0 %1202
        %v1204 = vsub.f32 %v1200, %v1203
        %v1205 = vmul.f32 %v1204, 1.442695
        %v1206 = vpow.pop %v1205
        %v1207 = vsel %vm1020, %v1206, 0.0
        %1208 = vadd.xlane.f32.xlu0 %v1207
        %v1209 = vpop.xlane.xlu0 %1208
        %v1210 = vrcp.pop %v1209
        %v1211 = vmul.f32 %v1206, %v1210
        %v1212 = vpack.c.bf16 %v1211, %v1211
        %1213 = vrot.lane.b32.xlu0 %v1017, 48
        %v1214 = vpop.permute.xlu0 %1213
        %v1216 = vsel %vm1020, %v1212, 0
        %v1219 = vsel %vm1059, %v1214, 0
        %1221 = vmatpush.bf16.msra.mxu0 0
        %1222 = vmatpush.bf16.msra.mxu0 0
        %1223 = vmatpush.bf16.msra.mxu0 0
        %1224 = vmatpush.bf16.msra.mxu0 0
        %1225 = vmatpush.bf16.msra.mxu0 0
        %1226 = vmatpush.bf16.msra.mxu0 0
        %1227 = vmatpush.bf16.msra.mxu0 0
        %1228 = vmatpush.bf16.msra.mxu0 %v1219
        %1229 = vmatmul.bf16.gmra.mxu0 %v1216
        %v1230 = vpop.f32.mrf.mxu0
        %v1231 = vadd.f32 0.0, %v1230
        %v1232 = vpop.f32.mrf.mxu0
        %1233 = vdwg.mxu0
        %v1234 = vpack.c.bf16 %v1231, %v1231
        %v1235 = vld [vmem:[%s6 + $0x8] sm:$0xf]
        %v1237 = vsel %vm1020, %v1234, 0
        %v1240 = vsel %vm1059, %v1235, 0
        %1242 = vmatpush.bf16.msra.mxu0 0
        %1243 = vmatpush.bf16.msra.mxu0 0
        %1244 = vmatpush.bf16.msra.mxu0 0
        %1245 = vmatpush.bf16.msra.mxu0 0
        %1246 = vmatpush.bf16.msra.mxu0 0
        %1247 = vmatpush.bf16.msra.mxu0 0
        %1248 = vmatpush.bf16.msra.mxu0 0
        %1249 = vmatpush.bf16.msra.mxu0 %v1240
        %1250 = vmatmul.bf16.gmra.mxu0 %v1237
        %v1251 = vpop.f32.mrf.mxu0
        %v1252 = vadd.f32 0.0, %v1251
        %v1253 = vpop.f32.mrf.mxu0
        %1254 = vdwg.mxu0
        %v1255 = vadd.f32 %v1173, %v1252
        %1256 = vrot.lane.b32.xlu0 %v1017, 104
        %v1257 = vpop.permute.xlu0 %1256
        %1258 = vrot.lane.b32.xlu0 %v1017, 72
        %v1259 = vpop.permute.xlu0 %1258
        %v1261 = vsel %vm1020, %v1257, 0
        %v1264 = vsel %vm1020, %v1259, 0
        %1266 = vmatpush.bf16.xpose.msra.mxu0 0
        %1267 = vmatpush.bf16.xpose.msra.mxu0 0
        %1268 = vmatpush.bf16.xpose.msra.mxu0 0
        %1269 = vmatpush.bf16.xpose.msra.mxu0 0
        %1270 = vmatpush.bf16.xpose.msra.mxu0 0
        %1271 = vmatpush.bf16.xpose.msra.mxu0 0
        %1272 = vmatpush.bf16.xpose.msra.mxu0 0
        %1273 = vmatpush.bf16.xpose.msra.mxu0 %v1264
        %1274 = vmatmul.bf16.gmra.mxu0 %v1261
        %v1275 = vpop.f32.mrf.mxu0
        %v1276 = vadd.f32 0.0, %v1275
        %v1277 = vpop.f32.mrf.mxu0
        %1278 = vdwg.mxu0
        %v1279 = vmul.f32 %v1276, 0.35355338
        %v1280 = vadd.f32 %v1279, %v1013
        %v1281 = vsel %vm1020, %v1280, -inf
        %1282 = vmax.xlane.f32.xlu0 %v1281
        %v1283 = vpop.xlane.xlu0 %1282
        %v1284 = vsub.f32 %v1280, %v1283
        %v1285 = vmul.f32 %v1284, 1.442695
        %v1286 = vpow.pop %v1285
        %v1287 = vsel %vm1020, %v1286, 0.0
        %1288 = vadd.xlane.f32.xlu0 %v1287
        %v1289 = vpop.xlane.xlu0 %1288
        %v1290 = vrcp.pop %v1289
        %v1291 = vmul.f32 %v1286, %v1290
        %v1292 = vpack.c.bf16 %v1291, %v1291
        %1293 = vrot.lane.b32.xlu0 %v1017, 40
        %v1294 = vpop.permute.xlu0 %1293
        %v1296 = vsel %vm1020, %v1292, 0
        %v1299 = vsel %vm1059, %v1294, 0
        %1301 = vmatpush.bf16.msra.mxu0 0
        %1302 = vmatpush.bf16.msra.mxu0 0
        %1303 = vmatpush.bf16.msra.mxu0 0
        %1304 = vmatpush.bf16.msra.mxu0 0
        %1305 = vmatpush.bf16.msra.mxu0 0
        %1306 = vmatpush.bf16.msra.mxu0 0
        %1307 = vmatpush.bf16.msra.mxu0 0
        %1308 = vmatpush.bf16.msra.mxu0 %v1299
        %1309 = vmatmul.bf16.gmra.mxu0 %v1296
        %v1310 = vpop.f32.mrf.mxu0
        %v1311 = vadd.f32 0.0, %v1310
        %v1312 = vpop.f32.mrf.mxu0
        %1313 = vdwg.mxu0
        %v1314 = vpack.c.bf16 %v1311, %v1311
        %v1315 = vld [vmem:[%s6 + $0xc] sm:$0xf]
        %v1317 = vsel %vm1020, %v1314, 0
        %v1320 = vsel %vm1059, %v1315, 0
        %1322 = vmatpush.bf16.msra.mxu0 0
        %1323 = vmatpush.bf16.msra.mxu0 0
        %1324 = vmatpush.bf16.msra.mxu0 0
        %1325 = vmatpush.bf16.msra.mxu0 0
        %1326 = vmatpush.bf16.msra.mxu0 0
        %1327 = vmatpush.bf16.msra.mxu0 0
        %1328 = vmatpush.bf16.msra.mxu0 0
        %1329 = vmatpush.bf16.msra.mxu0 %v1320
        %1330 = vmatmul.bf16.gmra.mxu0 %v1317
        %v1331 = vpop.f32.mrf.mxu0
        %v1332 = vadd.f32 0.0, %v1331
        %v1333 = vpop.f32.mrf.mxu0
        %1334 = vdwg.mxu0
        %v1335 = vadd.f32 %v1255, %v1332
        %v1336 = vld [vmem:[#allocation4] sm:$0x1]
        %v1338 = vperm.slane %v1336, 0
        %v1340 = vadd.f32 %v1335, %v1338
        %v1341 = vunpack.c.l.bf16 %v974
        %v1342 = vadd.f32 %v1340, %v1341
        %v1343 = vld [vmem:[#allocation6] sm:$0x1]
        %v1344 = vld [vmem:[#allocation7] sm:$0x1]
        %v1345 = vsel %vm996, %v1342, 0.0
        %1346 = vadd.xlane.f32.xlu0 %v1345
        %v1347 = vpop.xlane.xlu0 %1346
        %v1348 = vrcp.pop 32.0
        %v1349 = vmul.f32 32.0, %v1348
        %v1350 = vsub.f32 1.0, %v1349
        %v1351 = vmul.f32 %v1348, %v1350
        %v1352 = vadd.f32 %v1348, %v1351
        %vm1353 = vweird.f32 %v1348
        %v1354 = vsel %vm1353, %v1348, %v1352
        %v1355 = vmul.f32 %v1347, %v1354
        %v1356 = vsub.f32 %v1342, %v1355
        %v1357 = vmul.f32 %v1356, %v1356
        %v1358 = vsel %vm996, %v1357, 0.0
        %1359 = vadd.xlane.f32.xlu0 %v1358
        %v1360 = vpop.xlane.xlu0 %1359
        %v1361 = vmul.f32 %v1360, %v1354
        %v1362 = vadd.f32 %v1361, 1e-05
        %v1363 = vrsqrt.pop %v1362
        %v1364 = vmul.f32 %v1363, %v1362
        %v1365 = vmul.f32 %v1364, %v1363
        %v1366 = vmul.f32 0.5, %v1365
        %v1367 = vsub.f32 1.5, %v1366
        %v1368 = vmul.f32 %v1363, %v1367
        %vm1369 = vweird.f32 %v1362
        %vm1370 = vweird.f32 %v1363
        %vm1371 = vmor %vm1369, %vm1370
        %v1372 = vsel %vm1371, %v1363, %v1368
        %v1373 = vmul.f32 %v1356, %v1372
        %v1375 = vperm.slane %v1343, 0
        %v1377 = vmul.f32 %v1373, %v1375
        %v1379 = vperm.slane %v1344, 0
        %v1381 = vadd.f32 %v1377, %v1379
        %v1382 = vpack.c.bf16 %v1381, %v1381
        %v1383 = vld [vmem:[%s10] sm:$0xf]
        %v1384 = vld [vmem:[%s10 + $0x4] sm:$0xf]
        %v1385 = vld [vmem:[%s10 + $0x8] sm:$0xf]
        %v1386 = vld [vmem:[%s10 + $0xc] sm:$0xf]
        %v1387 = vld [vmem:[#allocation9] sm:$0x1]
        %v1389 = vperm.slane %v1387, 0
        %v1395 = vunpack.c.l.b16 %v1383
        %v1396 = vunpack.c.l.b16 %v1384
        %v1397 = vunpack.c.l.b16 %v1385
        %v1398 = vunpack.c.l.b16 %v1386
        %v1399 = vpack.c.b16 %v1396, %v1395
        %v1400 = vpack.c.b16 %v1398, %v1397
        %v1404 = vsel %vm996, %v1382, 0
        %1406 = vmatpush.bf16.msra.mxu0 0
        %1407 = vmatpush.bf16.msra.mxu0 0
        %1408 = vmatpush.bf16.msra.mxu0 0
        %1409 = vmatpush.bf16.msra.mxu0 0
        %1410 = vmatpush.bf16.msra.mxu0 0
        %1411 = vmatpush.bf16.msra.mxu0 0
        %1412 = vmatpush.bf16.msra.mxu0 %v1400
        %1413 = vmatpush.bf16.msra.mxu0 %v1399
        %1414 = vmatmul.bf16.gmra.mxu0 %v1404
        %v1415 = vpop.f32.mrf.mxu0
        %v1416 = vadd.f32 %v1389, %v1415
        %v1417 = vpop.f32.mrf.mxu0
        %1418 = vdwg.mxu0
        %v1419 = vld [vmem:[%s12] sm:$0xf]
        %v1420 = vld [vmem:[%s12 + $0x4] sm:$0xf]
        %v1421 = vld [vmem:[%s12 + $0x8] sm:$0xf]
        %v1422 = vld [vmem:[%s12 + $0xc] sm:$0xf]
        %v1423 = vld [vmem:[#allocation10] sm:$0x1]
        %v1425 = vperm.slane %v1423, 0
        %v1431 = vunpack.c.l.b16 %v1419
        %v1432 = vunpack.c.l.b16 %v1420
        %v1433 = vunpack.c.l.b16 %v1421
        %v1434 = vunpack.c.l.b16 %v1422
        %v1435 = vpack.c.b16 %v1432, %v1431
        %v1436 = vpack.c.b16 %v1434, %v1433
        %v1440 = vsel %vm996, %v975, 0
        %1442 = vmatpush.bf16.msra.mxu0 0
        %1443 = vmatpush.bf16.msra.mxu0 0
        %1444 = vmatpush.bf16.msra.mxu0 0
        %1445 = vmatpush.bf16.msra.mxu0 0
        %1446 = vmatpush.bf16.msra.mxu0 0
        %1447 = vmatpush.bf16.msra.mxu0 0
        %1448 = vmatpush.bf16.msra.mxu0 %v1436
        %1449 = vmatpush.bf16.msra.mxu0 %v1435
        %1450 = vmatmul.bf16.gmra.mxu0 %v1440
        %v1451 = vpop.f32.mrf.mxu0
        %v1452 = vadd.f32 %v1425, %v1451
        %v1453 = vpop.f32.mrf.mxu0
        %1454 = vdwg.mxu0
        %v1455 = vld [vmem:[%s968] sm:$0xff]
        %v1456 = vpack.c.bf16 %v1416, %v1416
        %v1457 = vpack.c.bf16 %v1452, %v1452
        %v1459 = vsel %vm1020, %v1456, 0
        %v1462 = vsel %vm1020, %v1457, 0
        %1464 = vmatpush.bf16.xpose.msra.mxu0 0
        %1465 = vmatpush.bf16.xpose.msra.mxu0 0
        %1466 = vmatpush.bf16.xpose.msra.mxu0 0
        %1467 = vmatpush.bf16.xpose.msra.mxu0 0
        %1468 = vmatpush.bf16.xpose.msra.mxu0 0
        %1469 = vmatpush.bf16.xpose.msra.mxu0 0
        %1470 = vmatpush.bf16.xpose.msra.mxu0 0
        %1471 = vmatpush.bf16.xpose.msra.mxu0 %v1462
        %1472 = vmatmul.bf16.gmra.mxu0 %v1459
        %v1473 = vpop.f32.mrf.mxu0
        %v1474 = vadd.f32 0.0, %v1473
        %v1475 = vpop.f32.mrf.mxu0
        %1476 = vdwg.mxu0
        %v1477 = vmul.f32 %v1474, 0.35355338
        %v1478 = vadd.f32 %v1477, %v1455
        %v1479 = vsel %vm1020, %v1478, -inf
        %1480 = vmax.xlane.f32.xlu0 %v1479
        %v1481 = vpop.xlane.xlu0 %1480
        %v1482 = vsub.f32 %v1478, %v1481
        %v1483 = vmul.f32 %v1482, 1.442695
        %v1484 = vpow.pop %v1483
        %v1485 = vsel %vm1020, %v1484, 0.0
        %1486 = vadd.xlane.f32.xlu0 %v1485
        %v1487 = vpop.xlane.xlu0 %1486
        %v1488 = vrcp.pop %v1487
        %v1489 = vmul.f32 %v1484, %v1488
        %v1490 = vpack.c.bf16 %v1489, %v1489
        %v1492 = vunpack.c.l.b16 %v1457
        %v1493 = vpack.c.b16 %v1492, %v1492
        %1494 = vrot.lane.b32.xlu0 %v1493, 96
        %v1495 = vpop.permute.xlu0 %1494
        %v1497 = vsel %vm1020, %v1490, 0
        %v1500 = vsel %vm1059, %v1495, 0
        %1502 = vmatpush.bf16.msra.mxu0 0
        %1503 = vmatpush.bf16.msra.mxu0 0
        %1504 = vmatpush.bf16.msra.mxu0 0
        %1505 = vmatpush.bf16.msra.mxu0 0
        %1506 = vmatpush.bf16.msra.mxu0 0
        %1507 = vmatpush.bf16.msra.mxu0 0
        %1508 = vmatpush.bf16.msra.mxu0 0
        %1509 = vmatpush.bf16.msra.mxu0 %v1500
        %1510 = vmatmul.bf16.gmra.mxu0 %v1497
        %v1511 = vpop.f32.mrf.mxu0
        %v1512 = vadd.f32 0.0, %v1511
        %v1513 = vpop.f32.mrf.mxu0
        %1514 = vdwg.mxu0
        %v1515 = vpack.c.bf16 %v1512, %v1512
        %v1516 = vld [vmem:[%s14] sm:$0xf]
        %v1518 = vunpack.c.l.b16 %v1456
        %v1519 = vpack.c.b16 %v1518, %v1518
        %1520 = vrot.lane.b32.xlu0 %v1519, 120
        %v1521 = vpop.permute.xlu0 %1520
        %1522 = vrot.lane.b32.xlu0 %v1493, 120
        %v1523 = vpop.permute.xlu0 %1522
        %v1525 = vsel %vm1020, %v1521, 0
        %v1528 = vsel %vm1020, %v1523, 0
        %1530 = vmatpush.bf16.xpose.msra.mxu0 0
        %1531 = vmatpush.bf16.xpose.msra.mxu0 0
        %1532 = vmatpush.bf16.xpose.msra.mxu0 0
        %1533 = vmatpush.bf16.xpose.msra.mxu0 0
        %1534 = vmatpush.bf16.xpose.msra.mxu0 0
        %1535 = vmatpush.bf16.xpose.msra.mxu0 0
        %1536 = vmatpush.bf16.xpose.msra.mxu0 0
        %1537 = vmatpush.bf16.xpose.msra.mxu0 %v1528
        %1538 = vmatmul.bf16.gmra.mxu0 %v1525
        %v1539 = vpop.f32.mrf.mxu0
        %v1540 = vadd.f32 0.0, %v1539
        %v1541 = vpop.f32.mrf.mxu0
        %1542 = vdwg.mxu0
        %v1543 = vmul.f32 %v1540, 0.35355338
        %v1544 = vadd.f32 %v1543, %v1455
        %v1545 = vsel %vm1020, %v1544, -inf
        %1546 = vmax.xlane.f32.xlu0 %v1545
        %v1547 = vpop.xlane.xlu0 %1546
        %v1548 = vsub.f32 %v1544, %v1547
        %v1549 = vmul.f32 %v1548, 1.442695
        %v1550 = vpow.pop %v1549
        %v1551 = vsel %vm1020, %v1550, 0.0
        %1552 = vadd.xlane.f32.xlu0 %v1551
        %v1553 = vpop.xlane.xlu0 %1552
        %v1554 = vrcp.pop %v1553
        %v1555 = vmul.f32 %v1550, %v1554
        %v1556 = vpack.c.bf16 %v1555, %v1555
        %1557 = vrot.lane.b32.xlu0 %v1493, 88
        %v1558 = vpop.permute.xlu0 %1557
        %v1560 = vsel %vm1020, %v1556, 0
        %v1563 = vsel %vm1059, %v1558, 0
        %1565 = vmatpush.bf16.msra.mxu0 0
        %1566 = vmatpush.bf16.msra.mxu0 0
        %1567 = vmatpush.bf16.msra.mxu0 0
        %1568 = vmatpush.bf16.msra.mxu0 0
        %1569 = vmatpush.bf16.msra.mxu0 0
        %1570 = vmatpush.bf16.msra.mxu0 0
        %1571 = vmatpush.bf16.msra.mxu0 0
        %1572 = vmatpush.bf16.msra.mxu0 %v1563
        %1573 = vmatmul.bf16.gmra.mxu0 %v1560
        %v1574 = vpop.f32.mrf.mxu0
        %v1575 = vadd.f32 0.0, %v1574
        %v1576 = vpop.f32.mrf.mxu0
        %1577 = vdwg.mxu0
        %v1578 = vpack.c.bf16 %v1575, %v1575
        %v1579 = vld [vmem:[%s14 + $0x4] sm:$0xf]
        %v1581 = vsel %vm1020, %v1578, 0
        %v1584 = vsel %vm1059, %v1579, 0
        %1586 = vmatpush.bf16.msra.mxu0 0
        %1587 = vmatpush.bf16.msra.mxu0 0
        %1588 = vmatpush.bf16.msra.mxu0 0
        %1589 = vmatpush.bf16.msra.mxu0 0
        %1590 = vmatpush.bf16.msra.mxu0 0
        %1591 = vmatpush.bf16.msra.mxu0 0
        %1592 = vmatpush.bf16.msra.mxu0 0
        %1593 = vmatpush.bf16.msra.mxu0 %v1584
        %1594 = vmatmul.bf16.gmra.mxu0 %v1581
        %v1595 = vpop.f32.mrf.mxu0
        %v1596 = vadd.f32 0.0, %v1595
        %v1597 = vpop.f32.mrf.mxu0
        %1598 = vdwg.mxu0
        %v1600 = vsel %vm1020, %v1515, 0
        %v1603 = vsel %vm1059, %v1516, 0
        %1605 = vmatpush.bf16.msra.mxu0 0
        %1606 = vmatpush.bf16.msra.mxu0 0
        %1607 = vmatpush.bf16.msra.mxu0 0
        %1608 = vmatpush.bf16.msra.mxu0 0
        %1609 = vmatpush.bf16.msra.mxu0 0
        %1610 = vmatpush.bf16.msra.mxu0 0
        %1611 = vmatpush.bf16.msra.mxu0 0
        %1612 = vmatpush.bf16.msra.mxu0 %v1603
        %1613 = vmatmul.bf16.gmra.mxu0 %v1600
        %v1614 = vpop.f32.mrf.mxu0
        %v1615 = vadd.f32 %v1596, %v1614
        %v1616 = vpop.f32.mrf.mxu0
        %1617 = vdwg.mxu0
        %1618 = vrot.lane.b32.xlu0 %v1519, 112
        %v1619 = vpop.permute.xlu0 %1618
        %1620 = vrot.lane.b32.xlu0 %v1493, 112
        %v1621 = vpop.permute.xlu0 %1620
        %v1623 = vsel %vm1020, %v1619, 0
        %v1626 = vsel %vm1020, %v1621, 0
        %1628 = vmatpush.bf16.xpose.msra.mxu0 0
        %1629 = vmatpush.bf16.xpose.msra.mxu0 0
        %1630 = vmatpush.bf16.xpose.msra.mxu0 0
        %1631 = vmatpush.bf16.xpose.msra.mxu0 0
        %1632 = vmatpush.bf16.xpose.msra.mxu0 0
        %1633 = vmatpush.bf16.xpose.msra.mxu0 0
        %1634 = vmatpush.bf16.xpose.msra.mxu0 0
        %1635 = vmatpush.bf16.xpose.msra.mxu0 %v1626
        %1636 = vmatmul.bf16.gmra.mxu0 %v1623
        %v1637 = vpop.f32.mrf.mxu0
        %v1638 = vadd.f32 0.0, %v1637
        %v1639 = vpop.f32.mrf.mxu0
        %1640 = vdwg.mxu0
        %v1641 = vmul.f32 %v1638, 0.35355338
        %v1642 = vadd.f32 %v1641, %v1455
        %v1643 = vsel %vm1020, %v1642, -inf
        %1644 = vmax.xlane.f32.xlu0 %v1643
        %v1645 = vpop.xlane.xlu0 %1644
        %v1646 = vsub.f32 %v1642, %v1645
        %v1647 = vmul.f32 %v1646, 1.442695
        %v1648 = vpow.pop %v1647
        %v1649 = vsel %vm1020, %v1648, 0.0
        %1650 = vadd.xlane.f32.xlu0 %v1649
        %v1651 = vpop.xlane.xlu0 %1650
        %v1652 = vrcp.pop %v1651
        %v1653 = vmul.f32 %v1648, %v1652
        %v1654 = vpack.c.bf16 %v1653, %v1653
        %1655 = vrot.lane.b32.xlu0 %v1493, 80
        %v1656 = vpop.permute.xlu0 %1655
        %v1658 = vsel %vm1020, %v1654, 0
        %v1661 = vsel %vm1059, %v1656, 0
        %1663 = vmatpush.bf16.msra.mxu0 0
        %1664 = vmatpush.bf16.msra.mxu0 0
        %1665 = vmatpush.bf16.msra.mxu0 0
        %1666 = vmatpush.bf16.msra.mxu0 0
        %1667 = vmatpush.bf16.msra.mxu0 0
        %1668 = vmatpush.bf16.msra.mxu0 0
        %1669 = vmatpush.bf16.msra.mxu0 0
        %1670 = vmatpush.bf16.msra.mxu0 %v1661
        %1671 = vmatmul.bf16.gmra.mxu0 %v1658
        %v1672 = vpop.f32.mrf.mxu0
        %v1673 = vadd.f32 0.0, %v1672
        %v1674 = vpop.f32.mrf.mxu0
        %1675 = vdwg.mxu0
        %v1676 = vpack.c.bf16 %v1673, %v1673
        %v1677 = vld [vmem:[%s14 + $0x8] sm:$0xf]
        %v1679 = vsel %vm1020, %v1676, 0
        %v1682 = vsel %vm1059, %v1677, 0
        %1684 = vmatpush.bf16.msra.mxu0 0
        %1685 = vmatpush.bf16.msra.mxu0 0
        %1686 = vmatpush.bf16.msra.mxu0 0
        %1687 = vmatpush.bf16.msra.mxu0 0
        %1688 = vmatpush.bf16.msra.mxu0 0
        %1689 = vmatpush.bf16.msra.mxu0 0
        %1690 = vmatpush.bf16.msra.mxu0 0
        %1691 = vmatpush.bf16.msra.mxu0 %v1682
        %1692 = vmatmul.bf16.gmra.mxu0 %v1679
        %v1693 = vpop.f32.mrf.mxu0
        %v1694 = vadd.f32 0.0, %v1693
        %v1695 = vpop.f32.mrf.mxu0
        %1696 = vdwg.mxu0
        %v1697 = vadd.f32 %v1615, %v1694
        %1698 = vrot.lane.b32.xlu0 %v1519, 104
        %v1699 = vpop.permute.xlu0 %1698
        %1700 = vrot.lane.b32.xlu0 %v1493, 104
        %v1701 = vpop.permute.xlu0 %1700
        %v1703 = vsel %vm1020, %v1699, 0
        %v1706 = vsel %vm1020, %v1701, 0
        %1708 = vmatpush.bf16.xpose.msra.mxu0 0
        %1709 = vmatpush.bf16.xpose.msra.mxu0 0
        %1710 = vmatpush.bf16.xpose.msra.mxu0 0
        %1711 = vmatpush.bf16.xpose.msra.mxu0 0
        %1712 = vmatpush.bf16.xpose.msra.mxu0 0
        %1713 = vmatpush.bf16.xpose.msra.mxu0 0
        %1714 = vmatpush.bf16.xpose.msra.mxu0 0
        %1715 = vmatpush.bf16.xpose.msra.mxu0 %v1706
        %1716 = vmatmul.bf16.gmra.mxu0 %v1703
        %v1717 = vpop.f32.mrf.mxu0
        %v1718 = vadd.f32 0.0, %v1717
        %v1719 = vpop.f32.mrf.mxu0
        %1720 = vdwg.mxu0
        %v1721 = vmul.f32 %v1718, 0.35355338
        %v1722 = vadd.f32 %v1721, %v1455
        %v1723 = vsel %vm1020, %v1722, -inf
        %1724 = vmax.xlane.f32.xlu0 %v1723
        %v1725 = vpop.xlane.xlu0 %1724
        %v1726 = vsub.f32 %v1722, %v1725
        %v1727 = vmul.f32 %v1726, 1.442695
        %v1728 = vpow.pop %v1727
        %v1729 = vsel %vm1020, %v1728, 0.0
        %1730 = vadd.xlane.f32.xlu0 %v1729
        %v1731 = vpop.xlane.xlu0 %1730
        %v1732 = vrcp.pop %v1731
        %v1733 = vmul.f32 %v1728, %v1732
        %v1734 = vpack.c.bf16 %v1733, %v1733
        %1735 = vrot.lane.b32.xlu0 %v1493, 72
        %v1736 = vpop.permute.xlu0 %1735
        %v1738 = vsel %vm1020, %v1734, 0
        %v1741 = vsel %vm1059, %v1736, 0
        %1743 = vmatpush.bf16.msra.mxu0 0
        %1744 = vmatpush.bf16.msra.mxu0 0
        %1745 = vmatpush.bf16.msra.mxu0 0
        %1746 = vmatpush.bf16.msra.mxu0 0
        %1747 = vmatpush.bf16.msra.mxu0 0
        %1748 = vmatpush.bf16.msra.mxu0 0
        %1749 = vmatpush.bf16.msra.mxu0 0
        %1750 = vmatpush.bf16.msra.mxu0 %v1741
        %1751 = vmatmul.bf16.gmra.mxu0 %v1738
        %v1752 = vpop.f32.mrf.mxu0
        %v1753 = vadd.f32 0.0, %v1752
        %v1754 = vpop.f32.mrf.mxu0
        %1755 = vdwg.mxu0
        %v1756 = vpack.c.bf16 %v1753, %v1753
        %v1757 = vld [vmem:[%s14 + $0xc] sm:$0xf]
        %v1759 = vsel %vm1020, %v1756, 0
        %v1762 = vsel %vm1059, %v1757, 0
        %1764 = vmatpush.bf16.msra.mxu0 0
        %1765 = vmatpush.bf16.msra.mxu0 0
        %1766 = vmatpush.bf16.msra.mxu0 0
        %1767 = vmatpush.bf16.msra.mxu0 0
        %1768 = vmatpush.bf16.msra.mxu0 0
        %1769 = vmatpush.bf16.msra.mxu0 0
        %1770 = vmatpush.bf16.msra.mxu0 0
        %1771 = vmatpush.bf16.msra.mxu0 %v1762
        %1772 = vmatmul.bf16.gmra.mxu0 %v1759
        %v1773 = vpop.f32.mrf.mxu0
        %v1774 = vadd.f32 0.0, %v1773
        %v1775 = vpop.f32.mrf.mxu0
        %1776 = vdwg.mxu0
        %v1777 = vadd.f32 %v1697, %v1774
        %v1778 = vld [vmem:[#allocation12] sm:$0x1]
        %v1780 = vperm.slane %v1778, 0
        %v1782 = vadd.f32 %v1777, %v1780
        %v1783 = vadd.f32 %v1782, %v1381
        %v1784 = vld [vmem:[#allocation13] sm:$0x1]
        %v1785 = vld [vmem:[#allocation15] sm:$0x1]
        %v1786 = vsel %vm996, %v1783, 0.0
        %1787 = vadd.xlane.f32.xlu0 %v1786
        %v1788 = vpop.xlane.xlu0 %1787
        %v1789 = vmul.f32 %v1788, %v1354
        %v1790 = vsub.f32 %v1783, %v1789
        %v1791 = vmul.f32 %v1790, %v1790
        %v1792 = vsel %vm996, %v1791, 0.0
        %1793 = vadd.xlane.f32.xlu0 %v1792
        %v1794 = vpop.xlane.xlu0 %1793
        %v1795 = vmul.f32 %v1794, %v1354
        %v1796 = vadd.f32 %v1795, 1e-05
        %v1797 = vrsqrt.pop %v1796
        %v1798 = vmul.f32 %v1797, %v1796
        %v1799 = vmul.f32 %v1798, %v1797
        %v1800 = vmul.f32 0.5, %v1799
        %v1801 = vsub.f32 1.5, %v1800
        %v1802 = vmul.f32 %v1797, %v1801
        %vm1803 = vweird.f32 %v1796
        %vm1804 = vweird.f32 %v1797
        %vm1805 = vmor %vm1803, %vm1804
        %v1806 = vsel %vm1805, %v1797, %v1802
        %v1807 = vmul.f32 %v1790, %v1806
        %v1809 = vperm.slane %v1784, 0
        %v1811 = vmul.f32 %v1807, %v1809
        %v1813 = vperm.slane %v1785, 0
        %v1815 = vadd.f32 %v1811, %v1813
        %v1816 = vpack.c.bf16 %v1815, %v1815
        %v1817 = vld [vmem:[%s18] sm:$0xf]
        %v1818 = vld [vmem:[%s18 + $0x4] sm:$0xf]
        %v1819 = vld [vmem:[%s18 + $0x8] sm:$0xf]
        %v1820 = vld [vmem:[%s18 + $0xc] sm:$0xf]
        %v1821 = vld [vmem:[#allocation16] sm:$0x1]
        %v1823 = vperm.slane %v1821, 0
        %v1829 = vunpack.c.l.b16 %v1817
        %v1830 = vunpack.c.l.b16 %v1818
        %v1831 = vunpack.c.l.b16 %v1819
        %v1832 = vunpack.c.l.b16 %v1820
        %v1833 = vpack.c.b16 %v1830, %v1829
        %v1834 = vpack.c.b16 %v1832, %v1831
        %v1838 = vsel %vm996, %v1816, 0
        %1840 = vmatpush.bf16.msra.mxu0 0
        %1841 = vmatpush.bf16.msra.mxu0 0
        %1842 = vmatpush.bf16.msra.mxu0 0
        %1843 = vmatpush.bf16.msra.mxu0 0
        %1844 = vmatpush.bf16.msra.mxu0 0
        %1845 = vmatpush.bf16.msra.mxu0 0
        %1846 = vmatpush.bf16.msra.mxu0 %v1834
        %1847 = vmatpush.bf16.msra.mxu0 %v1833
        %1848 = vmatmul.bf16.gmra.mxu0 %v1838
        %v1849 = vpop.f32.mrf.mxu0
        %v1850 = vadd.f32 %v1823, %v1849
        %v1851 = vpop.f32.mrf.mxu0
        %1852 = vdwg.mxu0
        %v1853 = vmax.f32 %v1850, 0.0
        %v1854 = vpack.c.bf16 %v1853, %v1853
        %v1855 = vld [vmem:[%s20] sm:$0xf]
        %v1856 = vld [vmem:[%s20 + $0x4] sm:$0xf]
        %v1857 = vld [vmem:[%s20 + $0x8] sm:$0xf]
        %v1858 = vld [vmem:[%s20 + $0xc] sm:$0xf]
        %v1859 = vld [vmem:[%s20 + $0x10] sm:$0xf]
        %v1860 = vld [vmem:[%s20 + $0x14] sm:$0xf]
        %v1861 = vld [vmem:[%s20 + $0x18] sm:$0xf]
        %v1862 = vld [vmem:[%s20 + $0x1c] sm:$0xf]
        %v1863 = vld [vmem:[#allocation18] sm:$0x1]
        %v1865 = vperm.slane %v1863, 0
        %v1875 = vunpack.c.l.b16 %v1855
        %v1876 = vunpack.c.l.b16 %v1856
        %v1877 = vunpack.c.l.b16 %v1857
        %v1878 = vunpack.c.l.b16 %v1858
        %v1879 = vunpack.c.l.b16 %v1859
        %v1880 = vunpack.c.l.b16 %v1860
        %v1881 = vunpack.c.l.b16 %v1861
        %v1882 = vunpack.c.l.b16 %v1862
        %v1883 = vpack.c.b16 %v1876, %v1875
        %v1884 = vpack.c.b16 %v1878, %v1877
        %v1885 = vpack.c.b16 %v1880, %v1879
        %v1886 = vpack.c.b16 %v1882, %v1881
        %vm1891 = vcmask 523264
        %v1893 = vsel %vm1891, %v1854, 0
        %1895 = vmatpush.bf16.msra.mxu0 0
        %1896 = vmatpush.bf16.msra.mxu0 0
        %1897 = vmatpush.bf16.msra.mxu0 0
        %1898 = vmatpush.bf16.msra.mxu0 0
        %1899 = vmatpush.bf16.msra.mxu0 %v1886
        %1900 = vmatpush.bf16.msra.mxu0 %v1885
        %1901 = vmatpush.bf16.msra.mxu0 %v1884
        %1902 = vmatpush.bf16.msra.mxu0 %v1883
        %1903 = vmatmul.bf16.gmra.mxu0 %v1893
        %v1904 = vpop.f32.mrf.mxu0
        %v1905 = vadd.f32 %v1865, %v1904
        %v1906 = vpop.f32.mrf.mxu0
        %1907 = vdwg.mxu0
        %v1908 = vadd.f32 %v1905, %v1815
        %v1909 = vld [vmem:[#allocation19] sm:$0x1]
        %v1910 = vld [vmem:[#allocation21] sm:$0x1]
        %v1911 = vsel %vm996, %v1908, 0.0
        %1912 = vadd.xlane.f32.xlu0 %v1911
        %v1913 = vpop.xlane.xlu0 %1912
        %v1914 = vmul.f32 %v1913, %v1354
        %v1915 = vsub.f32 %v1908, %v1914
        %v1916 = vmul.f32 %v1915, %v1915
        %v1917 = vsel %vm996, %v1916, 0.0
        %1918 = vadd.xlane.f32.xlu0 %v1917
        %v1919 = vpop.xlane.xlu0 %1918
        %v1920 = vmul.f32 %v1919, %v1354
        %v1921 = vadd.f32 %v1920, 1e-05
        %v1922 = vrsqrt.pop %v1921
        %v1923 = vmul.f32 %v1922, %v1921
        %v1924 = vmul.f32 %v1923, %v1922
        %v1925 = vmul.f32 0.5, %v1924
        %v1926 = vsub.f32 1.5, %v1925
        %v1927 = vmul.f32 %v1922, %v1926
        %vm1928 = vweird.f32 %v1921
        %vm1929 = vweird.f32 %v1922
        %vm1930 = vmor %vm1928, %vm1929
        %v1931 = vsel %vm1930, %v1922, %v1927
        %v1932 = vmul.f32 %v1915, %v1931
        %v1934 = vperm.slane %v1909, 0
        %v1936 = vmul.f32 %v1932, %v1934
        %v1938 = vperm.slane %v1910, 0
        %v1940 = vadd.f32 %v1936, %v1938
        %v1941 = vpack.c.bf16 %v1940, %v1940
        %vm1942 = vcmask 257024
        %1943 = vst.msk [vmem:[%s972] sm:$0xf] %vm1942, %v1941
        %p1944 = scmp.lt.s32.totalorder %s42, 1
        %s1945 = scalar_select %p1944, %s42, 1
        %s1946 = smul.addr %s1945, 4
        %s1947 = scalar_lea.vmem %s24, %s1946
        // Predicated region
        $region169: #{seq2seq_forward.8} parent=115 // pred_check
          %p1948 = pneg %p584
        $region170: #{seq2seq_forward.8} parent=115 // pred_check_branch
          %1950 = sbr.rel (%p1948) target = $region172
        $region171: #{seq2seq_forward.8} parent=115 // pred_region
          _
        $region172: #{seq2seq_forward.8} parent=115 // pred_fallthru
          _
      $region116: #{seq2seq_forward.8} parent=5 // pred_fallthru
        _
      %p1951 = scmp.le.s32.totalorder 2, %s37
      // Predicated region
      $region173: #{seq2seq_forward.8} parent=5 // pred_check
        %p1952 = pneg %p1951
      $region174: #{seq2seq_forward.8} parent=5 // pred_check_branch
        %1954 = sbr.rel (%p1952) target = $region176
      $region175: #{seq2seq_forward.8} parent=5 // pred_region
        %s1955 = ssub.s32 %s37, 2
        // Predicated region
        $region177: #{seq2seq_forward.8} parent=175 // pred_check
          %p1956 = pneg %p590
        $region178: #{seq2seq_forward.8} parent=175 // pred_check_branch
          %1958 = sbr.rel (%p1956) target = $region180
        $region179: #{seq2seq_forward.8} parent=175 // pred_region
          %p1959 = scmp.lt.s32.totalorder %s43, 1
          %s1960 = scalar_select %p1959, %s43, 1
          %s1961 = smul.addr %s1960, 4
          %s1962 = scalar_lea.vmem %s24, %s1961
        $region180: #{seq2seq_forward.8} parent=175 // pred_fallthru
          _
      $region176: #{seq2seq_forward.8} parent=5 // pred_fallthru
        _
    $region6: #{seq2seq_forward.8} parent=1 // loop_footer
      %s41 = sadd.s32 1, %s37
    $region7: #{seq2seq_forward.8} parent=1 // loop_footer_branch
      %36 = sbr.rel target = $region3
    $region8: #{seq2seq_forward.8} parent=1 // loop_exit
      _
    %1963 = vsyncpa [#allocation3], 1
    %s1964 = scalar_lea.sflag [#allocation3], 1
    %1965 = vsyncpa %s1964, 1
    %1966 = vsyncpa [#allocation5], 1
    %1967 = vsyncpa [#allocation8], 1
    %1968 = vsyncpa [#allocation11], 1
    %1969 = vsyncpa [#allocation14], 1
    %1970 = vsyncpa [#allocation17], 1
    %1971 = vsyncpa [#allocation20], 1

// kernel: seq2seq_forward.7
$region0: #{seq2seq_forward.7}
  #allocation0 [shape = 'u32[]', space=smem, size = 0x4, offset = 0x4, fixed_abs, tag = 'smem constant byte address 0x4 - core index']
  #allocation1 [shape = 'u32[72,128]{1,0:T(1,128)}', space=vmem, size = 0x9000, scoped, tag = 'internal scratch']
  %s0 = inlined_call_operand.vmem [shape: bf16[2,8,32], index: 0, kind: input, shape index: {}]
  %s1 = inlined_call_operand.vmem [shape: bf16[2,8,32], index: 1, kind: input, shape index: {}]
  %s2 = inlined_call_operand.vmem [shape: f32[2,8,8], index: 2, kind: input, shape index: {}]
  %s3 = inlined_call_operand.vmem [shape: f32[2,8,8], index: 3, kind: input, shape index: {}]
  %s4 = inlined_call_operand.vmem [shape: bf16[32,96], index: 4, kind: input, shape index: {}]
  %s5 = inlined_call_operand.vmem [shape: f32[1,96], index: 5, kind: input, shape index: {}]
  %s6 = inlined_call_operand.vmem [shape: bf16[32,32], index: 6, kind: input, shape index: {}]
  %s7 = inlined_call_operand.vmem [shape: f32[1,32], index: 7, kind: input, shape index: {}]
  %s8 = inlined_call_operand.hbm [shape: f32[1,32], index: 8, kind: input, shape index: {}]
  %s9 = inlined_call_operand.hbm [shape: f32[1,32], index: 9, kind: input, shape index: {}]
  %s10 = inlined_call_operand.vmem [shape: bf16[32,32], index: 10, kind: input, shape index: {}]
  %s11 = inlined_call_operand.hbm [shape: f32[1,32], index: 11, kind: input, shape index: {}]
  %s12 = inlined_call_operand.vmem [shape: bf16[32,64], index: 12, kind: input, shape index: {}]
  %s13 = inlined_call_operand.hbm [shape: f32[1,64], index: 13, kind: input, shape index: {}]
  %s14 = inlined_call_operand.vmem [shape: bf16[32,32], index: 14, kind: input, shape index: {}]
  %s15 = inlined_call_operand.hbm [shape: f32[1,32], index: 15, kind: input, shape index: {}]
  %s16 = inlined_call_operand.hbm [shape: f32[1,32], index: 16, kind: input, shape index: {}]
  %s17 = inlined_call_operand.hbm [shape: f32[1,32], index: 17, kind: input, shape index: {}]
  %s18 = inlined_call_operand.vmem [shape: bf16[32,64], index: 18, kind: input, shape index: {}]
  %s19 = inlined_call_operand.hbm [shape: f32[1,64], index: 19, kind: input, shape index: {}]
  %s20 = inlined_call_operand.vmem [shape: bf16[64,32], index: 20, kind: input, shape index: {}]
  %s21 = inlined_call_operand.hbm [shape: f32[1,32], index: 21, kind: input, shape index: {}]
  %s22 = inlined_call_operand.hbm [shape: f32[1,32], index: 22, kind: input, shape index: {}]
  %s23 = inlined_call_operand.hbm [shape: f32[1,32], index: 23, kind: input, shape index: {}]
  %s24 = inlined_call_operand.vmem [shape: bf16[2,8,32], index: 24, kind: output, shape index: {}]
  %s25 = sld [smem:[#allocation0]]
  $region173: #{seq2seq_forward.7} parent=0
    _
  %s27 = ssub.s32 1, %s25
  %s28 = scalar_select 0, %s27, %s25
  $region1: #{seq2seq_forward.7} parent=0
    #allocation2 [shape = 'u8[512]{0}', space=vmem, size = 0x400, scoped, tag = 'input window, operand 8, single buffered']
    #allocation3 [shape = 's32[2]{0}', space=sflag, size = 0x8, scoped, tag = 'scoped memory for seq2seq_forward.7']
    #allocation4 [shape = 'u8[512]{0}', space=vmem, size = 0x400, scoped, tag = 'input window, operand 9, single buffered']
    #allocation5 [shape = 's32[1]{0}', space=sflag, size = 0x4, scoped, tag = 'scoped memory for seq2seq_forward.7']
    #allocation6 [shape = 'u8[512]{0}', space=vmem, size = 0x400, scoped, tag = 'input window, operand 11, single buffered']
    #allocation7 [shape = 'u8[512]{0}', space=vmem, size = 0x400, scoped, tag = 'input window, operand 13, single buffered']
    #allocation8 [shape = 's32[1]{0}', space=sflag, size = 0x4, scoped, tag = 'scoped memory for seq2seq_forward.7']
    #allocation9 [shape = 'u8[512]{0}', space=vmem, size = 0x400, scoped, tag = 'input window, operand 15, single buffered']
    #allocation10 [shape = 'u8[512]{0}', space=vmem, size = 0x400, scoped, tag = 'input window, operand 16, single buffered']
    #allocation11 [shape = 's32[1]{0}', space=sflag, size = 0x4, scoped, tag = 'scoped memory for seq2seq_forward.7']
    #allocation12 [shape = 'u8[512]{0}', space=vmem, size = 0x400, scoped, tag = 'input window, operand 17, single buffered']
    #allocation13 [shape = 'u8[512]{0}', space=vmem, size = 0x400, scoped, tag = 'input window, operand 19, single buffered']
    #allocation14 [shape = 's32[1]{0}', space=sflag, size = 0x4, scoped, tag = 'scoped memory for seq2seq_forward.7']
    #allocation15 [shape = 'u8[512]{0}', space=vmem, size = 0x400, scoped, tag = 'input window, operand 21, single buffered']
    #allocation16 [shape = 'u8[512]{0}', space=vmem, size = 0x400, scoped, tag = 'input window, operand 22, single buffered']
    #allocation17 [shape = 's32[1]{0}', space=sflag, size = 0x4, scoped, tag = 'scoped memory for seq2seq_forward.7']
    #allocation18 [shape = 'u8[512]{0}', space=vmem, size = 0x400, scoped, tag = 'input window, operand 23, single buffered']
    %29 = vsyncpa [#allocation3], 0
    %30 = vsyncpa [#allocation5], 0
    %31 = vsyncpa [#allocation8], 0
    %32 = vsyncpa [#allocation11], 0
    %33 = vsyncpa [#allocation14], 0
    %34 = vsyncpa [#allocation17], 0
    loop: start=0, step=1, limit=4
    $region2: #{seq2seq_forward.7} parent=1 // loop_pre_header
      _
    $region3: #{seq2seq_forward.7} parent=1 // loop_header
      %s36 = sphi 0, %s40
      %p37 = scmp.ge.s32.totalorder %s36, 4
      %s46 = sphi 0, %s48
      %s49 = sphi 0, %s46
      %s50 = sphi 0, %s49
      %s66 = sphi 0, %s50
      %s72 = sphi 0, %s74
      %s75 = sphi 0, %s72
      %s76 = sphi 0, %s75
      %s92 = sphi 0, %s76
      %s98 = sphi 0, %s100
      %s101 = sphi 0, %s98
      %s102 = sphi 0, %s101
      %s118 = sphi 0, %s102
      %s124 = sphi 0, %s126
      %s127 = sphi 0, %s124
      %s128 = sphi 0, %s127
      %s144 = sphi 0, %s128
      %s148 = sphi 0, %s148
      %s150 = sphi 0, %s148
      %s151 = sphi 0, %s150
      %s165 = sphi 0, %s151
      %s169 = sphi 0, %s169
      %s171 = sphi 0, %s169
      %s172 = sphi 0, %s171
      %s186 = sphi 0, %s172
      %s190 = sphi 0, %s190
      %s192 = sphi 0, %s190
      %s193 = sphi 0, %s192
      %s207 = sphi 0, %s193
      %s211 = sphi 0, %s211
      %s213 = sphi 0, %s211
      %s214 = sphi 0, %s213
      %s228 = sphi 0, %s214
      %s232 = sphi 0, %s232
      %s234 = sphi 0, %s232
      %s235 = sphi 0, %s234
      %s249 = sphi 0, %s235
      %s253 = sphi 0, %s253
      %s255 = sphi 0, %s253
      %s256 = sphi 0, %s255
      %s270 = sphi 0, %s256
      %s274 = sphi 0, %s274
      %s276 = sphi 0, %s274
      %s277 = sphi 0, %s276
      %s291 = sphi 0, %s277
      %s295 = sphi 0, %s295
      %s297 = sphi 0, %s295
      %s298 = sphi 0, %s297
      %s312 = sphi 0, %s298
      %s316 = sphi 0, %s316
      %s318 = sphi 0, %s316
      %s319 = sphi 0, %s318
      %s333 = sphi 0, %s319
      %s337 = sphi 0, %s337
      %s339 = sphi 0, %s337
      %s340 = sphi 0, %s339
      %s354 = sphi 0, %s340
      %s358 = sphi 0, %s358
      %s360 = sphi 0, %s358
      %s361 = sphi 0, %s360
      %s375 = sphi 0, %s361
      %s379 = sphi 0, %s379
      %s381 = sphi 0, %s379
      %s382 = sphi 0, %s381
      %s396 = sphi 0, %s382
      %s400 = sphi 0, %s400
      %s402 = sphi 0, %s400
      %s403 = sphi 0, %s402
      %s417 = sphi 0, %s403
      %s421 = sphi 0, %s421
      %s423 = sphi 0, %s421
      %s424 = sphi 0, %s423
      %s438 = sphi 0, %s424
      %s442 = sphi 0, %s442
      %s444 = sphi 0, %s442
      %s445 = sphi 0, %s444
      %s459 = sphi 0, %s445
      %s463 = sphi 0, %s463
      %s465 = sphi 0, %s463
      %s466 = sphi 0, %s465
      %s480 = sphi 0, %s466
      %s484 = sphi 0, %s484
      %s486 = sphi 0, %s484
      %s487 = sphi 0, %s486
      %s501 = sphi 0, %s487
      %s505 = sphi 0, %s505
      %s507 = sphi 0, %s505
      %s508 = sphi 0, %s507
      %s522 = sphi 0, %s508
      %s526 = sphi 0, %s526
      %s528 = sphi 0, %s526
      %s529 = sphi 0, %s528
      %s543 = sphi 0, %s529
      %s547 = sphi 0, %s547
      %s549 = sphi 0, %s547
      %s550 = sphi 0, %s549
      %s564 = sphi 0, %s550
      %s570 = sphi 0, %s572
      %s573 = sphi 0, %s570
      %s574 = sphi 0, %s573
      %s590 = sphi 0, %s574
    $region4: #{seq2seq_forward.7} parent=1 // loop_header_branch
      %39 = sbr.rel (%p37) target = $region8
    $region5: #{seq2seq_forward.7} parent=1 // loop_body
      %s41 = ssub.s32 %s36, 1
      %s42 = ssub.s32 %s36, 2
      %s43 = sadd.s32 %s36, 1
      %s44 = ssub.s32 %s36, %s43
      %p45 = scmp.eq.s32.totalorder %s44, 0
      %s47 = sadd.s32 %s46, 1
      %s48 = scalar_select %p45, %s46, %s47
      %p51 = pneg %p45
      %p52 = scmp.eq.s32.totalorder %s36, 1
      %p53 = por %p51, %p52
      %p54 = scmp.ne.s32.totalorder %s46, %s49
      %p55 = scmp.eq.s32.totalorder %s36, 0
      %p56 = por %p54, %p55
      %p57 = scmp.ne.s32.totalorder %s46, %s49
      %p58 = scmp.eq.s32.totalorder %s41, 1
      %p59 = por %p57, %p58
      %p60 = scmp.ne.s32.totalorder %s49, %s50
      %p61 = scmp.eq.s32.totalorder %s41, 0
      %p62 = por %p60, %p61
      %p63 = scmp.ne.s32.totalorder %s49, %s50
      %p64 = scmp.eq.s32.totalorder %s42, 1
      %p65 = por %p63, %p64
      %p67 = scmp.ne.s32.totalorder %s50, %s66
      %p68 = scmp.eq.s32.totalorder %s42, 0
      %p69 = por %p67, %p68
      %s70 = ssub.s32 %s36, %s43
      %p71 = scmp.eq.s32.totalorder %s70, 0
      %s73 = sadd.s32 %s72, 1
      %s74 = scalar_select %p71, %s72, %s73
      %p77 = pneg %p71
      %p78 = scmp.eq.s32.totalorder %s36, 1
      %p79 = por %p77, %p78
      %p80 = scmp.ne.s32.totalorder %s72, %s75
      %p81 = scmp.eq.s32.totalorder %s36, 0
      %p82 = por %p80, %p81
      %p83 = scmp.ne.s32.totalorder %s72, %s75
      %p84 = scmp.eq.s32.totalorder %s41, 1
      %p85 = por %p83, %p84
      %p86 = scmp.ne.s32.totalorder %s75, %s76
      %p87 = scmp.eq.s32.totalorder %s41, 0
      %p88 = por %p86, %p87
      %p89 = scmp.ne.s32.totalorder %s75, %s76
      %p90 = scmp.eq.s32.totalorder %s42, 1
      %p91 = por %p89, %p90
      %p93 = scmp.ne.s32.totalorder %s76, %s92
      %p94 = scmp.eq.s32.totalorder %s42, 0
      %p95 = por %p93, %p94
      %s96 = ssub.s32 %s36, %s43
      %p97 = scmp.eq.s32.totalorder %s96, 0
      %s99 = sadd.s32 %s98, 1
      %s100 = scalar_select %p97, %s98, %s99
      %p103 = pneg %p97
      %p104 = scmp.eq.s32.totalorder %s36, 1
      %p105 = por %p103, %p104
      %p106 = scmp.ne.s32.totalorder %s98, %s101
      %p107 = scmp.eq.s32.totalorder %s36, 0
      %p108 = por %p106, %p107
      %p109 = scmp.ne.s32.totalorder %s98, %s101
      %p110 = scmp.eq.s32.totalorder %s41, 1
      %p111 = por %p109, %p110
      %p112 = scmp.ne.s32.totalorder %s101, %s102
      %p113 = scmp.eq.s32.totalorder %s41, 0
      %p114 = por %p112, %p113
      %p115 = scmp.ne.s32.totalorder %s101, %s102
      %p116 = scmp.eq.s32.totalorder %s42, 1
      %p117 = por %p115, %p116
      %p119 = scmp.ne.s32.totalorder %s102, %s118
      %p120 = scmp.eq.s32.totalorder %s42, 0
      %p121 = por %p119, %p120
      %s122 = ssub.s32 %s36, %s43
      %p123 = scmp.eq.s32.totalorder %s122, 0
      %s125 = sadd.s32 %s124, 1
      %s126 = scalar_select %p123, %s124, %s125
      %p129 = pneg %p123
      %p130 = scmp.eq.s32.totalorder %s36, 1
      %p131 = por %p129, %p130
      %p132 = scmp.ne.s32.totalorder %s124, %s127
      %p133 = scmp.eq.s32.totalorder %s36, 0
      %p134 = por %p132, %p133
      %p135 = scmp.ne.s32.totalorder %s124, %s127
      %p136 = scmp.eq.s32.totalorder %s41, 1
      %p137 = por %p135, %p136
      %p138 = scmp.ne.s32.totalorder %s127, %s128
      %p139 = scmp.eq.s32.totalorder %s41, 0
      %p140 = por %p138, %p139
      %p141 = scmp.ne.s32.totalorder %s127, %s128
      %p142 = scmp.eq.s32.totalorder %s42, 1
      %p143 = por %p141, %p142
      %p145 = scmp.ne.s32.totalorder %s128, %s144
      %p146 = scmp.eq.s32.totalorder %s42, 0
      %p147 = por %p145, %p146
      %s149 = sadd.s32 %s148, 1
      %p152 = scmp.eq.s32.totalorder %s36, 1
      %p153 = scmp.ne.s32.totalorder %s148, %s150
      %p154 = scmp.eq.s32.totalorder %s36, 0
      %p155 = por %p153, %p154
      %p156 = scmp.ne.s32.totalorder %s148, %s150
      %p157 = scmp.eq.s32.totalorder %s41, 1
      %p158 = por %p156, %p157
      %p159 = scmp.ne.s32.totalorder %s150, %s151
      %p160 = scmp.eq.s32.totalorder %s41, 0
      %p161 = por %p159, %p160
      %p162 = scmp.ne.s32.totalorder %s150, %s151
      %p163 = scmp.eq.s32.totalorder %s42, 1
      %p164 = por %p162, %p163
      %p166 = scmp.ne.s32.totalorder %s151, %s165
      %p167 = scmp.eq.s32.totalorder %s42, 0
      %p168 = por %p166, %p167
      %s170 = sadd.s32 %s169, 1
      %p173 = scmp.eq.s32.totalorder %s36, 1
      %p174 = scmp.ne.s32.totalorder %s169, %s171
      %p175 = scmp.eq.s32.totalorder %s36, 0
      %p176 = por %p174, %p175
      %p177 = scmp.ne.s32.totalorder %s169, %s171
      %p178 = scmp.eq.s32.totalorder %s41, 1
      %p179 = por %p177, %p178
      %p180 = scmp.ne.s32.totalorder %s171, %s172
      %p181 = scmp.eq.s32.totalorder %s41, 0
      %p182 = por %p180, %p181
      %p183 = scmp.ne.s32.totalorder %s171, %s172
      %p184 = scmp.eq.s32.totalorder %s42, 1
      %p185 = por %p183, %p184
      %p187 = scmp.ne.s32.totalorder %s172, %s186
      %p188 = scmp.eq.s32.totalorder %s42, 0
      %p189 = por %p187, %p188
      %s191 = sadd.s32 %s190, 1
      %p194 = scmp.eq.s32.totalorder %s36, 1
      %p195 = scmp.ne.s32.totalorder %s190, %s192
      %p196 = scmp.eq.s32.totalorder %s36, 0
      %p197 = por %p195, %p196
      %p198 = scmp.ne.s32.totalorder %s190, %s192
      %p199 = scmp.eq.s32.totalorder %s41, 1
      %p200 = por %p198, %p199
      %p201 = scmp.ne.s32.totalorder %s192, %s193
      %p202 = scmp.eq.s32.totalorder %s41, 0
      %p203 = por %p201, %p202
      %p204 = scmp.ne.s32.totalorder %s192, %s193
      %p205 = scmp.eq.s32.totalorder %s42, 1
      %p206 = por %p204, %p205
      %p208 = scmp.ne.s32.totalorder %s193, %s207
      %p209 = scmp.eq.s32.totalorder %s42, 0
      %p210 = por %p208, %p209
      %s212 = sadd.s32 %s211, 1
      %p215 = scmp.eq.s32.totalorder %s36, 1
      %p216 = scmp.ne.s32.totalorder %s211, %s213
      %p217 = scmp.eq.s32.totalorder %s36, 0
      %p218 = por %p216, %p217
      %p219 = scmp.ne.s32.totalorder %s211, %s213
      %p220 = scmp.eq.s32.totalorder %s41, 1
      %p221 = por %p219, %p220
      %p222 = scmp.ne.s32.totalorder %s213, %s214
      %p223 = scmp.eq.s32.totalorder %s41, 0
      %p224 = por %p222, %p223
      %p225 = scmp.ne.s32.totalorder %s213, %s214
      %p226 = scmp.eq.s32.totalorder %s42, 1
      %p227 = por %p225, %p226
      %p229 = scmp.ne.s32.totalorder %s214, %s228
      %p230 = scmp.eq.s32.totalorder %s42, 0
      %p231 = por %p229, %p230
      %s233 = sadd.s32 %s232, 1
      %p236 = scmp.eq.s32.totalorder %s36, 1
      %p237 = scmp.ne.s32.totalorder %s232, %s234
      %p238 = scmp.eq.s32.totalorder %s36, 0
      %p239 = por %p237, %p238
      %p240 = scmp.ne.s32.totalorder %s232, %s234
      %p241 = scmp.eq.s32.totalorder %s41, 1
      %p242 = por %p240, %p241
      %p243 = scmp.ne.s32.totalorder %s234, %s235
      %p244 = scmp.eq.s32.totalorder %s41, 0
      %p245 = por %p243, %p244
      %p246 = scmp.ne.s32.totalorder %s234, %s235
      %p247 = scmp.eq.s32.totalorder %s42, 1
      %p248 = por %p246, %p247
      %p250 = scmp.ne.s32.totalorder %s235, %s249
      %p251 = scmp.eq.s32.totalorder %s42, 0
      %p252 = por %p250, %p251
      %s254 = sadd.s32 %s253, 1
      %p257 = scmp.eq.s32.totalorder %s36, 1
      %p258 = scmp.ne.s32.totalorder %s253, %s255
      %p259 = scmp.eq.s32.totalorder %s36, 0
      %p260 = por %p258, %p259
      %p261 = scmp.ne.s32.totalorder %s253, %s255
      %p262 = scmp.eq.s32.totalorder %s41, 1
      %p263 = por %p261, %p262
      %p264 = scmp.ne.s32.totalorder %s255, %s256
      %p265 = scmp.eq.s32.totalorder %s41, 0
      %p266 = por %p264, %p265
      %p267 = scmp.ne.s32.totalorder %s255, %s256
      %p268 = scmp.eq.s32.totalorder %s42, 1
      %p269 = por %p267, %p268
      %p271 = scmp.ne.s32.totalorder %s256, %s270
      %p272 = scmp.eq.s32.totalorder %s42, 0
      %p273 = por %p271, %p272
      %s275 = sadd.s32 %s274, 1
      %p278 = scmp.eq.s32.totalorder %s36, 1
      %p279 = scmp.ne.s32.totalorder %s274, %s276
      %p280 = scmp.eq.s32.totalorder %s36, 0
      %p281 = por %p279, %p280
      %p282 = scmp.ne.s32.totalorder %s274, %s276
      %p283 = scmp.eq.s32.totalorder %s41, 1
      %p284 = por %p282, %p283
      %p285 = scmp.ne.s32.totalorder %s276, %s277
      %p286 = scmp.eq.s32.totalorder %s41, 0
      %p287 = por %p285, %p286
      %p288 = scmp.ne.s32.totalorder %s276, %s277
      %p289 = scmp.eq.s32.totalorder %s42, 1
      %p290 = por %p288, %p289
      %p292 = scmp.ne.s32.totalorder %s277, %s291
      %p293 = scmp.eq.s32.totalorder %s42, 0
      %p294 = por %p292, %p293
      %s296 = sadd.s32 %s295, 1
      %p299 = scmp.eq.s32.totalorder %s36, 1
      %p300 = scmp.ne.s32.totalorder %s295, %s297
      %p301 = scmp.eq.s32.totalorder %s36, 0
      %p302 = por %p300, %p301
      %p303 = scmp.ne.s32.totalorder %s295, %s297
      %p304 = scmp.eq.s32.totalorder %s41, 1
      %p305 = por %p303, %p304
      %p306 = scmp.ne.s32.totalorder %s297, %s298
      %p307 = scmp.eq.s32.totalorder %s41, 0
      %p308 = por %p306, %p307
      %p309 = scmp.ne.s32.totalorder %s297, %s298
      %p310 = scmp.eq.s32.totalorder %s42, 1
      %p311 = por %p309, %p310
      %p313 = scmp.ne.s32.totalorder %s298, %s312
      %p314 = scmp.eq.s32.totalorder %s42, 0
      %p315 = por %p313, %p314
      %s317 = sadd.s32 %s316, 1
      %p320 = scmp.eq.s32.totalorder %s36, 1
      %p321 = scmp.ne.s32.totalorder %s316, %s318
      %p322 = scmp.eq.s32.totalorder %s36, 0
      %p323 = por %p321, %p322
      %p324 = scmp.ne.s32.totalorder %s316, %s318
      %p325 = scmp.eq.s32.totalorder %s41, 1
      %p326 = por %p324, %p325
      %p327 = scmp.ne.s32.totalorder %s318, %s319
      %p328 = scmp.eq.s32.totalorder %s41, 0
      %p329 = por %p327, %p328
      %p330 = scmp.ne.s32.totalorder %s318, %s319
      %p331 = scmp.eq.s32.totalorder %s42, 1
      %p332 = por %p330, %p331
      %p334 = scmp.ne.s32.totalorder %s319, %s333
      %p335 = scmp.eq.s32.totalorder %s42, 0
      %p336 = por %p334, %p335
      %s338 = sadd.s32 %s337, 1
      %p341 = scmp.eq.s32.totalorder %s36, 1
      %p342 = scmp.ne.s32.totalorder %s337, %s339
      %p343 = scmp.eq.s32.totalorder %s36, 0
      %p344 = por %p342, %p343
      %p345 = scmp.ne.s32.totalorder %s337, %s339
      %p346 = scmp.eq.s32.totalorder %s41, 1
      %p347 = por %p345, %p346
      %p348 = scmp.ne.s32.totalorder %s339, %s340
      %p349 = scmp.eq.s32.totalorder %s41, 0
      %p350 = por %p348, %p349
      %p351 = scmp.ne.s32.totalorder %s339, %s340
      %p352 = scmp.eq.s32.totalorder %s42, 1
      %p353 = por %p351, %p352
      %p355 = scmp.ne.s32.totalorder %s340, %s354
      %p356 = scmp.eq.s32.totalorder %s42, 0
      %p357 = por %p355, %p356
      %s359 = sadd.s32 %s358, 1
      %p362 = scmp.eq.s32.totalorder %s36, 1
      %p363 = scmp.ne.s32.totalorder %s358, %s360
      %p364 = scmp.eq.s32.totalorder %s36, 0
      %p365 = por %p363, %p364
      %p366 = scmp.ne.s32.totalorder %s358, %s360
      %p367 = scmp.eq.s32.totalorder %s41, 1
      %p368 = por %p366, %p367
      %p369 = scmp.ne.s32.totalorder %s360, %s361
      %p370 = scmp.eq.s32.totalorder %s41, 0
      %p371 = por %p369, %p370
      %p372 = scmp.ne.s32.totalorder %s360, %s361
      %p373 = scmp.eq.s32.totalorder %s42, 1
      %p374 = por %p372, %p373
      %p376 = scmp.ne.s32.totalorder %s361, %s375
      %p377 = scmp.eq.s32.totalorder %s42, 0
      %p378 = por %p376, %p377
      %s380 = sadd.s32 %s379, 1
      %p383 = scmp.eq.s32.totalorder %s36, 1
      %p384 = scmp.ne.s32.totalorder %s379, %s381
      %p385 = scmp.eq.s32.totalorder %s36, 0
      %p386 = por %p384, %p385
      %p387 = scmp.ne.s32.totalorder %s379, %s381
      %p388 = scmp.eq.s32.totalorder %s41, 1
      %p389 = por %p387, %p388
      %p390 = scmp.ne.s32.totalorder %s381, %s382
      %p391 = scmp.eq.s32.totalorder %s41, 0
      %p392 = por %p390, %p391
      %p393 = scmp.ne.s32.totalorder %s381, %s382
      %p394 = scmp.eq.s32.totalorder %s42, 1
      %p395 = por %p393, %p394
      %p397 = scmp.ne.s32.totalorder %s382, %s396
      %p398 = scmp.eq.s32.totalorder %s42, 0
      %p399 = por %p397, %p398
      %s401 = sadd.s32 %s400, 1
      %p404 = scmp.eq.s32.totalorder %s36, 1
      %p405 = scmp.ne.s32.totalorder %s400, %s402
      %p406 = scmp.eq.s32.totalorder %s36, 0
      %p407 = por %p405, %p406
      %p408 = scmp.ne.s32.totalorder %s400, %s402
      %p409 = scmp.eq.s32.totalorder %s41, 1
      %p410 = por %p408, %p409
      %p411 = scmp.ne.s32.totalorder %s402, %s403
      %p412 = scmp.eq.s32.totalorder %s41, 0
      %p413 = por %p411, %p412
      %p414 = scmp.ne.s32.totalorder %s402, %s403
      %p415 = scmp.eq.s32.totalorder %s42, 1
      %p416 = por %p414, %p415
      %p418 = scmp.ne.s32.totalorder %s403, %s417
      %p419 = scmp.eq.s32.totalorder %s42, 0
      %p420 = por %p418, %p419
      %s422 = sadd.s32 %s421, 1
      %p425 = scmp.eq.s32.totalorder %s36, 1
      %p426 = scmp.ne.s32.totalorder %s421, %s423
      %p427 = scmp.eq.s32.totalorder %s36, 0
      %p428 = por %p426, %p427
      %p429 = scmp.ne.s32.totalorder %s421, %s423
      %p430 = scmp.eq.s32.totalorder %s41, 1
      %p431 = por %p429, %p430
      %p432 = scmp.ne.s32.totalorder %s423, %s424
      %p433 = scmp.eq.s32.totalorder %s41, 0
      %p434 = por %p432, %p433
      %p435 = scmp.ne.s32.totalorder %s423, %s424
      %p436 = scmp.eq.s32.totalorder %s42, 1
      %p437 = por %p435, %p436
      %p439 = scmp.ne.s32.totalorder %s424, %s438
      %p440 = scmp.eq.s32.totalorder %s42, 0
      %p441 = por %p439, %p440
      %s443 = sadd.s32 %s442, 1
      %p446 = scmp.eq.s32.totalorder %s36, 1
      %p447 = scmp.ne.s32.totalorder %s442, %s444
      %p448 = scmp.eq.s32.totalorder %s36, 0
      %p449 = por %p447, %p448
      %p450 = scmp.ne.s32.totalorder %s442, %s444
      %p451 = scmp.eq.s32.totalorder %s41, 1
      %p452 = por %p450, %p451
      %p453 = scmp.ne.s32.totalorder %s444, %s445
      %p454 = scmp.eq.s32.totalorder %s41, 0
      %p455 = por %p453, %p454
      %p456 = scmp.ne.s32.totalorder %s444, %s445
      %p457 = scmp.eq.s32.totalorder %s42, 1
      %p458 = por %p456, %p457
      %p460 = scmp.ne.s32.totalorder %s445, %s459
      %p461 = scmp.eq.s32.totalorder %s42, 0
      %p462 = por %p460, %p461
      %s464 = sadd.s32 %s463, 1
      %p467 = scmp.eq.s32.totalorder %s36, 1
      %p468 = scmp.ne.s32.totalorder %s463, %s465
      %p469 = scmp.eq.s32.totalorder %s36, 0
      %p470 = por %p468, %p469
      %p471 = scmp.ne.s32.totalorder %s463, %s465
      %p472 = scmp.eq.s32.totalorder %s41, 1
      %p473 = por %p471, %p472
      %p474 = scmp.ne.s32.totalorder %s465, %s466
      %p475 = scmp.eq.s32.totalorder %s41, 0
      %p476 = por %p474, %p475
      %p477 = scmp.ne.s32.totalorder %s465, %s466
      %p478 = scmp.eq.s32.totalorder %s42, 1
      %p479 = por %p477, %p478
      %p481 = scmp.ne.s32.totalorder %s466, %s480
      %p482 = scmp.eq.s32.totalorder %s42, 0
      %p483 = por %p481, %p482
      %s485 = sadd.s32 %s484, 1
      %p488 = scmp.eq.s32.totalorder %s36, 1
      %p489 = scmp.ne.s32.totalorder %s484, %s486
      %p490 = scmp.eq.s32.totalorder %s36, 0
      %p491 = por %p489, %p490
      %p492 = scmp.ne.s32.totalorder %s484, %s486
      %p493 = scmp.eq.s32.totalorder %s41, 1
      %p494 = por %p492, %p493
      %p495 = scmp.ne.s32.totalorder %s486, %s487
      %p496 = scmp.eq.s32.totalorder %s41, 0
      %p497 = por %p495, %p496
      %p498 = scmp.ne.s32.totalorder %s486, %s487
      %p499 = scmp.eq.s32.totalorder %s42, 1
      %p500 = por %p498, %p499
      %p502 = scmp.ne.s32.totalorder %s487, %s501
      %p503 = scmp.eq.s32.totalorder %s42, 0
      %p504 = por %p502, %p503
      %s506 = sadd.s32 %s505, 1
      %p509 = scmp.eq.s32.totalorder %s36, 1
      %p510 = scmp.ne.s32.totalorder %s505, %s507
      %p511 = scmp.eq.s32.totalorder %s36, 0
      %p512 = por %p510, %p511
      %p513 = scmp.ne.s32.totalorder %s505, %s507
      %p514 = scmp.eq.s32.totalorder %s41, 1
      %p515 = por %p513, %p514
      %p516 = scmp.ne.s32.totalorder %s507, %s508
      %p517 = scmp.eq.s32.totalorder %s41, 0
      %p518 = por %p516, %p517
      %p519 = scmp.ne.s32.totalorder %s507, %s508
      %p520 = scmp.eq.s32.totalorder %s42, 1
      %p521 = por %p519, %p520
      %p523 = scmp.ne.s32.totalorder %s508, %s522
      %p524 = scmp.eq.s32.totalorder %s42, 0
      %p525 = por %p523, %p524
      %s527 = sadd.s32 %s526, 1
      %p530 = scmp.eq.s32.totalorder %s36, 1
      %p531 = scmp.ne.s32.totalorder %s526, %s528
      %p532 = scmp.eq.s32.totalorder %s36, 0
      %p533 = por %p531, %p532
      %p534 = scmp.ne.s32.totalorder %s526, %s528
      %p535 = scmp.eq.s32.totalorder %s41, 1
      %p536 = por %p534, %p535
      %p537 = scmp.ne.s32.totalorder %s528, %s529
      %p538 = scmp.eq.s32.totalorder %s41, 0
      %p539 = por %p537, %p538
      %p540 = scmp.ne.s32.totalorder %s528, %s529
      %p541 = scmp.eq.s32.totalorder %s42, 1
      %p542 = por %p540, %p541
      %p544 = scmp.ne.s32.totalorder %s529, %s543
      %p545 = scmp.eq.s32.totalorder %s42, 0
      %p546 = por %p544, %p545
      %s548 = sadd.s32 %s547, 1
      %p551 = scmp.eq.s32.totalorder %s36, 1
      %p552 = scmp.ne.s32.totalorder %s547, %s549
      %p553 = scmp.eq.s32.totalorder %s36, 0
      %p554 = por %p552, %p553
      %p555 = scmp.ne.s32.totalorder %s547, %s549
      %p556 = scmp.eq.s32.totalorder %s41, 1
      %p557 = por %p555, %p556
      %p558 = scmp.ne.s32.totalorder %s549, %s550
      %p559 = scmp.eq.s32.totalorder %s41, 0
      %p560 = por %p558, %p559
      %p561 = scmp.ne.s32.totalorder %s549, %s550
      %p562 = scmp.eq.s32.totalorder %s42, 1
      %p563 = por %p561, %p562
      %p565 = scmp.ne.s32.totalorder %s550, %s564
      %p566 = scmp.eq.s32.totalorder %s42, 0
      %p567 = por %p565, %p566
      %s568 = ssub.s32 %s36, %s43
      %p569 = scmp.eq.s32.totalorder %s568, 0
      %s571 = sadd.s32 %s570, 1
      %s572 = scalar_select %p569, %s570, %s571
      %p575 = pneg %p569
      %p576 = scmp.eq.s32.totalorder %s36, 1
      %p577 = por %p575, %p576
      %p578 = scmp.ne.s32.totalorder %s570, %s573
      %p579 = scmp.eq.s32.totalorder %s36, 0
      %p580 = por %p578, %p579
      %p581 = scmp.ne.s32.totalorder %s570, %s573
      %p582 = scmp.eq.s32.totalorder %s41, 1
      %p583 = por %p581, %p582
      %p584 = scmp.ne.s32.totalorder %s573, %s574
      %p585 = scmp.eq.s32.totalorder %s41, 0
      %p586 = por %p584, %p585
      %p587 = scmp.ne.s32.totalorder %s573, %s574
      %p588 = scmp.eq.s32.totalorder %s42, 1
      %p589 = por %p587, %p588
      %p591 = scmp.ne.s32.totalorder %s574, %s590
      %p592 = scmp.eq.s32.totalorder %s42, 0
      %p593 = por %p591, %p592
      %p594 = scmp.le.s32.totalorder 1, %s36
      %p595 = scmp.lt.s32.totalorder %s36, 3
      %p596 = pnand %p594, %p595
      %p597 = pneg %p596
      // Predicated region
      $region9: #{seq2seq_forward.7} parent=5 // pred_check
        _
      $region10: #{seq2seq_forward.7} parent=5 // pred_check_branch
        %599 = sbr.rel (%p596) target = $region12
      $region11: #{seq2seq_forward.7} parent=5 // pred_region
        %s600 = ssub.s32 %s36, 1
        // Predicated region
        $region13: #{seq2seq_forward.7} parent=11 // pred_check
          %p601 = pneg %p161
        $region14: #{seq2seq_forward.7} parent=11 // pred_check_branch
          %603 = sbr.rel (%p601) target = $region16
        $region15: #{seq2seq_forward.7} parent=11 // pred_region
          _
        $region16: #{seq2seq_forward.7} parent=11 // pred_fallthru
          _
        // Predicated region
        $region17: #{seq2seq_forward.7} parent=11 // pred_check
          %p604 = pneg %p182
        $region18: #{seq2seq_forward.7} parent=11 // pred_check_branch
          %606 = sbr.rel (%p604) target = $region20
        $region19: #{seq2seq_forward.7} parent=11 // pred_region
          _
        $region20: #{seq2seq_forward.7} parent=11 // pred_fallthru
          _
        // Predicated region
        $region21: #{seq2seq_forward.7} parent=11 // pred_check
          %p607 = pneg %p203
        $region22: #{seq2seq_forward.7} parent=11 // pred_check_branch
          %609 = sbr.rel (%p607) target = $region24
        $region23: #{seq2seq_forward.7} parent=11 // pred_region
          _
        $region24: #{seq2seq_forward.7} parent=11 // pred_fallthru
          _
        // Predicated region
        $region25: #{seq2seq_forward.7} parent=11 // pred_check
          %p610 = pneg %p224
        $region26: #{seq2seq_forward.7} parent=11 // pred_check_branch
          %612 = sbr.rel (%p610) target = $region28
        $region27: #{seq2seq_forward.7} parent=11 // pred_region
          _
        $region28: #{seq2seq_forward.7} parent=11 // pred_fallthru
          _
        // Predicated region
        $region29: #{seq2seq_forward.7} parent=11 // pred_check
          %p613 = pneg %p245
        $region30: #{seq2seq_forward.7} parent=11 // pred_check_branch
          %615 = sbr.rel (%p613) target = $region32
        $region31: #{seq2seq_forward.7} parent=11 // pred_region
          %617 = vsyncadd [#allocation3], 0
          %s619 = sshll.u32 %s8, 4
          %s620 = int_to_ptr.hbm [resolvable:$true] %s619
          %s621 = sshll.u32 [#allocation2], 4
          %s622 = int_to_ptr.vmem [resolvable:$true] %s621
          %624 = dma.hbm_to_vmem [thread:$0]  %s620, 16, %s622, [#allocation3]
        $region32: #{seq2seq_forward.7} parent=11 // pred_fallthru
          _
        // Predicated region
        $region33: #{seq2seq_forward.7} parent=11 // pred_check
          %p625 = pneg %p266
        $region34: #{seq2seq_forward.7} parent=11 // pred_check_branch
          %627 = sbr.rel (%p625) target = $region36
        $region35: #{seq2seq_forward.7} parent=11 // pred_region
          %629 = vsyncadd [#allocation5], 0
          %s631 = sshll.u32 %s9, 4
          %s632 = int_to_ptr.hbm [resolvable:$true] %s631
          %s633 = sshll.u32 [#allocation4], 4
          %s634 = int_to_ptr.vmem [resolvable:$true] %s633
          %636 = dma.hbm_to_vmem [thread:$0]  %s632, 16, %s634, [#allocation5]
        $region36: #{seq2seq_forward.7} parent=11 // pred_fallthru
          _
        // Predicated region
        $region37: #{seq2seq_forward.7} parent=11 // pred_check
          %p637 = pneg %p287
        $region38: #{seq2seq_forward.7} parent=11 // pred_check_branch
          %639 = sbr.rel (%p637) target = $region40
        $region39: #{seq2seq_forward.7} parent=11 // pred_region
          _
        $region40: #{seq2seq_forward.7} parent=11 // pred_fallthru
          _
        // Predicated region
        $region41: #{seq2seq_forward.7} parent=11 // pred_check
          %p640 = pneg %p308
        $region42: #{seq2seq_forward.7} parent=11 // pred_check_branch
          %642 = sbr.rel (%p640) target = $region44
        $region43: #{seq2seq_forward.7} parent=11 // pred_region
          %644 = vsyncadd [#allocation5], 0
          %s646 = sshll.u32 %s11, 4
          %s647 = int_to_ptr.hbm [resolvable:$true] %s646
          %s648 = sshll.u32 [#allocation6], 4
          %s649 = int_to_ptr.vmem [resolvable:$true] %s648
          %651 = dma.hbm_to_vmem [thread:$0]  %s647, 16, %s649, [#allocation5]
        $region44: #{seq2seq_forward.7} parent=11 // pred_fallthru
          _
        // Predicated region
        $region45: #{seq2seq_forward.7} parent=11 // pred_check
          %p652 = pneg %p329
        $region46: #{seq2seq_forward.7} parent=11 // pred_check_branch
          %654 = sbr.rel (%p652) target = $region48
        $region47: #{seq2seq_forward.7} parent=11 // pred_region
          _
        $region48: #{seq2seq_forward.7} parent=11 // pred_fallthru
          _
        // Predicated region
        $region49: #{seq2seq_forward.7} parent=11 // pred_check
          %p655 = pneg %p350
        $region50: #{seq2seq_forward.7} parent=11 // pred_check_branch
          %657 = sbr.rel (%p655) target = $region52
        $region51: #{seq2seq_forward.7} parent=11 // pred_region
          %659 = vsyncadd [#allocation8], 0
          %s661 = sshll.u32 %s13, 4
          %s662 = int_to_ptr.hbm [resolvable:$true] %s661
          %s663 = sshll.u32 [#allocation7], 4
          %s664 = int_to_ptr.vmem [resolvable:$true] %s663
          %666 = dma.hbm_to_vmem [thread:$0]  %s662, 16, %s664, [#allocation8]
        $region52: #{seq2seq_forward.7} parent=11 // pred_fallthru
          _
        // Predicated region
        $region53: #{seq2seq_forward.7} parent=11 // pred_check
          %p667 = pneg %p371
        $region54: #{seq2seq_forward.7} parent=11 // pred_check_branch
          %669 = sbr.rel (%p667) target = $region56
        $region55: #{seq2seq_forward.7} parent=11 // pred_region
          _
        $region56: #{seq2seq_forward.7} parent=11 // pred_fallthru
          _
        // Predicated region
        $region57: #{seq2seq_forward.7} parent=11 // pred_check
          %p670 = pneg %p392
        $region58: #{seq2seq_forward.7} parent=11 // pred_check_branch
          %672 = sbr.rel (%p670) target = $region60
        $region59: #{seq2seq_forward.7} parent=11 // pred_region
          %674 = vsyncadd [#allocation8], 0
          %s676 = sshll.u32 %s15, 4
          %s677 = int_to_ptr.hbm [resolvable:$true] %s676
          %s678 = sshll.u32 [#allocation9], 4
          %s679 = int_to_ptr.vmem [resolvable:$true] %s678
          %681 = dma.hbm_to_vmem [thread:$0]  %s677, 16, %s679, [#allocation8]
        $region60: #{seq2seq_forward.7} parent=11 // pred_fallthru
          _
        // Predicated region
        $region61: #{seq2seq_forward.7} parent=11 // pred_check
          %p682 = pneg %p413
        $region62: #{seq2seq_forward.7} parent=11 // pred_check_branch
          %684 = sbr.rel (%p682) target = $region64
        $region63: #{seq2seq_forward.7} parent=11 // pred_region
          %686 = vsyncadd [#allocation11], 0
          %s688 = sshll.u32 %s16, 4
          %s689 = int_to_ptr.hbm [resolvable:$true] %s688
          %s690 = sshll.u32 [#allocation10], 4
          %s691 = int_to_ptr.vmem [resolvable:$true] %s690
          %693 = dma.hbm_to_vmem [thread:$0]  %s689, 16, %s691, [#allocation11]
        $region64: #{seq2seq_forward.7} parent=11 // pred_fallthru
          _
        // Predicated region
        $region65: #{seq2seq_forward.7} parent=11 // pred_check
          %p694 = pneg %p434
        $region66: #{seq2seq_forward.7} parent=11 // pred_check_branch
          %696 = sbr.rel (%p694) target = $region68
        $region67: #{seq2seq_forward.7} parent=11 // pred_region
          %698 = vsyncadd [#allocation11], 0
          %s700 = sshll.u32 %s17, 4
          %s701 = int_to_ptr.hbm [resolvable:$true] %s700
          %s702 = sshll.u32 [#allocation12], 4
          %s703 = int_to_ptr.vmem [resolvable:$true] %s702
          %705 = dma.hbm_to_vmem [thread:$0]  %s701, 16, %s703, [#allocation11]
        $region68: #{seq2seq_forward.7} parent=11 // pred_fallthru
          _
        // Predicated region
        $region69: #{seq2seq_forward.7} parent=11 // pred_check
          %p706 = pneg %p455
        $region70: #{seq2seq_forward.7} parent=11 // pred_check_branch
          %708 = sbr.rel (%p706) target = $region72
        $region71: #{seq2seq_forward.7} parent=11 // pred_region
          _
        $region72: #{seq2seq_forward.7} parent=11 // pred_fallthru
          _
        // Predicated region
        $region73: #{seq2seq_forward.7} parent=11 // pred_check
          %p709 = pneg %p476
        $region74: #{seq2seq_forward.7} parent=11 // pred_check_branch
          %711 = sbr.rel (%p709) target = $region76
        $region75: #{seq2seq_forward.7} parent=11 // pred_region
          %713 = vsyncadd [#allocation14], 0
          %s715 = sshll.u32 %s19, 4
          %s716 = int_to_ptr.hbm [resolvable:$true] %s715
          %s717 = sshll.u32 [#allocation13], 4
          %s718 = int_to_ptr.vmem [resolvable:$true] %s717
          %720 = dma.hbm_to_vmem [thread:$0]  %s716, 16, %s718, [#allocation14]
        $region76: #{seq2seq_forward.7} parent=11 // pred_fallthru
          _
        // Predicated region
        $region77: #{seq2seq_forward.7} parent=11 // pred_check
          %p721 = pneg %p497
        $region78: #{seq2seq_forward.7} parent=11 // pred_check_branch
          %723 = sbr.rel (%p721) target = $region80
        $region79: #{seq2seq_forward.7} parent=11 // pred_region
          _
        $region80: #{seq2seq_forward.7} parent=11 // pred_fallthru
          _
        // Predicated region
        $region81: #{seq2seq_forward.7} parent=11 // pred_check
          %p724 = pneg %p518
        $region82: #{seq2seq_forward.7} parent=11 // pred_check_branch
          %726 = sbr.rel (%p724) target = $region84
        $region83: #{seq2seq_forward.7} parent=11 // pred_region
          %728 = vsyncadd [#allocation14], 0
          %s730 = sshll.u32 %s21, 4
          %s731 = int_to_ptr.hbm [resolvable:$true] %s730
          %s732 = sshll.u32 [#allocation15], 4
          %s733 = int_to_ptr.vmem [resolvable:$true] %s732
          %735 = dma.hbm_to_vmem [thread:$0]  %s731, 16, %s733, [#allocation14]
        $region84: #{seq2seq_forward.7} parent=11 // pred_fallthru
          _
        // Predicated region
        $region85: #{seq2seq_forward.7} parent=11 // pred_check
          %p736 = pneg %p539
        $region86: #{seq2seq_forward.7} parent=11 // pred_check_branch
          %738 = sbr.rel (%p736) target = $region88
        $region87: #{seq2seq_forward.7} parent=11 // pred_region
          %740 = vsyncadd [#allocation17], 0
          %s742 = sshll.u32 %s22, 4
          %s743 = int_to_ptr.hbm [resolvable:$true] %s742
          %s744 = sshll.u32 [#allocation16], 4
          %s745 = int_to_ptr.vmem [resolvable:$true] %s744
          %747 = dma.hbm_to_vmem [thread:$0]  %s743, 16, %s745, [#allocation17]
        $region88: #{seq2seq_forward.7} parent=11 // pred_fallthru
          _
        // Predicated region
        $region89: #{seq2seq_forward.7} parent=11 // pred_check
          %p748 = pneg %p560
        $region90: #{seq2seq_forward.7} parent=11 // pred_check_branch
          %750 = sbr.rel (%p748) target = $region92
        $region91: #{seq2seq_forward.7} parent=11 // pred_region
          %752 = vsyncadd [#allocation17], 0
          %s754 = sshll.u32 %s23, 4
          %s755 = int_to_ptr.hbm [resolvable:$true] %s754
          %s756 = sshll.u32 [#allocation18], 4
          %s757 = int_to_ptr.vmem [resolvable:$true] %s756
          %759 = dma.hbm_to_vmem [thread:$0]  %s755, 16, %s757, [#allocation17]
        $region92: #{seq2seq_forward.7} parent=11 // pred_fallthru
          _
      $region12: #{seq2seq_forward.7} parent=5 // pred_fallthru
        _
      %p760 = scmp.lt.s32.totalorder %s36, 2
      // Predicated region
      $region93: #{seq2seq_forward.7} parent=5 // pred_check
        %p761 = pneg %p760
      $region94: #{seq2seq_forward.7} parent=5 // pred_check_branch
        %763 = sbr.rel (%p761) target = $region96
      $region95: #{seq2seq_forward.7} parent=5 // pred_region
        // Predicated region
        $region97: #{seq2seq_forward.7} parent=95 // pred_check
          %p764 = pneg %p56
        $region98: #{seq2seq_forward.7} parent=95 // pred_check_branch
          %766 = sbr.rel (%p764) target = $region100
        $region99: #{seq2seq_forward.7} parent=95 // pred_region
          %p767 = scmp.lt.s32.totalorder %s36, 1
          %s768 = scalar_select %p767, %s36, 1
          %s769 = smul.addr %s768, 4
          %s770 = scalar_lea.vmem %s0, %s769
        $region100: #{seq2seq_forward.7} parent=95 // pred_fallthru
          _
        // Predicated region
        $region101: #{seq2seq_forward.7} parent=95 // pred_check
          %p771 = pneg %p82
        $region102: #{seq2seq_forward.7} parent=95 // pred_check_branch
          %773 = sbr.rel (%p771) target = $region104
        $region103: #{seq2seq_forward.7} parent=95 // pred_region
          %p774 = scmp.lt.s32.totalorder %s36, 1
          %s775 = scalar_select %p774, %s36, 1
          %s776 = smul.addr %s775, 4
          %s777 = scalar_lea.vmem %s1, %s776
        $region104: #{seq2seq_forward.7} parent=95 // pred_fallthru
          _
        // Predicated region
        $region105: #{seq2seq_forward.7} parent=95 // pred_check
          %p778 = pneg %p108
        $region106: #{seq2seq_forward.7} parent=95 // pred_check_branch
          %780 = sbr.rel (%p778) target = $region108
        $region107: #{seq2seq_forward.7} parent=95 // pred_region
          %p781 = scmp.lt.s32.totalorder %s36, 1
          %s782 = scalar_select %p781, %s36, 1
          %s783 = smul.addr %s782, 8
          %s784 = scalar_lea.vmem %s2, %s783
        $region108: #{seq2seq_forward.7} parent=95 // pred_fallthru
          _
        // Predicated region
        $region109: #{seq2seq_forward.7} parent=95 // pred_check
          %p785 = pneg %p134
        $region110: #{seq2seq_forward.7} parent=95 // pred_check_branch
          %787 = sbr.rel (%p785) target = $region112
        $region111: #{seq2seq_forward.7} parent=95 // pred_region
          %p788 = scmp.lt.s32.totalorder %s36, 1
          %s789 = scalar_select %p788, %s36, 1
          %s790 = smul.addr %s789, 8
          %s791 = scalar_lea.vmem %s3, %s790
        $region112: #{seq2seq_forward.7} parent=95 // pred_fallthru
          _
      $region96: #{seq2seq_forward.7} parent=5 // pred_fallthru
        _
      %p792 = scmp.le.s32.totalorder 1, %s36
      %p793 = scmp.lt.s32.totalorder %s36, 3
      %p794 = pnand %p792, %p793
      %p795 = pneg %p794
      // Predicated region
      $region113: #{seq2seq_forward.7} parent=5 // pred_check
        _
      $region114: #{seq2seq_forward.7} parent=5 // pred_check_branch
        %797 = sbr.rel (%p794) target = $region116
      $region115: #{seq2seq_forward.7} parent=5 // pred_region
        %s798 = ssub.s32 %s36, 1
        // Predicated region
        $region117: #{seq2seq_forward.7} parent=115 // pred_check
          %p799 = pneg %p245
        $region118: #{seq2seq_forward.7} parent=115 // pred_check_branch
          %801 = sbr.rel (%p799) target = $region120
        $region119: #{seq2seq_forward.7} parent=115 // pred_region
          %803 = dma.done [#allocation3], 16
        $region120: #{seq2seq_forward.7} parent=115 // pred_fallthru
          _
        // Predicated region
        $region121: #{seq2seq_forward.7} parent=115 // pred_check
          %p804 = pneg %p266
        $region122: #{seq2seq_forward.7} parent=115 // pred_check_branch
          %806 = sbr.rel (%p804) target = $region124
        $region123: #{seq2seq_forward.7} parent=115 // pred_region
          %808 = dma.done [#allocation5], 16
        $region124: #{seq2seq_forward.7} parent=115 // pred_fallthru
          _
        // Predicated region
        $region125: #{seq2seq_forward.7} parent=115 // pred_check
          %p809 = pneg %p308
        $region126: #{seq2seq_forward.7} parent=115 // pred_check_branch
          %811 = sbr.rel (%p809) target = $region128
        $region127: #{seq2seq_forward.7} parent=115 // pred_region
          %813 = dma.done [#allocation5], 16
        $region128: #{seq2seq_forward.7} parent=115 // pred_fallthru
          _
        // Predicated region
        $region129: #{seq2seq_forward.7} parent=115 // pred_check
          %p814 = pneg %p350
        $region130: #{seq2seq_forward.7} parent=115 // pred_check_branch
          %816 = sbr.rel (%p814) target = $region132
        $region131: #{seq2seq_forward.7} parent=115 // pred_region
          %818 = dma.done [#allocation8], 16
        $region132: #{seq2seq_forward.7} parent=115 // pred_fallthru
          _
        // Predicated region
        $region133: #{seq2seq_forward.7} parent=115 // pred_check
          %p819 = pneg %p392
        $region134: #{seq2seq_forward.7} parent=115 // pred_check_branch
          %821 = sbr.rel (%p819) target = $region136
        $region135: #{seq2seq_forward.7} parent=115 // pred_region
          %823 = dma.done [#allocation8], 16
        $region136: #{seq2seq_forward.7} parent=115 // pred_fallthru
          _
        // Predicated region
        $region137: #{seq2seq_forward.7} parent=115 // pred_check
          %p824 = pneg %p413
        $region138: #{seq2seq_forward.7} parent=115 // pred_check_branch
          %826 = sbr.rel (%p824) target = $region140
        $region139: #{seq2seq_forward.7} parent=115 // pred_region
          %828 = dma.done [#allocation11], 16
        $region140: #{seq2seq_forward.7} parent=115 // pred_fallthru
          _
        // Predicated region
        $region141: #{seq2seq_forward.7} parent=115 // pred_check
          %p829 = pneg %p434
        $region142: #{seq2seq_forward.7} parent=115 // pred_check_branch
          %831 = sbr.rel (%p829) target = $region144
        $region143: #{seq2seq_forward.7} parent=115 // pred_region
          %833 = dma.done [#allocation11], 16
        $region144: #{seq2seq_forward.7} parent=115 // pred_fallthru
          _
        // Predicated region
        $region145: #{seq2seq_forward.7} parent=115 // pred_check
          %p834 = pneg %p476
        $region146: #{seq2seq_forward.7} parent=115 // pred_check_branch
          %836 = sbr.rel (%p834) target = $region148
        $region147: #{seq2seq_forward.7} parent=115 // pred_region
          %838 = dma.done [#allocation14], 16
        $region148: #{seq2seq_forward.7} parent=115 // pred_fallthru
          _
        // Predicated region
        $region149: #{seq2seq_forward.7} parent=115 // pred_check
          %p839 = pneg %p518
        $region150: #{seq2seq_forward.7} parent=115 // pred_check_branch
          %841 = sbr.rel (%p839) target = $region152
        $region151: #{seq2seq_forward.7} parent=115 // pred_region
          %843 = dma.done [#allocation14], 16
        $region152: #{seq2seq_forward.7} parent=115 // pred_fallthru
          _
        // Predicated region
        $region153: #{seq2seq_forward.7} parent=115 // pred_check
          %p844 = pneg %p539
        $region154: #{seq2seq_forward.7} parent=115 // pred_check_branch
          %846 = sbr.rel (%p844) target = $region156
        $region155: #{seq2seq_forward.7} parent=115 // pred_region
          %848 = dma.done [#allocation17], 16
        $region156: #{seq2seq_forward.7} parent=115 // pred_fallthru
          _
        // Predicated region
        $region157: #{seq2seq_forward.7} parent=115 // pred_check
          %p849 = pneg %p560
        $region158: #{seq2seq_forward.7} parent=115 // pred_check_branch
          %851 = sbr.rel (%p849) target = $region160
        $region159: #{seq2seq_forward.7} parent=115 // pred_region
          %853 = dma.done [#allocation17], 16
        $region160: #{seq2seq_forward.7} parent=115 // pred_fallthru
          _
        %p854 = scmp.lt.s32.totalorder %s41, 1
        %s855 = scalar_select %p854, %s41, 1
        %s856 = smul.addr %s855, 4
        %s857 = scalar_lea.vmem %s0, %s856
        %p858 = pneg %p62
        %p859 = pneg %p59
        %p860 = scmp.lt.s32.totalorder %s41, 1
        %s861 = scalar_select %p860, %s41, 1
        %s862 = smul.addr %s861, 4
        %s863 = scalar_lea.vmem %s1, %s862
        %p864 = pneg %p88
        %p865 = pneg %p85
        %p866 = scmp.lt.s32.totalorder %s41, 1
        %s867 = scalar_select %p866, %s41, 1
        %s868 = smul.addr %s867, 8
        %s869 = scalar_lea.vmem %s2, %s868
        %p870 = pneg %p114
        %p871 = pneg %p111
        %p872 = scmp.lt.s32.totalorder %s41, 1
        %s873 = scalar_select %p872, %s41, 1
        %s874 = smul.addr %s873, 8
        %s875 = scalar_lea.vmem %s3, %s874
        %p876 = pneg %p140
        %p877 = pneg %p137
        %p878 = pneg %p161
        %p879 = pneg %p158
        %p880 = pneg %p182
        %p881 = pneg %p179
        %p882 = pneg %p203
        %p883 = pneg %p200
        %p884 = pneg %p224
        %p885 = pneg %p221
        %p886 = pneg %p245
        %p887 = pneg %p242
        %p888 = pneg %p266
        %p889 = pneg %p263
        %p890 = pneg %p287
        %p891 = pneg %p284
        %p892 = pneg %p308
        %p893 = pneg %p305
        %p894 = pneg %p329
        %p895 = pneg %p326
        %p896 = pneg %p350
        %p897 = pneg %p347
        %p898 = pneg %p371
        %p899 = pneg %p368
        %p900 = pneg %p392
        %p901 = pneg %p389
        %p902 = pneg %p413
        %p903 = pneg %p410
        %p904 = pneg %p434
        %p905 = pneg %p431
        %p906 = pneg %p455
        %p907 = pneg %p452
        %p908 = pneg %p476
        %p909 = pneg %p473
        %p910 = pneg %p497
        %p911 = pneg %p494
        %p912 = pneg %p518
        %p913 = pneg %p515
        %p914 = pneg %p539
        %p915 = pneg %p536
        %p916 = pneg %p560
        %p917 = pneg %p557
        %p918 = pneg %p586
        %p919 = pneg %p583
        %p920 = scmp.lt.s32.totalorder %s41, 1
        %s921 = scalar_select %p920, %s41, 1
        %s922 = smul.addr %s921, 4
        %s923 = scalar_lea.vmem %s24, %s922
        %p924 = scmp.lt.s32.totalorder %s41, 1
        %s925 = scalar_select %p924, %s41, 1
        %s926 = smul.addr %s925, 4
        %s927 = scalar_lea.vmem %s0, %s926
        %p928 = scmp.lt.s32.totalorder %s41, 1
        %s929 = scalar_select %p928, %s41, 1
        %s930 = smul.addr %s929, 4
        %s931 = scalar_lea.vmem %s1, %s930
        %p932 = scmp.lt.s32.totalorder %s41, 1
        %s933 = scalar_select %p932, %s41, 1
        %s934 = smul.addr %s933, 8
        %s935 = scalar_lea.vmem %s2, %s934
        %p936 = scmp.lt.s32.totalorder %s41, 1
        %s937 = scalar_select %p936, %s41, 1
        %s938 = smul.addr %s937, 8
        %s939 = scalar_lea.vmem %s3, %s938
        %p940 = scmp.lt.s32.totalorder %s41, 1
        %s941 = scalar_select %p940, %s41, 1
        %s942 = smul.addr %s941, 4
        %s943 = scalar_lea.vmem %s24, %s942
        %v945 = vld [vmem:[%s927] sm:$0xf]
        %v946 = vld [vmem:[%s931] sm:$0xf]
        %v947 = vld [vmem:[%s4] sm:$0xf]
        %v948 = vld [vmem:[%s4 + $0x4] sm:$0xf]
        %v949 = vld [vmem:[%s4 + $0x8] sm:$0xf]
        %v950 = vld [vmem:[%s4 + $0xc] sm:$0xf]
        %v951 = vld [vmem:[%s5] sm:$0x1]
        %v953 = vperm.slane %v951, 0
        %v959 = vunpack.c.l.b16 %v947
        %v960 = vunpack.c.l.b16 %v948
        %v961 = vunpack.c.l.b16 %v949
        %v962 = vunpack.c.l.b16 %v950
        %v963 = vpack.c.b16 %v960, %v959
        %v964 = vpack.c.b16 %v962, %v961
        %vm967 = vcmask 261120
        %v969 = vsel %vm967, %v945, 0
        %971 = vmatpush.bf16.msra.mxu0 0
        %972 = vmatpush.bf16.msra.mxu0 0
        %973 = vmatpush.bf16.msra.mxu0 0
        %974 = vmatpush.bf16.msra.mxu0 0
        %975 = vmatpush.bf16.msra.mxu0 0
        %976 = vmatpush.bf16.msra.mxu0 0
        %977 = vmatpush.bf16.msra.mxu0 %v964
        %978 = vmatpush.bf16.msra.mxu0 %v963
        %979 = vmatmul.bf16.gmra.mxu0 %v969
        %v980 = vpop.f32.mrf.mxu0
        %v981 = vadd.f32 %v953, %v980
        %v982 = vpop.f32.mrf.mxu0
        %983 = vdwg.mxu0
        %v984 = vld [vmem:[%s935] sm:$0xff]
        %v985 = vpack.c.bf16 %v981, %v981
        %v987 = vunpack.c.l.b16 %v985
        %v988 = vpack.c.b16 %v987, %v987
        %989 = vrot.lane.b32.xlu0 %v988, 96
        %v990 = vpop.permute.xlu0 %989
        %vm991 = vcmask 64512
        %v993 = vsel %vm991, %v985, 0
        %v996 = vsel %vm991, %v990, 0
        %998 = vmatpush.bf16.xpose.msra.mxu0 0
        %999 = vmatpush.bf16.xpose.msra.mxu0 0
        %1000 = vmatpush.bf16.xpose.msra.mxu0 0
        %1001 = vmatpush.bf16.xpose.msra.mxu0 0
        %1002 = vmatpush.bf16.xpose.msra.mxu0 0
        %1003 = vmatpush.bf16.xpose.msra.mxu0 0
        %1004 = vmatpush.bf16.xpose.msra.mxu0 0
        %1005 = vmatpush.bf16.xpose.msra.mxu0 %v996
        %1006 = vmatmul.bf16.gmra.mxu0 %v993
        %v1007 = vpop.f32.mrf.mxu0
        %v1008 = vadd.f32 0.0, %v1007
        %v1009 = vpop.f32.mrf.mxu0
        %1010 = vdwg.mxu0
        %v1011 = vmul.f32 %v1008, 0.35355338
        %v1012 = vadd.f32 %v1011, %v984
        %v1013 = vsel %vm991, %v1012, -inf
        %1014 = vmax.xlane.f32.xlu0 %v1013
        %v1015 = vpop.xlane.xlu0 %1014
        %v1016 = vsub.f32 %v1012, %v1015
        %v1017 = vmul.f32 %v1016, 1.442695
        %v1018 = vpow.pop %v1017
        %v1019 = vsel %vm991, %v1018, 0.0
        %1020 = vadd.xlane.f32.xlu0 %v1019
        %v1021 = vpop.xlane.xlu0 %1020
        %v1022 = vrcp.pop %v1021
        %v1023 = vmul.f32 %v1018, %v1022
        %v1024 = vpack.c.bf16 %v1023, %v1023
        %1025 = vrot.lane.b32.xlu0 %v988, 64
        %v1026 = vpop.permute.xlu0 %1025
        %v1028 = vsel %vm991, %v1024, 0
        %vm1030 = vcmask 1043456
        %v1032 = vsel %vm1030, %v1026, 0
        %1034 = vmatpush.bf16.msra.mxu0 0
        %1035 = vmatpush.bf16.msra.mxu0 0
        %1036 = vmatpush.bf16.msra.mxu0 0
        %1037 = vmatpush.bf16.msra.mxu0 0
        %1038 = vmatpush.bf16.msra.mxu0 0
        %1039 = vmatpush.bf16.msra.mxu0 0
        %1040 = vmatpush.bf16.msra.mxu0 0
        %1041 = vmatpush.bf16.msra.mxu0 %v1032
        %1042 = vmatmul.bf16.gmra.mxu0 %v1028
        %v1043 = vpop.f32.mrf.mxu0
        %v1044 = vadd.f32 0.0, %v1043
        %v1045 = vpop.f32.mrf.mxu0
        %1046 = vdwg.mxu0
        %v1047 = vpack.c.bf16 %v1044, %v1044
        %v1048 = vld [vmem:[%s6] sm:$0xf]
        %1049 = vrot.lane.b32.xlu0 %v988, 120
        %v1050 = vpop.permute.xlu0 %1049
        %1051 = vrot.lane.b32.xlu0 %v988, 88
        %v1052 = vpop.permute.xlu0 %1051
        %v1054 = vsel %vm991, %v1050, 0
        %v1057 = vsel %vm991, %v1052, 0
        %1059 = vmatpush.bf16.xpose.msra.mxu0 0
        %1060 = vmatpush.bf16.xpose.msra.mxu0 0
        %1061 = vmatpush.bf16.xpose.msra.mxu0 0
        %1062 = vmatpush.bf16.xpose.msra.mxu0 0
        %1063 = vmatpush.bf16.xpose.msra.mxu0 0
        %1064 = vmatpush.bf16.xpose.msra.mxu0 0
        %1065 = vmatpush.bf16.xpose.msra.mxu0 0
        %1066 = vmatpush.bf16.xpose.msra.mxu0 %v1057
        %1067 = vmatmul.bf16.gmra.mxu0 %v1054
        %v1068 = vpop.f32.mrf.mxu0
        %v1069 = vadd.f32 0.0, %v1068
        %v1070 = vpop.f32.mrf.mxu0
        %1071 = vdwg.mxu0
        %v1072 = vmul.f32 %v1069, 0.35355338
        %v1073 = vadd.f32 %v1072, %v984
        %v1074 = vsel %vm991, %v1073, -inf
        %1075 = vmax.xlane.f32.xlu0 %v1074
        %v1076 = vpop.xlane.xlu0 %1075
        %v1077 = vsub.f32 %v1073, %v1076
        %v1078 = vmul.f32 %v1077, 1.442695
        %v1079 = vpow.pop %v1078
        %v1080 = vsel %vm991, %v1079, 0.0
        %1081 = vadd.xlane.f32.xlu0 %v1080
        %v1082 = vpop.xlane.xlu0 %1081
        %v1083 = vrcp.pop %v1082
        %v1084 = vmul.f32 %v1079, %v1083
        %v1085 = vpack.c.bf16 %v1084, %v1084
        %1086 = vrot.lane.b32.xlu0 %v988, 56
        %v1087 = vpop.permute.xlu0 %1086
        %v1089 = vsel %vm991, %v1085, 0
        %v1092 = vsel %vm1030, %v1087, 0
        %1094 = vmatpush.bf16.msra.mxu0 0
        %1095 = vmatpush.bf16.msra.mxu0 0
        %1096 = vmatpush.bf16.msra.mxu0 0
        %1097 = vmatpush.bf16.msra.mxu0 0
        %1098 = vmatpush.bf16.msra.mxu0 0
        %1099 = vmatpush.bf16.msra.mxu0 0
        %1100 = vmatpush.bf16.msra.mxu0 0
        %1101 = vmatpush.bf16.msra.mxu0 %v1092
        %1102 = vmatmul.bf16.gmra.mxu0 %v1089
        %v1103 = vpop.f32.mrf.mxu0
        %v1104 = vadd.f32 0.0, %v1103
        %v1105 = vpop.f32.mrf.mxu0
        %1106 = vdwg.mxu0
        %v1107 = vpack.c.bf16 %v1104, %v1104
        %v1108 = vld [vmem:[%s6 + $0x4] sm:$0xf]
        %v1110 = vsel %vm991, %v1107, 0
        %v1113 = vsel %vm1030, %v1108, 0
        %1115 = vmatpush.bf16.msra.mxu0 0
        %1116 = vmatpush.bf16.msra.mxu0 0
        %1117 = vmatpush.bf16.msra.mxu0 0
        %1118 = vmatpush.bf16.msra.mxu0 0
        %1119 = vmatpush.bf16.msra.mxu0 0
        %1120 = vmatpush.bf16.msra.mxu0 0
        %1121 = vmatpush.bf16.msra.mxu0 0
        %1122 = vmatpush.bf16.msra.mxu0 %v1113
        %1123 = vmatmul.bf16.gmra.mxu0 %v1110
        %v1124 = vpop.f32.mrf.mxu0
        %v1125 = vadd.f32 0.0, %v1124
        %v1126 = vpop.f32.mrf.mxu0
        %1127 = vdwg.mxu0
        %v1129 = vsel %vm991, %v1047, 0
        %v1132 = vsel %vm1030, %v1048, 0
        %1134 = vmatpush.bf16.msra.mxu0 0
        %1135 = vmatpush.bf16.msra.mxu0 0
        %1136 = vmatpush.bf16.msra.mxu0 0
        %1137 = vmatpush.bf16.msra.mxu0 0
        %1138 = vmatpush.bf16.msra.mxu0 0
        %1139 = vmatpush.bf16.msra.mxu0 0
        %1140 = vmatpush.bf16.msra.mxu0 0
        %1141 = vmatpush.bf16.msra.mxu0 %v1132
        %1142 = vmatmul.bf16.gmra.mxu0 %v1129
        %v1143 = vpop.f32.mrf.mxu0
        %v1144 = vadd.f32 %v1125, %v1143
        %v1145 = vpop.f32.mrf.mxu0
        %1146 = vdwg.mxu0
        %1147 = vrot.lane.b32.xlu0 %v988, 112
        %v1148 = vpop.permute.xlu0 %1147
        %1149 = vrot.lane.b32.xlu0 %v988, 80
        %v1150 = vpop.permute.xlu0 %1149
        %v1152 = vsel %vm991, %v1148, 0
        %v1155 = vsel %vm991, %v1150, 0
        %1157 = vmatpush.bf16.xpose.msra.mxu0 0
        %1158 = vmatpush.bf16.xpose.msra.mxu0 0
        %1159 = vmatpush.bf16.xpose.msra.mxu0 0
        %1160 = vmatpush.bf16.xpose.msra.mxu0 0
        %1161 = vmatpush.bf16.xpose.msra.mxu0 0
        %1162 = vmatpush.bf16.xpose.msra.mxu0 0
        %1163 = vmatpush.bf16.xpose.msra.mxu0 0
        %1164 = vmatpush.bf16.xpose.msra.mxu0 %v1155
        %1165 = vmatmul.bf16.gmra.mxu0 %v1152
        %v1166 = vpop.f32.mrf.mxu0
        %v1167 = vadd.f32 0.0, %v1166
        %v1168 = vpop.f32.mrf.mxu0
        %1169 = vdwg.mxu0
        %v1170 = vmul.f32 %v1167, 0.35355338
        %v1171 = vadd.f32 %v1170, %v984
        %v1172 = vsel %vm991, %v1171, -inf
        %1173 = vmax.xlane.f32.xlu0 %v1172
        %v1174 = vpop.xlane.xlu0 %1173
        %v1175 = vsub.f32 %v1171, %v1174
        %v1176 = vmul.f32 %v1175, 1.442695
        %v1177 = vpow.pop %v1176
        %v1178 = vsel %vm991, %v1177, 0.0
        %1179 = vadd.xlane.f32.xlu0 %v1178
        %v1180 = vpop.xlane.xlu0 %1179
        %v1181 = vrcp.pop %v1180
        %v1182 = vmul.f32 %v1177, %v1181
        %v1183 = vpack.c.bf16 %v1182, %v1182
        %1184 = vrot.lane.b32.xlu0 %v988, 48
        %v1185 = vpop.permute.xlu0 %1184
        %v1187 = vsel %vm991, %v1183, 0
        %v1190 = vsel %vm1030, %v1185, 0
        %1192 = vmatpush.bf16.msra.mxu0 0
        %1193 = vmatpush.bf16.msra.mxu0 0
        %1194 = vmatpush.bf16.msra.mxu0 0
        %1195 = vmatpush.bf16.msra.mxu0 0
        %1196 = vmatpush.bf16.msra.mxu0 0
        %1197 = vmatpush.bf16.msra.mxu0 0
        %1198 = vmatpush.bf16.msra.mxu0 0
        %1199 = vmatpush.bf16.msra.mxu0 %v1190
        %1200 = vmatmul.bf16.gmra.mxu0 %v1187
        %v1201 = vpop.f32.mrf.mxu0
        %v1202 = vadd.f32 0.0, %v1201
        %v1203 = vpop.f32.mrf.mxu0
        %1204 = vdwg.mxu0
        %v1205 = vpack.c.bf16 %v1202, %v1202
        %v1206 = vld [vmem:[%s6 + $0x8] sm:$0xf]
        %v1208 = vsel %vm991, %v1205, 0
        %v1211 = vsel %vm1030, %v1206, 0
        %1213 = vmatpush.bf16.msra.mxu0 0
        %1214 = vmatpush.bf16.msra.mxu0 0
        %1215 = vmatpush.bf16.msra.mxu0 0
        %1216 = vmatpush.bf16.msra.mxu0 0
        %1217 = vmatpush.bf16.msra.mxu0 0
        %1218 = vmatpush.bf16.msra.mxu0 0
        %1219 = vmatpush.bf16.msra.mxu0 0
        %1220 = vmatpush.bf16.msra.mxu0 %v1211
        %1221 = vmatmul.bf16.gmra.mxu0 %v1208
        %v1222 = vpop.f32.mrf.mxu0
        %v1223 = vadd.f32 0.0, %v1222
        %v1224 = vpop.f32.mrf.mxu0
        %1225 = vdwg.mxu0
        %v1226 = vadd.f32 %v1144, %v1223
        %1227 = vrot.lane.b32.xlu0 %v988, 104
        %v1228 = vpop.permute.xlu0 %1227
        %1229 = vrot.lane.b32.xlu0 %v988, 72
        %v1230 = vpop.permute.xlu0 %1229
        %v1232 = vsel %vm991, %v1228, 0
        %v1235 = vsel %vm991, %v1230, 0
        %1237 = vmatpush.bf16.xpose.msra.mxu0 0
        %1238 = vmatpush.bf16.xpose.msra.mxu0 0
        %1239 = vmatpush.bf16.xpose.msra.mxu0 0
        %1240 = vmatpush.bf16.xpose.msra.mxu0 0
        %1241 = vmatpush.bf16.xpose.msra.mxu0 0
        %1242 = vmatpush.bf16.xpose.msra.mxu0 0
        %1243 = vmatpush.bf16.xpose.msra.mxu0 0
        %1244 = vmatpush.bf16.xpose.msra.mxu0 %v1235
        %1245 = vmatmul.bf16.gmra.mxu0 %v1232
        %v1246 = vpop.f32.mrf.mxu0
        %v1247 = vadd.f32 0.0, %v1246
        %v1248 = vpop.f32.mrf.mxu0
        %1249 = vdwg.mxu0
        %v1250 = vmul.f32 %v1247, 0.35355338
        %v1251 = vadd.f32 %v1250, %v984
        %v1252 = vsel %vm991, %v1251, -inf
        %1253 = vmax.xlane.f32.xlu0 %v1252
        %v1254 = vpop.xlane.xlu0 %1253
        %v1255 = vsub.f32 %v1251, %v1254
        %v1256 = vmul.f32 %v1255, 1.442695
        %v1257 = vpow.pop %v1256
        %v1258 = vsel %vm991, %v1257, 0.0
        %1259 = vadd.xlane.f32.xlu0 %v1258
        %v1260 = vpop.xlane.xlu0 %1259
        %v1261 = vrcp.pop %v1260
        %v1262 = vmul.f32 %v1257, %v1261
        %v1263 = vpack.c.bf16 %v1262, %v1262
        %1264 = vrot.lane.b32.xlu0 %v988, 40
        %v1265 = vpop.permute.xlu0 %1264
        %v1267 = vsel %vm991, %v1263, 0
        %v1270 = vsel %vm1030, %v1265, 0
        %1272 = vmatpush.bf16.msra.mxu0 0
        %1273 = vmatpush.bf16.msra.mxu0 0
        %1274 = vmatpush.bf16.msra.mxu0 0
        %1275 = vmatpush.bf16.msra.mxu0 0
        %1276 = vmatpush.bf16.msra.mxu0 0
        %1277 = vmatpush.bf16.msra.mxu0 0
        %1278 = vmatpush.bf16.msra.mxu0 0
        %1279 = vmatpush.bf16.msra.mxu0 %v1270
        %1280 = vmatmul.bf16.gmra.mxu0 %v1267
        %v1281 = vpop.f32.mrf.mxu0
        %v1282 = vadd.f32 0.0, %v1281
        %v1283 = vpop.f32.mrf.mxu0
        %1284 = vdwg.mxu0
        %v1285 = vpack.c.bf16 %v1282, %v1282
        %v1286 = vld [vmem:[%s6 + $0xc] sm:$0xf]
        %v1288 = vsel %vm991, %v1285, 0
        %v1291 = vsel %vm1030, %v1286, 0
        %1293 = vmatpush.bf16.msra.mxu0 0
        %1294 = vmatpush.bf16.msra.mxu0 0
        %1295 = vmatpush.bf16.msra.mxu0 0
        %1296 = vmatpush.bf16.msra.mxu0 0
        %1297 = vmatpush.bf16.msra.mxu0 0
        %1298 = vmatpush.bf16.msra.mxu0 0
        %1299 = vmatpush.bf16.msra.mxu0 0
        %1300 = vmatpush.bf16.msra.mxu0 %v1291
        %1301 = vmatmul.bf16.gmra.mxu0 %v1288
        %v1302 = vpop.f32.mrf.mxu0
        %v1303 = vadd.f32 0.0, %v1302
        %v1304 = vpop.f32.mrf.mxu0
        %1305 = vdwg.mxu0
        %v1306 = vadd.f32 %v1226, %v1303
        %v1307 = vld [vmem:[%s7] sm:$0x1]
        %v1309 = vperm.slane %v1307, 0
        %v1311 = vadd.f32 %v1306, %v1309
        %v1312 = vunpack.c.l.bf16 %v945
        %v1313 = vadd.f32 %v1311, %v1312
        %v1314 = vld [vmem:[#allocation2] sm:$0x1]
        %v1315 = vld [vmem:[#allocation4] sm:$0x1]
        %v1316 = vsel %vm967, %v1313, 0.0
        %1317 = vadd.xlane.f32.xlu0 %v1316
        %v1318 = vpop.xlane.xlu0 %1317
        %v1319 = vrcp.pop 32.0
        %v1320 = vmul.f32 32.0, %v1319
        %v1321 = vsub.f32 1.0, %v1320
        %v1322 = vmul.f32 %v1319, %v1321
        %v1323 = vadd.f32 %v1319, %v1322
        %vm1324 = vweird.f32 %v1319
        %v1325 = vsel %vm1324, %v1319, %v1323
        %v1326 = vmul.f32 %v1318, %v1325
        %v1327 = vsub.f32 %v1313, %v1326
        %v1328 = vmul.f32 %v1327, %v1327
        %v1329 = vsel %vm967, %v1328, 0.0
        %1330 = vadd.xlane.f32.xlu0 %v1329
        %v1331 = vpop.xlane.xlu0 %1330
        %v1332 = vmul.f32 %v1331, %v1325
        %v1333 = vadd.f32 %v1332, 1e-05
        %v1334 = vrsqrt.pop %v1333
        %v1335 = vmul.f32 %v1334, %v1333
        %v1336 = vmul.f32 %v1335, %v1334
        %v1337 = vmul.f32 0.5, %v1336
        %v1338 = vsub.f32 1.5, %v1337
        %v1339 = vmul.f32 %v1334, %v1338
        %vm1340 = vweird.f32 %v1333
        %vm1341 = vweird.f32 %v1334
        %vm1342 = vmor %vm1340, %vm1341
        %v1343 = vsel %vm1342, %v1334, %v1339
        %v1344 = vmul.f32 %v1327, %v1343
        %v1346 = vperm.slane %v1314, 0
        %v1348 = vmul.f32 %v1344, %v1346
        %v1350 = vperm.slane %v1315, 0
        %v1352 = vadd.f32 %v1348, %v1350
        %v1353 = vpack.c.bf16 %v1352, %v1352
        %v1354 = vld [vmem:[%s10] sm:$0xf]
        %v1355 = vld [vmem:[%s10 + $0x4] sm:$0xf]
        %v1356 = vld [vmem:[%s10 + $0x8] sm:$0xf]
        %v1357 = vld [vmem:[%s10 + $0xc] sm:$0xf]
        %v1358 = vld [vmem:[#allocation6] sm:$0x1]
        %v1360 = vperm.slane %v1358, 0
        %v1366 = vunpack.c.l.b16 %v1354
        %v1367 = vunpack.c.l.b16 %v1355
        %v1368 = vunpack.c.l.b16 %v1356
        %v1369 = vunpack.c.l.b16 %v1357
        %v1370 = vpack.c.b16 %v1367, %v1366
        %v1371 = vpack.c.b16 %v1369, %v1368
        %v1375 = vsel %vm967, %v1353, 0
        %1377 = vmatpush.bf16.msra.mxu0 0
        %1378 = vmatpush.bf16.msra.mxu0 0
        %1379 = vmatpush.bf16.msra.mxu0 0
        %1380 = vmatpush.bf16.msra.mxu0 0
        %1381 = vmatpush.bf16.msra.mxu0 0
        %1382 = vmatpush.bf16.msra.mxu0 0
        %1383 = vmatpush.bf16.msra.mxu0 %v1371
        %1384 = vmatpush.bf16.msra.mxu0 %v1370
        %1385 = vmatmul.bf16.gmra.mxu0 %v1375
        %v1386 = vpop.f32.mrf.mxu0
        %v1387 = vadd.f32 %v1360, %v1386
        %v1388 = vpop.f32.mrf.mxu0
        %1389 = vdwg.mxu0
        %v1390 = vld [vmem:[%s12] sm:$0xf]
        %v1391 = vld [vmem:[%s12 + $0x4] sm:$0xf]
        %v1392 = vld [vmem:[%s12 + $0x8] sm:$0xf]
        %v1393 = vld [vmem:[%s12 + $0xc] sm:$0xf]
        %v1394 = vld [vmem:[#allocation7] sm:$0x1]
        %v1396 = vperm.slane %v1394, 0
        %v1402 = vunpack.c.l.b16 %v1390
        %v1403 = vunpack.c.l.b16 %v1391
        %v1404 = vunpack.c.l.b16 %v1392
        %v1405 = vunpack.c.l.b16 %v1393
        %v1406 = vpack.c.b16 %v1403, %v1402
        %v1407 = vpack.c.b16 %v1405, %v1404
        %v1411 = vsel %vm967, %v946, 0
        %1413 = vmatpush.bf16.msra.mxu0 0
        %1414 = vmatpush.bf16.msra.mxu0 0
        %1415 = vmatpush.bf16.msra.mxu0 0
        %1416 = vmatpush.bf16.msra.mxu0 0
        %1417 = vmatpush.bf16.msra.mxu0 0
        %1418 = vmatpush.bf16.msra.mxu0 0
        %1419 = vmatpush.bf16.msra.mxu0 %v1407
        %1420 = vmatpush.bf16.msra.mxu0 %v1406
        %1421 = vmatmul.bf16.gmra.mxu0 %v1411
        %v1422 = vpop.f32.mrf.mxu0
        %v1423 = vadd.f32 %v1396, %v1422
        %v1424 = vpop.f32.mrf.mxu0
        %1425 = vdwg.mxu0
        %v1426 = vld [vmem:[%s939] sm:$0xff]
        %v1427 = vpack.c.bf16 %v1387, %v1387
        %v1428 = vpack.c.bf16 %v1423, %v1423
        %v1430 = vsel %vm991, %v1427, 0
        %v1433 = vsel %vm991, %v1428, 0
        %1435 = vmatpush.bf16.xpose.msra.mxu0 0
        %1436 = vmatpush.bf16.xpose.msra.mxu0 0
        %1437 = vmatpush.bf16.xpose.msra.mxu0 0
        %1438 = vmatpush.bf16.xpose.msra.mxu0 0
        %1439 = vmatpush.bf16.xpose.msra.mxu0 0
        %1440 = vmatpush.bf16.xpose.msra.mxu0 0
        %1441 = vmatpush.bf16.xpose.msra.mxu0 0
        %1442 = vmatpush.bf16.xpose.msra.mxu0 %v1433
        %1443 = vmatmul.bf16.gmra.mxu0 %v1430
        %v1444 = vpop.f32.mrf.mxu0
        %v1445 = vadd.f32 0.0, %v1444
        %v1446 = vpop.f32.mrf.mxu0
        %1447 = vdwg.mxu0
        %v1448 = vmul.f32 %v1445, 0.35355338
        %v1449 = vadd.f32 %v1448, %v1426
        %v1450 = vsel %vm991, %v1449, -inf
        %1451 = vmax.xlane.f32.xlu0 %v1450
        %v1452 = vpop.xlane.xlu0 %1451
        %v1453 = vsub.f32 %v1449, %v1452
        %v1454 = vmul.f32 %v1453, 1.442695
        %v1455 = vpow.pop %v1454
        %v1456 = vsel %vm991, %v1455, 0.0
        %1457 = vadd.xlane.f32.xlu0 %v1456
        %v1458 = vpop.xlane.xlu0 %1457
        %v1459 = vrcp.pop %v1458
        %v1460 = vmul.f32 %v1455, %v1459
        %v1461 = vpack.c.bf16 %v1460, %v1460
        %v1463 = vunpack.c.l.b16 %v1428
        %v1464 = vpack.c.b16 %v1463, %v1463
        %1465 = vrot.lane.b32.xlu0 %v1464, 96
        %v1466 = vpop.permute.xlu0 %1465
        %v1468 = vsel %vm991, %v1461, 0
        %v1471 = vsel %vm1030, %v1466, 0
        %1473 = vmatpush.bf16.msra.mxu0 0
        %1474 = vmatpush.bf16.msra.mxu0 0
        %1475 = vmatpush.bf16.msra.mxu0 0
        %1476 = vmatpush.bf16.msra.mxu0 0
        %1477 = vmatpush.bf16.msra.mxu0 0
        %1478 = vmatpush.bf16.msra.mxu0 0
        %1479 = vmatpush.bf16.msra.mxu0 0
        %1480 = vmatpush.bf16.msra.mxu0 %v1471
        %1481 = vmatmul.bf16.gmra.mxu0 %v1468
        %v1482 = vpop.f32.mrf.mxu0
        %v1483 = vadd.f32 0.0, %v1482
        %v1484 = vpop.f32.mrf.mxu0
        %1485 = vdwg.mxu0
        %v1486 = vpack.c.bf16 %v1483, %v1483
        %v1487 = vld [vmem:[%s14] sm:$0xf]
        %v1489 = vunpack.c.l.b16 %v1427
        %v1490 = vpack.c.b16 %v1489, %v1489
        %1491 = vrot.lane.b32.xlu0 %v1490, 120
        %v1492 = vpop.permute.xlu0 %1491
        %1493 = vrot.lane.b32.xlu0 %v1464, 120
        %v1494 = vpop.permute.xlu0 %1493
        %v1496 = vsel %vm991, %v1492, 0
        %v1499 = vsel %vm991, %v1494, 0
        %1501 = vmatpush.bf16.xpose.msra.mxu0 0
        %1502 = vmatpush.bf16.xpose.msra.mxu0 0
        %1503 = vmatpush.bf16.xpose.msra.mxu0 0
        %1504 = vmatpush.bf16.xpose.msra.mxu0 0
        %1505 = vmatpush.bf16.xpose.msra.mxu0 0
        %1506 = vmatpush.bf16.xpose.msra.mxu0 0
        %1507 = vmatpush.bf16.xpose.msra.mxu0 0
        %1508 = vmatpush.bf16.xpose.msra.mxu0 %v1499
        %1509 = vmatmul.bf16.gmra.mxu0 %v1496
        %v1510 = vpop.f32.mrf.mxu0
        %v1511 = vadd.f32 0.0, %v1510
        %v1512 = vpop.f32.mrf.mxu0
        %1513 = vdwg.mxu0
        %v1514 = vmul.f32 %v1511, 0.35355338
        %v1515 = vadd.f32 %v1514, %v1426
        %v1516 = vsel %vm991, %v1515, -inf
        %1517 = vmax.xlane.f32.xlu0 %v1516
        %v1518 = vpop.xlane.xlu0 %1517
        %v1519 = vsub.f32 %v1515, %v1518
        %v1520 = vmul.f32 %v1519, 1.442695
        %v1521 = vpow.pop %v1520
        %v1522 = vsel %vm991, %v1521, 0.0
        %1523 = vadd.xlane.f32.xlu0 %v1522
        %v1524 = vpop.xlane.xlu0 %1523
        %v1525 = vrcp.pop %v1524
        %v1526 = vmul.f32 %v1521, %v1525
        %v1527 = vpack.c.bf16 %v1526, %v1526
        %1528 = vrot.lane.b32.xlu0 %v1464, 88
        %v1529 = vpop.permute.xlu0 %1528
        %v1531 = vsel %vm991, %v1527, 0
        %v1534 = vsel %vm1030, %v1529, 0
        %1536 = vmatpush.bf16.msra.mxu0 0
        %1537 = vmatpush.bf16.msra.mxu0 0
        %1538 = vmatpush.bf16.msra.mxu0 0
        %1539 = vmatpush.bf16.msra.mxu0 0
        %1540 = vmatpush.bf16.msra.mxu0 0
        %1541 = vmatpush.bf16.msra.mxu0 0
        %1542 = vmatpush.bf16.msra.mxu0 0
        %1543 = vmatpush.bf16.msra.mxu0 %v1534
        %1544 = vmatmul.bf16.gmra.mxu0 %v1531
        %v1545 = vpop.f32.mrf.mxu0
        %v1546 = vadd.f32 0.0, %v1545
        %v1547 = vpop.f32.mrf.mxu0
        %1548 = vdwg.mxu0
        %v1549 = vpack.c.bf16 %v1546, %v1546
        %v1550 = vld [vmem:[%s14 + $0x4] sm:$0xf]
        %v1552 = vsel %vm991, %v1549, 0
        %v1555 = vsel %vm1030, %v1550, 0
        %1557 = vmatpush.bf16.msra.mxu0 0
        %1558 = vmatpush.bf16.msra.mxu0 0
        %1559 = vmatpush.bf16.msra.mxu0 0
        %1560 = vmatpush.bf16.msra.mxu0 0
        %1561 = vmatpush.bf16.msra.mxu0 0
        %1562 = vmatpush.bf16.msra.mxu0 0
        %1563 = vmatpush.bf16.msra.mxu0 0
        %1564 = vmatpush.bf16.msra.mxu0 %v1555
        %1565 = vmatmul.bf16.gmra.mxu0 %v1552
        %v1566 = vpop.f32.mrf.mxu0
        %v1567 = vadd.f32 0.0, %v1566
        %v1568 = vpop.f32.mrf.mxu0
        %1569 = vdwg.mxu0
        %v1571 = vsel %vm991, %v1486, 0
        %v1574 = vsel %vm1030, %v1487, 0
        %1576 = vmatpush.bf16.msra.mxu0 0
        %1577 = vmatpush.bf16.msra.mxu0 0
        %1578 = vmatpush.bf16.msra.mxu0 0
        %1579 = vmatpush.bf16.msra.mxu0 0
        %1580 = vmatpush.bf16.msra.mxu0 0
        %1581 = vmatpush.bf16.msra.mxu0 0
        %1582 = vmatpush.bf16.msra.mxu0 0
        %1583 = vmatpush.bf16.msra.mxu0 %v1574
        %1584 = vmatmul.bf16.gmra.mxu0 %v1571
        %v1585 = vpop.f32.mrf.mxu0
        %v1586 = vadd.f32 %v1567, %v1585
        %v1587 = vpop.f32.mrf.mxu0
        %1588 = vdwg.mxu0
        %1589 = vrot.lane.b32.xlu0 %v1490, 112
        %v1590 = vpop.permute.xlu0 %1589
        %1591 = vrot.lane.b32.xlu0 %v1464, 112
        %v1592 = vpop.permute.xlu0 %1591
        %v1594 = vsel %vm991, %v1590, 0
        %v1597 = vsel %vm991, %v1592, 0
        %1599 = vmatpush.bf16.xpose.msra.mxu0 0
        %1600 = vmatpush.bf16.xpose.msra.mxu0 0
        %1601 = vmatpush.bf16.xpose.msra.mxu0 0
        %1602 = vmatpush.bf16.xpose.msra.mxu0 0
        %1603 = vmatpush.bf16.xpose.msra.mxu0 0
        %1604 = vmatpush.bf16.xpose.msra.mxu0 0
        %1605 = vmatpush.bf16.xpose.msra.mxu0 0
        %1606 = vmatpush.bf16.xpose.msra.mxu0 %v1597
        %1607 = vmatmul.bf16.gmra.mxu0 %v1594
        %v1608 = vpop.f32.mrf.mxu0
        %v1609 = vadd.f32 0.0, %v1608
        %v1610 = vpop.f32.mrf.mxu0
        %1611 = vdwg.mxu0
        %v1612 = vmul.f32 %v1609, 0.35355338
        %v1613 = vadd.f32 %v1612, %v1426
        %v1614 = vsel %vm991, %v1613, -inf
        %1615 = vmax.xlane.f32.xlu0 %v1614
        %v1616 = vpop.xlane.xlu0 %1615
        %v1617 = vsub.f32 %v1613, %v1616
        %v1618 = vmul.f32 %v1617, 1.442695
        %v1619 = vpow.pop %v1618
        %v1620 = vsel %vm991, %v1619, 0.0
        %1621 = vadd.xlane.f32.xlu0 %v1620
        %v1622 = vpop.xlane.xlu0 %1621
        %v1623 = vrcp.pop %v1622
        %v1624 = vmul.f32 %v1619, %v1623
        %v1625 = vpack.c.bf16 %v1624, %v1624
        %1626 = vrot.lane.b32.xlu0 %v1464, 80
        %v1627 = vpop.permute.xlu0 %1626
        %v1629 = vsel %vm991, %v1625, 0
        %v1632 = vsel %vm1030, %v1627, 0
        %1634 = vmatpush.bf16.msra.mxu0 0
        %1635 = vmatpush.bf16.msra.mxu0 0
        %1636 = vmatpush.bf16.msra.mxu0 0
        %1637 = vmatpush.bf16.msra.mxu0 0
        %1638 = vmatpush.bf16.msra.mxu0 0
        %1639 = vmatpush.bf16.msra.mxu0 0
        %1640 = vmatpush.bf16.msra.mxu0 0
        %1641 = vmatpush.bf16.msra.mxu0 %v1632
        %1642 = vmatmul.bf16.gmra.mxu0 %v1629
        %v1643 = vpop.f32.mrf.mxu0
        %v1644 = vadd.f32 0.0, %v1643
        %v1645 = vpop.f32.mrf.mxu0
        %1646 = vdwg.mxu0
        %v1647 = vpack.c.bf16 %v1644, %v1644
        %v1648 = vld [vmem:[%s14 + $0x8] sm:$0xf]
        %v1650 = vsel %vm991, %v1647, 0
        %v1653 = vsel %vm1030, %v1648, 0
        %1655 = vmatpush.bf16.msra.mxu0 0
        %1656 = vmatpush.bf16.msra.mxu0 0
        %1657 = vmatpush.bf16.msra.mxu0 0
        %1658 = vmatpush.bf16.msra.mxu0 0
        %1659 = vmatpush.bf16.msra.mxu0 0
        %1660 = vmatpush.bf16.msra.mxu0 0
        %1661 = vmatpush.bf16.msra.mxu0 0
        %1662 = vmatpush.bf16.msra.mxu0 %v1653
        %1663 = vmatmul.bf16.gmra.mxu0 %v1650
        %v1664 = vpop.f32.mrf.mxu0
        %v1665 = vadd.f32 0.0, %v1664
        %v1666 = vpop.f32.mrf.mxu0
        %1667 = vdwg.mxu0
        %v1668 = vadd.f32 %v1586, %v1665
        %1669 = vrot.lane.b32.xlu0 %v1490, 104
        %v1670 = vpop.permute.xlu0 %1669
        %1671 = vrot.lane.b32.xlu0 %v1464, 104
        %v1672 = vpop.permute.xlu0 %1671
        %v1674 = vsel %vm991, %v1670, 0
        %v1677 = vsel %vm991, %v1672, 0
        %1679 = vmatpush.bf16.xpose.msra.mxu0 0
        %1680 = vmatpush.bf16.xpose.msra.mxu0 0
        %1681 = vmatpush.bf16.xpose.msra.mxu0 0
        %1682 = vmatpush.bf16.xpose.msra.mxu0 0
        %1683 = vmatpush.bf16.xpose.msra.mxu0 0
        %1684 = vmatpush.bf16.xpose.msra.mxu0 0
        %1685 = vmatpush.bf16.xpose.msra.mxu0 0
        %1686 = vmatpush.bf16.xpose.msra.mxu0 %v1677
        %1687 = vmatmul.bf16.gmra.mxu0 %v1674
        %v1688 = vpop.f32.mrf.mxu0
        %v1689 = vadd.f32 0.0, %v1688
        %v1690 = vpop.f32.mrf.mxu0
        %1691 = vdwg.mxu0
        %v1692 = vmul.f32 %v1689, 0.35355338
        %v1693 = vadd.f32 %v1692, %v1426
        %v1694 = vsel %vm991, %v1693, -inf
        %1695 = vmax.xlane.f32.xlu0 %v1694
        %v1696 = vpop.xlane.xlu0 %1695
        %v1697 = vsub.f32 %v1693, %v1696
        %v1698 = vmul.f32 %v1697, 1.442695
        %v1699 = vpow.pop %v1698
        %v1700 = vsel %vm991, %v1699, 0.0
        %1701 = vadd.xlane.f32.xlu0 %v1700
        %v1702 = vpop.xlane.xlu0 %1701
        %v1703 = vrcp.pop %v1702
        %v1704 = vmul.f32 %v1699, %v1703
        %v1705 = vpack.c.bf16 %v1704, %v1704
        %1706 = vrot.lane.b32.xlu0 %v1464, 72
        %v1707 = vpop.permute.xlu0 %1706
        %v1709 = vsel %vm991, %v1705, 0
        %v1712 = vsel %vm1030, %v1707, 0
        %1714 = vmatpush.bf16.msra.mxu0 0
        %1715 = vmatpush.bf16.msra.mxu0 0
        %1716 = vmatpush.bf16.msra.mxu0 0
        %1717 = vmatpush.bf16.msra.mxu0 0
        %1718 = vmatpush.bf16.msra.mxu0 0
        %1719 = vmatpush.bf16.msra.mxu0 0
        %1720 = vmatpush.bf16.msra.mxu0 0
        %1721 = vmatpush.bf16.msra.mxu0 %v1712
        %1722 = vmatmul.bf16.gmra.mxu0 %v1709
        %v1723 = vpop.f32.mrf.mxu0
        %v1724 = vadd.f32 0.0, %v1723
        %v1725 = vpop.f32.mrf.mxu0
        %1726 = vdwg.mxu0
        %v1727 = vpack.c.bf16 %v1724, %v1724
        %v1728 = vld [vmem:[%s14 + $0xc] sm:$0xf]
        %v1730 = vsel %vm991, %v1727, 0
        %v1733 = vsel %vm1030, %v1728, 0
        %1735 = vmatpush.bf16.msra.mxu0 0
        %1736 = vmatpush.bf16.msra.mxu0 0
        %1737 = vmatpush.bf16.msra.mxu0 0
        %1738 = vmatpush.bf16.msra.mxu0 0
        %1739 = vmatpush.bf16.msra.mxu0 0
        %1740 = vmatpush.bf16.msra.mxu0 0
        %1741 = vmatpush.bf16.msra.mxu0 0
        %1742 = vmatpush.bf16.msra.mxu0 %v1733
        %1743 = vmatmul.bf16.gmra.mxu0 %v1730
        %v1744 = vpop.f32.mrf.mxu0
        %v1745 = vadd.f32 0.0, %v1744
        %v1746 = vpop.f32.mrf.mxu0
        %1747 = vdwg.mxu0
        %v1748 = vadd.f32 %v1668, %v1745
        %v1749 = vld [vmem:[#allocation9] sm:$0x1]
        %v1751 = vperm.slane %v1749, 0
        %v1753 = vadd.f32 %v1748, %v1751
        %v1754 = vadd.f32 %v1753, %v1352
        %v1755 = vld [vmem:[#allocation10] sm:$0x1]
        %v1756 = vld [vmem:[#allocation12] sm:$0x1]
        %v1757 = vsel %vm967, %v1754, 0.0
        %1758 = vadd.xlane.f32.xlu0 %v1757
        %v1759 = vpop.xlane.xlu0 %1758
        %v1760 = vmul.f32 %v1759, %v1325
        %v1761 = vsub.f32 %v1754, %v1760
        %v1762 = vmul.f32 %v1761, %v1761
        %v1763 = vsel %vm967, %v1762, 0.0
        %1764 = vadd.xlane.f32.xlu0 %v1763
        %v1765 = vpop.xlane.xlu0 %1764
        %v1766 = vmul.f32 %v1765, %v1325
        %v1767 = vadd.f32 %v1766, 1e-05
        %v1768 = vrsqrt.pop %v1767
        %v1769 = vmul.f32 %v1768, %v1767
        %v1770 = vmul.f32 %v1769, %v1768
        %v1771 = vmul.f32 0.5, %v1770
        %v1772 = vsub.f32 1.5, %v1771
        %v1773 = vmul.f32 %v1768, %v1772
        %vm1774 = vweird.f32 %v1767
        %vm1775 = vweird.f32 %v1768
        %vm1776 = vmor %vm1774, %vm1775
        %v1777 = vsel %vm1776, %v1768, %v1773
        %v1778 = vmul.f32 %v1761, %v1777
        %v1780 = vperm.slane %v1755, 0
        %v1782 = vmul.f32 %v1778, %v1780
        %v1784 = vperm.slane %v1756, 0
        %v1786 = vadd.f32 %v1782, %v1784
        %v1787 = vpack.c.bf16 %v1786, %v1786
        %v1788 = vld [vmem:[%s18] sm:$0xf]
        %v1789 = vld [vmem:[%s18 + $0x4] sm:$0xf]
        %v1790 = vld [vmem:[%s18 + $0x8] sm:$0xf]
        %v1791 = vld [vmem:[%s18 + $0xc] sm:$0xf]
        %v1792 = vld [vmem:[#allocation13] sm:$0x1]
        %v1794 = vperm.slane %v1792, 0
        %v1800 = vunpack.c.l.b16 %v1788
        %v1801 = vunpack.c.l.b16 %v1789
        %v1802 = vunpack.c.l.b16 %v1790
        %v1803 = vunpack.c.l.b16 %v1791
        %v1804 = vpack.c.b16 %v1801, %v1800
        %v1805 = vpack.c.b16 %v1803, %v1802
        %v1809 = vsel %vm967, %v1787, 0
        %1811 = vmatpush.bf16.msra.mxu0 0
        %1812 = vmatpush.bf16.msra.mxu0 0
        %1813 = vmatpush.bf16.msra.mxu0 0
        %1814 = vmatpush.bf16.msra.mxu0 0
        %1815 = vmatpush.bf16.msra.mxu0 0
        %1816 = vmatpush.bf16.msra.mxu0 0
        %1817 = vmatpush.bf16.msra.mxu0 %v1805
        %1818 = vmatpush.bf16.msra.mxu0 %v1804
        %1819 = vmatmul.bf16.gmra.mxu0 %v1809
        %v1820 = vpop.f32.mrf.mxu0
        %v1821 = vadd.f32 %v1794, %v1820
        %v1822 = vpop.f32.mrf.mxu0
        %1823 = vdwg.mxu0
        %v1824 = vmax.f32 %v1821, 0.0
        %v1825 = vpack.c.bf16 %v1824, %v1824
        %v1826 = vld [vmem:[%s20] sm:$0xf]
        %v1827 = vld [vmem:[%s20 + $0x4] sm:$0xf]
        %v1828 = vld [vmem:[%s20 + $0x8] sm:$0xf]
        %v1829 = vld [vmem:[%s20 + $0xc] sm:$0xf]
        %v1830 = vld [vmem:[%s20 + $0x10] sm:$0xf]
        %v1831 = vld [vmem:[%s20 + $0x14] sm:$0xf]
        %v1832 = vld [vmem:[%s20 + $0x18] sm:$0xf]
        %v1833 = vld [vmem:[%s20 + $0x1c] sm:$0xf]
        %v1834 = vld [vmem:[#allocation15] sm:$0x1]
        %v1836 = vperm.slane %v1834, 0
        %v1846 = vunpack.c.l.b16 %v1826
        %v1847 = vunpack.c.l.b16 %v1827
        %v1848 = vunpack.c.l.b16 %v1828
        %v1849 = vunpack.c.l.b16 %v1829
        %v1850 = vunpack.c.l.b16 %v1830
        %v1851 = vunpack.c.l.b16 %v1831
        %v1852 = vunpack.c.l.b16 %v1832
        %v1853 = vunpack.c.l.b16 %v1833
        %v1854 = vpack.c.b16 %v1847, %v1846
        %v1855 = vpack.c.b16 %v1849, %v1848
        %v1856 = vpack.c.b16 %v1851, %v1850
        %v1857 = vpack.c.b16 %v1853, %v1852
        %vm1862 = vcmask 523264
        %v1864 = vsel %vm1862, %v1825, 0
        %1866 = vmatpush.bf16.msra.mxu0 0
        %1867 = vmatpush.bf16.msra.mxu0 0
        %1868 = vmatpush.bf16.msra.mxu0 0
        %1869 = vmatpush.bf16.msra.mxu0 0
        %1870 = vmatpush.bf16.msra.mxu0 %v1857
        %1871 = vmatpush.bf16.msra.mxu0 %v1856
        %1872 = vmatpush.bf16.msra.mxu0 %v1855
        %1873 = vmatpush.bf16.msra.mxu0 %v1854
        %1874 = vmatmul.bf16.gmra.mxu0 %v1864
        %v1875 = vpop.f32.mrf.mxu0
        %v1876 = vadd.f32 %v1836, %v1875
        %v1877 = vpop.f32.mrf.mxu0
        %1878 = vdwg.mxu0
        %v1879 = vadd.f32 %v1876, %v1786
        %v1880 = vld [vmem:[#allocation16] sm:$0x1]
        %v1881 = vld [vmem:[#allocation18] sm:$0x1]
        %v1882 = vsel %vm967, %v1879, 0.0
        %1883 = vadd.xlane.f32.xlu0 %v1882
        %v1884 = vpop.xlane.xlu0 %1883
        %v1885 = vmul.f32 %v1884, %v1325
        %v1886 = vsub.f32 %v1879, %v1885
        %v1887 = vmul.f32 %v1886, %v1886
        %v1888 = vsel %vm967, %v1887, 0.0
        %1889 = vadd.xlane.f32.xlu0 %v1888
        %v1890 = vpop.xlane.xlu0 %1889
        %v1891 = vmul.f32 %v1890, %v1325
        %v1892 = vadd.f32 %v1891, 1e-05
        %v1893 = vrsqrt.pop %v1892
        %v1894 = vmul.f32 %v1893, %v1892
        %v1895 = vmul.f32 %v1894, %v1893
        %v1896 = vmul.f32 0.5, %v1895
        %v1897 = vsub.f32 1.5, %v1896
        %v1898 = vmul.f32 %v1893, %v1897
        %vm1899 = vweird.f32 %v1892
        %vm1900 = vweird.f32 %v1893
        %vm1901 = vmor %vm1899, %vm1900
        %v1902 = vsel %vm1901, %v1893, %v1898
        %v1903 = vmul.f32 %v1886, %v1902
        %v1905 = vperm.slane %v1880, 0
        %v1907 = vmul.f32 %v1903, %v1905
        %v1909 = vperm.slane %v1881, 0
        %v1911 = vadd.f32 %v1907, %v1909
        %v1912 = vpack.c.bf16 %v1911, %v1911
        %vm1913 = vcmask 257024
        %1914 = vst.msk [vmem:[%s943] sm:$0xf] %vm1913, %v1912
        %p1915 = scmp.lt.s32.totalorder %s41, 1
        %s1916 = scalar_select %p1915, %s41, 1
        %s1917 = smul.addr %s1916, 4
        %s1918 = scalar_lea.vmem %s24, %s1917
        // Predicated region
        $region161: #{seq2seq_forward.7} parent=115 // pred_check
          %p1919 = pneg %p583
        $region162: #{seq2seq_forward.7} parent=115 // pred_check_branch
          %1921 = sbr.rel (%p1919) target = $region164
        $region163: #{seq2seq_forward.7} parent=115 // pred_region
          _
        $region164: #{seq2seq_forward.7} parent=115 // pred_fallthru
          _
      $region116: #{seq2seq_forward.7} parent=5 // pred_fallthru
        _
      %p1922 = scmp.le.s32.totalorder 2, %s36
      // Predicated region
      $region165: #{seq2seq_forward.7} parent=5 // pred_check
        %p1923 = pneg %p1922
      $region166: #{seq2seq_forward.7} parent=5 // pred_check_branch
        %1925 = sbr.rel (%p1923) target = $region168
      $region167: #{seq2seq_forward.7} parent=5 // pred_region
        %s1926 = ssub.s32 %s36, 2
        // Predicated region
        $region169: #{seq2seq_forward.7} parent=167 // pred_check
          %p1927 = pneg %p589
        $region170: #{seq2seq_forward.7} parent=167 // pred_check_branch
          %1929 = sbr.rel (%p1927) target = $region172
        $region171: #{seq2seq_forward.7} parent=167 // pred_region
          %p1930 = scmp.lt.s32.totalorder %s42, 1
          %s1931 = scalar_select %p1930, %s42, 1
          %s1932 = smul.addr %s1931, 4
          %s1933 = scalar_lea.vmem %s24, %s1932
        $region172: #{seq2seq_forward.7} parent=167 // pred_fallthru
          _
      $region168: #{seq2seq_forward.7} parent=5 // pred_fallthru
        _
    $region6: #{seq2seq_forward.7} parent=1 // loop_footer
      %s40 = sadd.s32 1, %s36
    $region7: #{seq2seq_forward.7} parent=1 // loop_footer_branch
      %35 = sbr.rel target = $region3
    $region8: #{seq2seq_forward.7} parent=1 // loop_exit
      _
    %1934 = vsyncpa [#allocation3], 1
    %s1935 = scalar_lea.sflag [#allocation3], 1
    %1936 = vsyncpa %s1935, 1
    %1937 = vsyncpa [#allocation5], 1
    %1938 = vsyncpa [#allocation8], 1
    %1939 = vsyncpa [#allocation11], 1
    %1940 = vsyncpa [#allocation14], 1
    %1941 = vsyncpa [#allocation17], 1

// kernel: seq2seq_forward.9
$region0: #{seq2seq_forward.9}
  #allocation0 [shape = 'u32[]', space=smem, size = 0x4, offset = 0x4, fixed_abs, tag = 'smem constant byte address 0x4 - core index']
  #allocation1 [shape = 'u32[72,128]{1,0:T(1,128)}', space=vmem, size = 0x9000, scoped, tag = 'internal scratch']
  %s0 = inlined_call_operand.vmem [shape: bf16[16,32], index: 0, kind: input, shape index: {}]
  %s1 = inlined_call_operand.vmem [shape: f32[1,32], index: 1, kind: input, shape index: {}]
  %s2 = inlined_call_operand.hbm [shape: f32[1,32], index: 2, kind: input, shape index: {}]
  %s3 = inlined_call_operand.vmem [shape: bf16[32,128], index: 3, kind: input, shape index: {}]
  %s4 = inlined_call_operand.hbm [shape: f32[1,128], index: 4, kind: input, shape index: {}]
  %s5 = inlined_call_operand.vmem [shape: f32[16,128], index: 5, kind: output, shape index: {}]
  %s6 = sld [smem:[#allocation0]]
  $region61: #{seq2seq_forward.9} parent=0
    _
  %s8 = ssub.s32 1, %s6
  %s9 = scalar_select 0, %s8, %s6
  $region1: #{seq2seq_forward.9} parent=0
    #allocation2 [shape = 'u8[512]{0}', space=vmem, size = 0x400, scoped, tag = 'input window, operand 2, single buffered']
    #allocation3 [shape = 's32[2]{0}', space=sflag, size = 0x8, scoped, tag = 'scoped memory for seq2seq_forward.9']
    #allocation4 [shape = 'u8[512]{0}', space=vmem, size = 0x400, scoped, tag = 'input window, operand 4, single buffered']
    #allocation5 [shape = 's32[1]{0}', space=sflag, size = 0x4, scoped, tag = 'scoped memory for seq2seq_forward.9']
    %10 = vsyncpa [#allocation3], 0
    %11 = vsyncpa [#allocation5], 0
    loop: start=0, step=1, limit=4
    $region2: #{seq2seq_forward.9} parent=1 // loop_pre_header
      _
    $region3: #{seq2seq_forward.9} parent=1 // loop_header
      %s13 = sphi 0, %s17
      %p14 = scmp.ge.s32.totalorder %s13, 4
      %s20 = sphi 0, %s32
      %s21 = sphi 0, %s28
      %s22 = sphi 0, %s20
      %s23 = sphi 0, %s21
      %s24 = sphi 0, %s22
      %s25 = sphi 0, %s23
      %s35 = sphi 0, %s37
      %s38 = sphi 0, %s35
      %s39 = sphi 0, %s38
      %s55 = sphi 0, %s39
      %s59 = sphi 0, %s59
      %s61 = sphi 0, %s59
      %s62 = sphi 0, %s61
      %s76 = sphi 0, %s62
      %s80 = sphi 0, %s80
      %s82 = sphi 0, %s80
      %s83 = sphi 0, %s82
      %s97 = sphi 0, %s83
      %s103 = sphi 0, %s105
      %s106 = sphi 0, %s103
      %s107 = sphi 0, %s106
      %s123 = sphi 0, %s107
      %s129 = sphi 0, %s131
      %s132 = sphi 0, %s129
      %s133 = sphi 0, %s132
      %s149 = sphi 0, %s133
      %s157 = sphi 0, %s159
      %s160 = sphi 0, %s157
      %s161 = sphi 0, %s160
      %s177 = sphi 0, %s161
    $region4: #{seq2seq_forward.9} parent=1 // loop_header_branch
      %16 = sbr.rel (%p14) target = $region8
    $region5: #{seq2seq_forward.9} parent=1 // loop_body
      %s18 = ssub.s32 %s13, 1
      %s19 = ssub.s32 %s13, 2
      %s26 = sadd.s32 1, %s21
      %p27 = scmp.ge.s32.totalorder %s26, 1
      %s28 = scalar_select %p27, 0, %s26
      %s29 = sadd.s32 1, %s20
      %s30 = scalar_select %p27, %s29, %s20
      %p31 = scmp.ge.s32.totalorder %s30, 2
      %s32 = scalar_select %p31, 0, %s30
      %s33 = ssub.s32 %s20, %s32
      %p34 = scmp.eq.s32.totalorder %s33, 0
      %s36 = sadd.s32 %s35, 1
      %s37 = scalar_select %p34, %s35, %s36
      %p40 = pneg %p34
      %p41 = scmp.eq.s32.totalorder %s13, 1
      %p42 = por %p40, %p41
      %p43 = scmp.ne.s32.totalorder %s35, %s38
      %p44 = scmp.eq.s32.totalorder %s13, 0
      %p45 = por %p43, %p44
      %p46 = scmp.ne.s32.totalorder %s35, %s38
      %p47 = scmp.eq.s32.totalorder %s18, 1
      %p48 = por %p46, %p47
      %p49 = scmp.ne.s32.totalorder %s38, %s39
      %p50 = scmp.eq.s32.totalorder %s18, 0
      %p51 = por %p49, %p50
      %p52 = scmp.ne.s32.totalorder %s38, %s39
      %p53 = scmp.eq.s32.totalorder %s19, 1
      %p54 = por %p52, %p53
      %p56 = scmp.ne.s32.totalorder %s39, %s55
      %p57 = scmp.eq.s32.totalorder %s19, 0
      %p58 = por %p56, %p57
      %s60 = sadd.s32 %s59, 1
      %p63 = scmp.eq.s32.totalorder %s13, 1
      %p64 = scmp.ne.s32.totalorder %s59, %s61
      %p65 = scmp.eq.s32.totalorder %s13, 0
      %p66 = por %p64, %p65
      %p67 = scmp.ne.s32.totalorder %s59, %s61
      %p68 = scmp.eq.s32.totalorder %s18, 1
      %p69 = por %p67, %p68
      %p70 = scmp.ne.s32.totalorder %s61, %s62
      %p71 = scmp.eq.s32.totalorder %s18, 0
      %p72 = por %p70, %p71
      %p73 = scmp.ne.s32.totalorder %s61, %s62
      %p74 = scmp.eq.s32.totalorder %s19, 1
      %p75 = por %p73, %p74
      %p77 = scmp.ne.s32.totalorder %s62, %s76
      %p78 = scmp.eq.s32.totalorder %s19, 0
      %p79 = por %p77, %p78
      %s81 = sadd.s32 %s80, 1
      %p84 = scmp.eq.s32.totalorder %s13, 1
      %p85 = scmp.ne.s32.totalorder %s80, %s82
      %p86 = scmp.eq.s32.totalorder %s13, 0
      %p87 = por %p85, %p86
      %p88 = scmp.ne.s32.totalorder %s80, %s82
      %p89 = scmp.eq.s32.totalorder %s18, 1
      %p90 = por %p88, %p89
      %p91 = scmp.ne.s32.totalorder %s82, %s83
      %p92 = scmp.eq.s32.totalorder %s18, 0
      %p93 = por %p91, %p92
      %p94 = scmp.ne.s32.totalorder %s82, %s83
      %p95 = scmp.eq.s32.totalorder %s19, 1
      %p96 = por %p94, %p95
      %p98 = scmp.ne.s32.totalorder %s83, %s97
      %p99 = scmp.eq.s32.totalorder %s19, 0
      %p100 = por %p98, %p99
      %s101 = ssub.s32 %s21, %s28
      %p102 = scmp.eq.s32.totalorder %s101, 0
      %s104 = sadd.s32 %s103, 1
      %s105 = scalar_select %p102, %s103, %s104
      %p108 = pneg %p102
      %p109 = scmp.eq.s32.totalorder %s13, 1
      %p110 = por %p108, %p109
      %p111 = scmp.ne.s32.totalorder %s103, %s106
      %p112 = scmp.eq.s32.totalorder %s13, 0
      %p113 = por %p111, %p112
      %p114 = scmp.ne.s32.totalorder %s103, %s106
      %p115 = scmp.eq.s32.totalorder %s18, 1
      %p116 = por %p114, %p115
      %p117 = scmp.ne.s32.totalorder %s106, %s107
      %p118 = scmp.eq.s32.totalorder %s18, 0
      %p119 = por %p117, %p118
      %p120 = scmp.ne.s32.totalorder %s106, %s107
      %p121 = scmp.eq.s32.totalorder %s19, 1
      %p122 = por %p120, %p121
      %p124 = scmp.ne.s32.totalorder %s107, %s123
      %p125 = scmp.eq.s32.totalorder %s19, 0
      %p126 = por %p124, %p125
      %s127 = ssub.s32 %s21, %s28
      %p128 = scmp.eq.s32.totalorder %s127, 0
      %s130 = sadd.s32 %s129, 1
      %s131 = scalar_select %p128, %s129, %s130
      %p134 = pneg %p128
      %p135 = scmp.eq.s32.totalorder %s13, 1
      %p136 = por %p134, %p135
      %p137 = scmp.ne.s32.totalorder %s129, %s132
      %p138 = scmp.eq.s32.totalorder %s13, 0
      %p139 = por %p137, %p138
      %p140 = scmp.ne.s32.totalorder %s129, %s132
      %p141 = scmp.eq.s32.totalorder %s18, 1
      %p142 = por %p140, %p141
      %p143 = scmp.ne.s32.totalorder %s132, %s133
      %p144 = scmp.eq.s32.totalorder %s18, 0
      %p145 = por %p143, %p144
      %p146 = scmp.ne.s32.totalorder %s132, %s133
      %p147 = scmp.eq.s32.totalorder %s19, 1
      %p148 = por %p146, %p147
      %p150 = scmp.ne.s32.totalorder %s133, %s149
      %p151 = scmp.eq.s32.totalorder %s19, 0
      %p152 = por %p150, %p151
      %s153 = ssub.s32 %s20, %s32
      %s154 = ssub.s32 %s21, %s28
      %s155 = sor.u32 %s153, %s154
      %p156 = scmp.eq.s32.totalorder %s155, 0
      %s158 = sadd.s32 %s157, 1
      %s159 = scalar_select %p156, %s157, %s158
      %p162 = pneg %p156
      %p163 = scmp.eq.s32.totalorder %s13, 1
      %p164 = por %p162, %p163
      %p165 = scmp.ne.s32.totalorder %s157, %s160
      %p166 = scmp.eq.s32.totalorder %s13, 0
      %p167 = por %p165, %p166
      %p168 = scmp.ne.s32.totalorder %s157, %s160
      %p169 = scmp.eq.s32.totalorder %s18, 1
      %p170 = por %p168, %p169
      %p171 = scmp.ne.s32.totalorder %s160, %s161
      %p172 = scmp.eq.s32.totalorder %s18, 0
      %p173 = por %p171, %p172
      %p174 = scmp.ne.s32.totalorder %s160, %s161
      %p175 = scmp.eq.s32.totalorder %s19, 1
      %p176 = por %p174, %p175
      %p178 = scmp.ne.s32.totalorder %s161, %s177
      %p179 = scmp.eq.s32.totalorder %s19, 0
      %p180 = por %p178, %p179
      %p181 = scmp.le.s32.totalorder 1, %s13
      %p182 = scmp.lt.s32.totalorder %s13, 3
      %p183 = pnand %p181, %p182
      %p184 = pneg %p183
      // Predicated region
      $region9: #{seq2seq_forward.9} parent=5 // pred_check
        _
      $region10: #{seq2seq_forward.9} parent=5 // pred_check_branch
        %186 = sbr.rel (%p183) target = $region12
      $region11: #{seq2seq_forward.9} parent=5 // pred_region
        %s187 = ssub.s32 %s13, 1
        // Predicated region
        $region13: #{seq2seq_forward.9} parent=11 // pred_check
          %p188 = pneg %p72
        $region14: #{seq2seq_forward.9} parent=11 // pred_check_branch
          %190 = sbr.rel (%p188) target = $region16
        $region15: #{seq2seq_forward.9} parent=11 // pred_region
          _
        $region16: #{seq2seq_forward.9} parent=11 // pred_fallthru
          _
        // Predicated region
        $region17: #{seq2seq_forward.9} parent=11 // pred_check
          %p191 = pneg %p93
        $region18: #{seq2seq_forward.9} parent=11 // pred_check_branch
          %193 = sbr.rel (%p191) target = $region20
        $region19: #{seq2seq_forward.9} parent=11 // pred_region
          %195 = vsyncadd [#allocation3], 0
          %s197 = sshll.u32 %s2, 4
          %s198 = int_to_ptr.hbm [resolvable:$true] %s197
          %s199 = sshll.u32 [#allocation2], 4
          %s200 = int_to_ptr.vmem [resolvable:$true] %s199
          %202 = dma.hbm_to_vmem [thread:$0]  %s198, 16, %s200, [#allocation3]
        $region20: #{seq2seq_forward.9} parent=11 // pred_fallthru
          _
        // Predicated region
        $region21: #{seq2seq_forward.9} parent=11 // pred_check
          %p203 = pneg %p119
        $region22: #{seq2seq_forward.9} parent=11 // pred_check_branch
          %205 = sbr.rel (%p203) target = $region24
        $region23: #{seq2seq_forward.9} parent=11 // pred_region
          %p206 = scmp.lt.s32.totalorder %s23, 0
          %s207 = scalar_select %p206, %s23, 0
          %s208 = smul.addr %s207, 4
          %s209 = scalar_lea.vmem %s3, %s208
        $region24: #{seq2seq_forward.9} parent=11 // pred_fallthru
          _
        // Predicated region
        $region25: #{seq2seq_forward.9} parent=11 // pred_check
          %p210 = pneg %p145
        $region26: #{seq2seq_forward.9} parent=11 // pred_check_branch
          %212 = sbr.rel (%p210) target = $region28
        $region27: #{seq2seq_forward.9} parent=11 // pred_region
          %214 = vsyncadd [#allocation5], 0
          %s215 = scalar_lea.hbm %s4, %s23
          %s217 = sshll.u32 %s215, 4
          %s218 = int_to_ptr.hbm [resolvable:$true] %s217
          %s219 = sshll.u32 [#allocation4], 4
          %s220 = int_to_ptr.vmem [resolvable:$true] %s219
          %222 = dma.hbm_to_vmem [thread:$0]  %s218, 16, %s220, [#allocation5]
        $region28: #{seq2seq_forward.9} parent=11 // pred_fallthru
          _
      $region12: #{seq2seq_forward.9} parent=5 // pred_fallthru
        _
      %p223 = scmp.lt.s32.totalorder %s13, 2
      // Predicated region
      $region29: #{seq2seq_forward.9} parent=5 // pred_check
        %p224 = pneg %p223
      $region30: #{seq2seq_forward.9} parent=5 // pred_check_branch
        %226 = sbr.rel (%p224) target = $region32
      $region31: #{seq2seq_forward.9} parent=5 // pred_region
        // Predicated region
        $region33: #{seq2seq_forward.9} parent=31 // pred_check
          %p227 = pneg %p45
        $region34: #{seq2seq_forward.9} parent=31 // pred_check_branch
          %229 = sbr.rel (%p227) target = $region36
        $region35: #{seq2seq_forward.9} parent=31 // pred_region
          %p230 = scmp.lt.s32.totalorder %s20, 1
          %s231 = scalar_select %p230, %s20, 1
          %s232 = smul.addr %s231, 4
          %s233 = scalar_lea.vmem %s0, %s232
        $region36: #{seq2seq_forward.9} parent=31 // pred_fallthru
          _
      $region32: #{seq2seq_forward.9} parent=5 // pred_fallthru
        _
      %p234 = scmp.le.s32.totalorder 1, %s13
      %p235 = scmp.lt.s32.totalorder %s13, 3
      %p236 = pnand %p234, %p235
      %p237 = pneg %p236
      // Predicated region
      $region37: #{seq2seq_forward.9} parent=5 // pred_check
        _
      $region38: #{seq2seq_forward.9} parent=5 // pred_check_branch
        %239 = sbr.rel (%p236) target = $region40
      $region39: #{seq2seq_forward.9} parent=5 // pred_region
        %s240 = ssub.s32 %s13, 1
        // Predicated region
        $region41: #{seq2seq_forward.9} parent=39 // pred_check
          %p241 = pneg %p93
        $region42: #{seq2seq_forward.9} parent=39 // pred_check_branch
          %243 = sbr.rel (%p241) target = $region44
        $region43: #{seq2seq_forward.9} parent=39 // pred_region
          %245 = dma.done [#allocation3], 16
        $region44: #{seq2seq_forward.9} parent=39 // pred_fallthru
          _
        // Predicated region
        $region45: #{seq2seq_forward.9} parent=39 // pred_check
          %p246 = pneg %p145
        $region46: #{seq2seq_forward.9} parent=39 // pred_check_branch
          %248 = sbr.rel (%p246) target = $region48
        $region47: #{seq2seq_forward.9} parent=39 // pred_region
          %250 = dma.done [#allocation5], 16
        $region48: #{seq2seq_forward.9} parent=39 // pred_fallthru
          _
        %p251 = scmp.lt.s32.totalorder %s22, 1
        %s252 = scalar_select %p251, %s22, 1
        %s253 = smul.addr %s252, 4
        %s254 = scalar_lea.vmem %s0, %s253
        %p255 = pneg %p51
        %p256 = pneg %p48
        %p257 = pneg %p72
        %p258 = pneg %p69
        %p259 = pneg %p93
        %p260 = pneg %p90
        %p261 = scmp.lt.s32.totalorder %s23, 0
        %s262 = scalar_select %p261, %s23, 0
        %s263 = smul.addr %s262, 4
        %s264 = scalar_lea.vmem %s3, %s263
        %p265 = pneg %p119
        %p266 = pneg %p116
        %p267 = pneg %p145
        %p268 = pneg %p142
        %p269 = pneg %p173
        %p270 = pneg %p170
        %p271 = scmp.lt.s32.totalorder %s22, 1
        %s272 = scalar_select %p271, %s22, 1
        %p273 = scmp.lt.s32.totalorder %s23, 0
        %s274 = scalar_select %p273, %s23, 0
        %s275 = sadd.s32 %s274, %s272
        %s276 = smul.addr %s275, 8
        %s277 = scalar_lea.vmem %s5, %s276
        %p278 = scmp.lt.s32.totalorder %s22, 1
        %s279 = scalar_select %p278, %s22, 1
        %s280 = smul.addr %s279, 4
        %s281 = scalar_lea.vmem %s0, %s280
        %p282 = scmp.lt.s32.totalorder %s23, 0
        %s283 = scalar_select %p282, %s23, 0
        %s284 = smul.addr %s283, 4
        %s285 = scalar_lea.vmem %s3, %s284
        %p286 = scmp.lt.s32.totalorder %s22, 1
        %s287 = scalar_select %p286, %s22, 1
        %p288 = scmp.lt.s32.totalorder %s23, 0
        %s289 = scalar_select %p288, %s23, 0
        %s290 = sadd.s32 %s289, %s287
        %s291 = smul.addr %s290, 8
        %s292 = scalar_lea.vmem %s5, %s291
        %v294 = vld [vmem:[%s281] sm:$0xf]
        %v295 = vunpack.c.l.bf16 %v294
        %v296 = vld [vmem:[%s1] sm:$0x1]
        %v297 = vld [vmem:[#allocation2] sm:$0x1]
        %vm298 = vcmask 261120
        %v299 = vsel %vm298, %v295, 0.0
        %300 = vadd.xlane.f32.xlu0 %v299
        %v301 = vpop.xlane.xlu0 %300
        %v302 = vrcp.pop 32.0
        %v303 = vmul.f32 32.0, %v302
        %v304 = vsub.f32 1.0, %v303
        %v305 = vmul.f32 %v302, %v304
        %v306 = vadd.f32 %v302, %v305
        %vm307 = vweird.f32 %v302
        %v308 = vsel %vm307, %v302, %v306
        %v309 = vmul.f32 %v301, %v308
        %v310 = vsub.f32 %v295, %v309
        %v311 = vmul.f32 %v310, %v310
        %v312 = vsel %vm298, %v311, 0.0
        %313 = vadd.xlane.f32.xlu0 %v312
        %v314 = vpop.xlane.xlu0 %313
        %v315 = vmul.f32 %v314, %v308
        %v316 = vadd.f32 %v315, 1e-05
        %v317 = vrsqrt.pop %v316
        %v318 = vmul.f32 %v317, %v316
        %v319 = vmul.f32 %v318, %v317
        %v320 = vmul.f32 0.5, %v319
        %v321 = vsub.f32 1.5, %v320
        %v322 = vmul.f32 %v317, %v321
        %vm323 = vweird.f32 %v316
        %vm324 = vweird.f32 %v317
        %vm325 = vmor %vm323, %vm324
        %v326 = vsel %vm325, %v317, %v322
        %v327 = vmul.f32 %v310, %v326
        %v329 = vperm.slane %v296, 0
        %v331 = vmul.f32 %v327, %v329
        %v333 = vperm.slane %v297, 0
        %v335 = vadd.f32 %v331, %v333
        %v336 = vpack.c.bf16 %v335, %v335
        %v337 = vld [vmem:[%s285] sm:$0xf]
        %v338 = vld [vmem:[%s285 + $0x4] sm:$0xf]
        %v339 = vld [vmem:[%s285 + $0x8] sm:$0xf]
        %v340 = vld [vmem:[%s285 + $0xc] sm:$0xf]
        %v341 = vld [vmem:[#allocation4] sm:$0x1]
        %v343 = vperm.slane %v341, 0
        %v349 = vunpack.c.l.b16 %v337
        %v350 = vunpack.c.l.b16 %v338
        %v351 = vunpack.c.l.b16 %v339
        %v352 = vunpack.c.l.b16 %v340
        %v353 = vpack.c.b16 %v350, %v349
        %v354 = vpack.c.b16 %v352, %v351
        %v358 = vsel %vm298, %v336, 0
        %360 = vmatpush.bf16.msra.mxu0 0
        %361 = vmatpush.bf16.msra.mxu0 0
        %362 = vmatpush.bf16.msra.mxu0 0
        %363 = vmatpush.bf16.msra.mxu0 0
        %364 = vmatpush.bf16.msra.mxu0 0
        %365 = vmatpush.bf16.msra.mxu0 0
        %366 = vmatpush.bf16.msra.mxu0 %v354
        %367 = vmatpush.bf16.msra.mxu0 %v353
        %368 = vmatmul.bf16.gmra.mxu0 %v358
        %v369 = vpop.f32.mrf.mxu0
        %v370 = vadd.f32 %v343, %v369
        %v371 = vpop.f32.mrf.mxu0
        %372 = vdwg.mxu0
        %373 = vst [vmem:[%s292] sm:$0xff] %v370
        %p374 = scmp.lt.s32.totalorder %s22, 1
        %s375 = scalar_select %p374, %s22, 1
        %p376 = scmp.lt.s32.totalorder %s23, 0
        %s377 = scalar_select %p376, %s23, 0
        %s378 = sadd.s32 %s377, %s375
        %s379 = smul.addr %s378, 8
        %s380 = scalar_lea.vmem %s5, %s379
        // Predicated region
        $region49: #{seq2seq_forward.9} parent=39 // pred_check
          %p381 = pneg %p170
        $region50: #{seq2seq_forward.9} parent=39 // pred_check_branch
          %383 = sbr.rel (%p381) target = $region52
        $region51: #{seq2seq_forward.9} parent=39 // pred_region
          _
        $region52: #{seq2seq_forward.9} parent=39 // pred_fallthru
          _
      $region40: #{seq2seq_forward.9} parent=5 // pred_fallthru
        _
      %p384 = scmp.le.s32.totalorder 2, %s13
      // Predicated region
      $region53: #{seq2seq_forward.9} parent=5 // pred_check
        %p385 = pneg %p384
      $region54: #{seq2seq_forward.9} parent=5 // pred_check_branch
        %387 = sbr.rel (%p385) target = $region56
      $region55: #{seq2seq_forward.9} parent=5 // pred_region
        %s388 = ssub.s32 %s13, 2
        // Predicated region
        $region57: #{seq2seq_forward.9} parent=55 // pred_check
          %p389 = pneg %p176
        $region58: #{seq2seq_forward.9} parent=55 // pred_check_branch
          %391 = sbr.rel (%p389) target = $region60
        $region59: #{seq2seq_forward.9} parent=55 // pred_region
          %p392 = scmp.lt.s32.totalorder %s24, 1
          %s393 = scalar_select %p392, %s24, 1
          %p394 = scmp.lt.s32.totalorder %s25, 0
          %s395 = scalar_select %p394, %s25, 0
          %s396 = sadd.s32 %s395, %s393
          %s397 = smul.addr %s396, 8
          %s398 = scalar_lea.vmem %s5, %s397
        $region60: #{seq2seq_forward.9} parent=55 // pred_fallthru
          _
      $region56: #{seq2seq_forward.9} parent=5 // pred_fallthru
        _
    $region6: #{seq2seq_forward.9} parent=1 // loop_footer
      %s17 = sadd.s32 1, %s13
    $region7: #{seq2seq_forward.9} parent=1 // loop_footer_branch
      %12 = sbr.rel target = $region3
    $region8: #{seq2seq_forward.9} parent=1 // loop_exit
      _
    %399 = vsyncpa [#allocation3], 1
    %s400 = scalar_lea.sflag [#allocation3], 1
    %401 = vsyncpa %s400, 1
    %402 = vsyncpa [#allocation5], 1

</llo_original>
